<compile_context>
chip_gen: v7x
topology: tpu7x:2x2x1
jax: 0.10.0
libtpu: 0.0.40
codegen_flags: <defaults>
</compile_context>

<pallas_src>
import functools
import math

import jax
import jax.numpy as jnp
from jax import lax
from jax.experimental import pallas as pl
from jax.experimental.pallas import tpu as pltpu


# ----------------------------------------------------------------------------
# In-kernel helpers
# ----------------------------------------------------------------------------
def _max_over_groups(h, tq, k):
    """Max over the k "neighbor" rows of each of tq queries.

    h : (k*tq, C) f32 with rows ordered NEIGHBOR-major (row j*tq + q = neighbor
        j of query q).  Every slice below is a multiple of tq (>= 8) rows, so
        it is (8,128)-tile aligned; the pairwise-max tree is pure VPU work and
        the caller does a single dense store of the (tq, C) result.
    """
    while k > 1 and k % 2 == 0:
        k //= 2
        h = jnp.maximum(h[: k * tq, :], h[k * tq:, :])
    if k > 1:  # short linear tail for non-power-of-two k (still tile aligned)
        acc = h[:tq, :]
        for j in range(1, k):
            acc = jnp.maximum(acc, h[j * tq:(j + 1) * tq, :])
        h = acc
    return h


def _mlp3(h, w1, b1, w2, b2, w3, b3):
    """[Linear+ReLU, Linear+ReLU, Linear]; bf16 MXU operands, f32 accumulate."""
    h = jnp.maximum(
        jnp.dot(h, w1, preferred_element_type=jnp.float32) + b1, 0.0)
    h = jnp.maximum(
        jnp.dot(h.astype(jnp.bfloat16), w2,
                preferred_element_type=jnp.float32) + b2, 0.0)
    return jnp.dot(h.astype(jnp.bfloat16), w3,
                   preferred_element_type=jnp.float32) + b3


# ----------------------------------------------------------------------------
# Pallas kernels
# ----------------------------------------------------------------------------
def _pointconv_kernel(feat_ref, w1_ref, b1_ref, w2_ref, b2_ref, w3_ref, b3_ref,
                      out_ref):
    """Per-edge 3-layer MLP (ReLU, ReLU, linear) + max over neighbors.

    feat_ref : (tq*K, Cin) bf16 edge features, NEIGHBOR-major rows
    out_ref  : (tq, Cout)  f32 max-aggregated query features (one dense store)
    """
    tq = out_ref.shape[0]
    k = feat_ref.shape[0] // tq
    h = _mlp3(feat_ref[...], w1_ref[...], b1_ref[...], w2_ref[...], b2_ref[...],
              w3_ref[...], b3_ref[...])
    out_ref[...] = _max_over_groups(h, tq, k)


def _global_head_kernel(feat_ref, w1_ref, b1_ref, w2_ref, b2_ref, w3_ref, b3_ref,
                        hw1_ref, hb1_ref, hw2_ref, hb2_ref, hw3_ref, hb3_ref,
                        out_ref):
    """GlobalSetAbstraction (nn(cat([x,pos])) per point + global max pool) fused
    with the classifier MLP [1024,512,256,10] (norm=None) + log_softmax.

    feat_ref : (S*Bp, Cin) bf16, point-major rows (row s*Bp + b)
    out_ref  : (Bp, 10)    f32 log-probabilities
    """
    bp = out_ref.shape[0]
    s = feat_ref.shape[0] // bp
    h = _mlp3(feat_ref[...], w1_ref[...], b1_ref[...], w2_ref[...], b2_ref[...],
              w3_ref[...], b3_ref[...])
    pooled = _max_over_groups(h, bp, s)                       # (Bp, 1024) f32
    # TODO(synk): dropout between head layers is skipped (inference semantics).
    g = _mlp3(pooled.astype(jnp.bfloat16), hw1_ref[...], hb1_ref[...],
              hw2_ref[...], hb2_ref[...], hw3_ref[...], hb3_ref[...])
    m = jnp.max(g, axis=-1, keepdims=True)
    lse = jnp.log(jnp.sum(jnp.exp(g - m), axis=-1, keepdims=True)) + m
    out_ref[...] = g - lse


# ----------------------------------------------------------------------------
# Pallas wrappers
# ----------------------------------------------------------------------------
def _neighbor_major(feat, tq):
    """(Q, K, C) query-major -> (Q*K, C) rows tiled by groups of tq queries,
    with the neighbor index as the slow axis inside each tile.  Layout plumbing
    lives in the wrapper so the kernel's loads/stores stay lane/sublane dense."""
    q, k, c = feat.shape
    g = q // tq
    return feat.reshape(g, tq, k, c).transpose(0, 2, 1, 3).reshape(g * k * tq, c)


def pointconv_mlp_max(feat, params):
    """feat: (Q, K, Cin) edge features -> (Q, Cout) via edge-MLP + max-agg.

    Padded neighbor slots must duplicate a valid neighbor (duplicates do not
    change the max), so no mask operand is needed.
    """
    Q, K, Cin = feat.shape
    (w1, b1), (w2, b2), (w3, b3) = params
    Cout = w3.shape[1]

    # Large query tiles amortize the ~0.35us per-grid-step overhead and the MXU
    # weight push; keep >=2 grid steps when possible so the "parallel" axis can
    # shard across v7x's two TensorCores.
    tq = 8
    for cand in (64, 32, 16):
        if Q >= 2 * cand:
            tq = cand
            break
    padq = (-Q) % tq
    if padq:
        feat = jnp.concatenate(
            [feat, jnp.zeros((padq, K, Cin), feat.dtype)], axis=0)
    Qp = Q + padq

    # TODO(synk): the K-times-duplicated edge tensor is still materialized in
    # HBM by the wrapper-side gather; an in-kernel DMA / scalar-prefetch gather
    # of per-cloud features would cut that traffic by ~K.
    feat2 = _neighbor_major(feat, tq).astype(jnp.bfloat16)
    w1b, w2b, w3b = (w.astype(jnp.bfloat16) for w in (w1, w2, w3))

    def rep(a):  # replicated (whole-array) operand
        return pl.BlockSpec(a.shape, lambda i: (0, 0))

    out = pl.pallas_call(
        _pointconv_kernel,
        out_shape=jax.ShapeDtypeStruct((Qp, Cout), jnp.float32),
        grid=(Qp // tq,),
        in_specs=[
            pl.BlockSpec((tq * K, Cin), lambda i: (i, 0)),
            rep(w1b), rep(b1), rep(w2b), rep(b2), rep(w3b), rep(b3),
        ],
        out_specs=pl.BlockSpec((tq, Cout), lambda i: (i, 0)),
        compiler_params=pltpu.CompilerParams(
            dimension_semantics=("parallel",),
            vmem_limit_bytes=32 * 1024 * 1024),
    )(feat2, w1b, b1, w2b, b2, w3b, b3)
    return out[:Q]


def global_sa_and_head(x, pos, sa3_params, head_params):
    """Fused GlobalSetAbstraction (nn(cat([x, pos])) -> global max pool) and
    classifier head: one pallas_call, no HBM round trip for the pooled (B,1024)
    features.  Returns (B, num_classes) log-probabilities."""
    B, S, _ = x.shape
    feat = jnp.concatenate([x, pos], axis=-1)                 # (B, S, C+3)
    Bp = B + (-B) % 8                                         # sublane-align B
    if Bp != B:
        feat = jnp.concatenate(
            [feat, jnp.zeros((Bp - B, S, feat.shape[-1]), feat.dtype)], axis=0)
    feat2 = _neighbor_major(feat, Bp).astype(jnp.bfloat16)    # (S*Bp, C+3)

    (w1, b1), (w2, b2), (w3, b3) = sa3_params
    (hw1, hb1), (hw2, hb2), (hw3, hb3) = head_params
    bf = lambda w: w.astype(jnp.bfloat16)

    out = pl.pallas_call(
        _global_head_kernel,
        out_shape=jax.ShapeDtypeStruct((Bp, hw3.shape[1]), jnp.float32),
        compiler_params=pltpu.CompilerParams(
            vmem_limit_bytes=32 * 1024 * 1024),
    )(feat2, bf(w1), b1, bf(w2), b2, bf(w3), b3,
      bf(hw1), hb1, bf(hw2), hb2, bf(hw3), hb3)
    return out[:B]


# ----------------------------------------------------------------------------
# Graph-construction glue (plain JAX): FPS + radius neighborhood
# ----------------------------------------------------------------------------
def fps_single(pos, num_samples):
    """Farthest point sampling for one cloud. Deterministic start at index 0."""
    def body(i, state):
        sel, mind = state
        nxt = jnp.argmax(mind).astype(jnp.int32)
        sel = sel.at[i].set(nxt)
        d = jnp.sum((pos - pos[nxt]) ** 2, axis=-1)
        return sel, jnp.minimum(mind, d)

    sel0 = jnp.zeros((num_samples,), jnp.int32)
    d0 = jnp.sum((pos - pos[0]) ** 2, axis=-1)
    sel, _ = lax.fori_loop(1, num_samples, body, (sel0, d0))
    return sel


def radius_neighbors(pos, pos_q, r, k):
    """First <=k points (by index order) within radius r of each query.

    Padded slots are filled with the query's first valid neighbor (the query
    point itself is always within radius), so downstream max-aggregation needs
    no mask and no out-of-range indices are ever produced.
    """
    n = pos.shape[0]
    d2 = jnp.sum((pos_q[:, None, :] - pos[None, :, :]) ** 2, axis=-1)
    within = d2 <= r * r
    key = jnp.where(within, jnp.arange(n)[None, :], n)
    order = jnp.argsort(key, axis=1)[:, :k]
    valid = jnp.take_along_axis(key, order, axis=1) < n
    order = jnp.where(valid, order, order[:, :1])             # duplicate, not mask
    return order.astype(jnp.int32)


# ----------------------------------------------------------------------------
# Model blocks
# ----------------------------------------------------------------------------
def set_abstraction(x, pos, ratio, r, k, params):
    """SetAbstraction: fps -> radius graph -> PointConv(MLP, max aggregation)."""
    B, N, _ = pos.shape
    S = int(math.ceil(ratio * N))
    idx = jax.vmap(functools.partial(fps_single, num_samples=S))(pos)       # (B,S)
    pos_q = jax.vmap(lambda p, i: p[i])(pos, idx)                           # (B,S,3)
    nidx = jax.vmap(lambda p, q: radius_neighbors(p, q, r, k))(pos, pos_q)  # (B,S,k)
    nbr_pos = jax.vmap(lambda p, i: p[i])(pos, nidx)                        # (B,S,k,3)
    rel = nbr_pos - pos_q[:, :, None, :]
    if x is None:
        feat = rel
    else:
        nbr_x = jax.vmap(lambda xx, i: xx[i])(x, nidx)                      # (B,S,k,C)
        feat = jnp.concatenate([nbr_x, rel], axis=-1)
    Cin = feat.shape[-1]
    out = pointconv_mlp_max(feat.reshape(B * S, k, Cin), params)
    return out.reshape(B, S, -1), pos_q


def pointnet2_forward(pos, params,
                      set_abstraction_ratio_1=0.5,
                      set_abstraction_ratio_2=0.25,
                      set_abstraction_radius_1=0.5,
                      set_abstraction_radius_2=1.0):
    B, N, _ = pos.shape
    # sa1: data.x is None (ModelNet), so PointConv input is just rel-pos (3 ch).
    x1, pos1 = set_abstraction(None, pos, set_abstraction_ratio_1,
                               set_abstraction_radius_1, k=min(64, N),
                               params=params["sa1"])
    x2, pos2 = set_abstraction(x1, pos1, set_abstraction_ratio_2,
                               set_abstraction_radius_2,
                               k=min(64, pos1.shape[1]), params=params["sa2"])
    # GlobalSetAbstraction + classifier head fused in one Pallas kernel.
    return global_sa_and_head(x2, pos2, params["sa3"], params["head"])  # (B,10)


# ----------------------------------------------------------------------------
# Deterministic parameter init
# ----------------------------------------------------------------------------
def init_linear(key, cin, cout):
    kw, kb = jax.random.split(key)
    bound = 1.0 / math.sqrt(cin)
    w = jax.random.uniform(kw, (cin, cout), jnp.float32, -bound, bound)
    b = jax.random.uniform(kb, (1, cout), jnp.float32, -bound, bound)
    return w, b


def init_mlp(key, channels):
    keys = jax.random.split(key, len(channels) - 1)
    return tuple(init_linear(k, ci, co)
                 for k, ci, co in zip(keys, channels[:-1], channels[1:]))


if __name__ == "__main__":
    key = jax.random.PRNGKey(0)
    kpos, kparam = jax.random.split(key)
    B, N = 2, 64
    pos = jax.random.uniform(kpos, (B, N, 3), jnp.float32, -1.0, 1.0)

    k1, k2, k3, k4 = jax.random.split(kparam, 4)
    params = {
        "sa1": init_mlp(k1, [3, 64, 64, 128]),
        "sa2": init_mlp(k2, [128 + 3, 128, 128, 256]),
        "sa3": init_mlp(k3, [256 + 3, 256, 512, 1024]),
        "head": init_mlp(k4, [1024, 512, 256, 10]),
    }

    fwd = jax.jit(pointnet2_forward)
    log_probs = fwd(pos, params)
    jax.block_until_ready(log_probs)
    assert log_probs.shape == (B, 10), log_probs.shape
    assert bool(jnp.all(jnp.isfinite(log_probs)))
    print("KERNEL_OK")
</pallas_src>

<mosaic_0001>
module attributes {stable_mosaic.version = 11 : i64} {
  func.func private @main(%arg0: i32) attributes {dimension_semantics = [#tpu.dimension_semantics<core_parallel>], iteration_bounds = array<i64: 2>, tpu.core_type = #tpu.core_type<sc_scalar_subcore>, window_params = []} {
    return
  }
}

module attributes {stable_mosaic.version = 11 : i64} {
  func.func private @main(%arg0: i32) attributes {dimension_semantics = [#tpu.dimension_semantics<core_parallel>], iteration_bounds = array<i64: 2>, tpu.core_type = #tpu.core_type<sc_scalar_subcore>, window_params = []} {
    return
  }
}

module attributes {stable_mosaic.version = 11 : i64} {
  func.func @_pointconv_kernel(%arg0: i32, %arg1: memref<2048x3xbf16, #tpu.memory_space<vmem>>, %arg2: memref<3x64xbf16, #tpu.memory_space<vmem>>, %arg3: memref<1x64xf32, #tpu.memory_space<vmem>>, %arg4: memref<64x64xbf16, #tpu.memory_space<vmem>>, %arg5: memref<1x64xf32, #tpu.memory_space<vmem>>, %arg6: memref<64x128xbf16, #tpu.memory_space<vmem>>, %arg7: memref<1x128xf32, #tpu.memory_space<vmem>>, %arg8: memref<32x128xf32, #tpu.memory_space<vmem>>) attributes {dimension_semantics = [#tpu.dimension_semantics<parallel>], iteration_bounds = array<i64: 2>, scalar_prefetch = 0 : i64, scratch_operands = 0 : i64, tpu.core_type = #tpu.core_type<tc>, window_params = [{transform_indices = @transform_0, window_bounds = array<i64: 2048, 3>}, {pipeline_mode = #tpu.pipeline_mode<synchronous>, transform_indices = @transform_1, window_bounds = array<i64: 3, 64>}, {pipeline_mode = #tpu.pipeline_mode<synchronous>, transform_indices = @transform_2, window_bounds = array<i64: 1, 64>}, {pipeline_mode = #tpu.pipeline_mode<synchronous>, transform_indices = @transform_3, window_bounds = array<i64: 64, 64>}, {pipeline_mode = #tpu.pipeline_mode<synchronous>, transform_indices = @transform_4, window_bounds = array<i64: 1, 64>}, {pipeline_mode = #tpu.pipeline_mode<synchronous>, transform_indices = @transform_5, window_bounds = array<i64: 64, 128>}, {pipeline_mode = #tpu.pipeline_mode<synchronous>, transform_indices = @transform_6, window_bounds = array<i64: 1, 128>}, {transform_indices = @transform_7, window_bounds = array<i64: 32, 128>}]} {
    %c0 = arith.constant 0 : index
    %c0_0 = arith.constant 0 : index
    %0 = vector.load %arg1[%c0, %c0_0] : memref<2048x3xbf16, #tpu.memory_space<vmem>>, vector<2048x3xbf16>
    %c0_1 = arith.constant 0 : index
    %c0_2 = arith.constant 0 : index
    %1 = vector.load %arg2[%c0_1, %c0_2] : memref<3x64xbf16, #tpu.memory_space<vmem>>, vector<3x64xbf16>
    %c0_3 = arith.constant 0 : index
    %c0_4 = arith.constant 0 : index
    %2 = vector.load %arg3[%c0_3, %c0_4] : memref<1x64xf32, #tpu.memory_space<vmem>>, vector<1x64xf32>
    %c0_5 = arith.constant 0 : index
    %c0_6 = arith.constant 0 : index
    %3 = vector.load %arg4[%c0_5, %c0_6] : memref<64x64xbf16, #tpu.memory_space<vmem>>, vector<64x64xbf16>
    %c0_7 = arith.constant 0 : index
    %c0_8 = arith.constant 0 : index
    %4 = vector.load %arg5[%c0_7, %c0_8] : memref<1x64xf32, #tpu.memory_space<vmem>>, vector<1x64xf32>
    %c0_9 = arith.constant 0 : index
    %c0_10 = arith.constant 0 : index
    %5 = vector.load %arg6[%c0_9, %c0_10] : memref<64x128xbf16, #tpu.memory_space<vmem>>, vector<64x128xbf16>
    %c0_11 = arith.constant 0 : index
    %c0_12 = arith.constant 0 : index
    %6 = vector.load %arg7[%c0_11, %c0_12] : memref<1x128xf32, #tpu.memory_space<vmem>>, vector<1x128xf32>
    %cst = arith.constant dense<0.000000e+00> : vector<2048x64xf32>
    %7 = tpu.matmul %0, %1, %cst {dimension_numbers = #tpu.dot_dimension_numbers<[1], [0], [0], [1], [0, 0, 1, 1], [], []>} : vector<2048x3xbf16>, vector<3x64xbf16>, vector<2048x64xf32> -> vector<2048x64xf32>
    %8 = vector.broadcast %2 : vector<1x64xf32> to vector<2048x64xf32>
    %9 = arith.addf %7, %8 : vector<2048x64xf32>
    %cst_13 = arith.constant 0.000000e+00 : f32
    %10 = vector.broadcast %cst_13 : f32 to vector<2048x64xf32>
    %11 = arith.maximumf %9, %10 : vector<2048x64xf32>
    %12 = arith.truncf %11 : vector<2048x64xf32> to vector<2048x64xbf16>
    %cst_14 = arith.constant dense<0.000000e+00> : vector<2048x64xf32>
    %13 = tpu.matmul %12, %3, %cst_14 {dimension_numbers = #tpu.dot_dimension_numbers<[1], [0], [0], [1], [0, 0, 1, 1], [], []>} : vector<2048x64xbf16>, vector<64x64xbf16>, vector<2048x64xf32> -> vector<2048x64xf32>
    %14 = vector.broadcast %4 : vector<1x64xf32> to vector<2048x64xf32>
    %15 = arith.addf %13, %14 : vector<2048x64xf32>
    %cst_15 = arith.constant 0.000000e+00 : f32
    %16 = vector.broadcast %cst_15 : f32 to vector<2048x64xf32>
    %17 = arith.maximumf %15, %16 : vector<2048x64xf32>
    %18 = arith.truncf %17 : vector<2048x64xf32> to vector<2048x64xbf16>
    %cst_16 = arith.constant dense<0.000000e+00> : vector<2048x128xf32>
    %19 = tpu.matmul %18, %5, %cst_16 {dimension_numbers = #tpu.dot_dimension_numbers<[1], [0], [0], [1], [0, 0, 1, 1], [], []>} : vector<2048x64xbf16>, vector<64x128xbf16>, vector<2048x128xf32> -> vector<2048x128xf32>
    %20 = vector.broadcast %6 : vector<1x128xf32> to vector<2048x128xf32>
    %21 = arith.addf %19, %20 : vector<2048x128xf32>
    %22 = vector.extract_strided_slice %21 {offsets = [0, 0], sizes = [1024, 128], strides = [1, 1]} : vector<2048x128xf32> to vector<1024x128xf32>
    %23 = vector.extract_strided_slice %21 {offsets = [1024, 0], sizes = [1024, 128], strides = [1, 1]} : vector<2048x128xf32> to vector<1024x128xf32>
    %24 = arith.maximumf %22, %23 : vector<1024x128xf32>
    %25 = vector.extract_strided_slice %24 {offsets = [0, 0], sizes = [512, 128], strides = [1, 1]} : vector<1024x128xf32> to vector<512x128xf32>
    %26 = vector.extract_strided_slice %24 {offsets = [512, 0], sizes = [512, 128], strides = [1, 1]} : vector<1024x128xf32> to vector<512x128xf32>
    %27 = arith.maximumf %25, %26 : vector<512x128xf32>
    %28 = vector.extract_strided_slice %27 {offsets = [0, 0], sizes = [256, 128], strides = [1, 1]} : vector<512x128xf32> to vector<256x128xf32>
    %29 = vector.extract_strided_slice %27 {offsets = [256, 0], sizes = [256, 128], strides = [1, 1]} : vector<512x128xf32> to vector<256x128xf32>
    %30 = arith.maximumf %28, %29 : vector<256x128xf32>
    %31 = vector.extract_strided_slice %30 {offsets = [0, 0], sizes = [128, 128], strides = [1, 1]} : vector<256x128xf32> to vector<128x128xf32>
    %32 = vector.extract_strided_slice %30 {offsets = [128, 0], sizes = [128, 128], strides = [1, 1]} : vector<256x128xf32> to vector<128x128xf32>
    %33 = arith.maximumf %31, %32 : vector<128x128xf32>
    %34 = vector.extract_strided_slice %33 {offsets = [0, 0], sizes = [64, 128], strides = [1, 1]} : vector<128x128xf32> to vector<64x128xf32>
    %35 = vector.extract_strided_slice %33 {offsets = [64, 0], sizes = [64, 128], strides = [1, 1]} : vector<128x128xf32> to vector<64x128xf32>
    %36 = arith.maximumf %34, %35 : vector<64x128xf32>
    %37 = vector.extract_strided_slice %36 {offsets = [0, 0], sizes = [32, 128], strides = [1, 1]} : vector<64x128xf32> to vector<32x128xf32>
    %38 = vector.extract_strided_slice %36 {offsets = [32, 0], sizes = [32, 128], strides = [1, 1]} : vector<64x128xf32> to vector<32x128xf32>
    %39 = arith.maximumf %37, %38 : vector<32x128xf32>
    %c0_17 = arith.constant 0 : index
    %c0_18 = arith.constant 0 : index
    %40 = vector.load %arg8[%c0_17, %c0_18] : memref<32x128xf32, #tpu.memory_space<vmem>>, vector<32x128xf32>
    tpu.vector_store %arg8[%c0_17, %c0_18], %39 {strides = array<i32>} : memref<32x128xf32, #tpu.memory_space<vmem>>, vector<32x128xf32>,
    return
  }
  func.func @transform_0(%arg0: i32) -> (i32, i32) {
    %c0_i32 = arith.constant 0 : i32
    %c0_i32_0 = arith.constant 0 : i32
    return %arg0, %c0_i32 : i32, i32
  }
  func.func @transform_1(%arg0: i32) -> (i32, i32) {
    %c0_i32 = arith.constant 0 : i32
    %c0_i32_0 = arith.constant 0 : i32
    %c0_i32_1 = arith.constant 0 : i32
    return %c0_i32, %c0_i32_0 : i32, i32
  }
  func.func @transform_2(%arg0: i32) -> (i32, i32) {
    %c0_i32 = arith.constant 0 : i32
    %c0_i32_0 = arith.constant 0 : i32
    %c0_i32_1 = arith.constant 0 : i32
    return %c0_i32, %c0_i32_0 : i32, i32
  }
  func.func @transform_3(%arg0: i32) -> (i32, i32) {
    %c0_i32 = arith.constant 0 : i32
    %c0_i32_0 = arith.constant 0 : i32
    %c0_i32_1 = arith.constant 0 : i32
    return %c0_i32, %c0_i32_0 : i32, i32
  }
  func.func @transform_4(%arg0: i32) -> (i32, i32) {
    %c0_i32 = arith.constant 0 : i32
    %c0_i32_0 = arith.constant 0 : i32
    %c0_i32_1 = arith.constant 0 : i32
    return %c0_i32, %c0_i32_0 : i32, i32
  }
  func.func @transform_5(%arg0: i32) -> (i32, i32) {
    %c0_i32 = arith.constant 0 : i32
    %c0_i32_0 = arith.constant 0 : i32
    %c0_i32_1 = arith.constant 0 : i32
    return %c0_i32, %c0_i32_0 : i32, i32
  }
  func.func @transform_6(%arg0: i32) -> (i32, i32) {
    %c0_i32 = arith.constant 0 : i32
    %c0_i32_0 = arith.constant 0 : i32
    %c0_i32_1 = arith.constant 0 : i32
    return %c0_i32, %c0_i32_0 : i32, i32
  }
  func.func @transform_7(%arg0: i32) -> (i32, i32) {
    %c0_i32 = arith.constant 0 : i32
    %c0_i32_0 = arith.constant 0 : i32
    return %arg0, %c0_i32 : i32, i32
  }
}

module attributes {stable_mosaic.version = 11 : i64} {
  func.func @_pointconv_kernel(%arg0: i32, %arg1: memref<256x131xbf16, #tpu.memory_space<vmem>>, %arg2: memref<131x128xbf16, #tpu.memory_space<vmem>>, %arg3: memref<1x128xf32, #tpu.memory_space<vmem>>, %arg4: memref<128x128xbf16, #tpu.memory_space<vmem>>, %arg5: memref<1x128xf32, #tpu.memory_space<vmem>>, %arg6: memref<128x256xbf16, #tpu.memory_space<vmem>>, %arg7: memref<1x256xf32, #tpu.memory_space<vmem>>, %arg8: memref<8x256xf32, #tpu.memory_space<vmem>>) attributes {dimension_semantics = [#tpu.dimension_semantics<parallel>], iteration_bounds = array<i64: 2>, scalar_prefetch = 0 : i64, scratch_operands = 0 : i64, tpu.core_type = #tpu.core_type<tc>, window_params = [{transform_indices = @transform_0, window_bounds = array<i64: 256, 131>}, {pipeline_mode = #tpu.pipeline_mode<synchronous>, transform_indices = @transform_1, window_bounds = array<i64: 131, 128>}, {pipeline_mode = #tpu.pipeline_mode<synchronous>, transform_indices = @transform_2, window_bounds = array<i64: 1, 128>}, {pipeline_mode = #tpu.pipeline_mode<synchronous>, transform_indices = @transform_3, window_bounds = array<i64: 128, 128>}, {pipeline_mode = #tpu.pipeline_mode<synchronous>, transform_indices = @transform_4, window_bounds = array<i64: 1, 128>}, {pipeline_mode = #tpu.pipeline_mode<synchronous>, transform_indices = @transform_5, window_bounds = array<i64: 128, 256>}, {pipeline_mode = #tpu.pipeline_mode<synchronous>, transform_indices = @transform_6, window_bounds = array<i64: 1, 256>}, {transform_indices = @transform_7, window_bounds = array<i64: 8, 256>}]} {
    %c0 = arith.constant 0 : index
    %c0_0 = arith.constant 0 : index
    %0 = vector.load %arg1[%c0, %c0_0] : memref<256x131xbf16, #tpu.memory_space<vmem>>, vector<256x131xbf16>
    %c0_1 = arith.constant 0 : index
    %c0_2 = arith.constant 0 : index
    %1 = vector.load %arg2[%c0_1, %c0_2] : memref<131x128xbf16, #tpu.memory_space<vmem>>, vector<131x128xbf16>
    %c0_3 = arith.constant 0 : index
    %c0_4 = arith.constant 0 : index
    %2 = vector.load %arg3[%c0_3, %c0_4] : memref<1x128xf32, #tpu.memory_space<vmem>>, vector<1x128xf32>
    %c0_5 = arith.constant 0 : index
    %c0_6 = arith.constant 0 : index
    %3 = vector.load %arg4[%c0_5, %c0_6] : memref<128x128xbf16, #tpu.memory_space<vmem>>, vector<128x128xbf16>
    %c0_7 = arith.constant 0 : index
    %c0_8 = arith.constant 0 : index
    %4 = vector.load %arg5[%c0_7, %c0_8] : memref<1x128xf32, #tpu.memory_space<vmem>>, vector<1x128xf32>
    %c0_9 = arith.constant 0 : index
    %c0_10 = arith.constant 0 : index
    %5 = vector.load %arg6[%c0_9, %c0_10] : memref<128x256xbf16, #tpu.memory_space<vmem>>, vector<128x256xbf16>
    %c0_11 = arith.constant 0 : index
    %c0_12 = arith.constant 0 : index
    %6 = vector.load %arg7[%c0_11, %c0_12] : memref<1x256xf32, #tpu.memory_space<vmem>>, vector<1x256xf32>
    %cst = arith.constant dense<0.000000e+00> : vector<256x128xf32>
    %7 = tpu.matmul %0, %1, %cst {dimension_numbers = #tpu.dot_dimension_numbers<[1], [0], [0], [1], [0, 0, 1, 1], [], []>} : vector<256x131xbf16>, vector<131x128xbf16>, vector<256x128xf32> -> vector<256x128xf32>
    %8 = vector.broadcast %2 : vector<1x128xf32> to vector<256x128xf32>
    %9 = arith.addf %7, %8 : vector<256x128xf32>
    %cst_13 = arith.constant 0.000000e+00 : f32
    %10 = vector.broadcast %cst_13 : f32 to vector<256x128xf32>
    %11 = arith.maximumf %9, %10 : vector<256x128xf32>
    %12 = arith.truncf %11 : vector<256x128xf32> to vector<256x128xbf16>
    %cst_14 = arith.constant dense<0.000000e+00> : vector<256x128xf32>
    %13 = tpu.matmul %12, %3, %cst_14 {dimension_numbers = #tpu.dot_dimension_numbers<[1], [0], [0], [1], [0, 0, 1, 1], [], []>} : vector<256x128xbf16>, vector<128x128xbf16>, vector<256x128xf32> -> vector<256x128xf32>
    %14 = vector.broadcast %4 : vector<1x128xf32> to vector<256x128xf32>
    %15 = arith.addf %13, %14 : vector<256x128xf32>
    %cst_15 = arith.constant 0.000000e+00 : f32
    %16 = vector.broadcast %cst_15 : f32 to vector<256x128xf32>
    %17 = arith.maximumf %15, %16 : vector<256x128xf32>
    %18 = arith.truncf %17 : vector<256x128xf32> to vector<256x128xbf16>
    %cst_16 = arith.constant dense<0.000000e+00> : vector<256x256xf32>
    %19 = tpu.matmul %18, %5, %cst_16 {dimension_numbers = #tpu.dot_dimension_numbers<[1], [0], [0], [1], [0, 0, 1, 1], [], []>} : vector<256x128xbf16>, vector<128x256xbf16>, vector<256x256xf32> -> vector<256x256xf32>
    %20 = vector.broadcast %6 : vector<1x256xf32> to vector<256x256xf32>
    %21 = arith.addf %19, %20 : vector<256x256xf32>
    %22 = vector.extract_strided_slice %21 {offsets = [0, 0], sizes = [128, 256], strides = [1, 1]} : vector<256x256xf32> to vector<128x256xf32>
    %23 = vector.extract_strided_slice %21 {offsets = [128, 0], sizes = [128, 256], strides = [1, 1]} : vector<256x256xf32> to vector<128x256xf32>
    %24 = arith.maximumf %22, %23 : vector<128x256xf32>
    %25 = vector.extract_strided_slice %24 {offsets = [0, 0], sizes = [64, 256], strides = [1, 1]} : vector<128x256xf32> to vector<64x256xf32>
    %26 = vector.extract_strided_slice %24 {offsets = [64, 0], sizes = [64, 256], strides = [1, 1]} : vector<128x256xf32> to vector<64x256xf32>
    %27 = arith.maximumf %25, %26 : vector<64x256xf32>
    %28 = vector.extract_strided_slice %27 {offsets = [0, 0], sizes = [32, 256], strides = [1, 1]} : vector<64x256xf32> to vector<32x256xf32>
    %29 = vector.extract_strided_slice %27 {offsets = [32, 0], sizes = [32, 256], strides = [1, 1]} : vector<64x256xf32> to vector<32x256xf32>
    %30 = arith.maximumf %28, %29 : vector<32x256xf32>
    %31 = vector.extract_strided_slice %30 {offsets = [0, 0], sizes = [16, 256], strides = [1, 1]} : vector<32x256xf32> to vector<16x256xf32>
    %32 = vector.extract_strided_slice %30 {offsets = [16, 0], sizes = [16, 256], strides = [1, 1]} : vector<32x256xf32> to vector<16x256xf32>
    %33 = arith.maximumf %31, %32 : vector<16x256xf32>
    %34 = vector.extract_strided_slice %33 {offsets = [0, 0], sizes = [8, 256], strides = [1, 1]} : vector<16x256xf32> to vector<8x256xf32>
    %35 = vector.extract_strided_slice %33 {offsets = [8, 0], sizes = [8, 256], strides = [1, 1]} : vector<16x256xf32> to vector<8x256xf32>
    %36 = arith.maximumf %34, %35 : vector<8x256xf32>
    %c0_17 = arith.constant 0 : index
    %c0_18 = arith.constant 0 : index
    %37 = vector.load %arg8[%c0_17, %c0_18] : memref<8x256xf32, #tpu.memory_space<vmem>>, vector<8x256xf32>
    tpu.vector_store %arg8[%c0_17, %c0_18], %36 {strides = array<i32>} : memref<8x256xf32, #tpu.memory_space<vmem>>, vector<8x256xf32>,
    return
  }
  func.func @transform_0(%arg0: i32) -> (i32, i32) {
    %c0_i32 = arith.constant 0 : i32
    %c0_i32_0 = arith.constant 0 : i32
    return %arg0, %c0_i32 : i32, i32
  }
  func.func @transform_1(%arg0: i32) -> (i32, i32) {
    %c0_i32 = arith.constant 0 : i32
    %c0_i32_0 = arith.constant 0 : i32
    %c0_i32_1 = arith.constant 0 : i32
    return %c0_i32, %c0_i32_0 : i32, i32
  }
  func.func @transform_2(%arg0: i32) -> (i32, i32) {
    %c0_i32 = arith.constant 0 : i32
    %c0_i32_0 = arith.constant 0 : i32
    %c0_i32_1 = arith.constant 0 : i32
    return %c0_i32, %c0_i32_0 : i32, i32
  }
  func.func @transform_3(%arg0: i32) -> (i32, i32) {
    %c0_i32 = arith.constant 0 : i32
    %c0_i32_0 = arith.constant 0 : i32
    %c0_i32_1 = arith.constant 0 : i32
    return %c0_i32, %c0_i32_0 : i32, i32
  }
  func.func @transform_4(%arg0: i32) -> (i32, i32) {
    %c0_i32 = arith.constant 0 : i32
    %c0_i32_0 = arith.constant 0 : i32
    %c0_i32_1 = arith.constant 0 : i32
    return %c0_i32, %c0_i32_0 : i32, i32
  }
  func.func @transform_5(%arg0: i32) -> (i32, i32) {
    %c0_i32 = arith.constant 0 : i32
    %c0_i32_0 = arith.constant 0 : i32
    %c0_i32_1 = arith.constant 0 : i32
    return %c0_i32, %c0_i32_0 : i32, i32
  }
  func.func @transform_6(%arg0: i32) -> (i32, i32) {
    %c0_i32 = arith.constant 0 : i32
    %c0_i32_0 = arith.constant 0 : i32
    %c0_i32_1 = arith.constant 0 : i32
    return %c0_i32, %c0_i32_0 : i32, i32
  }
  func.func @transform_7(%arg0: i32) -> (i32, i32) {
    %c0_i32 = arith.constant 0 : i32
    %c0_i32_0 = arith.constant 0 : i32
    return %arg0, %c0_i32 : i32, i32
  }
}

module attributes {stable_mosaic.version = 11 : i64} {
  func.func @_global_head_kernel(%arg0: memref<64x259xbf16, #tpu.memory_space<vmem>>, %arg1: memref<259x256xbf16, #tpu.memory_space<vmem>>, %arg2: memref<1x256xf32, #tpu.memory_space<vmem>>, %arg3: memref<256x512xbf16, #tpu.memory_space<vmem>>, %arg4: memref<1x512xf32, #tpu.memory_space<vmem>>, %arg5: memref<512x1024xbf16, #tpu.memory_space<vmem>>, %arg6: memref<1x1024xf32, #tpu.memory_space<vmem>>, %arg7: memref<1024x512xbf16, #tpu.memory_space<vmem>>, %arg8: memref<1x512xf32, #tpu.memory_space<vmem>>, %arg9: memref<512x256xbf16, #tpu.memory_space<vmem>>, %arg10: memref<1x256xf32, #tpu.memory_space<vmem>>, %arg11: memref<256x10xbf16, #tpu.memory_space<vmem>>, %arg12: memref<1x10xf32, #tpu.memory_space<vmem>>, %arg13: memref<8x10xf32, #tpu.memory_space<vmem>>) attributes {dimension_semantics = [], scalar_prefetch = 0 : i64, scratch_operands = 0 : i64, tpu.core_type = #tpu.core_type<tc>} {
    %c0 = arith.constant 0 : index
    %c0_0 = arith.constant 0 : index
    %0 = vector.load %arg0[%c0, %c0_0] : memref<64x259xbf16, #tpu.memory_space<vmem>>, vector<64x259xbf16>
    %c0_1 = arith.constant 0 : index
    %c0_2 = arith.constant 0 : index
    %1 = vector.load %arg1[%c0_1, %c0_2] : memref<259x256xbf16, #tpu.memory_space<vmem>>, vector<259x256xbf16>
    %c0_3 = arith.constant 0 : index
    %c0_4 = arith.constant 0 : index
    %2 = vector.load %arg2[%c0_3, %c0_4] : memref<1x256xf32, #tpu.memory_space<vmem>>, vector<1x256xf32>
    %c0_5 = arith.constant 0 : index
    %c0_6 = arith.constant 0 : index
    %3 = vector.load %arg3[%c0_5, %c0_6] : memref<256x512xbf16, #tpu.memory_space<vmem>>, vector<256x512xbf16>
    %c0_7 = arith.constant 0 : index
    %c0_8 = arith.constant 0 : index
    %4 = vector.load %arg4[%c0_7, %c0_8] : memref<1x512xf32, #tpu.memory_space<vmem>>, vector<1x512xf32>
    %c0_9 = arith.constant 0 : index
    %c0_10 = arith.constant 0 : index
    %5 = vector.load %arg5[%c0_9, %c0_10] : memref<512x1024xbf16, #tpu.memory_space<vmem>>, vector<512x1024xbf16>
    %c0_11 = arith.constant 0 : index
    %c0_12 = arith.constant 0 : index
    %6 = vector.load %arg6[%c0_11, %c0_12] : memref<1x1024xf32, #tpu.memory_space<vmem>>, vector<1x1024xf32>
    %cst = arith.constant dense<0.000000e+00> : vector<64x256xf32>
    %7 = tpu.matmul %0, %1, %cst {dimension_numbers = #tpu.dot_dimension_numbers<[1], [0], [0], [1], [0, 0, 1, 1], [], []>} : vector<64x259xbf16>, vector<259x256xbf16>, vector<64x256xf32> -> vector<64x256xf32>
    %8 = vector.broadcast %2 : vector<1x256xf32> to vector<64x256xf32>
    %9 = arith.addf %7, %8 : vector<64x256xf32>
    %cst_13 = arith.constant 0.000000e+00 : f32
    %10 = vector.broadcast %cst_13 : f32 to vector<64x256xf32>
    %11 = arith.maximumf %9, %10 : vector<64x256xf32>
    %12 = arith.truncf %11 : vector<64x256xf32> to vector<64x256xbf16>
    %cst_14 = arith.constant dense<0.000000e+00> : vector<64x512xf32>
    %13 = tpu.matmul %12, %3, %cst_14 {dimension_numbers = #tpu.dot_dimension_numbers<[1], [0], [0], [1], [0, 0, 1, 1], [], []>} : vector<64x256xbf16>, vector<256x512xbf16>, vector<64x512xf32> -> vector<64x512xf32>
    %14 = vector.broadcast %4 : vector<1x512xf32> to vector<64x512xf32>
    %15 = arith.addf %13, %14 : vector<64x512xf32>
    %cst_15 = arith.constant 0.000000e+00 : f32
    %16 = vector.broadcast %cst_15 : f32 to vector<64x512xf32>
    %17 = arith.maximumf %15, %16 : vector<64x512xf32>
    %18 = arith.truncf %17 : vector<64x512xf32> to vector<64x512xbf16>
    %cst_16 = arith.constant dense<0.000000e+00> : vector<64x1024xf32>
    %19 = tpu.matmul %18, %5, %cst_16 {dimension_numbers = #tpu.dot_dimension_numbers<[1], [0], [0], [1], [0, 0, 1, 1], [], []>} : vector<64x512xbf16>, vector<512x1024xbf16>, vector<64x1024xf32> -> vector<64x1024xf32>
    %20 = vector.broadcast %6 : vector<1x1024xf32> to vector<64x1024xf32>
    %21 = arith.addf %19, %20 : vector<64x1024xf32>
    %22 = vector.extract_strided_slice %21 {offsets = [0, 0], sizes = [32, 1024], strides = [1, 1]} : vector<64x1024xf32> to vector<32x1024xf32>
    %23 = vector.extract_strided_slice %21 {offsets = [32, 0], sizes = [32, 1024], strides = [1, 1]} : vector<64x1024xf32> to vector<32x1024xf32>
    %24 = arith.maximumf %22, %23 : vector<32x1024xf32>
    %25 = vector.extract_strided_slice %24 {offsets = [0, 0], sizes = [16, 1024], strides = [1, 1]} : vector<32x1024xf32> to vector<16x1024xf32>
    %26 = vector.extract_strided_slice %24 {offsets = [16, 0], sizes = [16, 1024], strides = [1, 1]} : vector<32x1024xf32> to vector<16x1024xf32>
    %27 = arith.maximumf %25, %26 : vector<16x1024xf32>
    %28 = vector.extract_strided_slice %27 {offsets = [0, 0], sizes = [8, 1024], strides = [1, 1]} : vector<16x1024xf32> to vector<8x1024xf32>
    %29 = vector.extract_strided_slice %27 {offsets = [8, 0], sizes = [8, 1024], strides = [1, 1]} : vector<16x1024xf32> to vector<8x1024xf32>
    %30 = arith.maximumf %28, %29 : vector<8x1024xf32>
    %31 = arith.truncf %30 : vector<8x1024xf32> to vector<8x1024xbf16>
    %c0_17 = arith.constant 0 : index
    %c0_18 = arith.constant 0 : index
    %32 = vector.load %arg7[%c0_17, %c0_18] : memref<1024x512xbf16, #tpu.memory_space<vmem>>, vector<1024x512xbf16>
    %c0_19 = arith.constant 0 : index
    %c0_20 = arith.constant 0 : index
    %33 = vector.load %arg8[%c0_19, %c0_20] : memref<1x512xf32, #tpu.memory_space<vmem>>, vector<1x512xf32>
    %c0_21 = arith.constant 0 : index
    %c0_22 = arith.constant 0 : index
    %34 = vector.load %arg9[%c0_21, %c0_22] : memref<512x256xbf16, #tpu.memory_space<vmem>>, vector<512x256xbf16>
    %c0_23 = arith.constant 0 : index
    %c0_24 = arith.constant 0 : index
    %35 = vector.load %arg10[%c0_23, %c0_24] : memref<1x256xf32, #tpu.memory_space<vmem>>, vector<1x256xf32>
    %c0_25 = arith.constant 0 : index
    %c0_26 = arith.constant 0 : index
    %36 = vector.load %arg11[%c0_25, %c0_26] : memref<256x10xbf16, #tpu.memory_space<vmem>>, vector<256x10xbf16>
    %c0_27 = arith.constant 0 : index
    %c0_28 = arith.constant 0 : index
    %37 = vector.load %arg12[%c0_27, %c0_28] : memref<1x10xf32, #tpu.memory_space<vmem>>, vector<1x10xf32>
    %cst_29 = arith.constant dense<0.000000e+00> : vector<8x512xf32>
    %38 = tpu.matmul %31, %32, %cst_29 {dimension_numbers = #tpu.dot_dimension_numbers<[1], [0], [0], [1], [0, 0, 1, 1], [], []>} : vector<8x1024xbf16>, vector<1024x512xbf16>, vector<8x512xf32> -> vector<8x512xf32>
    %39 = vector.broadcast %33 : vector<1x512xf32> to vector<8x512xf32>
    %40 = arith.addf %38, %39 : vector<8x512xf32>
    %cst_30 = arith.constant 0.000000e+00 : f32
    %41 = vector.broadcast %cst_30 : f32 to vector<8x512xf32>
    %42 = arith.maximumf %40, %41 : vector<8x512xf32>
    %43 = arith.truncf %42 : vector<8x512xf32> to vector<8x512xbf16>
    %cst_31 = arith.constant dense<0.000000e+00> : vector<8x256xf32>
    %44 = tpu.matmul %43, %34, %cst_31 {dimension_numbers = #tpu.dot_dimension_numbers<[1], [0], [0], [1], [0, 0, 1, 1], [], []>} : vector<8x512xbf16>, vector<512x256xbf16>, vector<8x256xf32> -> vector<8x256xf32>
    %45 = vector.broadcast %35 : vector<1x256xf32> to vector<8x256xf32>
    %46 = arith.addf %44, %45 : vector<8x256xf32>
    %cst_32 = arith.constant 0.000000e+00 : f32
    %47 = vector.broadcast %cst_32 : f32 to vector<8x256xf32>
    %48 = arith.maximumf %46, %47 : vector<8x256xf32>
    %49 = arith.truncf %48 : vector<8x256xf32> to vector<8x256xbf16>
    %cst_33 = arith.constant dense<0.000000e+00> : vector<8x10xf32>
    %50 = tpu.matmul %49, %36, %cst_33 {dimension_numbers = #tpu.dot_dimension_numbers<[1], [0], [0], [1], [0, 0, 1, 1], [], []>} : vector<8x256xbf16>, vector<256x10xbf16>, vector<8x10xf32> -> vector<8x10xf32>
    %51 = vector.broadcast %37 : vector<1x10xf32> to vector<8x10xf32>
    %52 = arith.addf %50, %51 : vector<8x10xf32>
    %cst_34 = arith.constant dense<0xFF800000> : vector<8xf32>
    %53 = vector.multi_reduction <maximumf>, %52, %cst_34 [1] : vector<8x10xf32> to vector<8xf32>
    %54 = vector.shape_cast %53 : vector<8xf32> to vector<8x1xf32>
    %55 = vector.broadcast %54 : vector<8x1xf32> to vector<8x10xf32>
    %56 = arith.subf %52, %55 : vector<8x10xf32>
    %57 = math.exp %56 : vector<8x10xf32>
    %cst_35 = arith.constant dense<0.000000e+00> : vector<8xf32>
    %58 = vector.multi_reduction <add>, %57, %cst_35 [1] : vector<8x10xf32> to vector<8xf32>
    %59 = vector.shape_cast %58 : vector<8xf32> to vector<8x1xf32>
    %60 = math.log %59 : vector<8x1xf32>
    %61 = arith.addf %60, %54 : vector<8x1xf32>
    %62 = vector.broadcast %61 : vector<8x1xf32> to vector<8x10xf32>
    %63 = arith.subf %52, %62 : vector<8x10xf32>
    %c0_36 = arith.constant 0 : index
    %c0_37 = arith.constant 0 : index
    %64 = vector.load %arg13[%c0_36, %c0_37] : memref<8x10xf32, #tpu.memory_space<vmem>>, vector<8x10xf32>
    tpu.vector_store %arg13[%c0_36, %c0_37], %63 {strides = array<i32>} : memref<8x10xf32, #tpu.memory_space<vmem>>, vector<8x10xf32>,
    return
  }
}

</mosaic_0001>

<llo_original>
// kernel: pointnet2_forward.4
$region0: #{pointnet2_forward.4}
  #allocation0 [shape = 'u32[]', space=smem, size = 0x4, offset = 0x4, fixed_abs, tag = 'smem constant byte address 0x4 - core index']
  #allocation1 [shape = 'u32[144,128]{1,0:T(1,128)}', space=vmem, size = 0x12000, scoped, tag = 'internal scratch']
  %s0 = inlined_call_operand.vmem [shape: bf16[512,131], index: 0, kind: input, shape index: {}]
  %s1 = inlined_call_operand.vmem [shape: bf16[131,128], index: 1, kind: input, shape index: {}]
  %s2 = inlined_call_operand.vmem [shape: f32[1,128], index: 2, kind: input, shape index: {}]
  %s3 = inlined_call_operand.vmem [shape: bf16[128,128], index: 3, kind: input, shape index: {}]
  %s4 = inlined_call_operand.vmem [shape: f32[1,128], index: 4, kind: input, shape index: {}]
  %s5 = inlined_call_operand.vmem [shape: bf16[128,256], index: 5, kind: input, shape index: {}]
  %s6 = inlined_call_operand.vmem [shape: f32[1,256], index: 6, kind: input, shape index: {}]
  %s7 = inlined_call_operand.vmem [shape: f32[16,256], index: 7, kind: output, shape index: {}]
  %s8 = sld [smem:[#allocation0]]
  $region61: #{pointnet2_forward.4} parent=0
    _
  %s10 = ssub.s32 1, %s8
  %s11 = scalar_select 0, %s10, %s8
  loop: start=0, step=1, limit=4
  $region2: #{pointnet2_forward.4} parent=0 // loop_pre_header
    _
  $region3: #{pointnet2_forward.4} parent=0 // loop_header
    %s13 = sphi 0, %s17
    %p14 = scmp.ge.s32.totalorder %s13, 4
    %s23 = sphi 0, %s25
    %s26 = sphi 0, %s23
    %s27 = sphi 0, %s26
    %s43 = sphi 0, %s27
    %s47 = sphi 0, %s47
    %s49 = sphi 0, %s47
    %s50 = sphi 0, %s49
    %s64 = sphi 0, %s50
    %s68 = sphi 0, %s68
    %s70 = sphi 0, %s68
    %s71 = sphi 0, %s70
    %s85 = sphi 0, %s71
    %s89 = sphi 0, %s89
    %s91 = sphi 0, %s89
    %s92 = sphi 0, %s91
    %s106 = sphi 0, %s92
    %s110 = sphi 0, %s110
    %s112 = sphi 0, %s110
    %s113 = sphi 0, %s112
    %s127 = sphi 0, %s113
    %s131 = sphi 0, %s131
    %s133 = sphi 0, %s131
    %s134 = sphi 0, %s133
    %s148 = sphi 0, %s134
    %s152 = sphi 0, %s152
    %s154 = sphi 0, %s152
    %s155 = sphi 0, %s154
    %s169 = sphi 0, %s155
    %s175 = sphi 0, %s177
    %s178 = sphi 0, %s175
    %s179 = sphi 0, %s178
    %s195 = sphi 0, %s179
  $region4: #{pointnet2_forward.4} parent=0 // loop_header_branch
    %16 = sbr.rel (%p14) target = $region8
  $region5: #{pointnet2_forward.4} parent=0 // loop_body
    %s18 = ssub.s32 %s13, 1
    %s19 = ssub.s32 %s13, 2
    %s20 = sadd.s32 %s13, 1
    %s21 = ssub.s32 %s13, %s20
    %p22 = scmp.eq.s32.totalorder %s21, 0
    %s24 = sadd.s32 %s23, 1
    %s25 = scalar_select %p22, %s23, %s24
    %p28 = pneg %p22
    %p29 = scmp.eq.s32.totalorder %s13, 1
    %p30 = por %p28, %p29
    %p31 = scmp.ne.s32.totalorder %s23, %s26
    %p32 = scmp.eq.s32.totalorder %s13, 0
    %p33 = por %p31, %p32
    %p34 = scmp.ne.s32.totalorder %s23, %s26
    %p35 = scmp.eq.s32.totalorder %s18, 1
    %p36 = por %p34, %p35
    %p37 = scmp.ne.s32.totalorder %s26, %s27
    %p38 = scmp.eq.s32.totalorder %s18, 0
    %p39 = por %p37, %p38
    %p40 = scmp.ne.s32.totalorder %s26, %s27
    %p41 = scmp.eq.s32.totalorder %s19, 1
    %p42 = por %p40, %p41
    %p44 = scmp.ne.s32.totalorder %s27, %s43
    %p45 = scmp.eq.s32.totalorder %s19, 0
    %p46 = por %p44, %p45
    %s48 = sadd.s32 %s47, 1
    %p51 = scmp.eq.s32.totalorder %s13, 1
    %p52 = scmp.ne.s32.totalorder %s47, %s49
    %p53 = scmp.eq.s32.totalorder %s13, 0
    %p54 = por %p52, %p53
    %p55 = scmp.ne.s32.totalorder %s47, %s49
    %p56 = scmp.eq.s32.totalorder %s18, 1
    %p57 = por %p55, %p56
    %p58 = scmp.ne.s32.totalorder %s49, %s50
    %p59 = scmp.eq.s32.totalorder %s18, 0
    %p60 = por %p58, %p59
    %p61 = scmp.ne.s32.totalorder %s49, %s50
    %p62 = scmp.eq.s32.totalorder %s19, 1
    %p63 = por %p61, %p62
    %p65 = scmp.ne.s32.totalorder %s50, %s64
    %p66 = scmp.eq.s32.totalorder %s19, 0
    %p67 = por %p65, %p66
    %s69 = sadd.s32 %s68, 1
    %p72 = scmp.eq.s32.totalorder %s13, 1
    %p73 = scmp.ne.s32.totalorder %s68, %s70
    %p74 = scmp.eq.s32.totalorder %s13, 0
    %p75 = por %p73, %p74
    %p76 = scmp.ne.s32.totalorder %s68, %s70
    %p77 = scmp.eq.s32.totalorder %s18, 1
    %p78 = por %p76, %p77
    %p79 = scmp.ne.s32.totalorder %s70, %s71
    %p80 = scmp.eq.s32.totalorder %s18, 0
    %p81 = por %p79, %p80
    %p82 = scmp.ne.s32.totalorder %s70, %s71
    %p83 = scmp.eq.s32.totalorder %s19, 1
    %p84 = por %p82, %p83
    %p86 = scmp.ne.s32.totalorder %s71, %s85
    %p87 = scmp.eq.s32.totalorder %s19, 0
    %p88 = por %p86, %p87
    %s90 = sadd.s32 %s89, 1
    %p93 = scmp.eq.s32.totalorder %s13, 1
    %p94 = scmp.ne.s32.totalorder %s89, %s91
    %p95 = scmp.eq.s32.totalorder %s13, 0
    %p96 = por %p94, %p95
    %p97 = scmp.ne.s32.totalorder %s89, %s91
    %p98 = scmp.eq.s32.totalorder %s18, 1
    %p99 = por %p97, %p98
    %p100 = scmp.ne.s32.totalorder %s91, %s92
    %p101 = scmp.eq.s32.totalorder %s18, 0
    %p102 = por %p100, %p101
    %p103 = scmp.ne.s32.totalorder %s91, %s92
    %p104 = scmp.eq.s32.totalorder %s19, 1
    %p105 = por %p103, %p104
    %p107 = scmp.ne.s32.totalorder %s92, %s106
    %p108 = scmp.eq.s32.totalorder %s19, 0
    %p109 = por %p107, %p108
    %s111 = sadd.s32 %s110, 1
    %p114 = scmp.eq.s32.totalorder %s13, 1
    %p115 = scmp.ne.s32.totalorder %s110, %s112
    %p116 = scmp.eq.s32.totalorder %s13, 0
    %p117 = por %p115, %p116
    %p118 = scmp.ne.s32.totalorder %s110, %s112
    %p119 = scmp.eq.s32.totalorder %s18, 1
    %p120 = por %p118, %p119
    %p121 = scmp.ne.s32.totalorder %s112, %s113
    %p122 = scmp.eq.s32.totalorder %s18, 0
    %p123 = por %p121, %p122
    %p124 = scmp.ne.s32.totalorder %s112, %s113
    %p125 = scmp.eq.s32.totalorder %s19, 1
    %p126 = por %p124, %p125
    %p128 = scmp.ne.s32.totalorder %s113, %s127
    %p129 = scmp.eq.s32.totalorder %s19, 0
    %p130 = por %p128, %p129
    %s132 = sadd.s32 %s131, 1
    %p135 = scmp.eq.s32.totalorder %s13, 1
    %p136 = scmp.ne.s32.totalorder %s131, %s133
    %p137 = scmp.eq.s32.totalorder %s13, 0
    %p138 = por %p136, %p137
    %p139 = scmp.ne.s32.totalorder %s131, %s133
    %p140 = scmp.eq.s32.totalorder %s18, 1
    %p141 = por %p139, %p140
    %p142 = scmp.ne.s32.totalorder %s133, %s134
    %p143 = scmp.eq.s32.totalorder %s18, 0
    %p144 = por %p142, %p143
    %p145 = scmp.ne.s32.totalorder %s133, %s134
    %p146 = scmp.eq.s32.totalorder %s19, 1
    %p147 = por %p145, %p146
    %p149 = scmp.ne.s32.totalorder %s134, %s148
    %p150 = scmp.eq.s32.totalorder %s19, 0
    %p151 = por %p149, %p150
    %s153 = sadd.s32 %s152, 1
    %p156 = scmp.eq.s32.totalorder %s13, 1
    %p157 = scmp.ne.s32.totalorder %s152, %s154
    %p158 = scmp.eq.s32.totalorder %s13, 0
    %p159 = por %p157, %p158
    %p160 = scmp.ne.s32.totalorder %s152, %s154
    %p161 = scmp.eq.s32.totalorder %s18, 1
    %p162 = por %p160, %p161
    %p163 = scmp.ne.s32.totalorder %s154, %s155
    %p164 = scmp.eq.s32.totalorder %s18, 0
    %p165 = por %p163, %p164
    %p166 = scmp.ne.s32.totalorder %s154, %s155
    %p167 = scmp.eq.s32.totalorder %s19, 1
    %p168 = por %p166, %p167
    %p170 = scmp.ne.s32.totalorder %s155, %s169
    %p171 = scmp.eq.s32.totalorder %s19, 0
    %p172 = por %p170, %p171
    %s173 = ssub.s32 %s13, %s20
    %p174 = scmp.eq.s32.totalorder %s173, 0
    %s176 = sadd.s32 %s175, 1
    %s177 = scalar_select %p174, %s175, %s176
    %p180 = pneg %p174
    %p181 = scmp.eq.s32.totalorder %s13, 1
    %p182 = por %p180, %p181
    %p183 = scmp.ne.s32.totalorder %s175, %s178
    %p184 = scmp.eq.s32.totalorder %s13, 0
    %p185 = por %p183, %p184
    %p186 = scmp.ne.s32.totalorder %s175, %s178
    %p187 = scmp.eq.s32.totalorder %s18, 1
    %p188 = por %p186, %p187
    %p189 = scmp.ne.s32.totalorder %s178, %s179
    %p190 = scmp.eq.s32.totalorder %s18, 0
    %p191 = por %p189, %p190
    %p192 = scmp.ne.s32.totalorder %s178, %s179
    %p193 = scmp.eq.s32.totalorder %s19, 1
    %p194 = por %p192, %p193
    %p196 = scmp.ne.s32.totalorder %s179, %s195
    %p197 = scmp.eq.s32.totalorder %s19, 0
    %p198 = por %p196, %p197
    %p199 = scmp.le.s32.totalorder 1, %s13
    %p200 = scmp.lt.s32.totalorder %s13, 3
    %p201 = pnand %p199, %p200
    %p202 = pneg %p201
    // Predicated region
    $region9: #{pointnet2_forward.4} parent=5 // pred_check
      _
    $region10: #{pointnet2_forward.4} parent=5 // pred_check_branch
      %204 = sbr.rel (%p201) target = $region12
    $region11: #{pointnet2_forward.4} parent=5 // pred_region
      %s205 = ssub.s32 %s13, 1
      // Predicated region
      $region13: #{pointnet2_forward.4} parent=11 // pred_check
        %p206 = pneg %p60
      $region14: #{pointnet2_forward.4} parent=11 // pred_check_branch
        %208 = sbr.rel (%p206) target = $region16
      $region15: #{pointnet2_forward.4} parent=11 // pred_region
        _
      $region16: #{pointnet2_forward.4} parent=11 // pred_fallthru
        _
      // Predicated region
      $region17: #{pointnet2_forward.4} parent=11 // pred_check
        %p209 = pneg %p81
      $region18: #{pointnet2_forward.4} parent=11 // pred_check_branch
        %211 = sbr.rel (%p209) target = $region20
      $region19: #{pointnet2_forward.4} parent=11 // pred_region
        _
      $region20: #{pointnet2_forward.4} parent=11 // pred_fallthru
        _
      // Predicated region
      $region21: #{pointnet2_forward.4} parent=11 // pred_check
        %p212 = pneg %p102
      $region22: #{pointnet2_forward.4} parent=11 // pred_check_branch
        %214 = sbr.rel (%p212) target = $region24
      $region23: #{pointnet2_forward.4} parent=11 // pred_region
        _
      $region24: #{pointnet2_forward.4} parent=11 // pred_fallthru
        _
      // Predicated region
      $region25: #{pointnet2_forward.4} parent=11 // pred_check
        %p215 = pneg %p123
      $region26: #{pointnet2_forward.4} parent=11 // pred_check_branch
        %217 = sbr.rel (%p215) target = $region28
      $region27: #{pointnet2_forward.4} parent=11 // pred_region
        _
      $region28: #{pointnet2_forward.4} parent=11 // pred_fallthru
        _
      // Predicated region
      $region29: #{pointnet2_forward.4} parent=11 // pred_check
        %p218 = pneg %p144
      $region30: #{pointnet2_forward.4} parent=11 // pred_check_branch
        %220 = sbr.rel (%p218) target = $region32
      $region31: #{pointnet2_forward.4} parent=11 // pred_region
        _
      $region32: #{pointnet2_forward.4} parent=11 // pred_fallthru
        _
      // Predicated region
      $region33: #{pointnet2_forward.4} parent=11 // pred_check
        %p221 = pneg %p165
      $region34: #{pointnet2_forward.4} parent=11 // pred_check_branch
        %223 = sbr.rel (%p221) target = $region36
      $region35: #{pointnet2_forward.4} parent=11 // pred_region
        _
      $region36: #{pointnet2_forward.4} parent=11 // pred_fallthru
        _
    $region12: #{pointnet2_forward.4} parent=5 // pred_fallthru
      _
    %p224 = scmp.lt.s32.totalorder %s13, 2
    // Predicated region
    $region37: #{pointnet2_forward.4} parent=5 // pred_check
      %p225 = pneg %p224
    $region38: #{pointnet2_forward.4} parent=5 // pred_check_branch
      %227 = sbr.rel (%p225) target = $region40
    $region39: #{pointnet2_forward.4} parent=5 // pred_region
      // Predicated region
      $region41: #{pointnet2_forward.4} parent=39 // pred_check
        %p228 = pneg %p33
      $region42: #{pointnet2_forward.4} parent=39 // pred_check_branch
        %230 = sbr.rel (%p228) target = $region44
      $region43: #{pointnet2_forward.4} parent=39 // pred_region
        %s231 = smul.u32 32, %s13
        %p232 = scmp.lt.s32.totalorder %s231, 63
        %s233 = scalar_select %p232, %s231, 63
        %s234 = smul.addr %s233, 2
        %s235 = smul.addr %s234, 4
        %s236 = scalar_lea.vmem %s0, %s235
        %s237 = smul.u32 32, %s13
      $region44: #{pointnet2_forward.4} parent=39 // pred_fallthru
        _
    $region40: #{pointnet2_forward.4} parent=5 // pred_fallthru
      _
    %p238 = scmp.le.s32.totalorder 1, %s13
    %p239 = scmp.lt.s32.totalorder %s13, 3
    %p240 = pnand %p238, %p239
    %p241 = pneg %p240
    // Predicated region
    $region45: #{pointnet2_forward.4} parent=5 // pred_check
      _
    $region46: #{pointnet2_forward.4} parent=5 // pred_check_branch
      %243 = sbr.rel (%p240) target = $region48
    $region47: #{pointnet2_forward.4} parent=5 // pred_region
      %s244 = ssub.s32 %s13, 1
      %s245 = smul.u32 32, %s18
      %p246 = scmp.lt.s32.totalorder %s245, 63
      %s247 = scalar_select %p246, %s245, 63
      %s248 = smul.addr %s247, 2
      %s249 = smul.addr %s248, 4
      %s250 = scalar_lea.vmem %s0, %s249
      %p251 = pneg %p39
      %p252 = pneg %p36
      %p253 = pneg %p60
      %p254 = pneg %p57
      %p255 = pneg %p81
      %p256 = pneg %p78
      %p257 = pneg %p102
      %p258 = pneg %p99
      %p259 = pneg %p123
      %p260 = pneg %p120
      %p261 = pneg %p144
      %p262 = pneg %p141
      %p263 = pneg %p165
      %p264 = pneg %p162
      %p265 = pneg %p191
      %p266 = pneg %p188
      %p267 = scmp.lt.s32.totalorder %s18, 1
      %s268 = scalar_select %p267, %s18, 1
      %s269 = smul.addr %s268, 2
      %s270 = smul.addr %s269, 8
      %s271 = scalar_lea.vmem %s7, %s270
      %s272 = smul.u32 32, %s18
      %p273 = scmp.lt.s32.totalorder %s272, 63
      %s274 = scalar_select %p273, %s272, 63
      %s275 = smul.addr %s274, 2
      %s276 = smul.addr %s275, 4
      %s277 = scalar_lea.vmem %s0, %s276
      %s278 = smul.u32 32, %s18
      %p279 = scmp.lt.s32.totalorder %s18, 1
      %s280 = scalar_select %p279, %s18, 1
      %s281 = smul.addr %s280, 2
      %s282 = smul.addr %s281, 8
      %s283 = scalar_lea.vmem %s7, %s282
      %v285 = vld [vmem:[%s277] sm:$0xff]
      %v286 = vld [vmem:[%s277 + $0x8] sm:$0xff]
      %v287 = vld [vmem:[%s277 + $0x10] sm:$0xff]
      %v288 = vld [vmem:[%s277 + $0x18] sm:$0xff]
      %v289 = vld [vmem:[%s277 + $0x20] sm:$0xff]
      %v290 = vld [vmem:[%s277 + $0x28] sm:$0xff]
      %v291 = vld [vmem:[%s277 + $0x30] sm:$0xff]
      %v292 = vld [vmem:[%s277 + $0x38] sm:$0xff]
      %v293 = vld [vmem:[%s277 + $0x40] sm:$0xff]
      %v294 = vld [vmem:[%s277 + $0x48] sm:$0xff]
      %v295 = vld [vmem:[%s277 + $0x50] sm:$0xff]
      %v296 = vld [vmem:[%s277 + $0x58] sm:$0xff]
      %v297 = vld [vmem:[%s277 + $0x60] sm:$0xff]
      %v298 = vld [vmem:[%s277 + $0x68] sm:$0xff]
      %v299 = vld [vmem:[%s277 + $0x70] sm:$0xff]
      %v300 = vld [vmem:[%s277 + $0x78] sm:$0xff]
      %v301 = vld [vmem:[%s277 + $0x80] sm:$0xff]
      %v302 = vld [vmem:[%s277 + $0x88] sm:$0xff]
      %v303 = vld [vmem:[%s277 + $0x90] sm:$0xff]
      %v304 = vld [vmem:[%s277 + $0x98] sm:$0xff]
      %v305 = vld [vmem:[%s277 + $0xa0] sm:$0xff]
      %v306 = vld [vmem:[%s277 + $0xa8] sm:$0xff]
      %v307 = vld [vmem:[%s277 + $0xb0] sm:$0xff]
      %v308 = vld [vmem:[%s277 + $0xb8] sm:$0xff]
      %v309 = vld [vmem:[%s277 + $0xc0] sm:$0xff]
      %v310 = vld [vmem:[%s277 + $0xc8] sm:$0xff]
      %v311 = vld [vmem:[%s277 + $0xd0] sm:$0xff]
      %v312 = vld [vmem:[%s277 + $0xd8] sm:$0xff]
      %v313 = vld [vmem:[%s277 + $0xe0] sm:$0xff]
      %v314 = vld [vmem:[%s277 + $0xe8] sm:$0xff]
      %v315 = vld [vmem:[%s277 + $0xf0] sm:$0xff]
      %v316 = vld [vmem:[%s277 + $0xf8] sm:$0xff]
      %v317 = vld [vmem:[%s1] sm:$0xf]
      %v318 = vld [vmem:[%s1 + $0x4] sm:$0xf]
      %v319 = vld [vmem:[%s1 + $0x8] sm:$0xf]
      %v320 = vld [vmem:[%s1 + $0xc] sm:$0xf]
      %v321 = vld [vmem:[%s1 + $0x10] sm:$0xf]
      %v322 = vld [vmem:[%s1 + $0x14] sm:$0xf]
      %v323 = vld [vmem:[%s1 + $0x18] sm:$0xf]
      %v324 = vld [vmem:[%s1 + $0x1c] sm:$0xf]
      %v325 = vld [vmem:[%s1 + $0x20] sm:$0xf]
      %v326 = vld [vmem:[%s1 + $0x24] sm:$0xf]
      %v327 = vld [vmem:[%s1 + $0x28] sm:$0xf]
      %v328 = vld [vmem:[%s1 + $0x2c] sm:$0xf]
      %v329 = vld [vmem:[%s1 + $0x30] sm:$0xf]
      %v330 = vld [vmem:[%s1 + $0x34] sm:$0xf]
      %v331 = vld [vmem:[%s1 + $0x38] sm:$0xf]
      %v332 = vld [vmem:[%s1 + $0x3c] sm:$0xf]
      %v333 = vld [vmem:[%s1 + $0x40] sm:$0x3]
      %v334 = vld [vmem:[%s2] sm:$0x1]
      %v335 = vld [vmem:[%s3] sm:$0xf]
      %v336 = vld [vmem:[%s3 + $0x4] sm:$0xf]
      %v337 = vld [vmem:[%s3 + $0x8] sm:$0xf]
      %v338 = vld [vmem:[%s3 + $0xc] sm:$0xf]
      %v339 = vld [vmem:[%s3 + $0x10] sm:$0xf]
      %v340 = vld [vmem:[%s3 + $0x14] sm:$0xf]
      %v341 = vld [vmem:[%s3 + $0x18] sm:$0xf]
      %v342 = vld [vmem:[%s3 + $0x1c] sm:$0xf]
      %v343 = vld [vmem:[%s3 + $0x20] sm:$0xf]
      %v344 = vld [vmem:[%s3 + $0x24] sm:$0xf]
      %v345 = vld [vmem:[%s3 + $0x28] sm:$0xf]
      %v346 = vld [vmem:[%s3 + $0x2c] sm:$0xf]
      %v347 = vld [vmem:[%s3 + $0x30] sm:$0xf]
      %v348 = vld [vmem:[%s3 + $0x34] sm:$0xf]
      %v349 = vld [vmem:[%s3 + $0x38] sm:$0xf]
      %v350 = vld [vmem:[%s3 + $0x3c] sm:$0xf]
      %v351 = vld [vmem:[%s4] sm:$0x1]
      %v352 = vld [vmem:[%s5] sm:$0xff]
      %v353 = vld [vmem:[%s5 + $0x8] sm:$0xff]
      %v354 = vld [vmem:[%s5 + $0x10] sm:$0xff]
      %v355 = vld [vmem:[%s5 + $0x18] sm:$0xff]
      %v356 = vld [vmem:[%s5 + $0x20] sm:$0xff]
      %v357 = vld [vmem:[%s5 + $0x28] sm:$0xff]
      %v358 = vld [vmem:[%s5 + $0x30] sm:$0xff]
      %v359 = vld [vmem:[%s5 + $0x38] sm:$0xff]
      %v360 = vld [vmem:[%s5 + $0x40] sm:$0xff]
      %v361 = vld [vmem:[%s5 + $0x48] sm:$0xff]
      %v362 = vld [vmem:[%s5 + $0x50] sm:$0xff]
      %v363 = vld [vmem:[%s5 + $0x58] sm:$0xff]
      %v364 = vld [vmem:[%s5 + $0x60] sm:$0xff]
      %v365 = vld [vmem:[%s5 + $0x68] sm:$0xff]
      %v366 = vld [vmem:[%s5 + $0x70] sm:$0xff]
      %v367 = vld [vmem:[%s5 + $0x78] sm:$0xff]
      %v368 = vld [vmem:[%s6] sm:$0x3]
      %v370 = vlaneseq
      %v371 = vshrl.u32 %v370, 7
      %v372 = vsub.s32 0, %v371
      %v373 = vrot.slane %v334, %v372
      %v407 = vunpack.c.l.b16 %v285
      %v408 = vunpack.c.h.b16 %v285
      %v409 = vunpack.c.l.b16 %v286
      %v410 = vunpack.c.h.b16 %v286
      %v411 = vunpack.c.l.b16 %v287
      %v412 = vunpack.c.h.b16 %v287
      %v413 = vunpack.c.l.b16 %v288
      %v414 = vunpack.c.h.b16 %v288
      %v415 = vunpack.c.l.b16 %v289
      %v416 = vunpack.c.h.b16 %v289
      %v417 = vunpack.c.l.b16 %v290
      %v418 = vunpack.c.h.b16 %v290
      %v419 = vunpack.c.l.b16 %v291
      %v420 = vunpack.c.h.b16 %v291
      %v421 = vunpack.c.l.b16 %v292
      %v422 = vunpack.c.h.b16 %v292
      %v423 = vunpack.c.l.b16 %v293
      %v424 = vunpack.c.h.b16 %v293
      %v425 = vunpack.c.l.b16 %v294
      %v426 = vunpack.c.h.b16 %v294
      %v427 = vunpack.c.l.b16 %v295
      %v428 = vunpack.c.h.b16 %v295
      %v429 = vunpack.c.l.b16 %v296
      %v430 = vunpack.c.h.b16 %v296
      %v431 = vunpack.c.l.b16 %v297
      %v432 = vunpack.c.h.b16 %v297
      %v433 = vunpack.c.l.b16 %v298
      %v434 = vunpack.c.h.b16 %v298
      %v435 = vunpack.c.l.b16 %v299
      %v436 = vunpack.c.h.b16 %v299
      %v437 = vunpack.c.l.b16 %v300
      %v438 = vunpack.c.h.b16 %v300
      %v439 = vunpack.c.l.b16 %v301
      %v440 = vunpack.c.h.b16 %v301
      %v441 = vunpack.c.l.b16 %v302
      %v442 = vunpack.c.h.b16 %v302
      %v443 = vunpack.c.l.b16 %v303
      %v444 = vunpack.c.h.b16 %v303
      %v445 = vunpack.c.l.b16 %v304
      %v446 = vunpack.c.h.b16 %v304
      %v447 = vunpack.c.l.b16 %v305
      %v448 = vunpack.c.h.b16 %v305
      %v449 = vunpack.c.l.b16 %v306
      %v450 = vunpack.c.h.b16 %v306
      %v451 = vunpack.c.l.b16 %v307
      %v452 = vunpack.c.h.b16 %v307
      %v453 = vunpack.c.l.b16 %v308
      %v454 = vunpack.c.h.b16 %v308
      %v455 = vunpack.c.l.b16 %v309
      %v456 = vunpack.c.h.b16 %v309
      %v457 = vunpack.c.l.b16 %v310
      %v458 = vunpack.c.h.b16 %v310
      %v459 = vunpack.c.l.b16 %v311
      %v460 = vunpack.c.h.b16 %v311
      %v461 = vunpack.c.l.b16 %v312
      %v462 = vunpack.c.h.b16 %v312
      %v463 = vunpack.c.l.b16 %v313
      %v464 = vunpack.c.h.b16 %v313
      %v465 = vunpack.c.l.b16 %v314
      %v466 = vunpack.c.h.b16 %v314
      %v467 = vunpack.c.l.b16 %v315
      %v468 = vunpack.c.h.b16 %v315
      %v469 = vunpack.c.l.b16 %v316
      %v470 = vunpack.c.h.b16 %v316
      %v471 = vpack.c.b16 %v409, %v407
      %v472 = vpack.c.b16 %v410, %v408
      %v473 = vpack.c.b16 %v413, %v411
      %v474 = vpack.c.b16 %v414, %v412
      %v475 = vpack.c.b16 %v417, %v415
      %v476 = vpack.c.b16 %v418, %v416
      %v477 = vpack.c.b16 %v421, %v419
      %v478 = vpack.c.b16 %v422, %v420
      %v479 = vpack.c.b16 %v425, %v423
      %v480 = vpack.c.b16 %v426, %v424
      %v481 = vpack.c.b16 %v429, %v427
      %v482 = vpack.c.b16 %v430, %v428
      %v483 = vpack.c.b16 %v433, %v431
      %v484 = vpack.c.b16 %v434, %v432
      %v485 = vpack.c.b16 %v437, %v435
      %v486 = vpack.c.b16 %v438, %v436
      %v487 = vpack.c.b16 %v441, %v439
      %v488 = vpack.c.b16 %v442, %v440
      %v489 = vpack.c.b16 %v445, %v443
      %v490 = vpack.c.b16 %v446, %v444
      %v491 = vpack.c.b16 %v449, %v447
      %v492 = vpack.c.b16 %v450, %v448
      %v493 = vpack.c.b16 %v453, %v451
      %v494 = vpack.c.b16 %v454, %v452
      %v495 = vpack.c.b16 %v457, %v455
      %v496 = vpack.c.b16 %v458, %v456
      %v497 = vpack.c.b16 %v461, %v459
      %v498 = vpack.c.b16 %v462, %v460
      %v499 = vpack.c.b16 %v465, %v463
      %v500 = vpack.c.b16 %v466, %v464
      %v501 = vpack.c.b16 %v469, %v467
      %v502 = vpack.c.b16 %v470, %v468
      %v536 = vunpack.c.l.b16 %v317
      %v537 = vunpack.c.l.b16 %v318
      %v538 = vunpack.c.l.b16 %v319
      %v539 = vunpack.c.l.b16 %v320
      %v540 = vunpack.c.l.b16 %v321
      %v541 = vunpack.c.l.b16 %v322
      %v542 = vunpack.c.l.b16 %v323
      %v543 = vunpack.c.l.b16 %v324
      %v544 = vunpack.c.l.b16 %v325
      %v545 = vunpack.c.l.b16 %v326
      %v546 = vunpack.c.l.b16 %v327
      %v547 = vunpack.c.l.b16 %v328
      %v548 = vunpack.c.l.b16 %v329
      %v549 = vunpack.c.l.b16 %v330
      %v550 = vunpack.c.l.b16 %v331
      %v551 = vunpack.c.l.b16 %v332
      %v552 = vunpack.c.l.b16 %v333
      %v553 = vpack.c.b16 %v537, %v536
      %v554 = vpack.c.b16 %v539, %v538
      %v555 = vpack.c.b16 %v541, %v540
      %v556 = vpack.c.b16 %v543, %v542
      %v557 = vpack.c.b16 %v545, %v544
      %v558 = vpack.c.b16 %v547, %v546
      %v559 = vpack.c.b16 %v549, %v548
      %v560 = vpack.c.b16 %v551, %v550
      %v561 = vpack.c.b16 %v552, %v552
      %vm570 = vcmask 23552
      %v572 = vsel %vm570, %v472, 0
      %v575 = vsel %vm570, %v474, 0
      %v578 = vsel %vm570, %v476, 0
      %v581 = vsel %vm570, %v478, 0
      %v584 = vsel %vm570, %v480, 0
      %v587 = vsel %vm570, %v482, 0
      %v590 = vsel %vm570, %v484, 0
      %v593 = vsel %vm570, %v486, 0
      %v596 = vsel %vm570, %v488, 0
      %v599 = vsel %vm570, %v490, 0
      %v602 = vsel %vm570, %v492, 0
      %v605 = vsel %vm570, %v494, 0
      %v608 = vsel %vm570, %v496, 0
      %v611 = vsel %vm570, %v498, 0
      %v614 = vsel %vm570, %v500, 0
      %v617 = vsel %vm570, %v502, 0
      %vm619 = vcmask 1040384
      %vm620 = vcmask 1041408
      %v621 = vsel %vm619, 4294967295, 65535
      %v622 = vsel %vm620, %v621, 0
      %v624 = vand.u32 %v561, %v622
      %626 = vmatprep.subr.bf16.mxu0 0
      %627 = vmatpush1.bf16.msra.mxu0 %v553
      %628 = vmatprep.subr.bf16.mxu0 0
      %629 = vmatpush1.bf16.msra.mxu0 %v554
      %630 = vmatprep.subr.bf16.mxu0 0
      %631 = vmatpush1.bf16.msra.mxu0 %v555
      %632 = vmatprep.subr.bf16.mxu0 0
      %633 = vmatpush1.bf16.msra.mxu0 %v556
      %634 = vmatprep.subr.bf16.mxu0 0
      %635 = vmatpush1.bf16.msra.mxu0 %v557
      %636 = vmatprep.subr.bf16.mxu0 0
      %637 = vmatpush1.bf16.msra.mxu0 %v558
      %638 = vmatprep.subr.bf16.mxu0 0
      %639 = vmatpush1.bf16.msra.mxu0 %v559
      %640 = vmatprep.subr.bf16.mxu0 0
      %641 = vmatpush1.bf16.msra.mxu0 %v560
      %642 = vmatprep.subr.bf16.mxu0 0
      %643 = vmatpush1.bf16.msra.mxu0 %v624
      %644 = vmatprep.subr.bf16.mxu0 0
      %645 = vmatpush1.bf16.msra.mxu0 0
      %646 = vmatprep.subr.bf16.mxu0 0
      %647 = vmatpush1.bf16.msra.mxu0 0
      %648 = vmatprep.subr.bf16.mxu0 0
      %649 = vmatpush1.bf16.msra.mxu0 0
      %650 = vmatprep.subr.bf16.mxu0 0
      %651 = vmatpush1.bf16.msra.mxu0 0
      %652 = vmatprep.subr.bf16.mxu0 0
      %653 = vmatpush1.bf16.msra.mxu0 0
      %654 = vmatprep.subr.bf16.mxu0 0
      %655 = vmatpush1.bf16.msra.mxu0 0
      %656 = vmatprep.subr.bf16.mxu0 0
      %657 = vmatpush1.bf16.msra.mxu0 0
      %658 = vmatprep.mubr.bf16.mxu0 %v572
      %659 = vmatmul.mubr.bf16.gmra.mrb[0].mxu0 %v471
      %v660 = vpop.f32.mrb[0].mxu0
      %v661 = vadd.f32 %v373, %v660
      %v662 = vpop.f32.mrb[0].mxu0
      %v663 = vpop.f32.mrb[0].mxu0
      %v664 = vadd.f32 %v373, %v663
      %v665 = vpop.f32.mrb[0].mxu0
      %666 = vmatprep.mubr.bf16.mxu0 %v575
      %667 = vmatmul.mubr.bf16.gmra.mrb[0].mxu0 %v473
      %v668 = vpop.f32.mrb[0].mxu0
      %v669 = vadd.f32 %v373, %v668
      %v670 = vpop.f32.mrb[0].mxu0
      %v671 = vpop.f32.mrb[0].mxu0
      %v672 = vadd.f32 %v373, %v671
      %v673 = vpop.f32.mrb[0].mxu0
      %674 = vmatprep.mubr.bf16.mxu0 %v578
      %675 = vmatmul.mubr.bf16.gmra.mrb[0].mxu0 %v475
      %v676 = vpop.f32.mrb[0].mxu0
      %v677 = vadd.f32 %v373, %v676
      %v678 = vpop.f32.mrb[0].mxu0
      %v679 = vpop.f32.mrb[0].mxu0
      %v680 = vadd.f32 %v373, %v679
      %v681 = vpop.f32.mrb[0].mxu0
      %682 = vmatprep.mubr.bf16.mxu0 %v581
      %683 = vmatmul.mubr.bf16.gmra.mrb[0].mxu0 %v477
      %v684 = vpop.f32.mrb[0].mxu0
      %v685 = vadd.f32 %v373, %v684
      %v686 = vpop.f32.mrb[0].mxu0
      %v687 = vpop.f32.mrb[0].mxu0
      %v688 = vadd.f32 %v373, %v687
      %v689 = vpop.f32.mrb[0].mxu0
      %690 = vmatprep.mubr.bf16.mxu0 %v584
      %691 = vmatmul.mubr.bf16.gmra.mrb[0].mxu0 %v479
      %v692 = vpop.f32.mrb[0].mxu0
      %v693 = vadd.f32 %v373, %v692
      %v694 = vpop.f32.mrb[0].mxu0
      %v695 = vpop.f32.mrb[0].mxu0
      %v696 = vadd.f32 %v373, %v695
      %v697 = vpop.f32.mrb[0].mxu0
      %698 = vmatprep.mubr.bf16.mxu0 %v587
      %699 = vmatmul.mubr.bf16.gmra.mrb[0].mxu0 %v481
      %v700 = vpop.f32.mrb[0].mxu0
      %v701 = vadd.f32 %v373, %v700
      %v702 = vpop.f32.mrb[0].mxu0
      %v703 = vpop.f32.mrb[0].mxu0
      %v704 = vadd.f32 %v373, %v703
      %v705 = vpop.f32.mrb[0].mxu0
      %706 = vmatprep.mubr.bf16.mxu0 %v590
      %707 = vmatmul.mubr.bf16.gmra.mrb[0].mxu0 %v483
      %v708 = vpop.f32.mrb[0].mxu0
      %v709 = vadd.f32 %v373, %v708
      %v710 = vpop.f32.mrb[0].mxu0
      %v711 = vpop.f32.mrb[0].mxu0
      %v712 = vadd.f32 %v373, %v711
      %v713 = vpop.f32.mrb[0].mxu0
      %714 = vmatprep.mubr.bf16.mxu0 %v593
      %715 = vmatmul.mubr.bf16.gmra.mrb[0].mxu0 %v485
      %v716 = vpop.f32.mrb[0].mxu0
      %v717 = vadd.f32 %v373, %v716
      %v718 = vpop.f32.mrb[0].mxu0
      %v719 = vpop.f32.mrb[0].mxu0
      %v720 = vadd.f32 %v373, %v719
      %v721 = vpop.f32.mrb[0].mxu0
      %722 = vmatprep.mubr.bf16.mxu0 %v596
      %723 = vmatmul.mubr.bf16.gmra.mrb[0].mxu0 %v487
      %v724 = vpop.f32.mrb[0].mxu0
      %v725 = vadd.f32 %v373, %v724
      %v726 = vpop.f32.mrb[0].mxu0
      %v727 = vpop.f32.mrb[0].mxu0
      %v728 = vadd.f32 %v373, %v727
      %v729 = vpop.f32.mrb[0].mxu0
      %730 = vmatprep.mubr.bf16.mxu0 %v599
      %731 = vmatmul.mubr.bf16.gmra.mrb[0].mxu0 %v489
      %v732 = vpop.f32.mrb[0].mxu0
      %v733 = vadd.f32 %v373, %v732
      %v734 = vpop.f32.mrb[0].mxu0
      %v735 = vpop.f32.mrb[0].mxu0
      %v736 = vadd.f32 %v373, %v735
      %v737 = vpop.f32.mrb[0].mxu0
      %738 = vmatprep.mubr.bf16.mxu0 %v602
      %739 = vmatmul.mubr.bf16.gmra.mrb[0].mxu0 %v491
      %v740 = vpop.f32.mrb[0].mxu0
      %v741 = vadd.f32 %v373, %v740
      %v742 = vpop.f32.mrb[0].mxu0
      %v743 = vpop.f32.mrb[0].mxu0
      %v744 = vadd.f32 %v373, %v743
      %v745 = vpop.f32.mrb[0].mxu0
      %746 = vmatprep.mubr.bf16.mxu0 %v605
      %747 = vmatmul.mubr.bf16.gmra.mrb[0].mxu0 %v493
      %v748 = vpop.f32.mrb[0].mxu0
      %v749 = vadd.f32 %v373, %v748
      %v750 = vpop.f32.mrb[0].mxu0
      %v751 = vpop.f32.mrb[0].mxu0
      %v752 = vadd.f32 %v373, %v751
      %v753 = vpop.f32.mrb[0].mxu0
      %754 = vmatprep.mubr.bf16.mxu0 %v608
      %755 = vmatmul.mubr.bf16.gmra.mrb[0].mxu0 %v495
      %v756 = vpop.f32.mrb[0].mxu0
      %v757 = vadd.f32 %v373, %v756
      %v758 = vpop.f32.mrb[0].mxu0
      %v759 = vpop.f32.mrb[0].mxu0
      %v760 = vadd.f32 %v373, %v759
      %v761 = vpop.f32.mrb[0].mxu0
      %762 = vmatprep.mubr.bf16.mxu0 %v611
      %763 = vmatmul.mubr.bf16.gmra.mrb[0].mxu0 %v497
      %v764 = vpop.f32.mrb[0].mxu0
      %v765 = vadd.f32 %v373, %v764
      %v766 = vpop.f32.mrb[0].mxu0
      %v767 = vpop.f32.mrb[0].mxu0
      %v768 = vadd.f32 %v373, %v767
      %v769 = vpop.f32.mrb[0].mxu0
      %770 = vmatprep.mubr.bf16.mxu0 %v614
      %771 = vmatmul.mubr.bf16.gmra.mrb[0].mxu0 %v499
      %v772 = vpop.f32.mrb[0].mxu0
      %v773 = vadd.f32 %v373, %v772
      %v774 = vpop.f32.mrb[0].mxu0
      %v775 = vpop.f32.mrb[0].mxu0
      %v776 = vadd.f32 %v373, %v775
      %v777 = vpop.f32.mrb[0].mxu0
      %778 = vmatprep.mubr.bf16.mxu0 %v617
      %779 = vmatmul.mubr.bf16.gmra.mrb[0].mxu0 %v501
      %v780 = vpop.f32.mrb[0].mxu0
      %v781 = vadd.f32 %v373, %v780
      %v782 = vpop.f32.mrb[0].mxu0
      %v783 = vpop.f32.mrb[0].mxu0
      %v784 = vadd.f32 %v373, %v783
      %v785 = vpop.f32.mrb[0].mxu0
      %786 = vdwg.mxu0
      %v787 = vmax.f32 %v661, 0.0
      %v788 = vmax.f32 %v664, 0.0
      %v789 = vmax.f32 %v669, 0.0
      %v790 = vmax.f32 %v672, 0.0
      %v791 = vmax.f32 %v677, 0.0
      %v792 = vmax.f32 %v680, 0.0
      %v793 = vmax.f32 %v685, 0.0
      %v794 = vmax.f32 %v688, 0.0
      %v795 = vmax.f32 %v693, 0.0
      %v796 = vmax.f32 %v696, 0.0
      %v797 = vmax.f32 %v701, 0.0
      %v798 = vmax.f32 %v704, 0.0
      %v799 = vmax.f32 %v709, 0.0
      %v800 = vmax.f32 %v712, 0.0
      %v801 = vmax.f32 %v717, 0.0
      %v802 = vmax.f32 %v720, 0.0
      %v803 = vmax.f32 %v725, 0.0
      %v804 = vmax.f32 %v728, 0.0
      %v805 = vmax.f32 %v733, 0.0
      %v806 = vmax.f32 %v736, 0.0
      %v807 = vmax.f32 %v741, 0.0
      %v808 = vmax.f32 %v744, 0.0
      %v809 = vmax.f32 %v749, 0.0
      %v810 = vmax.f32 %v752, 0.0
      %v811 = vmax.f32 %v757, 0.0
      %v812 = vmax.f32 %v760, 0.0
      %v813 = vmax.f32 %v765, 0.0
      %v814 = vmax.f32 %v768, 0.0
      %v815 = vmax.f32 %v773, 0.0
      %v816 = vmax.f32 %v776, 0.0
      %v817 = vmax.f32 %v781, 0.0
      %v818 = vmax.f32 %v784, 0.0
      %v819 = vpack.c.bf16 %v788, %v787
      %v820 = vpack.c.bf16 %v790, %v789
      %v821 = vpack.c.bf16 %v792, %v791
      %v822 = vpack.c.bf16 %v794, %v793
      %v823 = vpack.c.bf16 %v796, %v795
      %v824 = vpack.c.bf16 %v798, %v797
      %v825 = vpack.c.bf16 %v800, %v799
      %v826 = vpack.c.bf16 %v802, %v801
      %v827 = vpack.c.bf16 %v804, %v803
      %v828 = vpack.c.bf16 %v806, %v805
      %v829 = vpack.c.bf16 %v808, %v807
      %v830 = vpack.c.bf16 %v810, %v809
      %v831 = vpack.c.bf16 %v812, %v811
      %v832 = vpack.c.bf16 %v814, %v813
      %v833 = vpack.c.bf16 %v816, %v815
      %v834 = vpack.c.bf16 %v818, %v817
      %v836 = vlaneseq
      %v837 = vshrl.u32 %v836, 7
      %v838 = vsub.s32 0, %v837
      %v839 = vrot.slane %v351, %v838
      %v857 = vunpack.c.l.b16 %v335
      %v858 = vunpack.c.l.b16 %v336
      %v859 = vunpack.c.l.b16 %v337
      %v860 = vunpack.c.l.b16 %v338
      %v861 = vunpack.c.l.b16 %v339
      %v862 = vunpack.c.l.b16 %v340
      %v863 = vunpack.c.l.b16 %v341
      %v864 = vunpack.c.l.b16 %v342
      %v865 = vunpack.c.l.b16 %v343
      %v866 = vunpack.c.l.b16 %v344
      %v867 = vunpack.c.l.b16 %v345
      %v868 = vunpack.c.l.b16 %v346
      %v869 = vunpack.c.l.b16 %v347
      %v870 = vunpack.c.l.b16 %v348
      %v871 = vunpack.c.l.b16 %v349
      %v872 = vunpack.c.l.b16 %v350
      %v873 = vpack.c.b16 %v858, %v857
      %v874 = vpack.c.b16 %v860, %v859
      %v875 = vpack.c.b16 %v862, %v861
      %v876 = vpack.c.b16 %v864, %v863
      %v877 = vpack.c.b16 %v866, %v865
      %v878 = vpack.c.b16 %v868, %v867
      %v879 = vpack.c.b16 %v870, %v869
      %v880 = vpack.c.b16 %v872, %v871
      %889 = vmatprep.subr.bf16.mxu0 0
      %890 = vmatpush1.bf16.msra.mxu0 %v873
      %891 = vmatprep.subr.bf16.mxu0 0
      %892 = vmatpush1.bf16.msra.mxu0 %v874
      %893 = vmatprep.subr.bf16.mxu0 0
      %894 = vmatpush1.bf16.msra.mxu0 %v875
      %895 = vmatprep.subr.bf16.mxu0 0
      %896 = vmatpush1.bf16.msra.mxu0 %v876
      %897 = vmatprep.subr.bf16.mxu0 0
      %898 = vmatpush1.bf16.msra.mxu0 %v877
      %899 = vmatprep.subr.bf16.mxu0 0
      %900 = vmatpush1.bf16.msra.mxu0 %v878
      %901 = vmatprep.subr.bf16.mxu0 0
      %902 = vmatpush1.bf16.msra.mxu0 %v879
      %903 = vmatprep.subr.bf16.mxu0 0
      %904 = vmatpush1.bf16.msra.mxu0 %v880
      %905 = vmatprep.subr.bf16.mxu0 0
      %906 = vmatpush1.bf16.msra.mxu0 0
      %907 = vmatprep.subr.bf16.mxu0 0
      %908 = vmatpush1.bf16.msra.mxu0 0
      %909 = vmatprep.subr.bf16.mxu0 0
      %910 = vmatpush1.bf16.msra.mxu0 0
      %911 = vmatprep.subr.bf16.mxu0 0
      %912 = vmatpush1.bf16.msra.mxu0 0
      %913 = vmatprep.subr.bf16.mxu0 0
      %914 = vmatpush1.bf16.msra.mxu0 0
      %915 = vmatprep.subr.bf16.mxu0 0
      %916 = vmatpush1.bf16.msra.mxu0 0
      %917 = vmatprep.subr.bf16.mxu0 0
      %918 = vmatpush1.bf16.msra.mxu0 0
      %919 = vmatprep.subr.bf16.mxu0 0
      %920 = vmatpush1.bf16.msra.mxu0 0
      %921 = vmatprep.mubr.bf16.mxu0 0
      %922 = vmatmul.mubr.bf16.gmra.mrb[0].mxu0 %v819
      %v923 = vpop.f32.mrb[0].mxu0
      %v924 = vadd.f32 %v839, %v923
      %v925 = vpop.f32.mrb[0].mxu0
      %v926 = vpop.f32.mrb[0].mxu0
      %v927 = vadd.f32 %v839, %v926
      %v928 = vpop.f32.mrb[0].mxu0
      %929 = vmatprep.mubr.bf16.mxu0 0
      %930 = vmatmul.mubr.bf16.gmra.mrb[0].mxu0 %v820
      %v931 = vpop.f32.mrb[0].mxu0
      %v932 = vadd.f32 %v839, %v931
      %v933 = vpop.f32.mrb[0].mxu0
      %v934 = vpop.f32.mrb[0].mxu0
      %v935 = vadd.f32 %v839, %v934
      %v936 = vpop.f32.mrb[0].mxu0
      %937 = vmatprep.mubr.bf16.mxu0 0
      %938 = vmatmul.mubr.bf16.gmra.mrb[0].mxu0 %v821
      %v939 = vpop.f32.mrb[0].mxu0
      %v940 = vadd.f32 %v839, %v939
      %v941 = vpop.f32.mrb[0].mxu0
      %v942 = vpop.f32.mrb[0].mxu0
      %v943 = vadd.f32 %v839, %v942
      %v944 = vpop.f32.mrb[0].mxu0
      %945 = vmatprep.mubr.bf16.mxu0 0
      %946 = vmatmul.mubr.bf16.gmra.mrb[0].mxu0 %v822
      %v947 = vpop.f32.mrb[0].mxu0
      %v948 = vadd.f32 %v839, %v947
      %v949 = vpop.f32.mrb[0].mxu0
      %v950 = vpop.f32.mrb[0].mxu0
      %v951 = vadd.f32 %v839, %v950
      %v952 = vpop.f32.mrb[0].mxu0
      %953 = vmatprep.mubr.bf16.mxu0 0
      %954 = vmatmul.mubr.bf16.gmra.mrb[0].mxu0 %v823
      %v955 = vpop.f32.mrb[0].mxu0
      %v956 = vadd.f32 %v839, %v955
      %v957 = vpop.f32.mrb[0].mxu0
      %v958 = vpop.f32.mrb[0].mxu0
      %v959 = vadd.f32 %v839, %v958
      %v960 = vpop.f32.mrb[0].mxu0
      %961 = vmatprep.mubr.bf16.mxu0 0
      %962 = vmatmul.mubr.bf16.gmra.mrb[0].mxu0 %v824
      %v963 = vpop.f32.mrb[0].mxu0
      %v964 = vadd.f32 %v839, %v963
      %v965 = vpop.f32.mrb[0].mxu0
      %v966 = vpop.f32.mrb[0].mxu0
      %v967 = vadd.f32 %v839, %v966
      %v968 = vpop.f32.mrb[0].mxu0
      %969 = vmatprep.mubr.bf16.mxu0 0
      %970 = vmatmul.mubr.bf16.gmra.mrb[0].mxu0 %v825
      %v971 = vpop.f32.mrb[0].mxu0
      %v972 = vadd.f32 %v839, %v971
      %v973 = vpop.f32.mrb[0].mxu0
      %v974 = vpop.f32.mrb[0].mxu0
      %v975 = vadd.f32 %v839, %v974
      %v976 = vpop.f32.mrb[0].mxu0
      %977 = vmatprep.mubr.bf16.mxu0 0
      %978 = vmatmul.mubr.bf16.gmra.mrb[0].mxu0 %v826
      %v979 = vpop.f32.mrb[0].mxu0
      %v980 = vadd.f32 %v839, %v979
      %v981 = vpop.f32.mrb[0].mxu0
      %v982 = vpop.f32.mrb[0].mxu0
      %v983 = vadd.f32 %v839, %v982
      %v984 = vpop.f32.mrb[0].mxu0
      %985 = vmatprep.mubr.bf16.mxu0 0
      %986 = vmatmul.mubr.bf16.gmra.mrb[0].mxu0 %v827
      %v987 = vpop.f32.mrb[0].mxu0
      %v988 = vadd.f32 %v839, %v987
      %v989 = vpop.f32.mrb[0].mxu0
      %v990 = vpop.f32.mrb[0].mxu0
      %v991 = vadd.f32 %v839, %v990
      %v992 = vpop.f32.mrb[0].mxu0
      %993 = vmatprep.mubr.bf16.mxu0 0
      %994 = vmatmul.mubr.bf16.gmra.mrb[0].mxu0 %v828
      %v995 = vpop.f32.mrb[0].mxu0
      %v996 = vadd.f32 %v839, %v995
      %v997 = vpop.f32.mrb[0].mxu0
      %v998 = vpop.f32.mrb[0].mxu0
      %v999 = vadd.f32 %v839, %v998
      %v1000 = vpop.f32.mrb[0].mxu0
      %1001 = vmatprep.mubr.bf16.mxu0 0
      %1002 = vmatmul.mubr.bf16.gmra.mrb[0].mxu0 %v829
      %v1003 = vpop.f32.mrb[0].mxu0
      %v1004 = vadd.f32 %v839, %v1003
      %v1005 = vpop.f32.mrb[0].mxu0
      %v1006 = vpop.f32.mrb[0].mxu0
      %v1007 = vadd.f32 %v839, %v1006
      %v1008 = vpop.f32.mrb[0].mxu0
      %1009 = vmatprep.mubr.bf16.mxu0 0
      %1010 = vmatmul.mubr.bf16.gmra.mrb[0].mxu0 %v830
      %v1011 = vpop.f32.mrb[0].mxu0
      %v1012 = vadd.f32 %v839, %v1011
      %v1013 = vpop.f32.mrb[0].mxu0
      %v1014 = vpop.f32.mrb[0].mxu0
      %v1015 = vadd.f32 %v839, %v1014
      %v1016 = vpop.f32.mrb[0].mxu0
      %1017 = vmatprep.mubr.bf16.mxu0 0
      %1018 = vmatmul.mubr.bf16.gmra.mrb[0].mxu0 %v831
      %v1019 = vpop.f32.mrb[0].mxu0
      %v1020 = vadd.f32 %v839, %v1019
      %v1021 = vpop.f32.mrb[0].mxu0
      %v1022 = vpop.f32.mrb[0].mxu0
      %v1023 = vadd.f32 %v839, %v1022
      %v1024 = vpop.f32.mrb[0].mxu0
      %1025 = vmatprep.mubr.bf16.mxu0 0
      %1026 = vmatmul.mubr.bf16.gmra.mrb[0].mxu0 %v832
      %v1027 = vpop.f32.mrb[0].mxu0
      %v1028 = vadd.f32 %v839, %v1027
      %v1029 = vpop.f32.mrb[0].mxu0
      %v1030 = vpop.f32.mrb[0].mxu0
      %v1031 = vadd.f32 %v839, %v1030
      %v1032 = vpop.f32.mrb[0].mxu0
      %1033 = vmatprep.mubr.bf16.mxu0 0
      %1034 = vmatmul.mubr.bf16.gmra.mrb[0].mxu0 %v833
      %v1035 = vpop.f32.mrb[0].mxu0
      %v1036 = vadd.f32 %v839, %v1035
      %v1037 = vpop.f32.mrb[0].mxu0
      %v1038 = vpop.f32.mrb[0].mxu0
      %v1039 = vadd.f32 %v839, %v1038
      %v1040 = vpop.f32.mrb[0].mxu0
      %1041 = vmatprep.mubr.bf16.mxu0 0
      %1042 = vmatmul.mubr.bf16.gmra.mrb[0].mxu0 %v834
      %v1043 = vpop.f32.mrb[0].mxu0
      %v1044 = vadd.f32 %v839, %v1043
      %v1045 = vpop.f32.mrb[0].mxu0
      %v1046 = vpop.f32.mrb[0].mxu0
      %v1047 = vadd.f32 %v839, %v1046
      %v1048 = vpop.f32.mrb[0].mxu0
      %1049 = vdwg.mxu0
      %v1050 = vmax.f32 %v924, 0.0
      %v1051 = vmax.f32 %v927, 0.0
      %v1052 = vmax.f32 %v932, 0.0
      %v1053 = vmax.f32 %v935, 0.0
      %v1054 = vmax.f32 %v940, 0.0
      %v1055 = vmax.f32 %v943, 0.0
      %v1056 = vmax.f32 %v948, 0.0
      %v1057 = vmax.f32 %v951, 0.0
      %v1058 = vmax.f32 %v956, 0.0
      %v1059 = vmax.f32 %v959, 0.0
      %v1060 = vmax.f32 %v964, 0.0
      %v1061 = vmax.f32 %v967, 0.0
      %v1062 = vmax.f32 %v972, 0.0
      %v1063 = vmax.f32 %v975, 0.0
      %v1064 = vmax.f32 %v980, 0.0
      %v1065 = vmax.f32 %v983, 0.0
      %v1066 = vmax.f32 %v988, 0.0
      %v1067 = vmax.f32 %v991, 0.0
      %v1068 = vmax.f32 %v996, 0.0
      %v1069 = vmax.f32 %v999, 0.0
      %v1070 = vmax.f32 %v1004, 0.0
      %v1071 = vmax.f32 %v1007, 0.0
      %v1072 = vmax.f32 %v1012, 0.0
      %v1073 = vmax.f32 %v1015, 0.0
      %v1074 = vmax.f32 %v1020, 0.0
      %v1075 = vmax.f32 %v1023, 0.0
      %v1076 = vmax.f32 %v1028, 0.0
      %v1077 = vmax.f32 %v1031, 0.0
      %v1078 = vmax.f32 %v1036, 0.0
      %v1079 = vmax.f32 %v1039, 0.0
      %v1080 = vmax.f32 %v1044, 0.0
      %v1081 = vmax.f32 %v1047, 0.0
      %v1082 = vpack.c.bf16 %v1051, %v1050
      %v1083 = vpack.c.bf16 %v1053, %v1052
      %v1084 = vpack.c.bf16 %v1055, %v1054
      %v1085 = vpack.c.bf16 %v1057, %v1056
      %v1086 = vpack.c.bf16 %v1059, %v1058
      %v1087 = vpack.c.bf16 %v1061, %v1060
      %v1088 = vpack.c.bf16 %v1063, %v1062
      %v1089 = vpack.c.bf16 %v1065, %v1064
      %v1090 = vpack.c.bf16 %v1067, %v1066
      %v1091 = vpack.c.bf16 %v1069, %v1068
      %v1092 = vpack.c.bf16 %v1071, %v1070
      %v1093 = vpack.c.bf16 %v1073, %v1072
      %v1094 = vpack.c.bf16 %v1075, %v1074
      %v1095 = vpack.c.bf16 %v1077, %v1076
      %v1096 = vpack.c.bf16 %v1079, %v1078
      %v1097 = vpack.c.bf16 %v1081, %v1080
      %v1099 = vlaneseq
      %v1100 = vshrl.u32 %v1099, 7
      %v1101 = vsub.s32 0, %v1100
      %v1102 = vrot.slane %v368, %v1101
      %v1103 = vlaneseq
      %v1104 = vshrl.u32 %v1103, 7
      %v1105 = vsub.s32 1, %v1104
      %v1106 = vrot.slane %v368, %v1105
      %v1125 = vunpack.c.l.b16 %v352
      %v1126 = vunpack.c.h.b16 %v352
      %v1127 = vunpack.c.l.b16 %v353
      %v1128 = vunpack.c.h.b16 %v353
      %v1129 = vunpack.c.l.b16 %v354
      %v1130 = vunpack.c.h.b16 %v354
      %v1131 = vunpack.c.l.b16 %v355
      %v1132 = vunpack.c.h.b16 %v355
      %v1133 = vunpack.c.l.b16 %v356
      %v1134 = vunpack.c.h.b16 %v356
      %v1135 = vunpack.c.l.b16 %v357
      %v1136 = vunpack.c.h.b16 %v357
      %v1137 = vunpack.c.l.b16 %v358
      %v1138 = vunpack.c.h.b16 %v358
      %v1139 = vunpack.c.l.b16 %v359
      %v1140 = vunpack.c.h.b16 %v359
      %v1141 = vunpack.c.l.b16 %v360
      %v1142 = vunpack.c.h.b16 %v360
      %v1143 = vunpack.c.l.b16 %v361
      %v1144 = vunpack.c.h.b16 %v361
      %v1145 = vunpack.c.l.b16 %v362
      %v1146 = vunpack.c.h.b16 %v362
      %v1147 = vunpack.c.l.b16 %v363
      %v1148 = vunpack.c.h.b16 %v363
      %v1149 = vunpack.c.l.b16 %v364
      %v1150 = vunpack.c.h.b16 %v364
      %v1151 = vunpack.c.l.b16 %v365
      %v1152 = vunpack.c.h.b16 %v365
      %v1153 = vunpack.c.l.b16 %v366
      %v1154 = vunpack.c.h.b16 %v366
      %v1155 = vunpack.c.l.b16 %v367
      %v1156 = vunpack.c.h.b16 %v367
      %v1157 = vpack.c.b16 %v1127, %v1125
      %v1158 = vpack.c.b16 %v1128, %v1126
      %v1159 = vpack.c.b16 %v1131, %v1129
      %v1160 = vpack.c.b16 %v1132, %v1130
      %v1161 = vpack.c.b16 %v1135, %v1133
      %v1162 = vpack.c.b16 %v1136, %v1134
      %v1163 = vpack.c.b16 %v1139, %v1137
      %v1164 = vpack.c.b16 %v1140, %v1138
      %v1165 = vpack.c.b16 %v1143, %v1141
      %v1166 = vpack.c.b16 %v1144, %v1142
      %v1167 = vpack.c.b16 %v1147, %v1145
      %v1168 = vpack.c.b16 %v1148, %v1146
      %v1169 = vpack.c.b16 %v1151, %v1149
      %v1170 = vpack.c.b16 %v1152, %v1150
      %v1171 = vpack.c.b16 %v1155, %v1153
      %v1172 = vpack.c.b16 %v1156, %v1154
      %1189 = vmatprep.subr.bf16.mxu0 %v1158
      %1190 = vmatpush1.bf16.msra.mxu0 %v1157
      %1191 = vmatprep.subr.bf16.mxu0 %v1160
      %1192 = vmatpush1.bf16.msra.mxu0 %v1159
      %1193 = vmatprep.subr.bf16.mxu0 %v1162
      %1194 = vmatpush1.bf16.msra.mxu0 %v1161
      %1195 = vmatprep.subr.bf16.mxu0 %v1164
      %1196 = vmatpush1.bf16.msra.mxu0 %v1163
      %1197 = vmatprep.subr.bf16.mxu0 %v1166
      %1198 = vmatpush1.bf16.msra.mxu0 %v1165
      %1199 = vmatprep.subr.bf16.mxu0 %v1168
      %1200 = vmatpush1.bf16.msra.mxu0 %v1167
      %1201 = vmatprep.subr.bf16.mxu0 %v1170
      %1202 = vmatpush1.bf16.msra.mxu0 %v1169
      %1203 = vmatprep.subr.bf16.mxu0 %v1172
      %1204 = vmatpush1.bf16.msra.mxu0 %v1171
      %1205 = vmatprep.subr.bf16.mxu0 0
      %1206 = vmatpush1.bf16.msra.mxu0 0
      %1207 = vmatprep.subr.bf16.mxu0 0
      %1208 = vmatpush1.bf16.msra.mxu0 0
      %1209 = vmatprep.subr.bf16.mxu0 0
      %1210 = vmatpush1.bf16.msra.mxu0 0
      %1211 = vmatprep.subr.bf16.mxu0 0
      %1212 = vmatpush1.bf16.msra.mxu0 0
      %1213 = vmatprep.subr.bf16.mxu0 0
      %1214 = vmatpush1.bf16.msra.mxu0 0
      %1215 = vmatprep.subr.bf16.mxu0 0
      %1216 = vmatpush1.bf16.msra.mxu0 0
      %1217 = vmatprep.subr.bf16.mxu0 0
      %1218 = vmatpush1.bf16.msra.mxu0 0
      %1219 = vmatprep.subr.bf16.mxu0 0
      %1220 = vmatpush1.bf16.msra.mxu0 0
      %1221 = vmatprep.mubr.bf16.mxu0 0
      %1222 = vmatmul.mubr.bf16.gmra.mrb[0].mxu0 %v1082
      %v1223 = vpop.f32.mrb[0].mxu0
      %v1224 = vadd.f32 %v1102, %v1223
      %v1225 = vpop.f32.mrb[0].mxu0
      %v1226 = vadd.f32 %v1106, %v1225
      %v1227 = vpop.f32.mrb[0].mxu0
      %v1228 = vadd.f32 %v1102, %v1227
      %v1229 = vpop.f32.mrb[0].mxu0
      %v1230 = vadd.f32 %v1106, %v1229
      %1231 = vmatprep.mubr.bf16.mxu0 0
      %1232 = vmatmul.mubr.bf16.gmra.mrb[0].mxu0 %v1083
      %v1233 = vpop.f32.mrb[0].mxu0
      %v1234 = vadd.f32 %v1102, %v1233
      %v1235 = vpop.f32.mrb[0].mxu0
      %v1236 = vadd.f32 %v1106, %v1235
      %v1237 = vpop.f32.mrb[0].mxu0
      %v1238 = vadd.f32 %v1102, %v1237
      %v1239 = vpop.f32.mrb[0].mxu0
      %v1240 = vadd.f32 %v1106, %v1239
      %1241 = vmatprep.mubr.bf16.mxu0 0
      %1242 = vmatmul.mubr.bf16.gmra.mrb[0].mxu0 %v1084
      %v1243 = vpop.f32.mrb[0].mxu0
      %v1244 = vadd.f32 %v1102, %v1243
      %v1245 = vpop.f32.mrb[0].mxu0
      %v1246 = vadd.f32 %v1106, %v1245
      %v1247 = vpop.f32.mrb[0].mxu0
      %v1248 = vadd.f32 %v1102, %v1247
      %v1249 = vpop.f32.mrb[0].mxu0
      %v1250 = vadd.f32 %v1106, %v1249
      %1251 = vmatprep.mubr.bf16.mxu0 0
      %1252 = vmatmul.mubr.bf16.gmra.mrb[0].mxu0 %v1085
      %v1253 = vpop.f32.mrb[0].mxu0
      %v1254 = vadd.f32 %v1102, %v1253
      %v1255 = vpop.f32.mrb[0].mxu0
      %v1256 = vadd.f32 %v1106, %v1255
      %v1257 = vpop.f32.mrb[0].mxu0
      %v1258 = vadd.f32 %v1102, %v1257
      %v1259 = vpop.f32.mrb[0].mxu0
      %v1260 = vadd.f32 %v1106, %v1259
      %1261 = vmatprep.mubr.bf16.mxu0 0
      %1262 = vmatmul.mubr.bf16.gmra.mrb[0].mxu0 %v1086
      %v1263 = vpop.f32.mrb[0].mxu0
      %v1264 = vadd.f32 %v1102, %v1263
      %v1265 = vpop.f32.mrb[0].mxu0
      %v1266 = vadd.f32 %v1106, %v1265
      %v1267 = vpop.f32.mrb[0].mxu0
      %v1268 = vadd.f32 %v1102, %v1267
      %v1269 = vpop.f32.mrb[0].mxu0
      %v1270 = vadd.f32 %v1106, %v1269
      %1271 = vmatprep.mubr.bf16.mxu0 0
      %1272 = vmatmul.mubr.bf16.gmra.mrb[0].mxu0 %v1087
      %v1273 = vpop.f32.mrb[0].mxu0
      %v1274 = vadd.f32 %v1102, %v1273
      %v1275 = vpop.f32.mrb[0].mxu0
      %v1276 = vadd.f32 %v1106, %v1275
      %v1277 = vpop.f32.mrb[0].mxu0
      %v1278 = vadd.f32 %v1102, %v1277
      %v1279 = vpop.f32.mrb[0].mxu0
      %v1280 = vadd.f32 %v1106, %v1279
      %1281 = vmatprep.mubr.bf16.mxu0 0
      %1282 = vmatmul.mubr.bf16.gmra.mrb[0].mxu0 %v1088
      %v1283 = vpop.f32.mrb[0].mxu0
      %v1284 = vadd.f32 %v1102, %v1283
      %v1285 = vpop.f32.mrb[0].mxu0
      %v1286 = vadd.f32 %v1106, %v1285
      %v1287 = vpop.f32.mrb[0].mxu0
      %v1288 = vadd.f32 %v1102, %v1287
      %v1289 = vpop.f32.mrb[0].mxu0
      %v1290 = vadd.f32 %v1106, %v1289
      %1291 = vmatprep.mubr.bf16.mxu0 0
      %1292 = vmatmul.mubr.bf16.gmra.mrb[0].mxu0 %v1089
      %v1293 = vpop.f32.mrb[0].mxu0
      %v1294 = vadd.f32 %v1102, %v1293
      %v1295 = vpop.f32.mrb[0].mxu0
      %v1296 = vadd.f32 %v1106, %v1295
      %v1297 = vpop.f32.mrb[0].mxu0
      %v1298 = vadd.f32 %v1102, %v1297
      %v1299 = vpop.f32.mrb[0].mxu0
      %v1300 = vadd.f32 %v1106, %v1299
      %1301 = vmatprep.mubr.bf16.mxu0 0
      %1302 = vmatmul.mubr.bf16.gmra.mrb[0].mxu0 %v1090
      %v1303 = vpop.f32.mrb[0].mxu0
      %v1304 = vadd.f32 %v1102, %v1303
      %v1305 = vpop.f32.mrb[0].mxu0
      %v1306 = vadd.f32 %v1106, %v1305
      %v1307 = vpop.f32.mrb[0].mxu0
      %v1308 = vadd.f32 %v1102, %v1307
      %v1309 = vpop.f32.mrb[0].mxu0
      %v1310 = vadd.f32 %v1106, %v1309
      %1311 = vmatprep.mubr.bf16.mxu0 0
      %1312 = vmatmul.mubr.bf16.gmra.mrb[0].mxu0 %v1091
      %v1313 = vpop.f32.mrb[0].mxu0
      %v1314 = vadd.f32 %v1102, %v1313
      %v1315 = vpop.f32.mrb[0].mxu0
      %v1316 = vadd.f32 %v1106, %v1315
      %v1317 = vpop.f32.mrb[0].mxu0
      %v1318 = vadd.f32 %v1102, %v1317
      %v1319 = vpop.f32.mrb[0].mxu0
      %v1320 = vadd.f32 %v1106, %v1319
      %1321 = vmatprep.mubr.bf16.mxu0 0
      %1322 = vmatmul.mubr.bf16.gmra.mrb[0].mxu0 %v1092
      %v1323 = vpop.f32.mrb[0].mxu0
      %v1324 = vadd.f32 %v1102, %v1323
      %v1325 = vpop.f32.mrb[0].mxu0
      %v1326 = vadd.f32 %v1106, %v1325
      %v1327 = vpop.f32.mrb[0].mxu0
      %v1328 = vadd.f32 %v1102, %v1327
      %v1329 = vpop.f32.mrb[0].mxu0
      %v1330 = vadd.f32 %v1106, %v1329
      %1331 = vmatprep.mubr.bf16.mxu0 0
      %1332 = vmatmul.mubr.bf16.gmra.mrb[0].mxu0 %v1093
      %v1333 = vpop.f32.mrb[0].mxu0
      %v1334 = vadd.f32 %v1102, %v1333
      %v1335 = vpop.f32.mrb[0].mxu0
      %v1336 = vadd.f32 %v1106, %v1335
      %v1337 = vpop.f32.mrb[0].mxu0
      %v1338 = vadd.f32 %v1102, %v1337
      %v1339 = vpop.f32.mrb[0].mxu0
      %v1340 = vadd.f32 %v1106, %v1339
      %1341 = vmatprep.mubr.bf16.mxu0 0
      %1342 = vmatmul.mubr.bf16.gmra.mrb[0].mxu0 %v1094
      %v1343 = vpop.f32.mrb[0].mxu0
      %v1344 = vadd.f32 %v1102, %v1343
      %v1345 = vpop.f32.mrb[0].mxu0
      %v1346 = vadd.f32 %v1106, %v1345
      %v1347 = vpop.f32.mrb[0].mxu0
      %v1348 = vadd.f32 %v1102, %v1347
      %v1349 = vpop.f32.mrb[0].mxu0
      %v1350 = vadd.f32 %v1106, %v1349
      %1351 = vmatprep.mubr.bf16.mxu0 0
      %1352 = vmatmul.mubr.bf16.gmra.mrb[0].mxu0 %v1095
      %v1353 = vpop.f32.mrb[0].mxu0
      %v1354 = vadd.f32 %v1102, %v1353
      %v1355 = vpop.f32.mrb[0].mxu0
      %v1356 = vadd.f32 %v1106, %v1355
      %v1357 = vpop.f32.mrb[0].mxu0
      %v1358 = vadd.f32 %v1102, %v1357
      %v1359 = vpop.f32.mrb[0].mxu0
      %v1360 = vadd.f32 %v1106, %v1359
      %1361 = vmatprep.mubr.bf16.mxu0 0
      %1362 = vmatmul.mubr.bf16.gmra.mrb[0].mxu0 %v1096
      %v1363 = vpop.f32.mrb[0].mxu0
      %v1364 = vadd.f32 %v1102, %v1363
      %v1365 = vpop.f32.mrb[0].mxu0
      %v1366 = vadd.f32 %v1106, %v1365
      %v1367 = vpop.f32.mrb[0].mxu0
      %v1368 = vadd.f32 %v1102, %v1367
      %v1369 = vpop.f32.mrb[0].mxu0
      %v1370 = vadd.f32 %v1106, %v1369
      %1371 = vmatprep.mubr.bf16.mxu0 0
      %1372 = vmatmul.mubr.bf16.gmra.mrb[0].mxu0 %v1097
      %v1373 = vpop.f32.mrb[0].mxu0
      %v1374 = vadd.f32 %v1102, %v1373
      %v1375 = vpop.f32.mrb[0].mxu0
      %v1376 = vadd.f32 %v1106, %v1375
      %v1377 = vpop.f32.mrb[0].mxu0
      %v1378 = vadd.f32 %v1102, %v1377
      %v1379 = vpop.f32.mrb[0].mxu0
      %v1380 = vadd.f32 %v1106, %v1379
      %1381 = vdwg.mxu0
      %v1382 = vmax.f32 %v1224, %v1304
      %v1383 = vmax.f32 %v1226, %v1306
      %v1384 = vmax.f32 %v1228, %v1308
      %v1385 = vmax.f32 %v1230, %v1310
      %v1386 = vmax.f32 %v1234, %v1314
      %v1387 = vmax.f32 %v1236, %v1316
      %v1388 = vmax.f32 %v1238, %v1318
      %v1389 = vmax.f32 %v1240, %v1320
      %v1390 = vmax.f32 %v1244, %v1324
      %v1391 = vmax.f32 %v1246, %v1326
      %v1392 = vmax.f32 %v1248, %v1328
      %v1393 = vmax.f32 %v1250, %v1330
      %v1394 = vmax.f32 %v1254, %v1334
      %v1395 = vmax.f32 %v1256, %v1336
      %v1396 = vmax.f32 %v1258, %v1338
      %v1397 = vmax.f32 %v1260, %v1340
      %v1398 = vmax.f32 %v1264, %v1344
      %v1399 = vmax.f32 %v1266, %v1346
      %v1400 = vmax.f32 %v1268, %v1348
      %v1401 = vmax.f32 %v1270, %v1350
      %v1402 = vmax.f32 %v1274, %v1354
      %v1403 = vmax.f32 %v1276, %v1356
      %v1404 = vmax.f32 %v1278, %v1358
      %v1405 = vmax.f32 %v1280, %v1360
      %v1406 = vmax.f32 %v1284, %v1364
      %v1407 = vmax.f32 %v1286, %v1366
      %v1408 = vmax.f32 %v1288, %v1368
      %v1409 = vmax.f32 %v1290, %v1370
      %v1410 = vmax.f32 %v1294, %v1374
      %v1411 = vmax.f32 %v1296, %v1376
      %v1412 = vmax.f32 %v1298, %v1378
      %v1413 = vmax.f32 %v1300, %v1380
      %v1414 = vmax.f32 %v1382, %v1398
      %v1415 = vmax.f32 %v1383, %v1399
      %v1416 = vmax.f32 %v1384, %v1400
      %v1417 = vmax.f32 %v1385, %v1401
      %v1418 = vmax.f32 %v1386, %v1402
      %v1419 = vmax.f32 %v1387, %v1403
      %v1420 = vmax.f32 %v1388, %v1404
      %v1421 = vmax.f32 %v1389, %v1405
      %v1422 = vmax.f32 %v1390, %v1406
      %v1423 = vmax.f32 %v1391, %v1407
      %v1424 = vmax.f32 %v1392, %v1408
      %v1425 = vmax.f32 %v1393, %v1409
      %v1426 = vmax.f32 %v1394, %v1410
      %v1427 = vmax.f32 %v1395, %v1411
      %v1428 = vmax.f32 %v1396, %v1412
      %v1429 = vmax.f32 %v1397, %v1413
      %v1430 = vmax.f32 %v1414, %v1422
      %v1431 = vmax.f32 %v1415, %v1423
      %v1432 = vmax.f32 %v1416, %v1424
      %v1433 = vmax.f32 %v1417, %v1425
      %v1434 = vmax.f32 %v1418, %v1426
      %v1435 = vmax.f32 %v1419, %v1427
      %v1436 = vmax.f32 %v1420, %v1428
      %v1437 = vmax.f32 %v1421, %v1429
      %v1438 = vmax.f32 %v1430, %v1434
      %v1439 = vmax.f32 %v1431, %v1435
      %v1440 = vmax.f32 %v1432, %v1436
      %v1441 = vmax.f32 %v1433, %v1437
      %v1442 = vmax.f32 %v1438, %v1440
      %v1443 = vmax.f32 %v1439, %v1441
      %1444 = vst [vmem:[%s283] sm:$0xff] %v1442
      %1445 = vst [vmem:[%s283 + $0x8] sm:$0xff] %v1443
      %p1446 = scmp.lt.s32.totalorder %s18, 1
      %s1447 = scalar_select %p1446, %s18, 1
      %s1448 = smul.addr %s1447, 2
      %s1449 = smul.addr %s1448, 8
      %s1450 = scalar_lea.vmem %s7, %s1449
      // Predicated region
      $region49: #{pointnet2_forward.4} parent=47 // pred_check
        %p1451 = pneg %p188
      $region50: #{pointnet2_forward.4} parent=47 // pred_check_branch
        %1453 = sbr.rel (%p1451) target = $region52
      $region51: #{pointnet2_forward.4} parent=47 // pred_region
        _
      $region52: #{pointnet2_forward.4} parent=47 // pred_fallthru
        _
    $region48: #{pointnet2_forward.4} parent=5 // pred_fallthru
      _
    %p1454 = scmp.le.s32.totalorder 2, %s13
    // Predicated region
    $region53: #{pointnet2_forward.4} parent=5 // pred_check
      %p1455 = pneg %p1454
    $region54: #{pointnet2_forward.4} parent=5 // pred_check_branch
      %1457 = sbr.rel (%p1455) target = $region56
    $region55: #{pointnet2_forward.4} parent=5 // pred_region
      %s1458 = ssub.s32 %s13, 2
      // Predicated region
      $region57: #{pointnet2_forward.4} parent=55 // pred_check
        %p1459 = pneg %p194
      $region58: #{pointnet2_forward.4} parent=55 // pred_check_branch
        %1461 = sbr.rel (%p1459) target = $region60
      $region59: #{pointnet2_forward.4} parent=55 // pred_region
        %p1462 = scmp.lt.s32.totalorder %s19, 1
        %s1463 = scalar_select %p1462, %s19, 1
        %s1464 = smul.addr %s1463, 2
        %s1465 = smul.addr %s1464, 8
        %s1466 = scalar_lea.vmem %s7, %s1465
      $region60: #{pointnet2_forward.4} parent=55 // pred_fallthru
        _
    $region56: #{pointnet2_forward.4} parent=5 // pred_fallthru
      _
  $region6: #{pointnet2_forward.4} parent=0 // loop_footer
    %s17 = sadd.s32 1, %s13
  $region7: #{pointnet2_forward.4} parent=0 // loop_footer_branch
    %12 = sbr.rel target = $region3
  $region8: #{pointnet2_forward.4} parent=0 // loop_exit
    _

// kernel: pointnet2_forward.3
$region0: #{pointnet2_forward.3}
  #allocation0 [shape = 'u32[]', space=smem, size = 0x4, offset = 0x4, fixed_abs, tag = 'smem constant byte address 0x4 - core index']
  #allocation1 [shape = 'u32[144,128]{1,0:T(1,128)}', space=vmem, size = 0x12000, scoped, tag = 'internal scratch']
  %s0 = inlined_call_operand.vmem [shape: bf16[4096,3], index: 0, kind: input, shape index: {}]
  %s1 = inlined_call_operand.vmem [shape: bf16[3,64], index: 1, kind: input, shape index: {}]
  %s2 = inlined_call_operand.vmem [shape: f32[1,64], index: 2, kind: input, shape index: {}]
  %s3 = inlined_call_operand.vmem [shape: bf16[64,64], index: 3, kind: input, shape index: {}]
  %s4 = inlined_call_operand.vmem [shape: f32[1,64], index: 4, kind: input, shape index: {}]
  %s5 = inlined_call_operand.vmem [shape: bf16[64,128], index: 5, kind: input, shape index: {}]
  %s6 = inlined_call_operand.vmem [shape: f32[1,128], index: 6, kind: input, shape index: {}]
  %s7 = inlined_call_operand.vmem [shape: f32[64,128], index: 7, kind: output, shape index: {}]
  %s8 = sld [smem:[#allocation0]]
  $region61: #{pointnet2_forward.3} parent=0
    _
  %s10 = ssub.s32 1, %s8
  %s11 = scalar_select 0, %s10, %s8
  loop: start=0, step=1, limit=4
  $region2: #{pointnet2_forward.3} parent=0 // loop_pre_header
    _
  $region3: #{pointnet2_forward.3} parent=0 // loop_header
    %s13 = sphi 0, %s17
    %p14 = scmp.ge.s32.totalorder %s13, 4
    %s23 = sphi 0, %s25
    %s26 = sphi 0, %s23
    %s27 = sphi 0, %s26
    %s43 = sphi 0, %s27
    %s47 = sphi 0, %s47
    %s49 = sphi 0, %s47
    %s50 = sphi 0, %s49
    %s64 = sphi 0, %s50
    %s68 = sphi 0, %s68
    %s70 = sphi 0, %s68
    %s71 = sphi 0, %s70
    %s85 = sphi 0, %s71
    %s89 = sphi 0, %s89
    %s91 = sphi 0, %s89
    %s92 = sphi 0, %s91
    %s106 = sphi 0, %s92
    %s110 = sphi 0, %s110
    %s112 = sphi 0, %s110
    %s113 = sphi 0, %s112
    %s127 = sphi 0, %s113
    %s131 = sphi 0, %s131
    %s133 = sphi 0, %s131
    %s134 = sphi 0, %s133
    %s148 = sphi 0, %s134
    %s152 = sphi 0, %s152
    %s154 = sphi 0, %s152
    %s155 = sphi 0, %s154
    %s169 = sphi 0, %s155
    %s175 = sphi 0, %s177
    %s178 = sphi 0, %s175
    %s179 = sphi 0, %s178
    %s195 = sphi 0, %s179
  $region4: #{pointnet2_forward.3} parent=0 // loop_header_branch
    %16 = sbr.rel (%p14) target = $region8
  $region5: #{pointnet2_forward.3} parent=0 // loop_body
    %s18 = ssub.s32 %s13, 1
    %s19 = ssub.s32 %s13, 2
    %s20 = sadd.s32 %s13, 1
    %s21 = ssub.s32 %s13, %s20
    %p22 = scmp.eq.s32.totalorder %s21, 0
    %s24 = sadd.s32 %s23, 1
    %s25 = scalar_select %p22, %s23, %s24
    %p28 = pneg %p22
    %p29 = scmp.eq.s32.totalorder %s13, 1
    %p30 = por %p28, %p29
    %p31 = scmp.ne.s32.totalorder %s23, %s26
    %p32 = scmp.eq.s32.totalorder %s13, 0
    %p33 = por %p31, %p32
    %p34 = scmp.ne.s32.totalorder %s23, %s26
    %p35 = scmp.eq.s32.totalorder %s18, 1
    %p36 = por %p34, %p35
    %p37 = scmp.ne.s32.totalorder %s26, %s27
    %p38 = scmp.eq.s32.totalorder %s18, 0
    %p39 = por %p37, %p38
    %p40 = scmp.ne.s32.totalorder %s26, %s27
    %p41 = scmp.eq.s32.totalorder %s19, 1
    %p42 = por %p40, %p41
    %p44 = scmp.ne.s32.totalorder %s27, %s43
    %p45 = scmp.eq.s32.totalorder %s19, 0
    %p46 = por %p44, %p45
    %s48 = sadd.s32 %s47, 1
    %p51 = scmp.eq.s32.totalorder %s13, 1
    %p52 = scmp.ne.s32.totalorder %s47, %s49
    %p53 = scmp.eq.s32.totalorder %s13, 0
    %p54 = por %p52, %p53
    %p55 = scmp.ne.s32.totalorder %s47, %s49
    %p56 = scmp.eq.s32.totalorder %s18, 1
    %p57 = por %p55, %p56
    %p58 = scmp.ne.s32.totalorder %s49, %s50
    %p59 = scmp.eq.s32.totalorder %s18, 0
    %p60 = por %p58, %p59
    %p61 = scmp.ne.s32.totalorder %s49, %s50
    %p62 = scmp.eq.s32.totalorder %s19, 1
    %p63 = por %p61, %p62
    %p65 = scmp.ne.s32.totalorder %s50, %s64
    %p66 = scmp.eq.s32.totalorder %s19, 0
    %p67 = por %p65, %p66
    %s69 = sadd.s32 %s68, 1
    %p72 = scmp.eq.s32.totalorder %s13, 1
    %p73 = scmp.ne.s32.totalorder %s68, %s70
    %p74 = scmp.eq.s32.totalorder %s13, 0
    %p75 = por %p73, %p74
    %p76 = scmp.ne.s32.totalorder %s68, %s70
    %p77 = scmp.eq.s32.totalorder %s18, 1
    %p78 = por %p76, %p77
    %p79 = scmp.ne.s32.totalorder %s70, %s71
    %p80 = scmp.eq.s32.totalorder %s18, 0
    %p81 = por %p79, %p80
    %p82 = scmp.ne.s32.totalorder %s70, %s71
    %p83 = scmp.eq.s32.totalorder %s19, 1
    %p84 = por %p82, %p83
    %p86 = scmp.ne.s32.totalorder %s71, %s85
    %p87 = scmp.eq.s32.totalorder %s19, 0
    %p88 = por %p86, %p87
    %s90 = sadd.s32 %s89, 1
    %p93 = scmp.eq.s32.totalorder %s13, 1
    %p94 = scmp.ne.s32.totalorder %s89, %s91
    %p95 = scmp.eq.s32.totalorder %s13, 0
    %p96 = por %p94, %p95
    %p97 = scmp.ne.s32.totalorder %s89, %s91
    %p98 = scmp.eq.s32.totalorder %s18, 1
    %p99 = por %p97, %p98
    %p100 = scmp.ne.s32.totalorder %s91, %s92
    %p101 = scmp.eq.s32.totalorder %s18, 0
    %p102 = por %p100, %p101
    %p103 = scmp.ne.s32.totalorder %s91, %s92
    %p104 = scmp.eq.s32.totalorder %s19, 1
    %p105 = por %p103, %p104
    %p107 = scmp.ne.s32.totalorder %s92, %s106
    %p108 = scmp.eq.s32.totalorder %s19, 0
    %p109 = por %p107, %p108
    %s111 = sadd.s32 %s110, 1
    %p114 = scmp.eq.s32.totalorder %s13, 1
    %p115 = scmp.ne.s32.totalorder %s110, %s112
    %p116 = scmp.eq.s32.totalorder %s13, 0
    %p117 = por %p115, %p116
    %p118 = scmp.ne.s32.totalorder %s110, %s112
    %p119 = scmp.eq.s32.totalorder %s18, 1
    %p120 = por %p118, %p119
    %p121 = scmp.ne.s32.totalorder %s112, %s113
    %p122 = scmp.eq.s32.totalorder %s18, 0
    %p123 = por %p121, %p122
    %p124 = scmp.ne.s32.totalorder %s112, %s113
    %p125 = scmp.eq.s32.totalorder %s19, 1
    %p126 = por %p124, %p125
    %p128 = scmp.ne.s32.totalorder %s113, %s127
    %p129 = scmp.eq.s32.totalorder %s19, 0
    %p130 = por %p128, %p129
    %s132 = sadd.s32 %s131, 1
    %p135 = scmp.eq.s32.totalorder %s13, 1
    %p136 = scmp.ne.s32.totalorder %s131, %s133
    %p137 = scmp.eq.s32.totalorder %s13, 0
    %p138 = por %p136, %p137
    %p139 = scmp.ne.s32.totalorder %s131, %s133
    %p140 = scmp.eq.s32.totalorder %s18, 1
    %p141 = por %p139, %p140
    %p142 = scmp.ne.s32.totalorder %s133, %s134
    %p143 = scmp.eq.s32.totalorder %s18, 0
    %p144 = por %p142, %p143
    %p145 = scmp.ne.s32.totalorder %s133, %s134
    %p146 = scmp.eq.s32.totalorder %s19, 1
    %p147 = por %p145, %p146
    %p149 = scmp.ne.s32.totalorder %s134, %s148
    %p150 = scmp.eq.s32.totalorder %s19, 0
    %p151 = por %p149, %p150
    %s153 = sadd.s32 %s152, 1
    %p156 = scmp.eq.s32.totalorder %s13, 1
    %p157 = scmp.ne.s32.totalorder %s152, %s154
    %p158 = scmp.eq.s32.totalorder %s13, 0
    %p159 = por %p157, %p158
    %p160 = scmp.ne.s32.totalorder %s152, %s154
    %p161 = scmp.eq.s32.totalorder %s18, 1
    %p162 = por %p160, %p161
    %p163 = scmp.ne.s32.totalorder %s154, %s155
    %p164 = scmp.eq.s32.totalorder %s18, 0
    %p165 = por %p163, %p164
    %p166 = scmp.ne.s32.totalorder %s154, %s155
    %p167 = scmp.eq.s32.totalorder %s19, 1
    %p168 = por %p166, %p167
    %p170 = scmp.ne.s32.totalorder %s155, %s169
    %p171 = scmp.eq.s32.totalorder %s19, 0
    %p172 = por %p170, %p171
    %s173 = ssub.s32 %s13, %s20
    %p174 = scmp.eq.s32.totalorder %s173, 0
    %s176 = sadd.s32 %s175, 1
    %s177 = scalar_select %p174, %s175, %s176
    %p180 = pneg %p174
    %p181 = scmp.eq.s32.totalorder %s13, 1
    %p182 = por %p180, %p181
    %p183 = scmp.ne.s32.totalorder %s175, %s178
    %p184 = scmp.eq.s32.totalorder %s13, 0
    %p185 = por %p183, %p184
    %p186 = scmp.ne.s32.totalorder %s175, %s178
    %p187 = scmp.eq.s32.totalorder %s18, 1
    %p188 = por %p186, %p187
    %p189 = scmp.ne.s32.totalorder %s178, %s179
    %p190 = scmp.eq.s32.totalorder %s18, 0
    %p191 = por %p189, %p190
    %p192 = scmp.ne.s32.totalorder %s178, %s179
    %p193 = scmp.eq.s32.totalorder %s19, 1
    %p194 = por %p192, %p193
    %p196 = scmp.ne.s32.totalorder %s179, %s195
    %p197 = scmp.eq.s32.totalorder %s19, 0
    %p198 = por %p196, %p197
    %p199 = scmp.le.s32.totalorder 1, %s13
    %p200 = scmp.lt.s32.totalorder %s13, 3
    %p201 = pnand %p199, %p200
    %p202 = pneg %p201
    // Predicated region
    $region9: #{pointnet2_forward.3} parent=5 // pred_check
      _
    $region10: #{pointnet2_forward.3} parent=5 // pred_check_branch
      %204 = sbr.rel (%p201) target = $region12
    $region11: #{pointnet2_forward.3} parent=5 // pred_region
      %s205 = ssub.s32 %s13, 1
      // Predicated region
      $region13: #{pointnet2_forward.3} parent=11 // pred_check
        %p206 = pneg %p60
      $region14: #{pointnet2_forward.3} parent=11 // pred_check_branch
        %208 = sbr.rel (%p206) target = $region16
      $region15: #{pointnet2_forward.3} parent=11 // pred_region
        _
      $region16: #{pointnet2_forward.3} parent=11 // pred_fallthru
        _
      // Predicated region
      $region17: #{pointnet2_forward.3} parent=11 // pred_check
        %p209 = pneg %p81
      $region18: #{pointnet2_forward.3} parent=11 // pred_check_branch
        %211 = sbr.rel (%p209) target = $region20
      $region19: #{pointnet2_forward.3} parent=11 // pred_region
        _
      $region20: #{pointnet2_forward.3} parent=11 // pred_fallthru
        _
      // Predicated region
      $region21: #{pointnet2_forward.3} parent=11 // pred_check
        %p212 = pneg %p102
      $region22: #{pointnet2_forward.3} parent=11 // pred_check_branch
        %214 = sbr.rel (%p212) target = $region24
      $region23: #{pointnet2_forward.3} parent=11 // pred_region
        _
      $region24: #{pointnet2_forward.3} parent=11 // pred_fallthru
        _
      // Predicated region
      $region25: #{pointnet2_forward.3} parent=11 // pred_check
        %p215 = pneg %p123
      $region26: #{pointnet2_forward.3} parent=11 // pred_check_branch
        %217 = sbr.rel (%p215) target = $region28
      $region27: #{pointnet2_forward.3} parent=11 // pred_region
        _
      $region28: #{pointnet2_forward.3} parent=11 // pred_fallthru
        _
      // Predicated region
      $region29: #{pointnet2_forward.3} parent=11 // pred_check
        %p218 = pneg %p144
      $region30: #{pointnet2_forward.3} parent=11 // pred_check_branch
        %220 = sbr.rel (%p218) target = $region32
      $region31: #{pointnet2_forward.3} parent=11 // pred_region
        _
      $region32: #{pointnet2_forward.3} parent=11 // pred_fallthru
        _
      // Predicated region
      $region33: #{pointnet2_forward.3} parent=11 // pred_check
        %p221 = pneg %p165
      $region34: #{pointnet2_forward.3} parent=11 // pred_check_branch
        %223 = sbr.rel (%p221) target = $region36
      $region35: #{pointnet2_forward.3} parent=11 // pred_region
        _
      $region36: #{pointnet2_forward.3} parent=11 // pred_fallthru
        _
    $region12: #{pointnet2_forward.3} parent=5 // pred_fallthru
      _
    %p224 = scmp.lt.s32.totalorder %s13, 2
    // Predicated region
    $region37: #{pointnet2_forward.3} parent=5 // pred_check
      %p225 = pneg %p224
    $region38: #{pointnet2_forward.3} parent=5 // pred_check_branch
      %227 = sbr.rel (%p225) target = $region40
    $region39: #{pointnet2_forward.3} parent=5 // pred_region
      // Predicated region
      $region41: #{pointnet2_forward.3} parent=39 // pred_check
        %p228 = pneg %p33
      $region42: #{pointnet2_forward.3} parent=39 // pred_check_branch
        %230 = sbr.rel (%p228) target = $region44
      $region43: #{pointnet2_forward.3} parent=39 // pred_region
        %s231 = smul.u32 256, %s13
        %p232 = scmp.lt.s32.totalorder %s231, 511
        %s233 = scalar_select %p232, %s231, 511
        %s234 = smul.addr %s233, 4
        %s235 = scalar_lea.vmem %s0, %s234
        %s236 = smul.u32 256, %s13
      $region44: #{pointnet2_forward.3} parent=39 // pred_fallthru
        _
    $region40: #{pointnet2_forward.3} parent=5 // pred_fallthru
      _
    %p237 = scmp.le.s32.totalorder 1, %s13
    %p238 = scmp.lt.s32.totalorder %s13, 3
    %p239 = pnand %p237, %p238
    %p240 = pneg %p239
    // Predicated region
    $region45: #{pointnet2_forward.3} parent=5 // pred_check
      _
    $region46: #{pointnet2_forward.3} parent=5 // pred_check_branch
      %242 = sbr.rel (%p239) target = $region48
    $region47: #{pointnet2_forward.3} parent=5 // pred_region
      %s243 = ssub.s32 %s13, 1
      %s244 = smul.u32 256, %s18
      %p245 = scmp.lt.s32.totalorder %s244, 511
      %s246 = scalar_select %p245, %s244, 511
      %s247 = smul.addr %s246, 4
      %s248 = scalar_lea.vmem %s0, %s247
      %p249 = pneg %p39
      %p250 = pneg %p36
      %p251 = pneg %p60
      %p252 = pneg %p57
      %p253 = pneg %p81
      %p254 = pneg %p78
      %p255 = pneg %p102
      %p256 = pneg %p99
      %p257 = pneg %p123
      %p258 = pneg %p120
      %p259 = pneg %p144
      %p260 = pneg %p141
      %p261 = pneg %p165
      %p262 = pneg %p162
      %p263 = pneg %p191
      %p264 = pneg %p188
      %s265 = smul.u32 4, %s18
      %p266 = scmp.lt.s32.totalorder %s265, 7
      %s267 = scalar_select %p266, %s265, 7
      %s268 = smul.addr %s267, 8
      %s269 = scalar_lea.vmem %s7, %s268
      %s270 = smul.u32 256, %s18
      %p271 = scmp.lt.s32.totalorder %s270, 511
      %s272 = scalar_select %p271, %s270, 511
      %s273 = smul.addr %s272, 4
      %s274 = scalar_lea.vmem %s0, %s273
      %s275 = smul.u32 256, %s18
      %s276 = smul.u32 4, %s18
      %p277 = scmp.lt.s32.totalorder %s276, 7
      %s278 = scalar_select %p277, %s276, 7
      %s279 = smul.addr %s278, 8
      %s280 = scalar_lea.vmem %s7, %s279
      %s281 = smul.u32 4, %s18
      %v283 = vld [vmem:[%s274] sm:$0xf]
      %v284 = vld [vmem:[%s274 + $0x4] sm:$0xf]
      %v285 = vld [vmem:[%s274 + $0x8] sm:$0xf]
      %v286 = vld [vmem:[%s274 + $0xc] sm:$0xf]
      %v287 = vld [vmem:[%s274 + $0x10] sm:$0xf]
      %v288 = vld [vmem:[%s274 + $0x14] sm:$0xf]
      %v289 = vld [vmem:[%s274 + $0x18] sm:$0xf]
      %v290 = vld [vmem:[%s274 + $0x1c] sm:$0xf]
      %v291 = vld [vmem:[%s274 + $0x20] sm:$0xf]
      %v292 = vld [vmem:[%s274 + $0x24] sm:$0xf]
      %v293 = vld [vmem:[%s274 + $0x28] sm:$0xf]
      %v294 = vld [vmem:[%s274 + $0x2c] sm:$0xf]
      %v295 = vld [vmem:[%s274 + $0x30] sm:$0xf]
      %v296 = vld [vmem:[%s274 + $0x34] sm:$0xf]
      %v297 = vld [vmem:[%s274 + $0x38] sm:$0xf]
      %v298 = vld [vmem:[%s274 + $0x3c] sm:$0xf]
      %v299 = vld [vmem:[%s274 + $0x40] sm:$0xf]
      %v300 = vld [vmem:[%s274 + $0x44] sm:$0xf]
      %v301 = vld [vmem:[%s274 + $0x48] sm:$0xf]
      %v302 = vld [vmem:[%s274 + $0x4c] sm:$0xf]
      %v303 = vld [vmem:[%s274 + $0x50] sm:$0xf]
      %v304 = vld [vmem:[%s274 + $0x54] sm:$0xf]
      %v305 = vld [vmem:[%s274 + $0x58] sm:$0xf]
      %v306 = vld [vmem:[%s274 + $0x5c] sm:$0xf]
      %v307 = vld [vmem:[%s274 + $0x60] sm:$0xf]
      %v308 = vld [vmem:[%s274 + $0x64] sm:$0xf]
      %v309 = vld [vmem:[%s274 + $0x68] sm:$0xf]
      %v310 = vld [vmem:[%s274 + $0x6c] sm:$0xf]
      %v311 = vld [vmem:[%s274 + $0x70] sm:$0xf]
      %v312 = vld [vmem:[%s274 + $0x74] sm:$0xf]
      %v313 = vld [vmem:[%s274 + $0x78] sm:$0xf]
      %v314 = vld [vmem:[%s274 + $0x7c] sm:$0xf]
      %v315 = vld [vmem:[%s274 + $0x80] sm:$0xf]
      %v316 = vld [vmem:[%s274 + $0x84] sm:$0xf]
      %v317 = vld [vmem:[%s274 + $0x88] sm:$0xf]
      %v318 = vld [vmem:[%s274 + $0x8c] sm:$0xf]
      %v319 = vld [vmem:[%s274 + $0x90] sm:$0xf]
      %v320 = vld [vmem:[%s274 + $0x94] sm:$0xf]
      %v321 = vld [vmem:[%s274 + $0x98] sm:$0xf]
      %v322 = vld [vmem:[%s274 + $0x9c] sm:$0xf]
      %v323 = vld [vmem:[%s274 + $0xa0] sm:$0xf]
      %v324 = vld [vmem:[%s274 + $0xa4] sm:$0xf]
      %v325 = vld [vmem:[%s274 + $0xa8] sm:$0xf]
      %v326 = vld [vmem:[%s274 + $0xac] sm:$0xf]
      %v327 = vld [vmem:[%s274 + $0xb0] sm:$0xf]
      %v328 = vld [vmem:[%s274 + $0xb4] sm:$0xf]
      %v329 = vld [vmem:[%s274 + $0xb8] sm:$0xf]
      %v330 = vld [vmem:[%s274 + $0xbc] sm:$0xf]
      %v331 = vld [vmem:[%s274 + $0xc0] sm:$0xf]
      %v332 = vld [vmem:[%s274 + $0xc4] sm:$0xf]
      %v333 = vld [vmem:[%s274 + $0xc8] sm:$0xf]
      %v334 = vld [vmem:[%s274 + $0xcc] sm:$0xf]
      %v335 = vld [vmem:[%s274 + $0xd0] sm:$0xf]
      %v336 = vld [vmem:[%s274 + $0xd4] sm:$0xf]
      %v337 = vld [vmem:[%s274 + $0xd8] sm:$0xf]
      %v338 = vld [vmem:[%s274 + $0xdc] sm:$0xf]
      %v339 = vld [vmem:[%s274 + $0xe0] sm:$0xf]
      %v340 = vld [vmem:[%s274 + $0xe4] sm:$0xf]
      %v341 = vld [vmem:[%s274 + $0xe8] sm:$0xf]
      %v342 = vld [vmem:[%s274 + $0xec] sm:$0xf]
      %v343 = vld [vmem:[%s274 + $0xf0] sm:$0xf]
      %v344 = vld [vmem:[%s274 + $0xf4] sm:$0xf]
      %v345 = vld [vmem:[%s274 + $0xf8] sm:$0xf]
      %v346 = vld [vmem:[%s274 + $0xfc] sm:$0xf]
      %v347 = vld [vmem:[%s274 + $0x100] sm:$0xf]
      %v348 = vld [vmem:[%s274 + $0x104] sm:$0xf]
      %v349 = vld [vmem:[%s274 + $0x108] sm:$0xf]
      %v350 = vld [vmem:[%s274 + $0x10c] sm:$0xf]
      %v351 = vld [vmem:[%s274 + $0x110] sm:$0xf]
      %v352 = vld [vmem:[%s274 + $0x114] sm:$0xf]
      %v353 = vld [vmem:[%s274 + $0x118] sm:$0xf]
      %v354 = vld [vmem:[%s274 + $0x11c] sm:$0xf]
      %v355 = vld [vmem:[%s274 + $0x120] sm:$0xf]
      %v356 = vld [vmem:[%s274 + $0x124] sm:$0xf]
      %v357 = vld [vmem:[%s274 + $0x128] sm:$0xf]
      %v358 = vld [vmem:[%s274 + $0x12c] sm:$0xf]
      %v359 = vld [vmem:[%s274 + $0x130] sm:$0xf]
      %v360 = vld [vmem:[%s274 + $0x134] sm:$0xf]
      %v361 = vld [vmem:[%s274 + $0x138] sm:$0xf]
      %v362 = vld [vmem:[%s274 + $0x13c] sm:$0xf]
      %v363 = vld [vmem:[%s274 + $0x140] sm:$0xf]
      %v364 = vld [vmem:[%s274 + $0x144] sm:$0xf]
      %v365 = vld [vmem:[%s274 + $0x148] sm:$0xf]
      %v366 = vld [vmem:[%s274 + $0x14c] sm:$0xf]
      %v367 = vld [vmem:[%s274 + $0x150] sm:$0xf]
      %v368 = vld [vmem:[%s274 + $0x154] sm:$0xf]
      %v369 = vld [vmem:[%s274 + $0x158] sm:$0xf]
      %v370 = vld [vmem:[%s274 + $0x15c] sm:$0xf]
      %v371 = vld [vmem:[%s274 + $0x160] sm:$0xf]
      %v372 = vld [vmem:[%s274 + $0x164] sm:$0xf]
      %v373 = vld [vmem:[%s274 + $0x168] sm:$0xf]
      %v374 = vld [vmem:[%s274 + $0x16c] sm:$0xf]
      %v375 = vld [vmem:[%s274 + $0x170] sm:$0xf]
      %v376 = vld [vmem:[%s274 + $0x174] sm:$0xf]
      %v377 = vld [vmem:[%s274 + $0x178] sm:$0xf]
      %v378 = vld [vmem:[%s274 + $0x17c] sm:$0xf]
      %v379 = vld [vmem:[%s274 + $0x180] sm:$0xf]
      %v380 = vld [vmem:[%s274 + $0x184] sm:$0xf]
      %v381 = vld [vmem:[%s274 + $0x188] sm:$0xf]
      %v382 = vld [vmem:[%s274 + $0x18c] sm:$0xf]
      %v383 = vld [vmem:[%s274 + $0x190] sm:$0xf]
      %v384 = vld [vmem:[%s274 + $0x194] sm:$0xf]
      %v385 = vld [vmem:[%s274 + $0x198] sm:$0xf]
      %v386 = vld [vmem:[%s274 + $0x19c] sm:$0xf]
      %v387 = vld [vmem:[%s274 + $0x1a0] sm:$0xf]
      %v388 = vld [vmem:[%s274 + $0x1a4] sm:$0xf]
      %v389 = vld [vmem:[%s274 + $0x1a8] sm:$0xf]
      %v390 = vld [vmem:[%s274 + $0x1ac] sm:$0xf]
      %v391 = vld [vmem:[%s274 + $0x1b0] sm:$0xf]
      %v392 = vld [vmem:[%s274 + $0x1b4] sm:$0xf]
      %v393 = vld [vmem:[%s274 + $0x1b8] sm:$0xf]
      %v394 = vld [vmem:[%s274 + $0x1bc] sm:$0xf]
      %v395 = vld [vmem:[%s274 + $0x1c0] sm:$0xf]
      %v396 = vld [vmem:[%s274 + $0x1c4] sm:$0xf]
      %v397 = vld [vmem:[%s274 + $0x1c8] sm:$0xf]
      %v398 = vld [vmem:[%s274 + $0x1cc] sm:$0xf]
      %v399 = vld [vmem:[%s274 + $0x1d0] sm:$0xf]
      %v400 = vld [vmem:[%s274 + $0x1d4] sm:$0xf]
      %v401 = vld [vmem:[%s274 + $0x1d8] sm:$0xf]
      %v402 = vld [vmem:[%s274 + $0x1dc] sm:$0xf]
      %v403 = vld [vmem:[%s274 + $0x1e0] sm:$0xf]
      %v404 = vld [vmem:[%s274 + $0x1e4] sm:$0xf]
      %v405 = vld [vmem:[%s274 + $0x1e8] sm:$0xf]
      %v406 = vld [vmem:[%s274 + $0x1ec] sm:$0xf]
      %v407 = vld [vmem:[%s274 + $0x1f0] sm:$0xf]
      %v408 = vld [vmem:[%s274 + $0x1f4] sm:$0xf]
      %v409 = vld [vmem:[%s274 + $0x1f8] sm:$0xf]
      %v410 = vld [vmem:[%s274 + $0x1fc] sm:$0xf]
      %v411 = vld [vmem:[%s274 + $0x200] sm:$0xf]
      %v412 = vld [vmem:[%s274 + $0x204] sm:$0xf]
      %v413 = vld [vmem:[%s274 + $0x208] sm:$0xf]
      %v414 = vld [vmem:[%s274 + $0x20c] sm:$0xf]
      %v415 = vld [vmem:[%s274 + $0x210] sm:$0xf]
      %v416 = vld [vmem:[%s274 + $0x214] sm:$0xf]
      %v417 = vld [vmem:[%s274 + $0x218] sm:$0xf]
      %v418 = vld [vmem:[%s274 + $0x21c] sm:$0xf]
      %v419 = vld [vmem:[%s274 + $0x220] sm:$0xf]
      %v420 = vld [vmem:[%s274 + $0x224] sm:$0xf]
      %v421 = vld [vmem:[%s274 + $0x228] sm:$0xf]
      %v422 = vld [vmem:[%s274 + $0x22c] sm:$0xf]
      %v423 = vld [vmem:[%s274 + $0x230] sm:$0xf]
      %v424 = vld [vmem:[%s274 + $0x234] sm:$0xf]
      %v425 = vld [vmem:[%s274 + $0x238] sm:$0xf]
      %v426 = vld [vmem:[%s274 + $0x23c] sm:$0xf]
      %v427 = vld [vmem:[%s274 + $0x240] sm:$0xf]
      %v428 = vld [vmem:[%s274 + $0x244] sm:$0xf]
      %v429 = vld [vmem:[%s274 + $0x248] sm:$0xf]
      %v430 = vld [vmem:[%s274 + $0x24c] sm:$0xf]
      %v431 = vld [vmem:[%s274 + $0x250] sm:$0xf]
      %v432 = vld [vmem:[%s274 + $0x254] sm:$0xf]
      %v433 = vld [vmem:[%s274 + $0x258] sm:$0xf]
      %v434 = vld [vmem:[%s274 + $0x25c] sm:$0xf]
      %v435 = vld [vmem:[%s274 + $0x260] sm:$0xf]
      %v436 = vld [vmem:[%s274 + $0x264] sm:$0xf]
      %v437 = vld [vmem:[%s274 + $0x268] sm:$0xf]
      %v438 = vld [vmem:[%s274 + $0x26c] sm:$0xf]
      %v439 = vld [vmem:[%s274 + $0x270] sm:$0xf]
      %v440 = vld [vmem:[%s274 + $0x274] sm:$0xf]
      %v441 = vld [vmem:[%s274 + $0x278] sm:$0xf]
      %v442 = vld [vmem:[%s274 + $0x27c] sm:$0xf]
      %v443 = vld [vmem:[%s274 + $0x280] sm:$0xf]
      %v444 = vld [vmem:[%s274 + $0x284] sm:$0xf]
      %v445 = vld [vmem:[%s274 + $0x288] sm:$0xf]
      %v446 = vld [vmem:[%s274 + $0x28c] sm:$0xf]
      %v447 = vld [vmem:[%s274 + $0x290] sm:$0xf]
      %v448 = vld [vmem:[%s274 + $0x294] sm:$0xf]
      %v449 = vld [vmem:[%s274 + $0x298] sm:$0xf]
      %v450 = vld [vmem:[%s274 + $0x29c] sm:$0xf]
      %v451 = vld [vmem:[%s274 + $0x2a0] sm:$0xf]
      %v452 = vld [vmem:[%s274 + $0x2a4] sm:$0xf]
      %v453 = vld [vmem:[%s274 + $0x2a8] sm:$0xf]
      %v454 = vld [vmem:[%s274 + $0x2ac] sm:$0xf]
      %v455 = vld [vmem:[%s274 + $0x2b0] sm:$0xf]
      %v456 = vld [vmem:[%s274 + $0x2b4] sm:$0xf]
      %v457 = vld [vmem:[%s274 + $0x2b8] sm:$0xf]
      %v458 = vld [vmem:[%s274 + $0x2bc] sm:$0xf]
      %v459 = vld [vmem:[%s274 + $0x2c0] sm:$0xf]
      %v460 = vld [vmem:[%s274 + $0x2c4] sm:$0xf]
      %v461 = vld [vmem:[%s274 + $0x2c8] sm:$0xf]
      %v462 = vld [vmem:[%s274 + $0x2cc] sm:$0xf]
      %v463 = vld [vmem:[%s274 + $0x2d0] sm:$0xf]
      %v464 = vld [vmem:[%s274 + $0x2d4] sm:$0xf]
      %v465 = vld [vmem:[%s274 + $0x2d8] sm:$0xf]
      %v466 = vld [vmem:[%s274 + $0x2dc] sm:$0xf]
      %v467 = vld [vmem:[%s274 + $0x2e0] sm:$0xf]
      %v468 = vld [vmem:[%s274 + $0x2e4] sm:$0xf]
      %v469 = vld [vmem:[%s274 + $0x2e8] sm:$0xf]
      %v470 = vld [vmem:[%s274 + $0x2ec] sm:$0xf]
      %v471 = vld [vmem:[%s274 + $0x2f0] sm:$0xf]
      %v472 = vld [vmem:[%s274 + $0x2f4] sm:$0xf]
      %v473 = vld [vmem:[%s274 + $0x2f8] sm:$0xf]
      %v474 = vld [vmem:[%s274 + $0x2fc] sm:$0xf]
      %v475 = vld [vmem:[%s274 + $0x300] sm:$0xf]
      %v476 = vld [vmem:[%s274 + $0x304] sm:$0xf]
      %v477 = vld [vmem:[%s274 + $0x308] sm:$0xf]
      %v478 = vld [vmem:[%s274 + $0x30c] sm:$0xf]
      %v479 = vld [vmem:[%s274 + $0x310] sm:$0xf]
      %v480 = vld [vmem:[%s274 + $0x314] sm:$0xf]
      %v481 = vld [vmem:[%s274 + $0x318] sm:$0xf]
      %v482 = vld [vmem:[%s274 + $0x31c] sm:$0xf]
      %v483 = vld [vmem:[%s274 + $0x320] sm:$0xf]
      %v484 = vld [vmem:[%s274 + $0x324] sm:$0xf]
      %v485 = vld [vmem:[%s274 + $0x328] sm:$0xf]
      %v486 = vld [vmem:[%s274 + $0x32c] sm:$0xf]
      %v487 = vld [vmem:[%s274 + $0x330] sm:$0xf]
      %v488 = vld [vmem:[%s274 + $0x334] sm:$0xf]
      %v489 = vld [vmem:[%s274 + $0x338] sm:$0xf]
      %v490 = vld [vmem:[%s274 + $0x33c] sm:$0xf]
      %v491 = vld [vmem:[%s274 + $0x340] sm:$0xf]
      %v492 = vld [vmem:[%s274 + $0x344] sm:$0xf]
      %v493 = vld [vmem:[%s274 + $0x348] sm:$0xf]
      %v494 = vld [vmem:[%s274 + $0x34c] sm:$0xf]
      %v495 = vld [vmem:[%s274 + $0x350] sm:$0xf]
      %v496 = vld [vmem:[%s274 + $0x354] sm:$0xf]
      %v497 = vld [vmem:[%s274 + $0x358] sm:$0xf]
      %v498 = vld [vmem:[%s274 + $0x35c] sm:$0xf]
      %v499 = vld [vmem:[%s274 + $0x360] sm:$0xf]
      %v500 = vld [vmem:[%s274 + $0x364] sm:$0xf]
      %v501 = vld [vmem:[%s274 + $0x368] sm:$0xf]
      %v502 = vld [vmem:[%s274 + $0x36c] sm:$0xf]
      %v503 = vld [vmem:[%s274 + $0x370] sm:$0xf]
      %v504 = vld [vmem:[%s274 + $0x374] sm:$0xf]
      %v505 = vld [vmem:[%s274 + $0x378] sm:$0xf]
      %v506 = vld [vmem:[%s274 + $0x37c] sm:$0xf]
      %v507 = vld [vmem:[%s274 + $0x380] sm:$0xf]
      %v508 = vld [vmem:[%s274 + $0x384] sm:$0xf]
      %v509 = vld [vmem:[%s274 + $0x388] sm:$0xf]
      %v510 = vld [vmem:[%s274 + $0x38c] sm:$0xf]
      %v511 = vld [vmem:[%s274 + $0x390] sm:$0xf]
      %v512 = vld [vmem:[%s274 + $0x394] sm:$0xf]
      %v513 = vld [vmem:[%s274 + $0x398] sm:$0xf]
      %v514 = vld [vmem:[%s274 + $0x39c] sm:$0xf]
      %v515 = vld [vmem:[%s274 + $0x3a0] sm:$0xf]
      %v516 = vld [vmem:[%s274 + $0x3a4] sm:$0xf]
      %v517 = vld [vmem:[%s274 + $0x3a8] sm:$0xf]
      %v518 = vld [vmem:[%s274 + $0x3ac] sm:$0xf]
      %v519 = vld [vmem:[%s274 + $0x3b0] sm:$0xf]
      %v520 = vld [vmem:[%s274 + $0x3b4] sm:$0xf]
      %v521 = vld [vmem:[%s274 + $0x3b8] sm:$0xf]
      %v522 = vld [vmem:[%s274 + $0x3bc] sm:$0xf]
      %v523 = vld [vmem:[%s274 + $0x3c0] sm:$0xf]
      %v524 = vld [vmem:[%s274 + $0x3c4] sm:$0xf]
      %v525 = vld [vmem:[%s274 + $0x3c8] sm:$0xf]
      %v526 = vld [vmem:[%s274 + $0x3cc] sm:$0xf]
      %v527 = vld [vmem:[%s274 + $0x3d0] sm:$0xf]
      %v528 = vld [vmem:[%s274 + $0x3d4] sm:$0xf]
      %v529 = vld [vmem:[%s274 + $0x3d8] sm:$0xf]
      %v530 = vld [vmem:[%s274 + $0x3dc] sm:$0xf]
      %v531 = vld [vmem:[%s274 + $0x3e0] sm:$0xf]
      %v532 = vld [vmem:[%s274 + $0x3e4] sm:$0xf]
      %v533 = vld [vmem:[%s274 + $0x3e8] sm:$0xf]
      %v534 = vld [vmem:[%s274 + $0x3ec] sm:$0xf]
      %v535 = vld [vmem:[%s274 + $0x3f0] sm:$0xf]
      %v536 = vld [vmem:[%s274 + $0x3f4] sm:$0xf]
      %v537 = vld [vmem:[%s274 + $0x3f8] sm:$0xf]
      %v538 = vld [vmem:[%s274 + $0x3fc] sm:$0xf]
      %v539 = vld [vmem:[%s1] sm:$0x3]
      %v540 = vld [vmem:[%s2] sm:$0x1]
      %v541 = vld [vmem:[%s3] sm:$0xf]
      %v542 = vld [vmem:[%s3 + $0x4] sm:$0xf]
      %v543 = vld [vmem:[%s3 + $0x8] sm:$0xf]
      %v544 = vld [vmem:[%s3 + $0xc] sm:$0xf]
      %v545 = vld [vmem:[%s3 + $0x10] sm:$0xf]
      %v546 = vld [vmem:[%s3 + $0x14] sm:$0xf]
      %v547 = vld [vmem:[%s3 + $0x18] sm:$0xf]
      %v548 = vld [vmem:[%s3 + $0x1c] sm:$0xf]
      %v549 = vld [vmem:[%s4] sm:$0x1]
      %v550 = vld [vmem:[%s5] sm:$0xf]
      %v551 = vld [vmem:[%s5 + $0x4] sm:$0xf]
      %v552 = vld [vmem:[%s5 + $0x8] sm:$0xf]
      %v553 = vld [vmem:[%s5 + $0xc] sm:$0xf]
      %v554 = vld [vmem:[%s5 + $0x10] sm:$0xf]
      %v555 = vld [vmem:[%s5 + $0x14] sm:$0xf]
      %v556 = vld [vmem:[%s5 + $0x18] sm:$0xf]
      %v557 = vld [vmem:[%s5 + $0x1c] sm:$0xf]
      %v558 = vld [vmem:[%s6] sm:$0x1]
      %v560 = vlaneseq
      %v561 = vshrl.u32 %v560, 7
      %v562 = vsub.s32 0, %v561
      %v563 = vrot.slane %v540, %v562
      %v821 = vunpack.c.l.b16 %v283
      %v822 = vunpack.c.l.b16 %v284
      %v823 = vunpack.c.l.b16 %v285
      %v824 = vunpack.c.l.b16 %v286
      %v825 = vunpack.c.l.b16 %v287
      %v826 = vunpack.c.l.b16 %v288
      %v827 = vunpack.c.l.b16 %v289
      %v828 = vunpack.c.l.b16 %v290
      %v829 = vunpack.c.l.b16 %v291
      %v830 = vunpack.c.l.b16 %v292
      %v831 = vunpack.c.l.b16 %v293
      %v832 = vunpack.c.l.b16 %v294
      %v833 = vunpack.c.l.b16 %v295
      %v834 = vunpack.c.l.b16 %v296
      %v835 = vunpack.c.l.b16 %v297
      %v836 = vunpack.c.l.b16 %v298
      %v837 = vunpack.c.l.b16 %v299
      %v838 = vunpack.c.l.b16 %v300
      %v839 = vunpack.c.l.b16 %v301
      %v840 = vunpack.c.l.b16 %v302
      %v841 = vunpack.c.l.b16 %v303
      %v842 = vunpack.c.l.b16 %v304
      %v843 = vunpack.c.l.b16 %v305
      %v844 = vunpack.c.l.b16 %v306
      %v845 = vunpack.c.l.b16 %v307
      %v846 = vunpack.c.l.b16 %v308
      %v847 = vunpack.c.l.b16 %v309
      %v848 = vunpack.c.l.b16 %v310
      %v849 = vunpack.c.l.b16 %v311
      %v850 = vunpack.c.l.b16 %v312
      %v851 = vunpack.c.l.b16 %v313
      %v852 = vunpack.c.l.b16 %v314
      %v853 = vunpack.c.l.b16 %v315
      %v854 = vunpack.c.l.b16 %v316
      %v855 = vunpack.c.l.b16 %v317
      %v856 = vunpack.c.l.b16 %v318
      %v857 = vunpack.c.l.b16 %v319
      %v858 = vunpack.c.l.b16 %v320
      %v859 = vunpack.c.l.b16 %v321
      %v860 = vunpack.c.l.b16 %v322
      %v861 = vunpack.c.l.b16 %v323
      %v862 = vunpack.c.l.b16 %v324
      %v863 = vunpack.c.l.b16 %v325
      %v864 = vunpack.c.l.b16 %v326
      %v865 = vunpack.c.l.b16 %v327
      %v866 = vunpack.c.l.b16 %v328
      %v867 = vunpack.c.l.b16 %v329
      %v868 = vunpack.c.l.b16 %v330
      %v869 = vunpack.c.l.b16 %v331
      %v870 = vunpack.c.l.b16 %v332
      %v871 = vunpack.c.l.b16 %v333
      %v872 = vunpack.c.l.b16 %v334
      %v873 = vunpack.c.l.b16 %v335
      %v874 = vunpack.c.l.b16 %v336
      %v875 = vunpack.c.l.b16 %v337
      %v876 = vunpack.c.l.b16 %v338
      %v877 = vunpack.c.l.b16 %v339
      %v878 = vunpack.c.l.b16 %v340
      %v879 = vunpack.c.l.b16 %v341
      %v880 = vunpack.c.l.b16 %v342
      %v881 = vunpack.c.l.b16 %v343
      %v882 = vunpack.c.l.b16 %v344
      %v883 = vunpack.c.l.b16 %v345
      %v884 = vunpack.c.l.b16 %v346
      %v885 = vunpack.c.l.b16 %v347
      %v886 = vunpack.c.l.b16 %v348
      %v887 = vunpack.c.l.b16 %v349
      %v888 = vunpack.c.l.b16 %v350
      %v889 = vunpack.c.l.b16 %v351
      %v890 = vunpack.c.l.b16 %v352
      %v891 = vunpack.c.l.b16 %v353
      %v892 = vunpack.c.l.b16 %v354
      %v893 = vunpack.c.l.b16 %v355
      %v894 = vunpack.c.l.b16 %v356
      %v895 = vunpack.c.l.b16 %v357
      %v896 = vunpack.c.l.b16 %v358
      %v897 = vunpack.c.l.b16 %v359
      %v898 = vunpack.c.l.b16 %v360
      %v899 = vunpack.c.l.b16 %v361
      %v900 = vunpack.c.l.b16 %v362
      %v901 = vunpack.c.l.b16 %v363
      %v902 = vunpack.c.l.b16 %v364
      %v903 = vunpack.c.l.b16 %v365
      %v904 = vunpack.c.l.b16 %v366
      %v905 = vunpack.c.l.b16 %v367
      %v906 = vunpack.c.l.b16 %v368
      %v907 = vunpack.c.l.b16 %v369
      %v908 = vunpack.c.l.b16 %v370
      %v909 = vunpack.c.l.b16 %v371
      %v910 = vunpack.c.l.b16 %v372
      %v911 = vunpack.c.l.b16 %v373
      %v912 = vunpack.c.l.b16 %v374
      %v913 = vunpack.c.l.b16 %v375
      %v914 = vunpack.c.l.b16 %v376
      %v915 = vunpack.c.l.b16 %v377
      %v916 = vunpack.c.l.b16 %v378
      %v917 = vunpack.c.l.b16 %v379
      %v918 = vunpack.c.l.b16 %v380
      %v919 = vunpack.c.l.b16 %v381
      %v920 = vunpack.c.l.b16 %v382
      %v921 = vunpack.c.l.b16 %v383
      %v922 = vunpack.c.l.b16 %v384
      %v923 = vunpack.c.l.b16 %v385
      %v924 = vunpack.c.l.b16 %v386
      %v925 = vunpack.c.l.b16 %v387
      %v926 = vunpack.c.l.b16 %v388
      %v927 = vunpack.c.l.b16 %v389
      %v928 = vunpack.c.l.b16 %v390
      %v929 = vunpack.c.l.b16 %v391
      %v930 = vunpack.c.l.b16 %v392
      %v931 = vunpack.c.l.b16 %v393
      %v932 = vunpack.c.l.b16 %v394
      %v933 = vunpack.c.l.b16 %v395
      %v934 = vunpack.c.l.b16 %v396
      %v935 = vunpack.c.l.b16 %v397
      %v936 = vunpack.c.l.b16 %v398
      %v937 = vunpack.c.l.b16 %v399
      %v938 = vunpack.c.l.b16 %v400
      %v939 = vunpack.c.l.b16 %v401
      %v940 = vunpack.c.l.b16 %v402
      %v941 = vunpack.c.l.b16 %v403
      %v942 = vunpack.c.l.b16 %v404
      %v943 = vunpack.c.l.b16 %v405
      %v944 = vunpack.c.l.b16 %v406
      %v945 = vunpack.c.l.b16 %v407
      %v946 = vunpack.c.l.b16 %v408
      %v947 = vunpack.c.l.b16 %v409
      %v948 = vunpack.c.l.b16 %v410
      %v949 = vunpack.c.l.b16 %v411
      %v950 = vunpack.c.l.b16 %v412
      %v951 = vunpack.c.l.b16 %v413
      %v952 = vunpack.c.l.b16 %v414
      %v953 = vunpack.c.l.b16 %v415
      %v954 = vunpack.c.l.b16 %v416
      %v955 = vunpack.c.l.b16 %v417
      %v956 = vunpack.c.l.b16 %v418
      %v957 = vunpack.c.l.b16 %v419
      %v958 = vunpack.c.l.b16 %v420
      %v959 = vunpack.c.l.b16 %v421
      %v960 = vunpack.c.l.b16 %v422
      %v961 = vunpack.c.l.b16 %v423
      %v962 = vunpack.c.l.b16 %v424
      %v963 = vunpack.c.l.b16 %v425
      %v964 = vunpack.c.l.b16 %v426
      %v965 = vunpack.c.l.b16 %v427
      %v966 = vunpack.c.l.b16 %v428
      %v967 = vunpack.c.l.b16 %v429
      %v968 = vunpack.c.l.b16 %v430
      %v969 = vunpack.c.l.b16 %v431
      %v970 = vunpack.c.l.b16 %v432
      %v971 = vunpack.c.l.b16 %v433
      %v972 = vunpack.c.l.b16 %v434
      %v973 = vunpack.c.l.b16 %v435
      %v974 = vunpack.c.l.b16 %v436
      %v975 = vunpack.c.l.b16 %v437
      %v976 = vunpack.c.l.b16 %v438
      %v977 = vunpack.c.l.b16 %v439
      %v978 = vunpack.c.l.b16 %v440
      %v979 = vunpack.c.l.b16 %v441
      %v980 = vunpack.c.l.b16 %v442
      %v981 = vunpack.c.l.b16 %v443
      %v982 = vunpack.c.l.b16 %v444
      %v983 = vunpack.c.l.b16 %v445
      %v984 = vunpack.c.l.b16 %v446
      %v985 = vunpack.c.l.b16 %v447
      %v986 = vunpack.c.l.b16 %v448
      %v987 = vunpack.c.l.b16 %v449
      %v988 = vunpack.c.l.b16 %v450
      %v989 = vunpack.c.l.b16 %v451
      %v990 = vunpack.c.l.b16 %v452
      %v991 = vunpack.c.l.b16 %v453
      %v992 = vunpack.c.l.b16 %v454
      %v993 = vunpack.c.l.b16 %v455
      %v994 = vunpack.c.l.b16 %v456
      %v995 = vunpack.c.l.b16 %v457
      %v996 = vunpack.c.l.b16 %v458
      %v997 = vunpack.c.l.b16 %v459
      %v998 = vunpack.c.l.b16 %v460
      %v999 = vunpack.c.l.b16 %v461
      %v1000 = vunpack.c.l.b16 %v462
      %v1001 = vunpack.c.l.b16 %v463
      %v1002 = vunpack.c.l.b16 %v464
      %v1003 = vunpack.c.l.b16 %v465
      %v1004 = vunpack.c.l.b16 %v466
      %v1005 = vunpack.c.l.b16 %v467
      %v1006 = vunpack.c.l.b16 %v468
      %v1007 = vunpack.c.l.b16 %v469
      %v1008 = vunpack.c.l.b16 %v470
      %v1009 = vunpack.c.l.b16 %v471
      %v1010 = vunpack.c.l.b16 %v472
      %v1011 = vunpack.c.l.b16 %v473
      %v1012 = vunpack.c.l.b16 %v474
      %v1013 = vunpack.c.l.b16 %v475
      %v1014 = vunpack.c.l.b16 %v476
      %v1015 = vunpack.c.l.b16 %v477
      %v1016 = vunpack.c.l.b16 %v478
      %v1017 = vunpack.c.l.b16 %v479
      %v1018 = vunpack.c.l.b16 %v480
      %v1019 = vunpack.c.l.b16 %v481
      %v1020 = vunpack.c.l.b16 %v482
      %v1021 = vunpack.c.l.b16 %v483
      %v1022 = vunpack.c.l.b16 %v484
      %v1023 = vunpack.c.l.b16 %v485
      %v1024 = vunpack.c.l.b16 %v486
      %v1025 = vunpack.c.l.b16 %v487
      %v1026 = vunpack.c.l.b16 %v488
      %v1027 = vunpack.c.l.b16 %v489
      %v1028 = vunpack.c.l.b16 %v490
      %v1029 = vunpack.c.l.b16 %v491
      %v1030 = vunpack.c.l.b16 %v492
      %v1031 = vunpack.c.l.b16 %v493
      %v1032 = vunpack.c.l.b16 %v494
      %v1033 = vunpack.c.l.b16 %v495
      %v1034 = vunpack.c.l.b16 %v496
      %v1035 = vunpack.c.l.b16 %v497
      %v1036 = vunpack.c.l.b16 %v498
      %v1037 = vunpack.c.l.b16 %v499
      %v1038 = vunpack.c.l.b16 %v500
      %v1039 = vunpack.c.l.b16 %v501
      %v1040 = vunpack.c.l.b16 %v502
      %v1041 = vunpack.c.l.b16 %v503
      %v1042 = vunpack.c.l.b16 %v504
      %v1043 = vunpack.c.l.b16 %v505
      %v1044 = vunpack.c.l.b16 %v506
      %v1045 = vunpack.c.l.b16 %v507
      %v1046 = vunpack.c.l.b16 %v508
      %v1047 = vunpack.c.l.b16 %v509
      %v1048 = vunpack.c.l.b16 %v510
      %v1049 = vunpack.c.l.b16 %v511
      %v1050 = vunpack.c.l.b16 %v512
      %v1051 = vunpack.c.l.b16 %v513
      %v1052 = vunpack.c.l.b16 %v514
      %v1053 = vunpack.c.l.b16 %v515
      %v1054 = vunpack.c.l.b16 %v516
      %v1055 = vunpack.c.l.b16 %v517
      %v1056 = vunpack.c.l.b16 %v518
      %v1057 = vunpack.c.l.b16 %v519
      %v1058 = vunpack.c.l.b16 %v520
      %v1059 = vunpack.c.l.b16 %v521
      %v1060 = vunpack.c.l.b16 %v522
      %v1061 = vunpack.c.l.b16 %v523
      %v1062 = vunpack.c.l.b16 %v524
      %v1063 = vunpack.c.l.b16 %v525
      %v1064 = vunpack.c.l.b16 %v526
      %v1065 = vunpack.c.l.b16 %v527
      %v1066 = vunpack.c.l.b16 %v528
      %v1067 = vunpack.c.l.b16 %v529
      %v1068 = vunpack.c.l.b16 %v530
      %v1069 = vunpack.c.l.b16 %v531
      %v1070 = vunpack.c.l.b16 %v532
      %v1071 = vunpack.c.l.b16 %v533
      %v1072 = vunpack.c.l.b16 %v534
      %v1073 = vunpack.c.l.b16 %v535
      %v1074 = vunpack.c.l.b16 %v536
      %v1075 = vunpack.c.l.b16 %v537
      %v1076 = vunpack.c.l.b16 %v538
      %v1077 = vpack.c.b16 %v822, %v821
      %v1078 = vpack.c.b16 %v824, %v823
      %v1079 = vpack.c.b16 %v826, %v825
      %v1080 = vpack.c.b16 %v828, %v827
      %v1081 = vpack.c.b16 %v830, %v829
      %v1082 = vpack.c.b16 %v832, %v831
      %v1083 = vpack.c.b16 %v834, %v833
      %v1084 = vpack.c.b16 %v836, %v835
      %v1085 = vpack.c.b16 %v838, %v837
      %v1086 = vpack.c.b16 %v840, %v839
      %v1087 = vpack.c.b16 %v842, %v841
      %v1088 = vpack.c.b16 %v844, %v843
      %v1089 = vpack.c.b16 %v846, %v845
      %v1090 = vpack.c.b16 %v848, %v847
      %v1091 = vpack.c.b16 %v850, %v849
      %v1092 = vpack.c.b16 %v852, %v851
      %v1093 = vpack.c.b16 %v854, %v853
      %v1094 = vpack.c.b16 %v856, %v855
      %v1095 = vpack.c.b16 %v858, %v857
      %v1096 = vpack.c.b16 %v860, %v859
      %v1097 = vpack.c.b16 %v862, %v861
      %v1098 = vpack.c.b16 %v864, %v863
      %v1099 = vpack.c.b16 %v866, %v865
      %v1100 = vpack.c.b16 %v868, %v867
      %v1101 = vpack.c.b16 %v870, %v869
      %v1102 = vpack.c.b16 %v872, %v871
      %v1103 = vpack.c.b16 %v874, %v873
      %v1104 = vpack.c.b16 %v876, %v875
      %v1105 = vpack.c.b16 %v878, %v877
      %v1106 = vpack.c.b16 %v880, %v879
      %v1107 = vpack.c.b16 %v882, %v881
      %v1108 = vpack.c.b16 %v884, %v883
      %v1109 = vpack.c.b16 %v886, %v885
      %v1110 = vpack.c.b16 %v888, %v887
      %v1111 = vpack.c.b16 %v890, %v889
      %v1112 = vpack.c.b16 %v892, %v891
      %v1113 = vpack.c.b16 %v894, %v893
      %v1114 = vpack.c.b16 %v896, %v895
      %v1115 = vpack.c.b16 %v898, %v897
      %v1116 = vpack.c.b16 %v900, %v899
      %v1117 = vpack.c.b16 %v902, %v901
      %v1118 = vpack.c.b16 %v904, %v903
      %v1119 = vpack.c.b16 %v906, %v905
      %v1120 = vpack.c.b16 %v908, %v907
      %v1121 = vpack.c.b16 %v910, %v909
      %v1122 = vpack.c.b16 %v912, %v911
      %v1123 = vpack.c.b16 %v914, %v913
      %v1124 = vpack.c.b16 %v916, %v915
      %v1125 = vpack.c.b16 %v918, %v917
      %v1126 = vpack.c.b16 %v920, %v919
      %v1127 = vpack.c.b16 %v922, %v921
      %v1128 = vpack.c.b16 %v924, %v923
      %v1129 = vpack.c.b16 %v926, %v925
      %v1130 = vpack.c.b16 %v928, %v927
      %v1131 = vpack.c.b16 %v930, %v929
      %v1132 = vpack.c.b16 %v932, %v931
      %v1133 = vpack.c.b16 %v934, %v933
      %v1134 = vpack.c.b16 %v936, %v935
      %v1135 = vpack.c.b16 %v938, %v937
      %v1136 = vpack.c.b16 %v940, %v939
      %v1137 = vpack.c.b16 %v942, %v941
      %v1138 = vpack.c.b16 %v944, %v943
      %v1139 = vpack.c.b16 %v946, %v945
      %v1140 = vpack.c.b16 %v948, %v947
      %v1141 = vpack.c.b16 %v950, %v949
      %v1142 = vpack.c.b16 %v952, %v951
      %v1143 = vpack.c.b16 %v954, %v953
      %v1144 = vpack.c.b16 %v956, %v955
      %v1145 = vpack.c.b16 %v958, %v957
      %v1146 = vpack.c.b16 %v960, %v959
      %v1147 = vpack.c.b16 %v962, %v961
      %v1148 = vpack.c.b16 %v964, %v963
      %v1149 = vpack.c.b16 %v966, %v965
      %v1150 = vpack.c.b16 %v968, %v967
      %v1151 = vpack.c.b16 %v970, %v969
      %v1152 = vpack.c.b16 %v972, %v971
      %v1153 = vpack.c.b16 %v974, %v973
      %v1154 = vpack.c.b16 %v976, %v975
      %v1155 = vpack.c.b16 %v978, %v977
      %v1156 = vpack.c.b16 %v980, %v979
      %v1157 = vpack.c.b16 %v982, %v981
      %v1158 = vpack.c.b16 %v984, %v983
      %v1159 = vpack.c.b16 %v986, %v985
      %v1160 = vpack.c.b16 %v988, %v987
      %v1161 = vpack.c.b16 %v990, %v989
      %v1162 = vpack.c.b16 %v992, %v991
      %v1163 = vpack.c.b16 %v994, %v993
      %v1164 = vpack.c.b16 %v996, %v995
      %v1165 = vpack.c.b16 %v998, %v997
      %v1166 = vpack.c.b16 %v1000, %v999
      %v1167 = vpack.c.b16 %v1002, %v1001
      %v1168 = vpack.c.b16 %v1004, %v1003
      %v1169 = vpack.c.b16 %v1006, %v1005
      %v1170 = vpack.c.b16 %v1008, %v1007
      %v1171 = vpack.c.b16 %v1010, %v1009
      %v1172 = vpack.c.b16 %v1012, %v1011
      %v1173 = vpack.c.b16 %v1014, %v1013
      %v1174 = vpack.c.b16 %v1016, %v1015
      %v1175 = vpack.c.b16 %v1018, %v1017
      %v1176 = vpack.c.b16 %v1020, %v1019
      %v1177 = vpack.c.b16 %v1022, %v1021
      %v1178 = vpack.c.b16 %v1024, %v1023
      %v1179 = vpack.c.b16 %v1026, %v1025
      %v1180 = vpack.c.b16 %v1028, %v1027
      %v1181 = vpack.c.b16 %v1030, %v1029
      %v1182 = vpack.c.b16 %v1032, %v1031
      %v1183 = vpack.c.b16 %v1034, %v1033
      %v1184 = vpack.c.b16 %v1036, %v1035
      %v1185 = vpack.c.b16 %v1038, %v1037
      %v1186 = vpack.c.b16 %v1040, %v1039
      %v1187 = vpack.c.b16 %v1042, %v1041
      %v1188 = vpack.c.b16 %v1044, %v1043
      %v1189 = vpack.c.b16 %v1046, %v1045
      %v1190 = vpack.c.b16 %v1048, %v1047
      %v1191 = vpack.c.b16 %v1050, %v1049
      %v1192 = vpack.c.b16 %v1052, %v1051
      %v1193 = vpack.c.b16 %v1054, %v1053
      %v1194 = vpack.c.b16 %v1056, %v1055
      %v1195 = vpack.c.b16 %v1058, %v1057
      %v1196 = vpack.c.b16 %v1060, %v1059
      %v1197 = vpack.c.b16 %v1062, %v1061
      %v1198 = vpack.c.b16 %v1064, %v1063
      %v1199 = vpack.c.b16 %v1066, %v1065
      %v1200 = vpack.c.b16 %v1068, %v1067
      %v1201 = vpack.c.b16 %v1070, %v1069
      %v1202 = vpack.c.b16 %v1072, %v1071
      %v1203 = vpack.c.b16 %v1074, %v1073
      %v1204 = vpack.c.b16 %v1076, %v1075
      %vm1205 = vcmask 23552
      %v1207 = vsel %vm1205, %v1077, 0
      %v1210 = vsel %vm1205, %v1078, 0
      %v1213 = vsel %vm1205, %v1079, 0
      %v1216 = vsel %vm1205, %v1080, 0
      %v1219 = vsel %vm1205, %v1081, 0
      %v1222 = vsel %vm1205, %v1082, 0
      %v1225 = vsel %vm1205, %v1083, 0
      %v1228 = vsel %vm1205, %v1084, 0
      %v1231 = vsel %vm1205, %v1085, 0
      %v1234 = vsel %vm1205, %v1086, 0
      %v1237 = vsel %vm1205, %v1087, 0
      %v1240 = vsel %vm1205, %v1088, 0
      %v1243 = vsel %vm1205, %v1089, 0
      %v1246 = vsel %vm1205, %v1090, 0
      %v1249 = vsel %vm1205, %v1091, 0
      %v1252 = vsel %vm1205, %v1092, 0
      %v1255 = vsel %vm1205, %v1093, 0
      %v1258 = vsel %vm1205, %v1094, 0
      %v1261 = vsel %vm1205, %v1095, 0
      %v1264 = vsel %vm1205, %v1096, 0
      %v1267 = vsel %vm1205, %v1097, 0
      %v1270 = vsel %vm1205, %v1098, 0
      %v1273 = vsel %vm1205, %v1099, 0
      %v1276 = vsel %vm1205, %v1100, 0
      %v1279 = vsel %vm1205, %v1101, 0
      %v1282 = vsel %vm1205, %v1102, 0
      %v1285 = vsel %vm1205, %v1103, 0
      %v1288 = vsel %vm1205, %v1104, 0
      %v1291 = vsel %vm1205, %v1105, 0
      %v1294 = vsel %vm1205, %v1106, 0
      %v1297 = vsel %vm1205, %v1107, 0
      %v1300 = vsel %vm1205, %v1108, 0
      %v1303 = vsel %vm1205, %v1109, 0
      %v1306 = vsel %vm1205, %v1110, 0
      %v1309 = vsel %vm1205, %v1111, 0
      %v1312 = vsel %vm1205, %v1112, 0
      %v1315 = vsel %vm1205, %v1113, 0
      %v1318 = vsel %vm1205, %v1114, 0
      %v1321 = vsel %vm1205, %v1115, 0
      %v1324 = vsel %vm1205, %v1116, 0
      %v1327 = vsel %vm1205, %v1117, 0
      %v1330 = vsel %vm1205, %v1118, 0
      %v1333 = vsel %vm1205, %v1119, 0
      %v1336 = vsel %vm1205, %v1120, 0
      %v1339 = vsel %vm1205, %v1121, 0
      %v1342 = vsel %vm1205, %v1122, 0
      %v1345 = vsel %vm1205, %v1123, 0
      %v1348 = vsel %vm1205, %v1124, 0
      %v1351 = vsel %vm1205, %v1125, 0
      %v1354 = vsel %vm1205, %v1126, 0
      %v1357 = vsel %vm1205, %v1127, 0
      %v1360 = vsel %vm1205, %v1128, 0
      %v1363 = vsel %vm1205, %v1129, 0
      %v1366 = vsel %vm1205, %v1130, 0
      %v1369 = vsel %vm1205, %v1131, 0
      %v1372 = vsel %vm1205, %v1132, 0
      %v1375 = vsel %vm1205, %v1133, 0
      %v1378 = vsel %vm1205, %v1134, 0
      %v1381 = vsel %vm1205, %v1135, 0
      %v1384 = vsel %vm1205, %v1136, 0
      %v1387 = vsel %vm1205, %v1137, 0
      %v1390 = vsel %vm1205, %v1138, 0
      %v1393 = vsel %vm1205, %v1139, 0
      %v1396 = vsel %vm1205, %v1140, 0
      %v1399 = vsel %vm1205, %v1141, 0
      %v1402 = vsel %vm1205, %v1142, 0
      %v1405 = vsel %vm1205, %v1143, 0
      %v1408 = vsel %vm1205, %v1144, 0
      %v1411 = vsel %vm1205, %v1145, 0
      %v1414 = vsel %vm1205, %v1146, 0
      %v1417 = vsel %vm1205, %v1147, 0
      %v1420 = vsel %vm1205, %v1148, 0
      %v1423 = vsel %vm1205, %v1149, 0
      %v1426 = vsel %vm1205, %v1150, 0
      %v1429 = vsel %vm1205, %v1151, 0
      %v1432 = vsel %vm1205, %v1152, 0
      %v1435 = vsel %vm1205, %v1153, 0
      %v1438 = vsel %vm1205, %v1154, 0
      %v1441 = vsel %vm1205, %v1155, 0
      %v1444 = vsel %vm1205, %v1156, 0
      %v1447 = vsel %vm1205, %v1157, 0
      %v1450 = vsel %vm1205, %v1158, 0
      %v1453 = vsel %vm1205, %v1159, 0
      %v1456 = vsel %vm1205, %v1160, 0
      %v1459 = vsel %vm1205, %v1161, 0
      %v1462 = vsel %vm1205, %v1162, 0
      %v1465 = vsel %vm1205, %v1163, 0
      %v1468 = vsel %vm1205, %v1164, 0
      %v1471 = vsel %vm1205, %v1165, 0
      %v1474 = vsel %vm1205, %v1166, 0
      %v1477 = vsel %vm1205, %v1167, 0
      %v1480 = vsel %vm1205, %v1168, 0
      %v1483 = vsel %vm1205, %v1169, 0
      %v1486 = vsel %vm1205, %v1170, 0
      %v1489 = vsel %vm1205, %v1171, 0
      %v1492 = vsel %vm1205, %v1172, 0
      %v1495 = vsel %vm1205, %v1173, 0
      %v1498 = vsel %vm1205, %v1174, 0
      %v1501 = vsel %vm1205, %v1175, 0
      %v1504 = vsel %vm1205, %v1176, 0
      %v1507 = vsel %vm1205, %v1177, 0
      %v1510 = vsel %vm1205, %v1178, 0
      %v1513 = vsel %vm1205, %v1179, 0
      %v1516 = vsel %vm1205, %v1180, 0
      %v1519 = vsel %vm1205, %v1181, 0
      %v1522 = vsel %vm1205, %v1182, 0
      %v1525 = vsel %vm1205, %v1183, 0
      %v1528 = vsel %vm1205, %v1184, 0
      %v1531 = vsel %vm1205, %v1185, 0
      %v1534 = vsel %vm1205, %v1186, 0
      %v1537 = vsel %vm1205, %v1187, 0
      %v1540 = vsel %vm1205, %v1188, 0
      %v1543 = vsel %vm1205, %v1189, 0
      %v1546 = vsel %vm1205, %v1190, 0
      %v1549 = vsel %vm1205, %v1191, 0
      %v1552 = vsel %vm1205, %v1192, 0
      %v1555 = vsel %vm1205, %v1193, 0
      %v1558 = vsel %vm1205, %v1194, 0
      %v1561 = vsel %vm1205, %v1195, 0
      %v1564 = vsel %vm1205, %v1196, 0
      %v1567 = vsel %vm1205, %v1197, 0
      %v1570 = vsel %vm1205, %v1198, 0
      %v1573 = vsel %vm1205, %v1199, 0
      %v1576 = vsel %vm1205, %v1200, 0
      %v1579 = vsel %vm1205, %v1201, 0
      %v1582 = vsel %vm1205, %v1202, 0
      %v1585 = vsel %vm1205, %v1203, 0
      %v1588 = vsel %vm1205, %v1204, 0
      %vm1590 = vcmask 1040384
      %vm1591 = vcmask 1041408
      %v1592 = vsel %vm1590, 4294967295, 65535
      %v1593 = vsel %vm1591, %v1592, 0
      %v1595 = vand.u32 %v539, %v1593
      %1597 = vmatprep.subr.bf16.mxu0 0
      %1598 = vmatpush1.bf16.msra.mxu0 %v1595
      %1599 = vmatprep.subr.bf16.mxu0 0
      %1600 = vmatpush1.bf16.msra.mxu0 0
      %1601 = vmatprep.subr.bf16.mxu0 0
      %1602 = vmatpush1.bf16.msra.mxu0 0
      %1603 = vmatprep.subr.bf16.mxu0 0
      %1604 = vmatpush1.bf16.msra.mxu0 0
      %1605 = vmatprep.subr.bf16.mxu0 0
      %1606 = vmatpush1.bf16.msra.mxu0 0
      %1607 = vmatprep.subr.bf16.mxu0 0
      %1608 = vmatpush1.bf16.msra.mxu0 0
      %1609 = vmatprep.subr.bf16.mxu0 0
      %1610 = vmatpush1.bf16.msra.mxu0 0
      %1611 = vmatprep.subr.bf16.mxu0 0
      %1612 = vmatpush1.bf16.msra.mxu0 0
      %1613 = vmatprep.subr.bf16.mxu0 0
      %1614 = vmatpush1.bf16.msra.mxu0 0
      %1615 = vmatprep.subr.bf16.mxu0 0
      %1616 = vmatpush1.bf16.msra.mxu0 0
      %1617 = vmatprep.subr.bf16.mxu0 0
      %1618 = vmatpush1.bf16.msra.mxu0 0
      %1619 = vmatprep.subr.bf16.mxu0 0
      %1620 = vmatpush1.bf16.msra.mxu0 0
      %1621 = vmatprep.subr.bf16.mxu0 0
      %1622 = vmatpush1.bf16.msra.mxu0 0
      %1623 = vmatprep.subr.bf16.mxu0 0
      %1624 = vmatpush1.bf16.msra.mxu0 0
      %1625 = vmatprep.subr.bf16.mxu0 0
      %1626 = vmatpush1.bf16.msra.mxu0 0
      %1627 = vmatprep.subr.bf16.mxu0 0
      %1628 = vmatpush1.bf16.msra.mxu0 0
      %1629 = vmatprep.mubr.bf16.mxu0 0
      %1630 = vmatmul.mubr.bf16.gmra.mrb[0].mxu0 %v1207
      %v1631 = vpop.f32.mrb[0].mxu0
      %v1632 = vadd.f32 %v563, %v1631
      %v1633 = vpop.f32.mrb[0].mxu0
      %v1634 = vpop.f32.mrb[0].mxu0
      %v1635 = vadd.f32 %v563, %v1634
      %v1636 = vpop.f32.mrb[0].mxu0
      %1637 = vmatprep.mubr.bf16.mxu0 0
      %1638 = vmatmul.mubr.bf16.gmra.mrb[0].mxu0 %v1210
      %v1639 = vpop.f32.mrb[0].mxu0
      %v1640 = vadd.f32 %v563, %v1639
      %v1641 = vpop.f32.mrb[0].mxu0
      %v1642 = vpop.f32.mrb[0].mxu0
      %v1643 = vadd.f32 %v563, %v1642
      %v1644 = vpop.f32.mrb[0].mxu0
      %1645 = vmatprep.mubr.bf16.mxu0 0
      %1646 = vmatmul.mubr.bf16.gmra.mrb[0].mxu0 %v1213
      %v1647 = vpop.f32.mrb[0].mxu0
      %v1648 = vadd.f32 %v563, %v1647
      %v1649 = vpop.f32.mrb[0].mxu0
      %v1650 = vpop.f32.mrb[0].mxu0
      %v1651 = vadd.f32 %v563, %v1650
      %v1652 = vpop.f32.mrb[0].mxu0
      %1653 = vmatprep.mubr.bf16.mxu0 0
      %1654 = vmatmul.mubr.bf16.gmra.mrb[0].mxu0 %v1216
      %v1655 = vpop.f32.mrb[0].mxu0
      %v1656 = vadd.f32 %v563, %v1655
      %v1657 = vpop.f32.mrb[0].mxu0
      %v1658 = vpop.f32.mrb[0].mxu0
      %v1659 = vadd.f32 %v563, %v1658
      %v1660 = vpop.f32.mrb[0].mxu0
      %1661 = vmatprep.mubr.bf16.mxu0 0
      %1662 = vmatmul.mubr.bf16.gmra.mrb[0].mxu0 %v1219
      %v1663 = vpop.f32.mrb[0].mxu0
      %v1664 = vadd.f32 %v563, %v1663
      %v1665 = vpop.f32.mrb[0].mxu0
      %v1666 = vpop.f32.mrb[0].mxu0
      %v1667 = vadd.f32 %v563, %v1666
      %v1668 = vpop.f32.mrb[0].mxu0
      %1669 = vmatprep.mubr.bf16.mxu0 0
      %1670 = vmatmul.mubr.bf16.gmra.mrb[0].mxu0 %v1222
      %v1671 = vpop.f32.mrb[0].mxu0
      %v1672 = vadd.f32 %v563, %v1671
      %v1673 = vpop.f32.mrb[0].mxu0
      %v1674 = vpop.f32.mrb[0].mxu0
      %v1675 = vadd.f32 %v563, %v1674
      %v1676 = vpop.f32.mrb[0].mxu0
      %1677 = vmatprep.mubr.bf16.mxu0 0
      %1678 = vmatmul.mubr.bf16.gmra.mrb[0].mxu0 %v1225
      %v1679 = vpop.f32.mrb[0].mxu0
      %v1680 = vadd.f32 %v563, %v1679
      %v1681 = vpop.f32.mrb[0].mxu0
      %v1682 = vpop.f32.mrb[0].mxu0
      %v1683 = vadd.f32 %v563, %v1682
      %v1684 = vpop.f32.mrb[0].mxu0
      %1685 = vmatprep.mubr.bf16.mxu0 0
      %1686 = vmatmul.mubr.bf16.gmra.mrb[0].mxu0 %v1228
      %v1687 = vpop.f32.mrb[0].mxu0
      %v1688 = vadd.f32 %v563, %v1687
      %v1689 = vpop.f32.mrb[0].mxu0
      %v1690 = vpop.f32.mrb[0].mxu0
      %v1691 = vadd.f32 %v563, %v1690
      %v1692 = vpop.f32.mrb[0].mxu0
      %1693 = vmatprep.mubr.bf16.mxu0 0
      %1694 = vmatmul.mubr.bf16.gmra.mrb[0].mxu0 %v1231
      %v1695 = vpop.f32.mrb[0].mxu0
      %v1696 = vadd.f32 %v563, %v1695
      %v1697 = vpop.f32.mrb[0].mxu0
      %v1698 = vpop.f32.mrb[0].mxu0
      %v1699 = vadd.f32 %v563, %v1698
      %v1700 = vpop.f32.mrb[0].mxu0
      %1701 = vmatprep.mubr.bf16.mxu0 0
      %1702 = vmatmul.mubr.bf16.gmra.mrb[0].mxu0 %v1234
      %v1703 = vpop.f32.mrb[0].mxu0
      %v1704 = vadd.f32 %v563, %v1703
      %v1705 = vpop.f32.mrb[0].mxu0
      %v1706 = vpop.f32.mrb[0].mxu0
      %v1707 = vadd.f32 %v563, %v1706
      %v1708 = vpop.f32.mrb[0].mxu0
      %1709 = vmatprep.mubr.bf16.mxu0 0
      %1710 = vmatmul.mubr.bf16.gmra.mrb[0].mxu0 %v1237
      %v1711 = vpop.f32.mrb[0].mxu0
      %v1712 = vadd.f32 %v563, %v1711
      %v1713 = vpop.f32.mrb[0].mxu0
      %v1714 = vpop.f32.mrb[0].mxu0
      %v1715 = vadd.f32 %v563, %v1714
      %v1716 = vpop.f32.mrb[0].mxu0
      %1717 = vmatprep.mubr.bf16.mxu0 0
      %1718 = vmatmul.mubr.bf16.gmra.mrb[0].mxu0 %v1240
      %v1719 = vpop.f32.mrb[0].mxu0
      %v1720 = vadd.f32 %v563, %v1719
      %v1721 = vpop.f32.mrb[0].mxu0
      %v1722 = vpop.f32.mrb[0].mxu0
      %v1723 = vadd.f32 %v563, %v1722
      %v1724 = vpop.f32.mrb[0].mxu0
      %1725 = vmatprep.mubr.bf16.mxu0 0
      %1726 = vmatmul.mubr.bf16.gmra.mrb[0].mxu0 %v1243
      %v1727 = vpop.f32.mrb[0].mxu0
      %v1728 = vadd.f32 %v563, %v1727
      %v1729 = vpop.f32.mrb[0].mxu0
      %v1730 = vpop.f32.mrb[0].mxu0
      %v1731 = vadd.f32 %v563, %v1730
      %v1732 = vpop.f32.mrb[0].mxu0
      %1733 = vmatprep.mubr.bf16.mxu0 0
      %1734 = vmatmul.mubr.bf16.gmra.mrb[0].mxu0 %v1246
      %v1735 = vpop.f32.mrb[0].mxu0
      %v1736 = vadd.f32 %v563, %v1735
      %v1737 = vpop.f32.mrb[0].mxu0
      %v1738 = vpop.f32.mrb[0].mxu0
      %v1739 = vadd.f32 %v563, %v1738
      %v1740 = vpop.f32.mrb[0].mxu0
      %1741 = vmatprep.mubr.bf16.mxu0 0
      %1742 = vmatmul.mubr.bf16.gmra.mrb[0].mxu0 %v1249
      %v1743 = vpop.f32.mrb[0].mxu0
      %v1744 = vadd.f32 %v563, %v1743
      %v1745 = vpop.f32.mrb[0].mxu0
      %v1746 = vpop.f32.mrb[0].mxu0
      %v1747 = vadd.f32 %v563, %v1746
      %v1748 = vpop.f32.mrb[0].mxu0
      %1749 = vmatprep.mubr.bf16.mxu0 0
      %1750 = vmatmul.mubr.bf16.gmra.mrb[0].mxu0 %v1252
      %v1751 = vpop.f32.mrb[0].mxu0
      %v1752 = vadd.f32 %v563, %v1751
      %v1753 = vpop.f32.mrb[0].mxu0
      %v1754 = vpop.f32.mrb[0].mxu0
      %v1755 = vadd.f32 %v563, %v1754
      %v1756 = vpop.f32.mrb[0].mxu0
      %1757 = vmatprep.mubr.bf16.mxu0 0
      %1758 = vmatmul.mubr.bf16.gmra.mrb[0].mxu0 %v1255
      %v1759 = vpop.f32.mrb[0].mxu0
      %v1760 = vadd.f32 %v563, %v1759
      %v1761 = vpop.f32.mrb[0].mxu0
      %v1762 = vpop.f32.mrb[0].mxu0
      %v1763 = vadd.f32 %v563, %v1762
      %v1764 = vpop.f32.mrb[0].mxu0
      %1765 = vmatprep.mubr.bf16.mxu0 0
      %1766 = vmatmul.mubr.bf16.gmra.mrb[0].mxu0 %v1258
      %v1767 = vpop.f32.mrb[0].mxu0
      %v1768 = vadd.f32 %v563, %v1767
      %v1769 = vpop.f32.mrb[0].mxu0
      %v1770 = vpop.f32.mrb[0].mxu0
      %v1771 = vadd.f32 %v563, %v1770
      %v1772 = vpop.f32.mrb[0].mxu0
      %1773 = vmatprep.mubr.bf16.mxu0 0
      %1774 = vmatmul.mubr.bf16.gmra.mrb[0].mxu0 %v1261
      %v1775 = vpop.f32.mrb[0].mxu0
      %v1776 = vadd.f32 %v563, %v1775
      %v1777 = vpop.f32.mrb[0].mxu0
      %v1778 = vpop.f32.mrb[0].mxu0
      %v1779 = vadd.f32 %v563, %v1778
      %v1780 = vpop.f32.mrb[0].mxu0
      %1781 = vmatprep.mubr.bf16.mxu0 0
      %1782 = vmatmul.mubr.bf16.gmra.mrb[0].mxu0 %v1264
      %v1783 = vpop.f32.mrb[0].mxu0
      %v1784 = vadd.f32 %v563, %v1783
      %v1785 = vpop.f32.mrb[0].mxu0
      %v1786 = vpop.f32.mrb[0].mxu0
      %v1787 = vadd.f32 %v563, %v1786
      %v1788 = vpop.f32.mrb[0].mxu0
      %1789 = vmatprep.mubr.bf16.mxu0 0
      %1790 = vmatmul.mubr.bf16.gmra.mrb[0].mxu0 %v1267
      %v1791 = vpop.f32.mrb[0].mxu0
      %v1792 = vadd.f32 %v563, %v1791
      %v1793 = vpop.f32.mrb[0].mxu0
      %v1794 = vpop.f32.mrb[0].mxu0
      %v1795 = vadd.f32 %v563, %v1794
      %v1796 = vpop.f32.mrb[0].mxu0
      %1797 = vmatprep.mubr.bf16.mxu0 0
      %1798 = vmatmul.mubr.bf16.gmra.mrb[0].mxu0 %v1270
      %v1799 = vpop.f32.mrb[0].mxu0
      %v1800 = vadd.f32 %v563, %v1799
      %v1801 = vpop.f32.mrb[0].mxu0
      %v1802 = vpop.f32.mrb[0].mxu0
      %v1803 = vadd.f32 %v563, %v1802
      %v1804 = vpop.f32.mrb[0].mxu0
      %1805 = vmatprep.mubr.bf16.mxu0 0
      %1806 = vmatmul.mubr.bf16.gmra.mrb[0].mxu0 %v1273
      %v1807 = vpop.f32.mrb[0].mxu0
      %v1808 = vadd.f32 %v563, %v1807
      %v1809 = vpop.f32.mrb[0].mxu0
      %v1810 = vpop.f32.mrb[0].mxu0
      %v1811 = vadd.f32 %v563, %v1810
      %v1812 = vpop.f32.mrb[0].mxu0
      %1813 = vmatprep.mubr.bf16.mxu0 0
      %1814 = vmatmul.mubr.bf16.gmra.mrb[0].mxu0 %v1276
      %v1815 = vpop.f32.mrb[0].mxu0
      %v1816 = vadd.f32 %v563, %v1815
      %v1817 = vpop.f32.mrb[0].mxu0
      %v1818 = vpop.f32.mrb[0].mxu0
      %v1819 = vadd.f32 %v563, %v1818
      %v1820 = vpop.f32.mrb[0].mxu0
      %1821 = vmatprep.mubr.bf16.mxu0 0
      %1822 = vmatmul.mubr.bf16.gmra.mrb[0].mxu0 %v1279
      %v1823 = vpop.f32.mrb[0].mxu0
      %v1824 = vadd.f32 %v563, %v1823
      %v1825 = vpop.f32.mrb[0].mxu0
      %v1826 = vpop.f32.mrb[0].mxu0
      %v1827 = vadd.f32 %v563, %v1826
      %v1828 = vpop.f32.mrb[0].mxu0
      %1829 = vmatprep.mubr.bf16.mxu0 0
      %1830 = vmatmul.mubr.bf16.gmra.mrb[0].mxu0 %v1282
      %v1831 = vpop.f32.mrb[0].mxu0
      %v1832 = vadd.f32 %v563, %v1831
      %v1833 = vpop.f32.mrb[0].mxu0
      %v1834 = vpop.f32.mrb[0].mxu0
      %v1835 = vadd.f32 %v563, %v1834
      %v1836 = vpop.f32.mrb[0].mxu0
      %1837 = vmatprep.mubr.bf16.mxu0 0
      %1838 = vmatmul.mubr.bf16.gmra.mrb[0].mxu0 %v1285
      %v1839 = vpop.f32.mrb[0].mxu0
      %v1840 = vadd.f32 %v563, %v1839
      %v1841 = vpop.f32.mrb[0].mxu0
      %v1842 = vpop.f32.mrb[0].mxu0
      %v1843 = vadd.f32 %v563, %v1842
      %v1844 = vpop.f32.mrb[0].mxu0
      %1845 = vmatprep.mubr.bf16.mxu0 0
      %1846 = vmatmul.mubr.bf16.gmra.mrb[0].mxu0 %v1288
      %v1847 = vpop.f32.mrb[0].mxu0
      %v1848 = vadd.f32 %v563, %v1847
      %v1849 = vpop.f32.mrb[0].mxu0
      %v1850 = vpop.f32.mrb[0].mxu0
      %v1851 = vadd.f32 %v563, %v1850
      %v1852 = vpop.f32.mrb[0].mxu0
      %1853 = vmatprep.mubr.bf16.mxu0 0
      %1854 = vmatmul.mubr.bf16.gmra.mrb[0].mxu0 %v1291
      %v1855 = vpop.f32.mrb[0].mxu0
      %v1856 = vadd.f32 %v563, %v1855
      %v1857 = vpop.f32.mrb[0].mxu0
      %v1858 = vpop.f32.mrb[0].mxu0
      %v1859 = vadd.f32 %v563, %v1858
      %v1860 = vpop.f32.mrb[0].mxu0
      %1861 = vmatprep.mubr.bf16.mxu0 0
      %1862 = vmatmul.mubr.bf16.gmra.mrb[0].mxu0 %v1294
      %v1863 = vpop.f32.mrb[0].mxu0
      %v1864 = vadd.f32 %v563, %v1863
      %v1865 = vpop.f32.mrb[0].mxu0
      %v1866 = vpop.f32.mrb[0].mxu0
      %v1867 = vadd.f32 %v563, %v1866
      %v1868 = vpop.f32.mrb[0].mxu0
      %1869 = vmatprep.mubr.bf16.mxu0 0
      %1870 = vmatmul.mubr.bf16.gmra.mrb[0].mxu0 %v1297
      %v1871 = vpop.f32.mrb[0].mxu0
      %v1872 = vadd.f32 %v563, %v1871
      %v1873 = vpop.f32.mrb[0].mxu0
      %v1874 = vpop.f32.mrb[0].mxu0
      %v1875 = vadd.f32 %v563, %v1874
      %v1876 = vpop.f32.mrb[0].mxu0
      %1877 = vmatprep.mubr.bf16.mxu0 0
      %1878 = vmatmul.mubr.bf16.gmra.mrb[0].mxu0 %v1300
      %v1879 = vpop.f32.mrb[0].mxu0
      %v1880 = vadd.f32 %v563, %v1879
      %v1881 = vpop.f32.mrb[0].mxu0
      %v1882 = vpop.f32.mrb[0].mxu0
      %v1883 = vadd.f32 %v563, %v1882
      %v1884 = vpop.f32.mrb[0].mxu0
      %1885 = vmatprep.mubr.bf16.mxu0 0
      %1886 = vmatmul.mubr.bf16.gmra.mrb[0].mxu0 %v1303
      %v1887 = vpop.f32.mrb[0].mxu0
      %v1888 = vadd.f32 %v563, %v1887
      %v1889 = vpop.f32.mrb[0].mxu0
      %v1890 = vpop.f32.mrb[0].mxu0
      %v1891 = vadd.f32 %v563, %v1890
      %v1892 = vpop.f32.mrb[0].mxu0
      %1893 = vmatprep.mubr.bf16.mxu0 0
      %1894 = vmatmul.mubr.bf16.gmra.mrb[0].mxu0 %v1306
      %v1895 = vpop.f32.mrb[0].mxu0
      %v1896 = vadd.f32 %v563, %v1895
      %v1897 = vpop.f32.mrb[0].mxu0
      %v1898 = vpop.f32.mrb[0].mxu0
      %v1899 = vadd.f32 %v563, %v1898
      %v1900 = vpop.f32.mrb[0].mxu0
      %1901 = vmatprep.mubr.bf16.mxu0 0
      %1902 = vmatmul.mubr.bf16.gmra.mrb[0].mxu0 %v1309
      %v1903 = vpop.f32.mrb[0].mxu0
      %v1904 = vadd.f32 %v563, %v1903
      %v1905 = vpop.f32.mrb[0].mxu0
      %v1906 = vpop.f32.mrb[0].mxu0
      %v1907 = vadd.f32 %v563, %v1906
      %v1908 = vpop.f32.mrb[0].mxu0
      %1909 = vmatprep.mubr.bf16.mxu0 0
      %1910 = vmatmul.mubr.bf16.gmra.mrb[0].mxu0 %v1312
      %v1911 = vpop.f32.mrb[0].mxu0
      %v1912 = vadd.f32 %v563, %v1911
      %v1913 = vpop.f32.mrb[0].mxu0
      %v1914 = vpop.f32.mrb[0].mxu0
      %v1915 = vadd.f32 %v563, %v1914
      %v1916 = vpop.f32.mrb[0].mxu0
      %1917 = vmatprep.mubr.bf16.mxu0 0
      %1918 = vmatmul.mubr.bf16.gmra.mrb[0].mxu0 %v1315
      %v1919 = vpop.f32.mrb[0].mxu0
      %v1920 = vadd.f32 %v563, %v1919
      %v1921 = vpop.f32.mrb[0].mxu0
      %v1922 = vpop.f32.mrb[0].mxu0
      %v1923 = vadd.f32 %v563, %v1922
      %v1924 = vpop.f32.mrb[0].mxu0
      %1925 = vmatprep.mubr.bf16.mxu0 0
      %1926 = vmatmul.mubr.bf16.gmra.mrb[0].mxu0 %v1318
      %v1927 = vpop.f32.mrb[0].mxu0
      %v1928 = vadd.f32 %v563, %v1927
      %v1929 = vpop.f32.mrb[0].mxu0
      %v1930 = vpop.f32.mrb[0].mxu0
      %v1931 = vadd.f32 %v563, %v1930
      %v1932 = vpop.f32.mrb[0].mxu0
      %1933 = vmatprep.mubr.bf16.mxu0 0
      %1934 = vmatmul.mubr.bf16.gmra.mrb[0].mxu0 %v1321
      %v1935 = vpop.f32.mrb[0].mxu0
      %v1936 = vadd.f32 %v563, %v1935
      %v1937 = vpop.f32.mrb[0].mxu0
      %v1938 = vpop.f32.mrb[0].mxu0
      %v1939 = vadd.f32 %v563, %v1938
      %v1940 = vpop.f32.mrb[0].mxu0
      %1941 = vmatprep.mubr.bf16.mxu0 0
      %1942 = vmatmul.mubr.bf16.gmra.mrb[0].mxu0 %v1324
      %v1943 = vpop.f32.mrb[0].mxu0
      %v1944 = vadd.f32 %v563, %v1943
      %v1945 = vpop.f32.mrb[0].mxu0
      %v1946 = vpop.f32.mrb[0].mxu0
      %v1947 = vadd.f32 %v563, %v1946
      %v1948 = vpop.f32.mrb[0].mxu0
      %1949 = vmatprep.mubr.bf16.mxu0 0
      %1950 = vmatmul.mubr.bf16.gmra.mrb[0].mxu0 %v1327
      %v1951 = vpop.f32.mrb[0].mxu0
      %v1952 = vadd.f32 %v563, %v1951
      %v1953 = vpop.f32.mrb[0].mxu0
      %v1954 = vpop.f32.mrb[0].mxu0
      %v1955 = vadd.f32 %v563, %v1954
      %v1956 = vpop.f32.mrb[0].mxu0
      %1957 = vmatprep.mubr.bf16.mxu0 0
      %1958 = vmatmul.mubr.bf16.gmra.mrb[0].mxu0 %v1330
      %v1959 = vpop.f32.mrb[0].mxu0
      %v1960 = vadd.f32 %v563, %v1959
      %v1961 = vpop.f32.mrb[0].mxu0
      %v1962 = vpop.f32.mrb[0].mxu0
      %v1963 = vadd.f32 %v563, %v1962
      %v1964 = vpop.f32.mrb[0].mxu0
      %1965 = vmatprep.mubr.bf16.mxu0 0
      %1966 = vmatmul.mubr.bf16.gmra.mrb[0].mxu0 %v1333
      %v1967 = vpop.f32.mrb[0].mxu0
      %v1968 = vadd.f32 %v563, %v1967
      %v1969 = vpop.f32.mrb[0].mxu0
      %v1970 = vpop.f32.mrb[0].mxu0
      %v1971 = vadd.f32 %v563, %v1970
      %v1972 = vpop.f32.mrb[0].mxu0
      %1973 = vmatprep.mubr.bf16.mxu0 0
      %1974 = vmatmul.mubr.bf16.gmra.mrb[0].mxu0 %v1336
      %v1975 = vpop.f32.mrb[0].mxu0
      %v1976 = vadd.f32 %v563, %v1975
      %v1977 = vpop.f32.mrb[0].mxu0
      %v1978 = vpop.f32.mrb[0].mxu0
      %v1979 = vadd.f32 %v563, %v1978
      %v1980 = vpop.f32.mrb[0].mxu0
      %1981 = vmatprep.mubr.bf16.mxu0 0
      %1982 = vmatmul.mubr.bf16.gmra.mrb[0].mxu0 %v1339
      %v1983 = vpop.f32.mrb[0].mxu0
      %v1984 = vadd.f32 %v563, %v1983
      %v1985 = vpop.f32.mrb[0].mxu0
      %v1986 = vpop.f32.mrb[0].mxu0
      %v1987 = vadd.f32 %v563, %v1986
      %v1988 = vpop.f32.mrb[0].mxu0
      %1989 = vmatprep.mubr.bf16.mxu0 0
      %1990 = vmatmul.mubr.bf16.gmra.mrb[0].mxu0 %v1342
      %v1991 = vpop.f32.mrb[0].mxu0
      %v1992 = vadd.f32 %v563, %v1991
      %v1993 = vpop.f32.mrb[0].mxu0
      %v1994 = vpop.f32.mrb[0].mxu0
      %v1995 = vadd.f32 %v563, %v1994
      %v1996 = vpop.f32.mrb[0].mxu0
      %1997 = vmatprep.mubr.bf16.mxu0 0
      %1998 = vmatmul.mubr.bf16.gmra.mrb[0].mxu0 %v1345
      %v1999 = vpop.f32.mrb[0].mxu0
      %v2000 = vadd.f32 %v563, %v1999
      %v2001 = vpop.f32.mrb[0].mxu0
      %v2002 = vpop.f32.mrb[0].mxu0
      %v2003 = vadd.f32 %v563, %v2002
      %v2004 = vpop.f32.mrb[0].mxu0
      %2005 = vmatprep.mubr.bf16.mxu0 0
      %2006 = vmatmul.mubr.bf16.gmra.mrb[0].mxu0 %v1348
      %v2007 = vpop.f32.mrb[0].mxu0
      %v2008 = vadd.f32 %v563, %v2007
      %v2009 = vpop.f32.mrb[0].mxu0
      %v2010 = vpop.f32.mrb[0].mxu0
      %v2011 = vadd.f32 %v563, %v2010
      %v2012 = vpop.f32.mrb[0].mxu0
      %2013 = vmatprep.mubr.bf16.mxu0 0
      %2014 = vmatmul.mubr.bf16.gmra.mrb[0].mxu0 %v1351
      %v2015 = vpop.f32.mrb[0].mxu0
      %v2016 = vadd.f32 %v563, %v2015
      %v2017 = vpop.f32.mrb[0].mxu0
      %v2018 = vpop.f32.mrb[0].mxu0
      %v2019 = vadd.f32 %v563, %v2018
      %v2020 = vpop.f32.mrb[0].mxu0
      %2021 = vmatprep.mubr.bf16.mxu0 0
      %2022 = vmatmul.mubr.bf16.gmra.mrb[0].mxu0 %v1354
      %v2023 = vpop.f32.mrb[0].mxu0
      %v2024 = vadd.f32 %v563, %v2023
      %v2025 = vpop.f32.mrb[0].mxu0
      %v2026 = vpop.f32.mrb[0].mxu0
      %v2027 = vadd.f32 %v563, %v2026
      %v2028 = vpop.f32.mrb[0].mxu0
      %2029 = vmatprep.mubr.bf16.mxu0 0
      %2030 = vmatmul.mubr.bf16.gmra.mrb[0].mxu0 %v1357
      %v2031 = vpop.f32.mrb[0].mxu0
      %v2032 = vadd.f32 %v563, %v2031
      %v2033 = vpop.f32.mrb[0].mxu0
      %v2034 = vpop.f32.mrb[0].mxu0
      %v2035 = vadd.f32 %v563, %v2034
      %v2036 = vpop.f32.mrb[0].mxu0
      %2037 = vmatprep.mubr.bf16.mxu0 0
      %2038 = vmatmul.mubr.bf16.gmra.mrb[0].mxu0 %v1360
      %v2039 = vpop.f32.mrb[0].mxu0
      %v2040 = vadd.f32 %v563, %v2039
      %v2041 = vpop.f32.mrb[0].mxu0
      %v2042 = vpop.f32.mrb[0].mxu0
      %v2043 = vadd.f32 %v563, %v2042
      %v2044 = vpop.f32.mrb[0].mxu0
      %2045 = vmatprep.mubr.bf16.mxu0 0
      %2046 = vmatmul.mubr.bf16.gmra.mrb[0].mxu0 %v1363
      %v2047 = vpop.f32.mrb[0].mxu0
      %v2048 = vadd.f32 %v563, %v2047
      %v2049 = vpop.f32.mrb[0].mxu0
      %v2050 = vpop.f32.mrb[0].mxu0
      %v2051 = vadd.f32 %v563, %v2050
      %v2052 = vpop.f32.mrb[0].mxu0
      %2053 = vmatprep.mubr.bf16.mxu0 0
      %2054 = vmatmul.mubr.bf16.gmra.mrb[0].mxu0 %v1366
      %v2055 = vpop.f32.mrb[0].mxu0
      %v2056 = vadd.f32 %v563, %v2055
      %v2057 = vpop.f32.mrb[0].mxu0
      %v2058 = vpop.f32.mrb[0].mxu0
      %v2059 = vadd.f32 %v563, %v2058
      %v2060 = vpop.f32.mrb[0].mxu0
      %2061 = vmatprep.mubr.bf16.mxu0 0
      %2062 = vmatmul.mubr.bf16.gmra.mrb[0].mxu0 %v1369
      %v2063 = vpop.f32.mrb[0].mxu0
      %v2064 = vadd.f32 %v563, %v2063
      %v2065 = vpop.f32.mrb[0].mxu0
      %v2066 = vpop.f32.mrb[0].mxu0
      %v2067 = vadd.f32 %v563, %v2066
      %v2068 = vpop.f32.mrb[0].mxu0
      %2069 = vmatprep.mubr.bf16.mxu0 0
      %2070 = vmatmul.mubr.bf16.gmra.mrb[0].mxu0 %v1372
      %v2071 = vpop.f32.mrb[0].mxu0
      %v2072 = vadd.f32 %v563, %v2071
      %v2073 = vpop.f32.mrb[0].mxu0
      %v2074 = vpop.f32.mrb[0].mxu0
      %v2075 = vadd.f32 %v563, %v2074
      %v2076 = vpop.f32.mrb[0].mxu0
      %2077 = vmatprep.mubr.bf16.mxu0 0
      %2078 = vmatmul.mubr.bf16.gmra.mrb[0].mxu0 %v1375
      %v2079 = vpop.f32.mrb[0].mxu0
      %v2080 = vadd.f32 %v563, %v2079
      %v2081 = vpop.f32.mrb[0].mxu0
      %v2082 = vpop.f32.mrb[0].mxu0
      %v2083 = vadd.f32 %v563, %v2082
      %v2084 = vpop.f32.mrb[0].mxu0
      %2085 = vmatprep.mubr.bf16.mxu0 0
      %2086 = vmatmul.mubr.bf16.gmra.mrb[0].mxu0 %v1378
      %v2087 = vpop.f32.mrb[0].mxu0
      %v2088 = vadd.f32 %v563, %v2087
      %v2089 = vpop.f32.mrb[0].mxu0
      %v2090 = vpop.f32.mrb[0].mxu0
      %v2091 = vadd.f32 %v563, %v2090
      %v2092 = vpop.f32.mrb[0].mxu0
      %2093 = vmatprep.mubr.bf16.mxu0 0
      %2094 = vmatmul.mubr.bf16.gmra.mrb[0].mxu0 %v1381
      %v2095 = vpop.f32.mrb[0].mxu0
      %v2096 = vadd.f32 %v563, %v2095
      %v2097 = vpop.f32.mrb[0].mxu0
      %v2098 = vpop.f32.mrb[0].mxu0
      %v2099 = vadd.f32 %v563, %v2098
      %v2100 = vpop.f32.mrb[0].mxu0
      %2101 = vmatprep.mubr.bf16.mxu0 0
      %2102 = vmatmul.mubr.bf16.gmra.mrb[0].mxu0 %v1384
      %v2103 = vpop.f32.mrb[0].mxu0
      %v2104 = vadd.f32 %v563, %v2103
      %v2105 = vpop.f32.mrb[0].mxu0
      %v2106 = vpop.f32.mrb[0].mxu0
      %v2107 = vadd.f32 %v563, %v2106
      %v2108 = vpop.f32.mrb[0].mxu0
      %2109 = vmatprep.mubr.bf16.mxu0 0
      %2110 = vmatmul.mubr.bf16.gmra.mrb[0].mxu0 %v1387
      %v2111 = vpop.f32.mrb[0].mxu0
      %v2112 = vadd.f32 %v563, %v2111
      %v2113 = vpop.f32.mrb[0].mxu0
      %v2114 = vpop.f32.mrb[0].mxu0
      %v2115 = vadd.f32 %v563, %v2114
      %v2116 = vpop.f32.mrb[0].mxu0
      %2117 = vmatprep.mubr.bf16.mxu0 0
      %2118 = vmatmul.mubr.bf16.gmra.mrb[0].mxu0 %v1390
      %v2119 = vpop.f32.mrb[0].mxu0
      %v2120 = vadd.f32 %v563, %v2119
      %v2121 = vpop.f32.mrb[0].mxu0
      %v2122 = vpop.f32.mrb[0].mxu0
      %v2123 = vadd.f32 %v563, %v2122
      %v2124 = vpop.f32.mrb[0].mxu0
      %2125 = vmatprep.mubr.bf16.mxu0 0
      %2126 = vmatmul.mubr.bf16.gmra.mrb[0].mxu0 %v1393
      %v2127 = vpop.f32.mrb[0].mxu0
      %v2128 = vadd.f32 %v563, %v2127
      %v2129 = vpop.f32.mrb[0].mxu0
      %v2130 = vpop.f32.mrb[0].mxu0
      %v2131 = vadd.f32 %v563, %v2130
      %v2132 = vpop.f32.mrb[0].mxu0
      %2133 = vmatprep.mubr.bf16.mxu0 0
      %2134 = vmatmul.mubr.bf16.gmra.mrb[0].mxu0 %v1396
      %v2135 = vpop.f32.mrb[0].mxu0
      %v2136 = vadd.f32 %v563, %v2135
      %v2137 = vpop.f32.mrb[0].mxu0
      %v2138 = vpop.f32.mrb[0].mxu0
      %v2139 = vadd.f32 %v563, %v2138
      %v2140 = vpop.f32.mrb[0].mxu0
      %2141 = vmatprep.mubr.bf16.mxu0 0
      %2142 = vmatmul.mubr.bf16.gmra.mrb[0].mxu0 %v1399
      %v2143 = vpop.f32.mrb[0].mxu0
      %v2144 = vadd.f32 %v563, %v2143
      %v2145 = vpop.f32.mrb[0].mxu0
      %v2146 = vpop.f32.mrb[0].mxu0
      %v2147 = vadd.f32 %v563, %v2146
      %v2148 = vpop.f32.mrb[0].mxu0
      %2149 = vmatprep.mubr.bf16.mxu0 0
      %2150 = vmatmul.mubr.bf16.gmra.mrb[0].mxu0 %v1402
      %v2151 = vpop.f32.mrb[0].mxu0
      %v2152 = vadd.f32 %v563, %v2151
      %v2153 = vpop.f32.mrb[0].mxu0
      %v2154 = vpop.f32.mrb[0].mxu0
      %v2155 = vadd.f32 %v563, %v2154
      %v2156 = vpop.f32.mrb[0].mxu0
      %2157 = vmatprep.mubr.bf16.mxu0 0
      %2158 = vmatmul.mubr.bf16.gmra.mrb[0].mxu0 %v1405
      %v2159 = vpop.f32.mrb[0].mxu0
      %v2160 = vadd.f32 %v563, %v2159
      %v2161 = vpop.f32.mrb[0].mxu0
      %v2162 = vpop.f32.mrb[0].mxu0
      %v2163 = vadd.f32 %v563, %v2162
      %v2164 = vpop.f32.mrb[0].mxu0
      %2165 = vmatprep.mubr.bf16.mxu0 0
      %2166 = vmatmul.mubr.bf16.gmra.mrb[0].mxu0 %v1408
      %v2167 = vpop.f32.mrb[0].mxu0
      %v2168 = vadd.f32 %v563, %v2167
      %v2169 = vpop.f32.mrb[0].mxu0
      %v2170 = vpop.f32.mrb[0].mxu0
      %v2171 = vadd.f32 %v563, %v2170
      %v2172 = vpop.f32.mrb[0].mxu0
      %2173 = vmatprep.mubr.bf16.mxu0 0
      %2174 = vmatmul.mubr.bf16.gmra.mrb[0].mxu0 %v1411
      %v2175 = vpop.f32.mrb[0].mxu0
      %v2176 = vadd.f32 %v563, %v2175
      %v2177 = vpop.f32.mrb[0].mxu0
      %v2178 = vpop.f32.mrb[0].mxu0
      %v2179 = vadd.f32 %v563, %v2178
      %v2180 = vpop.f32.mrb[0].mxu0
      %2181 = vmatprep.mubr.bf16.mxu0 0
      %2182 = vmatmul.mubr.bf16.gmra.mrb[0].mxu0 %v1414
      %v2183 = vpop.f32.mrb[0].mxu0
      %v2184 = vadd.f32 %v563, %v2183
      %v2185 = vpop.f32.mrb[0].mxu0
      %v2186 = vpop.f32.mrb[0].mxu0
      %v2187 = vadd.f32 %v563, %v2186
      %v2188 = vpop.f32.mrb[0].mxu0
      %2189 = vmatprep.mubr.bf16.mxu0 0
      %2190 = vmatmul.mubr.bf16.gmra.mrb[0].mxu0 %v1417
      %v2191 = vpop.f32.mrb[0].mxu0
      %v2192 = vadd.f32 %v563, %v2191
      %v2193 = vpop.f32.mrb[0].mxu0
      %v2194 = vpop.f32.mrb[0].mxu0
      %v2195 = vadd.f32 %v563, %v2194
      %v2196 = vpop.f32.mrb[0].mxu0
      %2197 = vmatprep.mubr.bf16.mxu0 0
      %2198 = vmatmul.mubr.bf16.gmra.mrb[0].mxu0 %v1420
      %v2199 = vpop.f32.mrb[0].mxu0
      %v2200 = vadd.f32 %v563, %v2199
      %v2201 = vpop.f32.mrb[0].mxu0
      %v2202 = vpop.f32.mrb[0].mxu0
      %v2203 = vadd.f32 %v563, %v2202
      %v2204 = vpop.f32.mrb[0].mxu0
      %2205 = vmatprep.mubr.bf16.mxu0 0
      %2206 = vmatmul.mubr.bf16.gmra.mrb[0].mxu0 %v1423
      %v2207 = vpop.f32.mrb[0].mxu0
      %v2208 = vadd.f32 %v563, %v2207
      %v2209 = vpop.f32.mrb[0].mxu0
      %v2210 = vpop.f32.mrb[0].mxu0
      %v2211 = vadd.f32 %v563, %v2210
      %v2212 = vpop.f32.mrb[0].mxu0
      %2213 = vmatprep.mubr.bf16.mxu0 0
      %2214 = vmatmul.mubr.bf16.gmra.mrb[0].mxu0 %v1426
      %v2215 = vpop.f32.mrb[0].mxu0
      %v2216 = vadd.f32 %v563, %v2215
      %v2217 = vpop.f32.mrb[0].mxu0
      %v2218 = vpop.f32.mrb[0].mxu0
      %v2219 = vadd.f32 %v563, %v2218
      %v2220 = vpop.f32.mrb[0].mxu0
      %2221 = vmatprep.mubr.bf16.mxu0 0
      %2222 = vmatmul.mubr.bf16.gmra.mrb[0].mxu0 %v1429
      %v2223 = vpop.f32.mrb[0].mxu0
      %v2224 = vadd.f32 %v563, %v2223
      %v2225 = vpop.f32.mrb[0].mxu0
      %v2226 = vpop.f32.mrb[0].mxu0
      %v2227 = vadd.f32 %v563, %v2226
      %v2228 = vpop.f32.mrb[0].mxu0
      %2229 = vmatprep.mubr.bf16.mxu0 0
      %2230 = vmatmul.mubr.bf16.gmra.mrb[0].mxu0 %v1432
      %v2231 = vpop.f32.mrb[0].mxu0
      %v2232 = vadd.f32 %v563, %v2231
      %v2233 = vpop.f32.mrb[0].mxu0
      %v2234 = vpop.f32.mrb[0].mxu0
      %v2235 = vadd.f32 %v563, %v2234
      %v2236 = vpop.f32.mrb[0].mxu0
      %2237 = vmatprep.mubr.bf16.mxu0 0
      %2238 = vmatmul.mubr.bf16.gmra.mrb[0].mxu0 %v1435
      %v2239 = vpop.f32.mrb[0].mxu0
      %v2240 = vadd.f32 %v563, %v2239
      %v2241 = vpop.f32.mrb[0].mxu0
      %v2242 = vpop.f32.mrb[0].mxu0
      %v2243 = vadd.f32 %v563, %v2242
      %v2244 = vpop.f32.mrb[0].mxu0
      %2245 = vmatprep.mubr.bf16.mxu0 0
      %2246 = vmatmul.mubr.bf16.gmra.mrb[0].mxu0 %v1438
      %v2247 = vpop.f32.mrb[0].mxu0
      %v2248 = vadd.f32 %v563, %v2247
      %v2249 = vpop.f32.mrb[0].mxu0
      %v2250 = vpop.f32.mrb[0].mxu0
      %v2251 = vadd.f32 %v563, %v2250
      %v2252 = vpop.f32.mrb[0].mxu0
      %2253 = vmatprep.mubr.bf16.mxu0 0
      %2254 = vmatmul.mubr.bf16.gmra.mrb[0].mxu0 %v1441
      %v2255 = vpop.f32.mrb[0].mxu0
      %v2256 = vadd.f32 %v563, %v2255
      %v2257 = vpop.f32.mrb[0].mxu0
      %v2258 = vpop.f32.mrb[0].mxu0
      %v2259 = vadd.f32 %v563, %v2258
      %v2260 = vpop.f32.mrb[0].mxu0
      %2261 = vmatprep.mubr.bf16.mxu0 0
      %2262 = vmatmul.mubr.bf16.gmra.mrb[0].mxu0 %v1444
      %v2263 = vpop.f32.mrb[0].mxu0
      %v2264 = vadd.f32 %v563, %v2263
      %v2265 = vpop.f32.mrb[0].mxu0
      %v2266 = vpop.f32.mrb[0].mxu0
      %v2267 = vadd.f32 %v563, %v2266
      %v2268 = vpop.f32.mrb[0].mxu0
      %2269 = vmatprep.mubr.bf16.mxu0 0
      %2270 = vmatmul.mubr.bf16.gmra.mrb[0].mxu0 %v1447
      %v2271 = vpop.f32.mrb[0].mxu0
      %v2272 = vadd.f32 %v563, %v2271
      %v2273 = vpop.f32.mrb[0].mxu0
      %v2274 = vpop.f32.mrb[0].mxu0
      %v2275 = vadd.f32 %v563, %v2274
      %v2276 = vpop.f32.mrb[0].mxu0
      %2277 = vmatprep.mubr.bf16.mxu0 0
      %2278 = vmatmul.mubr.bf16.gmra.mrb[0].mxu0 %v1450
      %v2279 = vpop.f32.mrb[0].mxu0
      %v2280 = vadd.f32 %v563, %v2279
      %v2281 = vpop.f32.mrb[0].mxu0
      %v2282 = vpop.f32.mrb[0].mxu0
      %v2283 = vadd.f32 %v563, %v2282
      %v2284 = vpop.f32.mrb[0].mxu0
      %2285 = vmatprep.mubr.bf16.mxu0 0
      %2286 = vmatmul.mubr.bf16.gmra.mrb[0].mxu0 %v1453
      %v2287 = vpop.f32.mrb[0].mxu0
      %v2288 = vadd.f32 %v563, %v2287
      %v2289 = vpop.f32.mrb[0].mxu0
      %v2290 = vpop.f32.mrb[0].mxu0
      %v2291 = vadd.f32 %v563, %v2290
      %v2292 = vpop.f32.mrb[0].mxu0
      %2293 = vmatprep.mubr.bf16.mxu0 0
      %2294 = vmatmul.mubr.bf16.gmra.mrb[0].mxu0 %v1456
      %v2295 = vpop.f32.mrb[0].mxu0
      %v2296 = vadd.f32 %v563, %v2295
      %v2297 = vpop.f32.mrb[0].mxu0
      %v2298 = vpop.f32.mrb[0].mxu0
      %v2299 = vadd.f32 %v563, %v2298
      %v2300 = vpop.f32.mrb[0].mxu0
      %2301 = vmatprep.mubr.bf16.mxu0 0
      %2302 = vmatmul.mubr.bf16.gmra.mrb[0].mxu0 %v1459
      %v2303 = vpop.f32.mrb[0].mxu0
      %v2304 = vadd.f32 %v563, %v2303
      %v2305 = vpop.f32.mrb[0].mxu0
      %v2306 = vpop.f32.mrb[0].mxu0
      %v2307 = vadd.f32 %v563, %v2306
      %v2308 = vpop.f32.mrb[0].mxu0
      %2309 = vmatprep.mubr.bf16.mxu0 0
      %2310 = vmatmul.mubr.bf16.gmra.mrb[0].mxu0 %v1462
      %v2311 = vpop.f32.mrb[0].mxu0
      %v2312 = vadd.f32 %v563, %v2311
      %v2313 = vpop.f32.mrb[0].mxu0
      %v2314 = vpop.f32.mrb[0].mxu0
      %v2315 = vadd.f32 %v563, %v2314
      %v2316 = vpop.f32.mrb[0].mxu0
      %2317 = vmatprep.mubr.bf16.mxu0 0
      %2318 = vmatmul.mubr.bf16.gmra.mrb[0].mxu0 %v1465
      %v2319 = vpop.f32.mrb[0].mxu0
      %v2320 = vadd.f32 %v563, %v2319
      %v2321 = vpop.f32.mrb[0].mxu0
      %v2322 = vpop.f32.mrb[0].mxu0
      %v2323 = vadd.f32 %v563, %v2322
      %v2324 = vpop.f32.mrb[0].mxu0
      %2325 = vmatprep.mubr.bf16.mxu0 0
      %2326 = vmatmul.mubr.bf16.gmra.mrb[0].mxu0 %v1468
      %v2327 = vpop.f32.mrb[0].mxu0
      %v2328 = vadd.f32 %v563, %v2327
      %v2329 = vpop.f32.mrb[0].mxu0
      %v2330 = vpop.f32.mrb[0].mxu0
      %v2331 = vadd.f32 %v563, %v2330
      %v2332 = vpop.f32.mrb[0].mxu0
      %2333 = vmatprep.mubr.bf16.mxu0 0
      %2334 = vmatmul.mubr.bf16.gmra.mrb[0].mxu0 %v1471
      %v2335 = vpop.f32.mrb[0].mxu0
      %v2336 = vadd.f32 %v563, %v2335
      %v2337 = vpop.f32.mrb[0].mxu0
      %v2338 = vpop.f32.mrb[0].mxu0
      %v2339 = vadd.f32 %v563, %v2338
      %v2340 = vpop.f32.mrb[0].mxu0
      %2341 = vmatprep.mubr.bf16.mxu0 0
      %2342 = vmatmul.mubr.bf16.gmra.mrb[0].mxu0 %v1474
      %v2343 = vpop.f32.mrb[0].mxu0
      %v2344 = vadd.f32 %v563, %v2343
      %v2345 = vpop.f32.mrb[0].mxu0
      %v2346 = vpop.f32.mrb[0].mxu0
      %v2347 = vadd.f32 %v563, %v2346
      %v2348 = vpop.f32.mrb[0].mxu0
      %2349 = vmatprep.mubr.bf16.mxu0 0
      %2350 = vmatmul.mubr.bf16.gmra.mrb[0].mxu0 %v1477
      %v2351 = vpop.f32.mrb[0].mxu0
      %v2352 = vadd.f32 %v563, %v2351
      %v2353 = vpop.f32.mrb[0].mxu0
      %v2354 = vpop.f32.mrb[0].mxu0
      %v2355 = vadd.f32 %v563, %v2354
      %v2356 = vpop.f32.mrb[0].mxu0
      %2357 = vmatprep.mubr.bf16.mxu0 0
      %2358 = vmatmul.mubr.bf16.gmra.mrb[0].mxu0 %v1480
      %v2359 = vpop.f32.mrb[0].mxu0
      %v2360 = vadd.f32 %v563, %v2359
      %v2361 = vpop.f32.mrb[0].mxu0
      %v2362 = vpop.f32.mrb[0].mxu0
      %v2363 = vadd.f32 %v563, %v2362
      %v2364 = vpop.f32.mrb[0].mxu0
      %2365 = vmatprep.mubr.bf16.mxu0 0
      %2366 = vmatmul.mubr.bf16.gmra.mrb[0].mxu0 %v1483
      %v2367 = vpop.f32.mrb[0].mxu0
      %v2368 = vadd.f32 %v563, %v2367
      %v2369 = vpop.f32.mrb[0].mxu0
      %v2370 = vpop.f32.mrb[0].mxu0
      %v2371 = vadd.f32 %v563, %v2370
      %v2372 = vpop.f32.mrb[0].mxu0
      %2373 = vmatprep.mubr.bf16.mxu0 0
      %2374 = vmatmul.mubr.bf16.gmra.mrb[0].mxu0 %v1486
      %v2375 = vpop.f32.mrb[0].mxu0
      %v2376 = vadd.f32 %v563, %v2375
      %v2377 = vpop.f32.mrb[0].mxu0
      %v2378 = vpop.f32.mrb[0].mxu0
      %v2379 = vadd.f32 %v563, %v2378
      %v2380 = vpop.f32.mrb[0].mxu0
      %2381 = vmatprep.mubr.bf16.mxu0 0
      %2382 = vmatmul.mubr.bf16.gmra.mrb[0].mxu0 %v1489
      %v2383 = vpop.f32.mrb[0].mxu0
      %v2384 = vadd.f32 %v563, %v2383
      %v2385 = vpop.f32.mrb[0].mxu0
      %v2386 = vpop.f32.mrb[0].mxu0
      %v2387 = vadd.f32 %v563, %v2386
      %v2388 = vpop.f32.mrb[0].mxu0
      %2389 = vmatprep.mubr.bf16.mxu0 0
      %2390 = vmatmul.mubr.bf16.gmra.mrb[0].mxu0 %v1492
      %v2391 = vpop.f32.mrb[0].mxu0
      %v2392 = vadd.f32 %v563, %v2391
      %v2393 = vpop.f32.mrb[0].mxu0
      %v2394 = vpop.f32.mrb[0].mxu0
      %v2395 = vadd.f32 %v563, %v2394
      %v2396 = vpop.f32.mrb[0].mxu0
      %2397 = vmatprep.mubr.bf16.mxu0 0
      %2398 = vmatmul.mubr.bf16.gmra.mrb[0].mxu0 %v1495
      %v2399 = vpop.f32.mrb[0].mxu0
      %v2400 = vadd.f32 %v563, %v2399
      %v2401 = vpop.f32.mrb[0].mxu0
      %v2402 = vpop.f32.mrb[0].mxu0
      %v2403 = vadd.f32 %v563, %v2402
      %v2404 = vpop.f32.mrb[0].mxu0
      %2405 = vmatprep.mubr.bf16.mxu0 0
      %2406 = vmatmul.mubr.bf16.gmra.mrb[0].mxu0 %v1498
      %v2407 = vpop.f32.mrb[0].mxu0
      %v2408 = vadd.f32 %v563, %v2407
      %v2409 = vpop.f32.mrb[0].mxu0
      %v2410 = vpop.f32.mrb[0].mxu0
      %v2411 = vadd.f32 %v563, %v2410
      %v2412 = vpop.f32.mrb[0].mxu0
      %2413 = vmatprep.mubr.bf16.mxu0 0
      %2414 = vmatmul.mubr.bf16.gmra.mrb[0].mxu0 %v1501
      %v2415 = vpop.f32.mrb[0].mxu0
      %v2416 = vadd.f32 %v563, %v2415
      %v2417 = vpop.f32.mrb[0].mxu0
      %v2418 = vpop.f32.mrb[0].mxu0
      %v2419 = vadd.f32 %v563, %v2418
      %v2420 = vpop.f32.mrb[0].mxu0
      %2421 = vmatprep.mubr.bf16.mxu0 0
      %2422 = vmatmul.mubr.bf16.gmra.mrb[0].mxu0 %v1504
      %v2423 = vpop.f32.mrb[0].mxu0
      %v2424 = vadd.f32 %v563, %v2423
      %v2425 = vpop.f32.mrb[0].mxu0
      %v2426 = vpop.f32.mrb[0].mxu0
      %v2427 = vadd.f32 %v563, %v2426
      %v2428 = vpop.f32.mrb[0].mxu0
      %2429 = vmatprep.mubr.bf16.mxu0 0
      %2430 = vmatmul.mubr.bf16.gmra.mrb[0].mxu0 %v1507
      %v2431 = vpop.f32.mrb[0].mxu0
      %v2432 = vadd.f32 %v563, %v2431
      %v2433 = vpop.f32.mrb[0].mxu0
      %v2434 = vpop.f32.mrb[0].mxu0
      %v2435 = vadd.f32 %v563, %v2434
      %v2436 = vpop.f32.mrb[0].mxu0
      %2437 = vmatprep.mubr.bf16.mxu0 0
      %2438 = vmatmul.mubr.bf16.gmra.mrb[0].mxu0 %v1510
      %v2439 = vpop.f32.mrb[0].mxu0
      %v2440 = vadd.f32 %v563, %v2439
      %v2441 = vpop.f32.mrb[0].mxu0
      %v2442 = vpop.f32.mrb[0].mxu0
      %v2443 = vadd.f32 %v563, %v2442
      %v2444 = vpop.f32.mrb[0].mxu0
      %2445 = vmatprep.mubr.bf16.mxu0 0
      %2446 = vmatmul.mubr.bf16.gmra.mrb[0].mxu0 %v1513
      %v2447 = vpop.f32.mrb[0].mxu0
      %v2448 = vadd.f32 %v563, %v2447
      %v2449 = vpop.f32.mrb[0].mxu0
      %v2450 = vpop.f32.mrb[0].mxu0
      %v2451 = vadd.f32 %v563, %v2450
      %v2452 = vpop.f32.mrb[0].mxu0
      %2453 = vmatprep.mubr.bf16.mxu0 0
      %2454 = vmatmul.mubr.bf16.gmra.mrb[0].mxu0 %v1516
      %v2455 = vpop.f32.mrb[0].mxu0
      %v2456 = vadd.f32 %v563, %v2455
      %v2457 = vpop.f32.mrb[0].mxu0
      %v2458 = vpop.f32.mrb[0].mxu0
      %v2459 = vadd.f32 %v563, %v2458
      %v2460 = vpop.f32.mrb[0].mxu0
      %2461 = vmatprep.mubr.bf16.mxu0 0
      %2462 = vmatmul.mubr.bf16.gmra.mrb[0].mxu0 %v1519
      %v2463 = vpop.f32.mrb[0].mxu0
      %v2464 = vadd.f32 %v563, %v2463
      %v2465 = vpop.f32.mrb[0].mxu0
      %v2466 = vpop.f32.mrb[0].mxu0
      %v2467 = vadd.f32 %v563, %v2466
      %v2468 = vpop.f32.mrb[0].mxu0
      %2469 = vmatprep.mubr.bf16.mxu0 0
      %2470 = vmatmul.mubr.bf16.gmra.mrb[0].mxu0 %v1522
      %v2471 = vpop.f32.mrb[0].mxu0
      %v2472 = vadd.f32 %v563, %v2471
      %v2473 = vpop.f32.mrb[0].mxu0
      %v2474 = vpop.f32.mrb[0].mxu0
      %v2475 = vadd.f32 %v563, %v2474
      %v2476 = vpop.f32.mrb[0].mxu0
      %2477 = vmatprep.mubr.bf16.mxu0 0
      %2478 = vmatmul.mubr.bf16.gmra.mrb[0].mxu0 %v1525
      %v2479 = vpop.f32.mrb[0].mxu0
      %v2480 = vadd.f32 %v563, %v2479
      %v2481 = vpop.f32.mrb[0].mxu0
      %v2482 = vpop.f32.mrb[0].mxu0
      %v2483 = vadd.f32 %v563, %v2482
      %v2484 = vpop.f32.mrb[0].mxu0
      %2485 = vmatprep.mubr.bf16.mxu0 0
      %2486 = vmatmul.mubr.bf16.gmra.mrb[0].mxu0 %v1528
      %v2487 = vpop.f32.mrb[0].mxu0
      %v2488 = vadd.f32 %v563, %v2487
      %v2489 = vpop.f32.mrb[0].mxu0
      %v2490 = vpop.f32.mrb[0].mxu0
      %v2491 = vadd.f32 %v563, %v2490
      %v2492 = vpop.f32.mrb[0].mxu0
      %2493 = vmatprep.mubr.bf16.mxu0 0
      %2494 = vmatmul.mubr.bf16.gmra.mrb[0].mxu0 %v1531
      %v2495 = vpop.f32.mrb[0].mxu0
      %v2496 = vadd.f32 %v563, %v2495
      %v2497 = vpop.f32.mrb[0].mxu0
      %v2498 = vpop.f32.mrb[0].mxu0
      %v2499 = vadd.f32 %v563, %v2498
      %v2500 = vpop.f32.mrb[0].mxu0
      %2501 = vmatprep.mubr.bf16.mxu0 0
      %2502 = vmatmul.mubr.bf16.gmra.mrb[0].mxu0 %v1534
      %v2503 = vpop.f32.mrb[0].mxu0
      %v2504 = vadd.f32 %v563, %v2503
      %v2505 = vpop.f32.mrb[0].mxu0
      %v2506 = vpop.f32.mrb[0].mxu0
      %v2507 = vadd.f32 %v563, %v2506
      %v2508 = vpop.f32.mrb[0].mxu0
      %2509 = vmatprep.mubr.bf16.mxu0 0
      %2510 = vmatmul.mubr.bf16.gmra.mrb[0].mxu0 %v1537
      %v2511 = vpop.f32.mrb[0].mxu0
      %v2512 = vadd.f32 %v563, %v2511
      %v2513 = vpop.f32.mrb[0].mxu0
      %v2514 = vpop.f32.mrb[0].mxu0
      %v2515 = vadd.f32 %v563, %v2514
      %v2516 = vpop.f32.mrb[0].mxu0
      %2517 = vmatprep.mubr.bf16.mxu0 0
      %2518 = vmatmul.mubr.bf16.gmra.mrb[0].mxu0 %v1540
      %v2519 = vpop.f32.mrb[0].mxu0
      %v2520 = vadd.f32 %v563, %v2519
      %v2521 = vpop.f32.mrb[0].mxu0
      %v2522 = vpop.f32.mrb[0].mxu0
      %v2523 = vadd.f32 %v563, %v2522
      %v2524 = vpop.f32.mrb[0].mxu0
      %2525 = vmatprep.mubr.bf16.mxu0 0
      %2526 = vmatmul.mubr.bf16.gmra.mrb[0].mxu0 %v1543
      %v2527 = vpop.f32.mrb[0].mxu0
      %v2528 = vadd.f32 %v563, %v2527
      %v2529 = vpop.f32.mrb[0].mxu0
      %v2530 = vpop.f32.mrb[0].mxu0
      %v2531 = vadd.f32 %v563, %v2530
      %v2532 = vpop.f32.mrb[0].mxu0
      %2533 = vmatprep.mubr.bf16.mxu0 0
      %2534 = vmatmul.mubr.bf16.gmra.mrb[0].mxu0 %v1546
      %v2535 = vpop.f32.mrb[0].mxu0
      %v2536 = vadd.f32 %v563, %v2535
      %v2537 = vpop.f32.mrb[0].mxu0
      %v2538 = vpop.f32.mrb[0].mxu0
      %v2539 = vadd.f32 %v563, %v2538
      %v2540 = vpop.f32.mrb[0].mxu0
      %2541 = vmatprep.mubr.bf16.mxu0 0
      %2542 = vmatmul.mubr.bf16.gmra.mrb[0].mxu0 %v1549
      %v2543 = vpop.f32.mrb[0].mxu0
      %v2544 = vadd.f32 %v563, %v2543
      %v2545 = vpop.f32.mrb[0].mxu0
      %v2546 = vpop.f32.mrb[0].mxu0
      %v2547 = vadd.f32 %v563, %v2546
      %v2548 = vpop.f32.mrb[0].mxu0
      %2549 = vmatprep.mubr.bf16.mxu0 0
      %2550 = vmatmul.mubr.bf16.gmra.mrb[0].mxu0 %v1552
      %v2551 = vpop.f32.mrb[0].mxu0
      %v2552 = vadd.f32 %v563, %v2551
      %v2553 = vpop.f32.mrb[0].mxu0
      %v2554 = vpop.f32.mrb[0].mxu0
      %v2555 = vadd.f32 %v563, %v2554
      %v2556 = vpop.f32.mrb[0].mxu0
      %2557 = vmatprep.mubr.bf16.mxu0 0
      %2558 = vmatmul.mubr.bf16.gmra.mrb[0].mxu0 %v1555
      %v2559 = vpop.f32.mrb[0].mxu0
      %v2560 = vadd.f32 %v563, %v2559
      %v2561 = vpop.f32.mrb[0].mxu0
      %v2562 = vpop.f32.mrb[0].mxu0
      %v2563 = vadd.f32 %v563, %v2562
      %v2564 = vpop.f32.mrb[0].mxu0
      %2565 = vmatprep.mubr.bf16.mxu0 0
      %2566 = vmatmul.mubr.bf16.gmra.mrb[0].mxu0 %v1558
      %v2567 = vpop.f32.mrb[0].mxu0
      %v2568 = vadd.f32 %v563, %v2567
      %v2569 = vpop.f32.mrb[0].mxu0
      %v2570 = vpop.f32.mrb[0].mxu0
      %v2571 = vadd.f32 %v563, %v2570
      %v2572 = vpop.f32.mrb[0].mxu0
      %2573 = vmatprep.mubr.bf16.mxu0 0
      %2574 = vmatmul.mubr.bf16.gmra.mrb[0].mxu0 %v1561
      %v2575 = vpop.f32.mrb[0].mxu0
      %v2576 = vadd.f32 %v563, %v2575
      %v2577 = vpop.f32.mrb[0].mxu0
      %v2578 = vpop.f32.mrb[0].mxu0
      %v2579 = vadd.f32 %v563, %v2578
      %v2580 = vpop.f32.mrb[0].mxu0
      %2581 = vmatprep.mubr.bf16.mxu0 0
      %2582 = vmatmul.mubr.bf16.gmra.mrb[0].mxu0 %v1564
      %v2583 = vpop.f32.mrb[0].mxu0
      %v2584 = vadd.f32 %v563, %v2583
      %v2585 = vpop.f32.mrb[0].mxu0
      %v2586 = vpop.f32.mrb[0].mxu0
      %v2587 = vadd.f32 %v563, %v2586
      %v2588 = vpop.f32.mrb[0].mxu0
      %2589 = vmatprep.mubr.bf16.mxu0 0
      %2590 = vmatmul.mubr.bf16.gmra.mrb[0].mxu0 %v1567
      %v2591 = vpop.f32.mrb[0].mxu0
      %v2592 = vadd.f32 %v563, %v2591
      %v2593 = vpop.f32.mrb[0].mxu0
      %v2594 = vpop.f32.mrb[0].mxu0
      %v2595 = vadd.f32 %v563, %v2594
      %v2596 = vpop.f32.mrb[0].mxu0
      %2597 = vmatprep.mubr.bf16.mxu0 0
      %2598 = vmatmul.mubr.bf16.gmra.mrb[0].mxu0 %v1570
      %v2599 = vpop.f32.mrb[0].mxu0
      %v2600 = vadd.f32 %v563, %v2599
      %v2601 = vpop.f32.mrb[0].mxu0
      %v2602 = vpop.f32.mrb[0].mxu0
      %v2603 = vadd.f32 %v563, %v2602
      %v2604 = vpop.f32.mrb[0].mxu0
      %2605 = vmatprep.mubr.bf16.mxu0 0
      %2606 = vmatmul.mubr.bf16.gmra.mrb[0].mxu0 %v1573
      %v2607 = vpop.f32.mrb[0].mxu0
      %v2608 = vadd.f32 %v563, %v2607
      %v2609 = vpop.f32.mrb[0].mxu0
      %v2610 = vpop.f32.mrb[0].mxu0
      %v2611 = vadd.f32 %v563, %v2610
      %v2612 = vpop.f32.mrb[0].mxu0
      %2613 = vmatprep.mubr.bf16.mxu0 0
      %2614 = vmatmul.mubr.bf16.gmra.mrb[0].mxu0 %v1576
      %v2615 = vpop.f32.mrb[0].mxu0
      %v2616 = vadd.f32 %v563, %v2615
      %v2617 = vpop.f32.mrb[0].mxu0
      %v2618 = vpop.f32.mrb[0].mxu0
      %v2619 = vadd.f32 %v563, %v2618
      %v2620 = vpop.f32.mrb[0].mxu0
      %2621 = vmatprep.mubr.bf16.mxu0 0
      %2622 = vmatmul.mubr.bf16.gmra.mrb[0].mxu0 %v1579
      %v2623 = vpop.f32.mrb[0].mxu0
      %v2624 = vadd.f32 %v563, %v2623
      %v2625 = vpop.f32.mrb[0].mxu0
      %v2626 = vpop.f32.mrb[0].mxu0
      %v2627 = vadd.f32 %v563, %v2626
      %v2628 = vpop.f32.mrb[0].mxu0
      %2629 = vmatprep.mubr.bf16.mxu0 0
      %2630 = vmatmul.mubr.bf16.gmra.mrb[0].mxu0 %v1582
      %v2631 = vpop.f32.mrb[0].mxu0
      %v2632 = vadd.f32 %v563, %v2631
      %v2633 = vpop.f32.mrb[0].mxu0
      %v2634 = vpop.f32.mrb[0].mxu0
      %v2635 = vadd.f32 %v563, %v2634
      %v2636 = vpop.f32.mrb[0].mxu0
      %2637 = vmatprep.mubr.bf16.mxu0 0
      %2638 = vmatmul.mubr.bf16.gmra.mrb[0].mxu0 %v1585
      %v2639 = vpop.f32.mrb[0].mxu0
      %v2640 = vadd.f32 %v563, %v2639
      %v2641 = vpop.f32.mrb[0].mxu0
      %v2642 = vpop.f32.mrb[0].mxu0
      %v2643 = vadd.f32 %v563, %v2642
      %v2644 = vpop.f32.mrb[0].mxu0
      %2645 = vmatprep.mubr.bf16.mxu0 0
      %2646 = vmatmul.mubr.bf16.gmra.mrb[0].mxu0 %v1588
      %v2647 = vpop.f32.mrb[0].mxu0
      %v2648 = vadd.f32 %v563, %v2647
      %v2649 = vpop.f32.mrb[0].mxu0
      %v2650 = vpop.f32.mrb[0].mxu0
      %v2651 = vadd.f32 %v563, %v2650
      %v2652 = vpop.f32.mrb[0].mxu0
      %2653 = vdwg.mxu0
      %v2654 = vmax.f32 %v1632, 0.0
      %v2655 = vmax.f32 %v1635, 0.0
      %v2656 = vmax.f32 %v1640, 0.0
      %v2657 = vmax.f32 %v1643, 0.0
      %v2658 = vmax.f32 %v1648, 0.0
      %v2659 = vmax.f32 %v1651, 0.0
      %v2660 = vmax.f32 %v1656, 0.0
      %v2661 = vmax.f32 %v1659, 0.0
      %v2662 = vmax.f32 %v1664, 0.0
      %v2663 = vmax.f32 %v1667, 0.0
      %v2664 = vmax.f32 %v1672, 0.0
      %v2665 = vmax.f32 %v1675, 0.0
      %v2666 = vmax.f32 %v1680, 0.0
      %v2667 = vmax.f32 %v1683, 0.0
      %v2668 = vmax.f32 %v1688, 0.0
      %v2669 = vmax.f32 %v1691, 0.0
      %v2670 = vmax.f32 %v1696, 0.0
      %v2671 = vmax.f32 %v1699, 0.0
      %v2672 = vmax.f32 %v1704, 0.0
      %v2673 = vmax.f32 %v1707, 0.0
      %v2674 = vmax.f32 %v1712, 0.0
      %v2675 = vmax.f32 %v1715, 0.0
      %v2676 = vmax.f32 %v1720, 0.0
      %v2677 = vmax.f32 %v1723, 0.0
      %v2678 = vmax.f32 %v1728, 0.0
      %v2679 = vmax.f32 %v1731, 0.0
      %v2680 = vmax.f32 %v1736, 0.0
      %v2681 = vmax.f32 %v1739, 0.0
      %v2682 = vmax.f32 %v1744, 0.0
      %v2683 = vmax.f32 %v1747, 0.0
      %v2684 = vmax.f32 %v1752, 0.0
      %v2685 = vmax.f32 %v1755, 0.0
      %v2686 = vmax.f32 %v1760, 0.0
      %v2687 = vmax.f32 %v1763, 0.0
      %v2688 = vmax.f32 %v1768, 0.0
      %v2689 = vmax.f32 %v1771, 0.0
      %v2690 = vmax.f32 %v1776, 0.0
      %v2691 = vmax.f32 %v1779, 0.0
      %v2692 = vmax.f32 %v1784, 0.0
      %v2693 = vmax.f32 %v1787, 0.0
      %v2694 = vmax.f32 %v1792, 0.0
      %v2695 = vmax.f32 %v1795, 0.0
      %v2696 = vmax.f32 %v1800, 0.0
      %v2697 = vmax.f32 %v1803, 0.0
      %v2698 = vmax.f32 %v1808, 0.0
      %v2699 = vmax.f32 %v1811, 0.0
      %v2700 = vmax.f32 %v1816, 0.0
      %v2701 = vmax.f32 %v1819, 0.0
      %v2702 = vmax.f32 %v1824, 0.0
      %v2703 = vmax.f32 %v1827, 0.0
      %v2704 = vmax.f32 %v1832, 0.0
      %v2705 = vmax.f32 %v1835, 0.0
      %v2706 = vmax.f32 %v1840, 0.0
      %v2707 = vmax.f32 %v1843, 0.0
      %v2708 = vmax.f32 %v1848, 0.0
      %v2709 = vmax.f32 %v1851, 0.0
      %v2710 = vmax.f32 %v1856, 0.0
      %v2711 = vmax.f32 %v1859, 0.0
      %v2712 = vmax.f32 %v1864, 0.0
      %v2713 = vmax.f32 %v1867, 0.0
      %v2714 = vmax.f32 %v1872, 0.0
      %v2715 = vmax.f32 %v1875, 0.0
      %v2716 = vmax.f32 %v1880, 0.0
      %v2717 = vmax.f32 %v1883, 0.0
      %v2718 = vmax.f32 %v1888, 0.0
      %v2719 = vmax.f32 %v1891, 0.0
      %v2720 = vmax.f32 %v1896, 0.0
      %v2721 = vmax.f32 %v1899, 0.0
      %v2722 = vmax.f32 %v1904, 0.0
      %v2723 = vmax.f32 %v1907, 0.0
      %v2724 = vmax.f32 %v1912, 0.0
      %v2725 = vmax.f32 %v1915, 0.0
      %v2726 = vmax.f32 %v1920, 0.0
      %v2727 = vmax.f32 %v1923, 0.0
      %v2728 = vmax.f32 %v1928, 0.0
      %v2729 = vmax.f32 %v1931, 0.0
      %v2730 = vmax.f32 %v1936, 0.0
      %v2731 = vmax.f32 %v1939, 0.0
      %v2732 = vmax.f32 %v1944, 0.0
      %v2733 = vmax.f32 %v1947, 0.0
      %v2734 = vmax.f32 %v1952, 0.0
      %v2735 = vmax.f32 %v1955, 0.0
      %v2736 = vmax.f32 %v1960, 0.0
      %v2737 = vmax.f32 %v1963, 0.0
      %v2738 = vmax.f32 %v1968, 0.0
      %v2739 = vmax.f32 %v1971, 0.0
      %v2740 = vmax.f32 %v1976, 0.0
      %v2741 = vmax.f32 %v1979, 0.0
      %v2742 = vmax.f32 %v1984, 0.0
      %v2743 = vmax.f32 %v1987, 0.0
      %v2744 = vmax.f32 %v1992, 0.0
      %v2745 = vmax.f32 %v1995, 0.0
      %v2746 = vmax.f32 %v2000, 0.0
      %v2747 = vmax.f32 %v2003, 0.0
      %v2748 = vmax.f32 %v2008, 0.0
      %v2749 = vmax.f32 %v2011, 0.0
      %v2750 = vmax.f32 %v2016, 0.0
      %v2751 = vmax.f32 %v2019, 0.0
      %v2752 = vmax.f32 %v2024, 0.0
      %v2753 = vmax.f32 %v2027, 0.0
      %v2754 = vmax.f32 %v2032, 0.0
      %v2755 = vmax.f32 %v2035, 0.0
      %v2756 = vmax.f32 %v2040, 0.0
      %v2757 = vmax.f32 %v2043, 0.0
      %v2758 = vmax.f32 %v2048, 0.0
      %v2759 = vmax.f32 %v2051, 0.0
      %v2760 = vmax.f32 %v2056, 0.0
      %v2761 = vmax.f32 %v2059, 0.0
      %v2762 = vmax.f32 %v2064, 0.0
      %v2763 = vmax.f32 %v2067, 0.0
      %v2764 = vmax.f32 %v2072, 0.0
      %v2765 = vmax.f32 %v2075, 0.0
      %v2766 = vmax.f32 %v2080, 0.0
      %v2767 = vmax.f32 %v2083, 0.0
      %v2768 = vmax.f32 %v2088, 0.0
      %v2769 = vmax.f32 %v2091, 0.0
      %v2770 = vmax.f32 %v2096, 0.0
      %v2771 = vmax.f32 %v2099, 0.0
      %v2772 = vmax.f32 %v2104, 0.0
      %v2773 = vmax.f32 %v2107, 0.0
      %v2774 = vmax.f32 %v2112, 0.0
      %v2775 = vmax.f32 %v2115, 0.0
      %v2776 = vmax.f32 %v2120, 0.0
      %v2777 = vmax.f32 %v2123, 0.0
      %v2778 = vmax.f32 %v2128, 0.0
      %v2779 = vmax.f32 %v2131, 0.0
      %v2780 = vmax.f32 %v2136, 0.0
      %v2781 = vmax.f32 %v2139, 0.0
      %v2782 = vmax.f32 %v2144, 0.0
      %v2783 = vmax.f32 %v2147, 0.0
      %v2784 = vmax.f32 %v2152, 0.0
      %v2785 = vmax.f32 %v2155, 0.0
      %v2786 = vmax.f32 %v2160, 0.0
      %v2787 = vmax.f32 %v2163, 0.0
      %v2788 = vmax.f32 %v2168, 0.0
      %v2789 = vmax.f32 %v2171, 0.0
      %v2790 = vmax.f32 %v2176, 0.0
      %v2791 = vmax.f32 %v2179, 0.0
      %v2792 = vmax.f32 %v2184, 0.0
      %v2793 = vmax.f32 %v2187, 0.0
      %v2794 = vmax.f32 %v2192, 0.0
      %v2795 = vmax.f32 %v2195, 0.0
      %v2796 = vmax.f32 %v2200, 0.0
      %v2797 = vmax.f32 %v2203, 0.0
      %v2798 = vmax.f32 %v2208, 0.0
      %v2799 = vmax.f32 %v2211, 0.0
      %v2800 = vmax.f32 %v2216, 0.0
      %v2801 = vmax.f32 %v2219, 0.0
      %v2802 = vmax.f32 %v2224, 0.0
      %v2803 = vmax.f32 %v2227, 0.0
      %v2804 = vmax.f32 %v2232, 0.0
      %v2805 = vmax.f32 %v2235, 0.0
      %v2806 = vmax.f32 %v2240, 0.0
      %v2807 = vmax.f32 %v2243, 0.0
      %v2808 = vmax.f32 %v2248, 0.0
      %v2809 = vmax.f32 %v2251, 0.0
      %v2810 = vmax.f32 %v2256, 0.0
      %v2811 = vmax.f32 %v2259, 0.0
      %v2812 = vmax.f32 %v2264, 0.0
      %v2813 = vmax.f32 %v2267, 0.0
      %v2814 = vmax.f32 %v2272, 0.0
      %v2815 = vmax.f32 %v2275, 0.0
      %v2816 = vmax.f32 %v2280, 0.0
      %v2817 = vmax.f32 %v2283, 0.0
      %v2818 = vmax.f32 %v2288, 0.0
      %v2819 = vmax.f32 %v2291, 0.0
      %v2820 = vmax.f32 %v2296, 0.0
      %v2821 = vmax.f32 %v2299, 0.0
      %v2822 = vmax.f32 %v2304, 0.0
      %v2823 = vmax.f32 %v2307, 0.0
      %v2824 = vmax.f32 %v2312, 0.0
      %v2825 = vmax.f32 %v2315, 0.0
      %v2826 = vmax.f32 %v2320, 0.0
      %v2827 = vmax.f32 %v2323, 0.0
      %v2828 = vmax.f32 %v2328, 0.0
      %v2829 = vmax.f32 %v2331, 0.0
      %v2830 = vmax.f32 %v2336, 0.0
      %v2831 = vmax.f32 %v2339, 0.0
      %v2832 = vmax.f32 %v2344, 0.0
      %v2833 = vmax.f32 %v2347, 0.0
      %v2834 = vmax.f32 %v2352, 0.0
      %v2835 = vmax.f32 %v2355, 0.0
      %v2836 = vmax.f32 %v2360, 0.0
      %v2837 = vmax.f32 %v2363, 0.0
      %v2838 = vmax.f32 %v2368, 0.0
      %v2839 = vmax.f32 %v2371, 0.0
      %v2840 = vmax.f32 %v2376, 0.0
      %v2841 = vmax.f32 %v2379, 0.0
      %v2842 = vmax.f32 %v2384, 0.0
      %v2843 = vmax.f32 %v2387, 0.0
      %v2844 = vmax.f32 %v2392, 0.0
      %v2845 = vmax.f32 %v2395, 0.0
      %v2846 = vmax.f32 %v2400, 0.0
      %v2847 = vmax.f32 %v2403, 0.0
      %v2848 = vmax.f32 %v2408, 0.0
      %v2849 = vmax.f32 %v2411, 0.0
      %v2850 = vmax.f32 %v2416, 0.0
      %v2851 = vmax.f32 %v2419, 0.0
      %v2852 = vmax.f32 %v2424, 0.0
      %v2853 = vmax.f32 %v2427, 0.0
      %v2854 = vmax.f32 %v2432, 0.0
      %v2855 = vmax.f32 %v2435, 0.0
      %v2856 = vmax.f32 %v2440, 0.0
      %v2857 = vmax.f32 %v2443, 0.0
      %v2858 = vmax.f32 %v2448, 0.0
      %v2859 = vmax.f32 %v2451, 0.0
      %v2860 = vmax.f32 %v2456, 0.0
      %v2861 = vmax.f32 %v2459, 0.0
      %v2862 = vmax.f32 %v2464, 0.0
      %v2863 = vmax.f32 %v2467, 0.0
      %v2864 = vmax.f32 %v2472, 0.0
      %v2865 = vmax.f32 %v2475, 0.0
      %v2866 = vmax.f32 %v2480, 0.0
      %v2867 = vmax.f32 %v2483, 0.0
      %v2868 = vmax.f32 %v2488, 0.0
      %v2869 = vmax.f32 %v2491, 0.0
      %v2870 = vmax.f32 %v2496, 0.0
      %v2871 = vmax.f32 %v2499, 0.0
      %v2872 = vmax.f32 %v2504, 0.0
      %v2873 = vmax.f32 %v2507, 0.0
      %v2874 = vmax.f32 %v2512, 0.0
      %v2875 = vmax.f32 %v2515, 0.0
      %v2876 = vmax.f32 %v2520, 0.0
      %v2877 = vmax.f32 %v2523, 0.0
      %v2878 = vmax.f32 %v2528, 0.0
      %v2879 = vmax.f32 %v2531, 0.0
      %v2880 = vmax.f32 %v2536, 0.0
      %v2881 = vmax.f32 %v2539, 0.0
      %v2882 = vmax.f32 %v2544, 0.0
      %v2883 = vmax.f32 %v2547, 0.0
      %v2884 = vmax.f32 %v2552, 0.0
      %v2885 = vmax.f32 %v2555, 0.0
      %v2886 = vmax.f32 %v2560, 0.0
      %v2887 = vmax.f32 %v2563, 0.0
      %v2888 = vmax.f32 %v2568, 0.0
      %v2889 = vmax.f32 %v2571, 0.0
      %v2890 = vmax.f32 %v2576, 0.0
      %v2891 = vmax.f32 %v2579, 0.0
      %v2892 = vmax.f32 %v2584, 0.0
      %v2893 = vmax.f32 %v2587, 0.0
      %v2894 = vmax.f32 %v2592, 0.0
      %v2895 = vmax.f32 %v2595, 0.0
      %v2896 = vmax.f32 %v2600, 0.0
      %v2897 = vmax.f32 %v2603, 0.0
      %v2898 = vmax.f32 %v2608, 0.0
      %v2899 = vmax.f32 %v2611, 0.0
      %v2900 = vmax.f32 %v2616, 0.0
      %v2901 = vmax.f32 %v2619, 0.0
      %v2902 = vmax.f32 %v2624, 0.0
      %v2903 = vmax.f32 %v2627, 0.0
      %v2904 = vmax.f32 %v2632, 0.0
      %v2905 = vmax.f32 %v2635, 0.0
      %v2906 = vmax.f32 %v2640, 0.0
      %v2907 = vmax.f32 %v2643, 0.0
      %v2908 = vmax.f32 %v2648, 0.0
      %v2909 = vmax.f32 %v2651, 0.0
      %v2910 = vpack.c.bf16 %v2655, %v2654
      %v2911 = vpack.c.bf16 %v2657, %v2656
      %v2912 = vpack.c.bf16 %v2659, %v2658
      %v2913 = vpack.c.bf16 %v2661, %v2660
      %v2914 = vpack.c.bf16 %v2663, %v2662
      %v2915 = vpack.c.bf16 %v2665, %v2664
      %v2916 = vpack.c.bf16 %v2667, %v2666
      %v2917 = vpack.c.bf16 %v2669, %v2668
      %v2918 = vpack.c.bf16 %v2671, %v2670
      %v2919 = vpack.c.bf16 %v2673, %v2672
      %v2920 = vpack.c.bf16 %v2675, %v2674
      %v2921 = vpack.c.bf16 %v2677, %v2676
      %v2922 = vpack.c.bf16 %v2679, %v2678
      %v2923 = vpack.c.bf16 %v2681, %v2680
      %v2924 = vpack.c.bf16 %v2683, %v2682
      %v2925 = vpack.c.bf16 %v2685, %v2684
      %v2926 = vpack.c.bf16 %v2687, %v2686
      %v2927 = vpack.c.bf16 %v2689, %v2688
      %v2928 = vpack.c.bf16 %v2691, %v2690
      %v2929 = vpack.c.bf16 %v2693, %v2692
      %v2930 = vpack.c.bf16 %v2695, %v2694
      %v2931 = vpack.c.bf16 %v2697, %v2696
      %v2932 = vpack.c.bf16 %v2699, %v2698
      %v2933 = vpack.c.bf16 %v2701, %v2700
      %v2934 = vpack.c.bf16 %v2703, %v2702
      %v2935 = vpack.c.bf16 %v2705, %v2704
      %v2936 = vpack.c.bf16 %v2707, %v2706
      %v2937 = vpack.c.bf16 %v2709, %v2708
      %v2938 = vpack.c.bf16 %v2711, %v2710
      %v2939 = vpack.c.bf16 %v2713, %v2712
      %v2940 = vpack.c.bf16 %v2715, %v2714
      %v2941 = vpack.c.bf16 %v2717, %v2716
      %v2942 = vpack.c.bf16 %v2719, %v2718
      %v2943 = vpack.c.bf16 %v2721, %v2720
      %v2944 = vpack.c.bf16 %v2723, %v2722
      %v2945 = vpack.c.bf16 %v2725, %v2724
      %v2946 = vpack.c.bf16 %v2727, %v2726
      %v2947 = vpack.c.bf16 %v2729, %v2728
      %v2948 = vpack.c.bf16 %v2731, %v2730
      %v2949 = vpack.c.bf16 %v2733, %v2732
      %v2950 = vpack.c.bf16 %v2735, %v2734
      %v2951 = vpack.c.bf16 %v2737, %v2736
      %v2952 = vpack.c.bf16 %v2739, %v2738
      %v2953 = vpack.c.bf16 %v2741, %v2740
      %v2954 = vpack.c.bf16 %v2743, %v2742
      %v2955 = vpack.c.bf16 %v2745, %v2744
      %v2956 = vpack.c.bf16 %v2747, %v2746
      %v2957 = vpack.c.bf16 %v2749, %v2748
      %v2958 = vpack.c.bf16 %v2751, %v2750
      %v2959 = vpack.c.bf16 %v2753, %v2752
      %v2960 = vpack.c.bf16 %v2755, %v2754
      %v2961 = vpack.c.bf16 %v2757, %v2756
      %v2962 = vpack.c.bf16 %v2759, %v2758
      %v2963 = vpack.c.bf16 %v2761, %v2760
      %v2964 = vpack.c.bf16 %v2763, %v2762
      %v2965 = vpack.c.bf16 %v2765, %v2764
      %v2966 = vpack.c.bf16 %v2767, %v2766
      %v2967 = vpack.c.bf16 %v2769, %v2768
      %v2968 = vpack.c.bf16 %v2771, %v2770
      %v2969 = vpack.c.bf16 %v2773, %v2772
      %v2970 = vpack.c.bf16 %v2775, %v2774
      %v2971 = vpack.c.bf16 %v2777, %v2776
      %v2972 = vpack.c.bf16 %v2779, %v2778
      %v2973 = vpack.c.bf16 %v2781, %v2780
      %v2974 = vpack.c.bf16 %v2783, %v2782
      %v2975 = vpack.c.bf16 %v2785, %v2784
      %v2976 = vpack.c.bf16 %v2787, %v2786
      %v2977 = vpack.c.bf16 %v2789, %v2788
      %v2978 = vpack.c.bf16 %v2791, %v2790
      %v2979 = vpack.c.bf16 %v2793, %v2792
      %v2980 = vpack.c.bf16 %v2795, %v2794
      %v2981 = vpack.c.bf16 %v2797, %v2796
      %v2982 = vpack.c.bf16 %v2799, %v2798
      %v2983 = vpack.c.bf16 %v2801, %v2800
      %v2984 = vpack.c.bf16 %v2803, %v2802
      %v2985 = vpack.c.bf16 %v2805, %v2804
      %v2986 = vpack.c.bf16 %v2807, %v2806
      %v2987 = vpack.c.bf16 %v2809, %v2808
      %v2988 = vpack.c.bf16 %v2811, %v2810
      %v2989 = vpack.c.bf16 %v2813, %v2812
      %v2990 = vpack.c.bf16 %v2815, %v2814
      %v2991 = vpack.c.bf16 %v2817, %v2816
      %v2992 = vpack.c.bf16 %v2819, %v2818
      %v2993 = vpack.c.bf16 %v2821, %v2820
      %v2994 = vpack.c.bf16 %v2823, %v2822
      %v2995 = vpack.c.bf16 %v2825, %v2824
      %v2996 = vpack.c.bf16 %v2827, %v2826
      %v2997 = vpack.c.bf16 %v2829, %v2828
      %v2998 = vpack.c.bf16 %v2831, %v2830
      %v2999 = vpack.c.bf16 %v2833, %v2832
      %v3000 = vpack.c.bf16 %v2835, %v2834
      %v3001 = vpack.c.bf16 %v2837, %v2836
      %v3002 = vpack.c.bf16 %v2839, %v2838
      %v3003 = vpack.c.bf16 %v2841, %v2840
      %v3004 = vpack.c.bf16 %v2843, %v2842
      %v3005 = vpack.c.bf16 %v2845, %v2844
      %v3006 = vpack.c.bf16 %v2847, %v2846
      %v3007 = vpack.c.bf16 %v2849, %v2848
      %v3008 = vpack.c.bf16 %v2851, %v2850
      %v3009 = vpack.c.bf16 %v2853, %v2852
      %v3010 = vpack.c.bf16 %v2855, %v2854
      %v3011 = vpack.c.bf16 %v2857, %v2856
      %v3012 = vpack.c.bf16 %v2859, %v2858
      %v3013 = vpack.c.bf16 %v2861, %v2860
      %v3014 = vpack.c.bf16 %v2863, %v2862
      %v3015 = vpack.c.bf16 %v2865, %v2864
      %v3016 = vpack.c.bf16 %v2867, %v2866
      %v3017 = vpack.c.bf16 %v2869, %v2868
      %v3018 = vpack.c.bf16 %v2871, %v2870
      %v3019 = vpack.c.bf16 %v2873, %v2872
      %v3020 = vpack.c.bf16 %v2875, %v2874
      %v3021 = vpack.c.bf16 %v2877, %v2876
      %v3022 = vpack.c.bf16 %v2879, %v2878
      %v3023 = vpack.c.bf16 %v2881, %v2880
      %v3024 = vpack.c.bf16 %v2883, %v2882
      %v3025 = vpack.c.bf16 %v2885, %v2884
      %v3026 = vpack.c.bf16 %v2887, %v2886
      %v3027 = vpack.c.bf16 %v2889, %v2888
      %v3028 = vpack.c.bf16 %v2891, %v2890
      %v3029 = vpack.c.bf16 %v2893, %v2892
      %v3030 = vpack.c.bf16 %v2895, %v2894
      %v3031 = vpack.c.bf16 %v2897, %v2896
      %v3032 = vpack.c.bf16 %v2899, %v2898
      %v3033 = vpack.c.bf16 %v2901, %v2900
      %v3034 = vpack.c.bf16 %v2903, %v2902
      %v3035 = vpack.c.bf16 %v2905, %v2904
      %v3036 = vpack.c.bf16 %v2907, %v2906
      %v3037 = vpack.c.bf16 %v2909, %v2908
      %v3039 = vlaneseq
      %v3040 = vshrl.u32 %v3039, 7
      %v3041 = vsub.s32 0, %v3040
      %v3042 = vrot.slane %v549, %v3041
      %v3052 = vunpack.c.l.b16 %v541
      %v3053 = vunpack.c.l.b16 %v542
      %v3054 = vunpack.c.l.b16 %v543
      %v3055 = vunpack.c.l.b16 %v544
      %v3056 = vunpack.c.l.b16 %v545
      %v3057 = vunpack.c.l.b16 %v546
      %v3058 = vunpack.c.l.b16 %v547
      %v3059 = vunpack.c.l.b16 %v548
      %v3060 = vpack.c.b16 %v3053, %v3052
      %v3061 = vpack.c.b16 %v3055, %v3054
      %v3062 = vpack.c.b16 %v3057, %v3056
      %v3063 = vpack.c.b16 %v3059, %v3058
      %vm3068 = vcmask 523264
      %v3070 = vsel %vm3068, %v2910, 0
      %v3073 = vsel %vm3068, %v2911, 0
      %v3076 = vsel %vm3068, %v2912, 0
      %v3079 = vsel %vm3068, %v2913, 0
      %v3082 = vsel %vm3068, %v2914, 0
      %v3085 = vsel %vm3068, %v2915, 0
      %v3088 = vsel %vm3068, %v2916, 0
      %v3091 = vsel %vm3068, %v2917, 0
      %v3094 = vsel %vm3068, %v2918, 0
      %v3097 = vsel %vm3068, %v2919, 0
      %v3100 = vsel %vm3068, %v2920, 0
      %v3103 = vsel %vm3068, %v2921, 0
      %v3106 = vsel %vm3068, %v2922, 0
      %v3109 = vsel %vm3068, %v2923, 0
      %v3112 = vsel %vm3068, %v2924, 0
      %v3115 = vsel %vm3068, %v2925, 0
      %v3118 = vsel %vm3068, %v2926, 0
      %v3121 = vsel %vm3068, %v2927, 0
      %v3124 = vsel %vm3068, %v2928, 0
      %v3127 = vsel %vm3068, %v2929, 0
      %v3130 = vsel %vm3068, %v2930, 0
      %v3133 = vsel %vm3068, %v2931, 0
      %v3136 = vsel %vm3068, %v2932, 0
      %v3139 = vsel %vm3068, %v2933, 0
      %v3142 = vsel %vm3068, %v2934, 0
      %v3145 = vsel %vm3068, %v2935, 0
      %v3148 = vsel %vm3068, %v2936, 0
      %v3151 = vsel %vm3068, %v2937, 0
      %v3154 = vsel %vm3068, %v2938, 0
      %v3157 = vsel %vm3068, %v2939, 0
      %v3160 = vsel %vm3068, %v2940, 0
      %v3163 = vsel %vm3068, %v2941, 0
      %v3166 = vsel %vm3068, %v2942, 0
      %v3169 = vsel %vm3068, %v2943, 0
      %v3172 = vsel %vm3068, %v2944, 0
      %v3175 = vsel %vm3068, %v2945, 0
      %v3178 = vsel %vm3068, %v2946, 0
      %v3181 = vsel %vm3068, %v2947, 0
      %v3184 = vsel %vm3068, %v2948, 0
      %v3187 = vsel %vm3068, %v2949, 0
      %v3190 = vsel %vm3068, %v2950, 0
      %v3193 = vsel %vm3068, %v2951, 0
      %v3196 = vsel %vm3068, %v2952, 0
      %v3199 = vsel %vm3068, %v2953, 0
      %v3202 = vsel %vm3068, %v2954, 0
      %v3205 = vsel %vm3068, %v2955, 0
      %v3208 = vsel %vm3068, %v2956, 0
      %v3211 = vsel %vm3068, %v2957, 0
      %v3214 = vsel %vm3068, %v2958, 0
      %v3217 = vsel %vm3068, %v2959, 0
      %v3220 = vsel %vm3068, %v2960, 0
      %v3223 = vsel %vm3068, %v2961, 0
      %v3226 = vsel %vm3068, %v2962, 0
      %v3229 = vsel %vm3068, %v2963, 0
      %v3232 = vsel %vm3068, %v2964, 0
      %v3235 = vsel %vm3068, %v2965, 0
      %v3238 = vsel %vm3068, %v2966, 0
      %v3241 = vsel %vm3068, %v2967, 0
      %v3244 = vsel %vm3068, %v2968, 0
      %v3247 = vsel %vm3068, %v2969, 0
      %v3250 = vsel %vm3068, %v2970, 0
      %v3253 = vsel %vm3068, %v2971, 0
      %v3256 = vsel %vm3068, %v2972, 0
      %v3259 = vsel %vm3068, %v2973, 0
      %v3262 = vsel %vm3068, %v2974, 0
      %v3265 = vsel %vm3068, %v2975, 0
      %v3268 = vsel %vm3068, %v2976, 0
      %v3271 = vsel %vm3068, %v2977, 0
      %v3274 = vsel %vm3068, %v2978, 0
      %v3277 = vsel %vm3068, %v2979, 0
      %v3280 = vsel %vm3068, %v2980, 0
      %v3283 = vsel %vm3068, %v2981, 0
      %v3286 = vsel %vm3068, %v2982, 0
      %v3289 = vsel %vm3068, %v2983, 0
      %v3292 = vsel %vm3068, %v2984, 0
      %v3295 = vsel %vm3068, %v2985, 0
      %v3298 = vsel %vm3068, %v2986, 0
      %v3301 = vsel %vm3068, %v2987, 0
      %v3304 = vsel %vm3068, %v2988, 0
      %v3307 = vsel %vm3068, %v2989, 0
      %v3310 = vsel %vm3068, %v2990, 0
      %v3313 = vsel %vm3068, %v2991, 0
      %v3316 = vsel %vm3068, %v2992, 0
      %v3319 = vsel %vm3068, %v2993, 0
      %v3322 = vsel %vm3068, %v2994, 0
      %v3325 = vsel %vm3068, %v2995, 0
      %v3328 = vsel %vm3068, %v2996, 0
      %v3331 = vsel %vm3068, %v2997, 0
      %v3334 = vsel %vm3068, %v2998, 0
      %v3337 = vsel %vm3068, %v2999, 0
      %v3340 = vsel %vm3068, %v3000, 0
      %v3343 = vsel %vm3068, %v3001, 0
      %v3346 = vsel %vm3068, %v3002, 0
      %v3349 = vsel %vm3068, %v3003, 0
      %v3352 = vsel %vm3068, %v3004, 0
      %v3355 = vsel %vm3068, %v3005, 0
      %v3358 = vsel %vm3068, %v3006, 0
      %v3361 = vsel %vm3068, %v3007, 0
      %v3364 = vsel %vm3068, %v3008, 0
      %v3367 = vsel %vm3068, %v3009, 0
      %v3370 = vsel %vm3068, %v3010, 0
      %v3373 = vsel %vm3068, %v3011, 0
      %v3376 = vsel %vm3068, %v3012, 0
      %v3379 = vsel %vm3068, %v3013, 0
      %v3382 = vsel %vm3068, %v3014, 0
      %v3385 = vsel %vm3068, %v3015, 0
      %v3388 = vsel %vm3068, %v3016, 0
      %v3391 = vsel %vm3068, %v3017, 0
      %v3394 = vsel %vm3068, %v3018, 0
      %v3397 = vsel %vm3068, %v3019, 0
      %v3400 = vsel %vm3068, %v3020, 0
      %v3403 = vsel %vm3068, %v3021, 0
      %v3406 = vsel %vm3068, %v3022, 0
      %v3409 = vsel %vm3068, %v3023, 0
      %v3412 = vsel %vm3068, %v3024, 0
      %v3415 = vsel %vm3068, %v3025, 0
      %v3418 = vsel %vm3068, %v3026, 0
      %v3421 = vsel %vm3068, %v3027, 0
      %v3424 = vsel %vm3068, %v3028, 0
      %v3427 = vsel %vm3068, %v3029, 0
      %v3430 = vsel %vm3068, %v3030, 0
      %v3433 = vsel %vm3068, %v3031, 0
      %v3436 = vsel %vm3068, %v3032, 0
      %v3439 = vsel %vm3068, %v3033, 0
      %v3442 = vsel %vm3068, %v3034, 0
      %v3445 = vsel %vm3068, %v3035, 0
      %v3448 = vsel %vm3068, %v3036, 0
      %v3451 = vsel %vm3068, %v3037, 0
      %3453 = vmatprep.subr.bf16.mxu0 0
      %3454 = vmatpush1.bf16.msra.mxu0 %v3060
      %3455 = vmatprep.subr.bf16.mxu0 0
      %3456 = vmatpush1.bf16.msra.mxu0 %v3061
      %3457 = vmatprep.subr.bf16.mxu0 0
      %3458 = vmatpush1.bf16.msra.mxu0 %v3062
      %3459 = vmatprep.subr.bf16.mxu0 0
      %3460 = vmatpush1.bf16.msra.mxu0 %v3063
      %3461 = vmatprep.subr.bf16.mxu0 0
      %3462 = vmatpush1.bf16.msra.mxu0 0
      %3463 = vmatprep.subr.bf16.mxu0 0
      %3464 = vmatpush1.bf16.msra.mxu0 0
      %3465 = vmatprep.subr.bf16.mxu0 0
      %3466 = vmatpush1.bf16.msra.mxu0 0
      %3467 = vmatprep.subr.bf16.mxu0 0
      %3468 = vmatpush1.bf16.msra.mxu0 0
      %3469 = vmatprep.subr.bf16.mxu0 0
      %3470 = vmatpush1.bf16.msra.mxu0 0
      %3471 = vmatprep.subr.bf16.mxu0 0
      %3472 = vmatpush1.bf16.msra.mxu0 0
      %3473 = vmatprep.subr.bf16.mxu0 0
      %3474 = vmatpush1.bf16.msra.mxu0 0
      %3475 = vmatprep.subr.bf16.mxu0 0
      %3476 = vmatpush1.bf16.msra.mxu0 0
      %3477 = vmatprep.subr.bf16.mxu0 0
      %3478 = vmatpush1.bf16.msra.mxu0 0
      %3479 = vmatprep.subr.bf16.mxu0 0
      %3480 = vmatpush1.bf16.msra.mxu0 0
      %3481 = vmatprep.subr.bf16.mxu0 0
      %3482 = vmatpush1.bf16.msra.mxu0 0
      %3483 = vmatprep.subr.bf16.mxu0 0
      %3484 = vmatpush1.bf16.msra.mxu0 0
      %3485 = vmatprep.mubr.bf16.mxu0 0
      %3486 = vmatmul.mubr.bf16.gmra.mrb[0].mxu0 %v3070
      %v3487 = vpop.f32.mrb[0].mxu0
      %v3488 = vadd.f32 %v3042, %v3487
      %v3489 = vpop.f32.mrb[0].mxu0
      %v3490 = vpop.f32.mrb[0].mxu0
      %v3491 = vadd.f32 %v3042, %v3490
      %v3492 = vpop.f32.mrb[0].mxu0
      %3493 = vmatprep.mubr.bf16.mxu0 0
      %3494 = vmatmul.mubr.bf16.gmra.mrb[0].mxu0 %v3073
      %v3495 = vpop.f32.mrb[0].mxu0
      %v3496 = vadd.f32 %v3042, %v3495
      %v3497 = vpop.f32.mrb[0].mxu0
      %v3498 = vpop.f32.mrb[0].mxu0
      %v3499 = vadd.f32 %v3042, %v3498
      %v3500 = vpop.f32.mrb[0].mxu0
      %3501 = vmatprep.mubr.bf16.mxu0 0
      %3502 = vmatmul.mubr.bf16.gmra.mrb[0].mxu0 %v3076
      %v3503 = vpop.f32.mrb[0].mxu0
      %v3504 = vadd.f32 %v3042, %v3503
      %v3505 = vpop.f32.mrb[0].mxu0
      %v3506 = vpop.f32.mrb[0].mxu0
      %v3507 = vadd.f32 %v3042, %v3506
      %v3508 = vpop.f32.mrb[0].mxu0
      %3509 = vmatprep.mubr.bf16.mxu0 0
      %3510 = vmatmul.mubr.bf16.gmra.mrb[0].mxu0 %v3079
      %v3511 = vpop.f32.mrb[0].mxu0
      %v3512 = vadd.f32 %v3042, %v3511
      %v3513 = vpop.f32.mrb[0].mxu0
      %v3514 = vpop.f32.mrb[0].mxu0
      %v3515 = vadd.f32 %v3042, %v3514
      %v3516 = vpop.f32.mrb[0].mxu0
      %3517 = vmatprep.mubr.bf16.mxu0 0
      %3518 = vmatmul.mubr.bf16.gmra.mrb[0].mxu0 %v3082
      %v3519 = vpop.f32.mrb[0].mxu0
      %v3520 = vadd.f32 %v3042, %v3519
      %v3521 = vpop.f32.mrb[0].mxu0
      %v3522 = vpop.f32.mrb[0].mxu0
      %v3523 = vadd.f32 %v3042, %v3522
      %v3524 = vpop.f32.mrb[0].mxu0
      %3525 = vmatprep.mubr.bf16.mxu0 0
      %3526 = vmatmul.mubr.bf16.gmra.mrb[0].mxu0 %v3085
      %v3527 = vpop.f32.mrb[0].mxu0
      %v3528 = vadd.f32 %v3042, %v3527
      %v3529 = vpop.f32.mrb[0].mxu0
      %v3530 = vpop.f32.mrb[0].mxu0
      %v3531 = vadd.f32 %v3042, %v3530
      %v3532 = vpop.f32.mrb[0].mxu0
      %3533 = vmatprep.mubr.bf16.mxu0 0
      %3534 = vmatmul.mubr.bf16.gmra.mrb[0].mxu0 %v3088
      %v3535 = vpop.f32.mrb[0].mxu0
      %v3536 = vadd.f32 %v3042, %v3535
      %v3537 = vpop.f32.mrb[0].mxu0
      %v3538 = vpop.f32.mrb[0].mxu0
      %v3539 = vadd.f32 %v3042, %v3538
      %v3540 = vpop.f32.mrb[0].mxu0
      %3541 = vmatprep.mubr.bf16.mxu0 0
      %3542 = vmatmul.mubr.bf16.gmra.mrb[0].mxu0 %v3091
      %v3543 = vpop.f32.mrb[0].mxu0
      %v3544 = vadd.f32 %v3042, %v3543
      %v3545 = vpop.f32.mrb[0].mxu0
      %v3546 = vpop.f32.mrb[0].mxu0
      %v3547 = vadd.f32 %v3042, %v3546
      %v3548 = vpop.f32.mrb[0].mxu0
      %3549 = vmatprep.mubr.bf16.mxu0 0
      %3550 = vmatmul.mubr.bf16.gmra.mrb[0].mxu0 %v3094
      %v3551 = vpop.f32.mrb[0].mxu0
      %v3552 = vadd.f32 %v3042, %v3551
      %v3553 = vpop.f32.mrb[0].mxu0
      %v3554 = vpop.f32.mrb[0].mxu0
      %v3555 = vadd.f32 %v3042, %v3554
      %v3556 = vpop.f32.mrb[0].mxu0
      %3557 = vmatprep.mubr.bf16.mxu0 0
      %3558 = vmatmul.mubr.bf16.gmra.mrb[0].mxu0 %v3097
      %v3559 = vpop.f32.mrb[0].mxu0
      %v3560 = vadd.f32 %v3042, %v3559
      %v3561 = vpop.f32.mrb[0].mxu0
      %v3562 = vpop.f32.mrb[0].mxu0
      %v3563 = vadd.f32 %v3042, %v3562
      %v3564 = vpop.f32.mrb[0].mxu0
      %3565 = vmatprep.mubr.bf16.mxu0 0
      %3566 = vmatmul.mubr.bf16.gmra.mrb[0].mxu0 %v3100
      %v3567 = vpop.f32.mrb[0].mxu0
      %v3568 = vadd.f32 %v3042, %v3567
      %v3569 = vpop.f32.mrb[0].mxu0
      %v3570 = vpop.f32.mrb[0].mxu0
      %v3571 = vadd.f32 %v3042, %v3570
      %v3572 = vpop.f32.mrb[0].mxu0
      %3573 = vmatprep.mubr.bf16.mxu0 0
      %3574 = vmatmul.mubr.bf16.gmra.mrb[0].mxu0 %v3103
      %v3575 = vpop.f32.mrb[0].mxu0
      %v3576 = vadd.f32 %v3042, %v3575
      %v3577 = vpop.f32.mrb[0].mxu0
      %v3578 = vpop.f32.mrb[0].mxu0
      %v3579 = vadd.f32 %v3042, %v3578
      %v3580 = vpop.f32.mrb[0].mxu0
      %3581 = vmatprep.mubr.bf16.mxu0 0
      %3582 = vmatmul.mubr.bf16.gmra.mrb[0].mxu0 %v3106
      %v3583 = vpop.f32.mrb[0].mxu0
      %v3584 = vadd.f32 %v3042, %v3583
      %v3585 = vpop.f32.mrb[0].mxu0
      %v3586 = vpop.f32.mrb[0].mxu0
      %v3587 = vadd.f32 %v3042, %v3586
      %v3588 = vpop.f32.mrb[0].mxu0
      %3589 = vmatprep.mubr.bf16.mxu0 0
      %3590 = vmatmul.mubr.bf16.gmra.mrb[0].mxu0 %v3109
      %v3591 = vpop.f32.mrb[0].mxu0
      %v3592 = vadd.f32 %v3042, %v3591
      %v3593 = vpop.f32.mrb[0].mxu0
      %v3594 = vpop.f32.mrb[0].mxu0
      %v3595 = vadd.f32 %v3042, %v3594
      %v3596 = vpop.f32.mrb[0].mxu0
      %3597 = vmatprep.mubr.bf16.mxu0 0
      %3598 = vmatmul.mubr.bf16.gmra.mrb[0].mxu0 %v3112
      %v3599 = vpop.f32.mrb[0].mxu0
      %v3600 = vadd.f32 %v3042, %v3599
      %v3601 = vpop.f32.mrb[0].mxu0
      %v3602 = vpop.f32.mrb[0].mxu0
      %v3603 = vadd.f32 %v3042, %v3602
      %v3604 = vpop.f32.mrb[0].mxu0
      %3605 = vmatprep.mubr.bf16.mxu0 0
      %3606 = vmatmul.mubr.bf16.gmra.mrb[0].mxu0 %v3115
      %v3607 = vpop.f32.mrb[0].mxu0
      %v3608 = vadd.f32 %v3042, %v3607
      %v3609 = vpop.f32.mrb[0].mxu0
      %v3610 = vpop.f32.mrb[0].mxu0
      %v3611 = vadd.f32 %v3042, %v3610
      %v3612 = vpop.f32.mrb[0].mxu0
      %3613 = vmatprep.mubr.bf16.mxu0 0
      %3614 = vmatmul.mubr.bf16.gmra.mrb[0].mxu0 %v3118
      %v3615 = vpop.f32.mrb[0].mxu0
      %v3616 = vadd.f32 %v3042, %v3615
      %v3617 = vpop.f32.mrb[0].mxu0
      %v3618 = vpop.f32.mrb[0].mxu0
      %v3619 = vadd.f32 %v3042, %v3618
      %v3620 = vpop.f32.mrb[0].mxu0
      %3621 = vmatprep.mubr.bf16.mxu0 0
      %3622 = vmatmul.mubr.bf16.gmra.mrb[0].mxu0 %v3121
      %v3623 = vpop.f32.mrb[0].mxu0
      %v3624 = vadd.f32 %v3042, %v3623
      %v3625 = vpop.f32.mrb[0].mxu0
      %v3626 = vpop.f32.mrb[0].mxu0
      %v3627 = vadd.f32 %v3042, %v3626
      %v3628 = vpop.f32.mrb[0].mxu0
      %3629 = vmatprep.mubr.bf16.mxu0 0
      %3630 = vmatmul.mubr.bf16.gmra.mrb[0].mxu0 %v3124
      %v3631 = vpop.f32.mrb[0].mxu0
      %v3632 = vadd.f32 %v3042, %v3631
      %v3633 = vpop.f32.mrb[0].mxu0
      %v3634 = vpop.f32.mrb[0].mxu0
      %v3635 = vadd.f32 %v3042, %v3634
      %v3636 = vpop.f32.mrb[0].mxu0
      %3637 = vmatprep.mubr.bf16.mxu0 0
      %3638 = vmatmul.mubr.bf16.gmra.mrb[0].mxu0 %v3127
      %v3639 = vpop.f32.mrb[0].mxu0
      %v3640 = vadd.f32 %v3042, %v3639
      %v3641 = vpop.f32.mrb[0].mxu0
      %v3642 = vpop.f32.mrb[0].mxu0
      %v3643 = vadd.f32 %v3042, %v3642
      %v3644 = vpop.f32.mrb[0].mxu0
      %3645 = vmatprep.mubr.bf16.mxu0 0
      %3646 = vmatmul.mubr.bf16.gmra.mrb[0].mxu0 %v3130
      %v3647 = vpop.f32.mrb[0].mxu0
      %v3648 = vadd.f32 %v3042, %v3647
      %v3649 = vpop.f32.mrb[0].mxu0
      %v3650 = vpop.f32.mrb[0].mxu0
      %v3651 = vadd.f32 %v3042, %v3650
      %v3652 = vpop.f32.mrb[0].mxu0
      %3653 = vmatprep.mubr.bf16.mxu0 0
      %3654 = vmatmul.mubr.bf16.gmra.mrb[0].mxu0 %v3133
      %v3655 = vpop.f32.mrb[0].mxu0
      %v3656 = vadd.f32 %v3042, %v3655
      %v3657 = vpop.f32.mrb[0].mxu0
      %v3658 = vpop.f32.mrb[0].mxu0
      %v3659 = vadd.f32 %v3042, %v3658
      %v3660 = vpop.f32.mrb[0].mxu0
      %3661 = vmatprep.mubr.bf16.mxu0 0
      %3662 = vmatmul.mubr.bf16.gmra.mrb[0].mxu0 %v3136
      %v3663 = vpop.f32.mrb[0].mxu0
      %v3664 = vadd.f32 %v3042, %v3663
      %v3665 = vpop.f32.mrb[0].mxu0
      %v3666 = vpop.f32.mrb[0].mxu0
      %v3667 = vadd.f32 %v3042, %v3666
      %v3668 = vpop.f32.mrb[0].mxu0
      %3669 = vmatprep.mubr.bf16.mxu0 0
      %3670 = vmatmul.mubr.bf16.gmra.mrb[0].mxu0 %v3139
      %v3671 = vpop.f32.mrb[0].mxu0
      %v3672 = vadd.f32 %v3042, %v3671
      %v3673 = vpop.f32.mrb[0].mxu0
      %v3674 = vpop.f32.mrb[0].mxu0
      %v3675 = vadd.f32 %v3042, %v3674
      %v3676 = vpop.f32.mrb[0].mxu0
      %3677 = vmatprep.mubr.bf16.mxu0 0
      %3678 = vmatmul.mubr.bf16.gmra.mrb[0].mxu0 %v3142
      %v3679 = vpop.f32.mrb[0].mxu0
      %v3680 = vadd.f32 %v3042, %v3679
      %v3681 = vpop.f32.mrb[0].mxu0
      %v3682 = vpop.f32.mrb[0].mxu0
      %v3683 = vadd.f32 %v3042, %v3682
      %v3684 = vpop.f32.mrb[0].mxu0
      %3685 = vmatprep.mubr.bf16.mxu0 0
      %3686 = vmatmul.mubr.bf16.gmra.mrb[0].mxu0 %v3145
      %v3687 = vpop.f32.mrb[0].mxu0
      %v3688 = vadd.f32 %v3042, %v3687
      %v3689 = vpop.f32.mrb[0].mxu0
      %v3690 = vpop.f32.mrb[0].mxu0
      %v3691 = vadd.f32 %v3042, %v3690
      %v3692 = vpop.f32.mrb[0].mxu0
      %3693 = vmatprep.mubr.bf16.mxu0 0
      %3694 = vmatmul.mubr.bf16.gmra.mrb[0].mxu0 %v3148
      %v3695 = vpop.f32.mrb[0].mxu0
      %v3696 = vadd.f32 %v3042, %v3695
      %v3697 = vpop.f32.mrb[0].mxu0
      %v3698 = vpop.f32.mrb[0].mxu0
      %v3699 = vadd.f32 %v3042, %v3698
      %v3700 = vpop.f32.mrb[0].mxu0
      %3701 = vmatprep.mubr.bf16.mxu0 0
      %3702 = vmatmul.mubr.bf16.gmra.mrb[0].mxu0 %v3151
      %v3703 = vpop.f32.mrb[0].mxu0
      %v3704 = vadd.f32 %v3042, %v3703
      %v3705 = vpop.f32.mrb[0].mxu0
      %v3706 = vpop.f32.mrb[0].mxu0
      %v3707 = vadd.f32 %v3042, %v3706
      %v3708 = vpop.f32.mrb[0].mxu0
      %3709 = vmatprep.mubr.bf16.mxu0 0
      %3710 = vmatmul.mubr.bf16.gmra.mrb[0].mxu0 %v3154
      %v3711 = vpop.f32.mrb[0].mxu0
      %v3712 = vadd.f32 %v3042, %v3711
      %v3713 = vpop.f32.mrb[0].mxu0
      %v3714 = vpop.f32.mrb[0].mxu0
      %v3715 = vadd.f32 %v3042, %v3714
      %v3716 = vpop.f32.mrb[0].mxu0
      %3717 = vmatprep.mubr.bf16.mxu0 0
      %3718 = vmatmul.mubr.bf16.gmra.mrb[0].mxu0 %v3157
      %v3719 = vpop.f32.mrb[0].mxu0
      %v3720 = vadd.f32 %v3042, %v3719
      %v3721 = vpop.f32.mrb[0].mxu0
      %v3722 = vpop.f32.mrb[0].mxu0
      %v3723 = vadd.f32 %v3042, %v3722
      %v3724 = vpop.f32.mrb[0].mxu0
      %3725 = vmatprep.mubr.bf16.mxu0 0
      %3726 = vmatmul.mubr.bf16.gmra.mrb[0].mxu0 %v3160
      %v3727 = vpop.f32.mrb[0].mxu0
      %v3728 = vadd.f32 %v3042, %v3727
      %v3729 = vpop.f32.mrb[0].mxu0
      %v3730 = vpop.f32.mrb[0].mxu0
      %v3731 = vadd.f32 %v3042, %v3730
      %v3732 = vpop.f32.mrb[0].mxu0
      %3733 = vmatprep.mubr.bf16.mxu0 0
      %3734 = vmatmul.mubr.bf16.gmra.mrb[0].mxu0 %v3163
      %v3735 = vpop.f32.mrb[0].mxu0
      %v3736 = vadd.f32 %v3042, %v3735
      %v3737 = vpop.f32.mrb[0].mxu0
      %v3738 = vpop.f32.mrb[0].mxu0
      %v3739 = vadd.f32 %v3042, %v3738
      %v3740 = vpop.f32.mrb[0].mxu0
      %3741 = vmatprep.mubr.bf16.mxu0 0
      %3742 = vmatmul.mubr.bf16.gmra.mrb[0].mxu0 %v3166
      %v3743 = vpop.f32.mrb[0].mxu0
      %v3744 = vadd.f32 %v3042, %v3743
      %v3745 = vpop.f32.mrb[0].mxu0
      %v3746 = vpop.f32.mrb[0].mxu0
      %v3747 = vadd.f32 %v3042, %v3746
      %v3748 = vpop.f32.mrb[0].mxu0
      %3749 = vmatprep.mubr.bf16.mxu0 0
      %3750 = vmatmul.mubr.bf16.gmra.mrb[0].mxu0 %v3169
      %v3751 = vpop.f32.mrb[0].mxu0
      %v3752 = vadd.f32 %v3042, %v3751
      %v3753 = vpop.f32.mrb[0].mxu0
      %v3754 = vpop.f32.mrb[0].mxu0
      %v3755 = vadd.f32 %v3042, %v3754
      %v3756 = vpop.f32.mrb[0].mxu0
      %3757 = vmatprep.mubr.bf16.mxu0 0
      %3758 = vmatmul.mubr.bf16.gmra.mrb[0].mxu0 %v3172
      %v3759 = vpop.f32.mrb[0].mxu0
      %v3760 = vadd.f32 %v3042, %v3759
      %v3761 = vpop.f32.mrb[0].mxu0
      %v3762 = vpop.f32.mrb[0].mxu0
      %v3763 = vadd.f32 %v3042, %v3762
      %v3764 = vpop.f32.mrb[0].mxu0
      %3765 = vmatprep.mubr.bf16.mxu0 0
      %3766 = vmatmul.mubr.bf16.gmra.mrb[0].mxu0 %v3175
      %v3767 = vpop.f32.mrb[0].mxu0
      %v3768 = vadd.f32 %v3042, %v3767
      %v3769 = vpop.f32.mrb[0].mxu0
      %v3770 = vpop.f32.mrb[0].mxu0
      %v3771 = vadd.f32 %v3042, %v3770
      %v3772 = vpop.f32.mrb[0].mxu0
      %3773 = vmatprep.mubr.bf16.mxu0 0
      %3774 = vmatmul.mubr.bf16.gmra.mrb[0].mxu0 %v3178
      %v3775 = vpop.f32.mrb[0].mxu0
      %v3776 = vadd.f32 %v3042, %v3775
      %v3777 = vpop.f32.mrb[0].mxu0
      %v3778 = vpop.f32.mrb[0].mxu0
      %v3779 = vadd.f32 %v3042, %v3778
      %v3780 = vpop.f32.mrb[0].mxu0
      %3781 = vmatprep.mubr.bf16.mxu0 0
      %3782 = vmatmul.mubr.bf16.gmra.mrb[0].mxu0 %v3181
      %v3783 = vpop.f32.mrb[0].mxu0
      %v3784 = vadd.f32 %v3042, %v3783
      %v3785 = vpop.f32.mrb[0].mxu0
      %v3786 = vpop.f32.mrb[0].mxu0
      %v3787 = vadd.f32 %v3042, %v3786
      %v3788 = vpop.f32.mrb[0].mxu0
      %3789 = vmatprep.mubr.bf16.mxu0 0
      %3790 = vmatmul.mubr.bf16.gmra.mrb[0].mxu0 %v3184
      %v3791 = vpop.f32.mrb[0].mxu0
      %v3792 = vadd.f32 %v3042, %v3791
      %v3793 = vpop.f32.mrb[0].mxu0
      %v3794 = vpop.f32.mrb[0].mxu0
      %v3795 = vadd.f32 %v3042, %v3794
      %v3796 = vpop.f32.mrb[0].mxu0
      %3797 = vmatprep.mubr.bf16.mxu0 0
      %3798 = vmatmul.mubr.bf16.gmra.mrb[0].mxu0 %v3187
      %v3799 = vpop.f32.mrb[0].mxu0
      %v3800 = vadd.f32 %v3042, %v3799
      %v3801 = vpop.f32.mrb[0].mxu0
      %v3802 = vpop.f32.mrb[0].mxu0
      %v3803 = vadd.f32 %v3042, %v3802
      %v3804 = vpop.f32.mrb[0].mxu0
      %3805 = vmatprep.mubr.bf16.mxu0 0
      %3806 = vmatmul.mubr.bf16.gmra.mrb[0].mxu0 %v3190
      %v3807 = vpop.f32.mrb[0].mxu0
      %v3808 = vadd.f32 %v3042, %v3807
      %v3809 = vpop.f32.mrb[0].mxu0
      %v3810 = vpop.f32.mrb[0].mxu0
      %v3811 = vadd.f32 %v3042, %v3810
      %v3812 = vpop.f32.mrb[0].mxu0
      %3813 = vmatprep.mubr.bf16.mxu0 0
      %3814 = vmatmul.mubr.bf16.gmra.mrb[0].mxu0 %v3193
      %v3815 = vpop.f32.mrb[0].mxu0
      %v3816 = vadd.f32 %v3042, %v3815
      %v3817 = vpop.f32.mrb[0].mxu0
      %v3818 = vpop.f32.mrb[0].mxu0
      %v3819 = vadd.f32 %v3042, %v3818
      %v3820 = vpop.f32.mrb[0].mxu0
      %3821 = vmatprep.mubr.bf16.mxu0 0
      %3822 = vmatmul.mubr.bf16.gmra.mrb[0].mxu0 %v3196
      %v3823 = vpop.f32.mrb[0].mxu0
      %v3824 = vadd.f32 %v3042, %v3823
      %v3825 = vpop.f32.mrb[0].mxu0
      %v3826 = vpop.f32.mrb[0].mxu0
      %v3827 = vadd.f32 %v3042, %v3826
      %v3828 = vpop.f32.mrb[0].mxu0
      %3829 = vmatprep.mubr.bf16.mxu0 0
      %3830 = vmatmul.mubr.bf16.gmra.mrb[0].mxu0 %v3199
      %v3831 = vpop.f32.mrb[0].mxu0
      %v3832 = vadd.f32 %v3042, %v3831
      %v3833 = vpop.f32.mrb[0].mxu0
      %v3834 = vpop.f32.mrb[0].mxu0
      %v3835 = vadd.f32 %v3042, %v3834
      %v3836 = vpop.f32.mrb[0].mxu0
      %3837 = vmatprep.mubr.bf16.mxu0 0
      %3838 = vmatmul.mubr.bf16.gmra.mrb[0].mxu0 %v3202
      %v3839 = vpop.f32.mrb[0].mxu0
      %v3840 = vadd.f32 %v3042, %v3839
      %v3841 = vpop.f32.mrb[0].mxu0
      %v3842 = vpop.f32.mrb[0].mxu0
      %v3843 = vadd.f32 %v3042, %v3842
      %v3844 = vpop.f32.mrb[0].mxu0
      %3845 = vmatprep.mubr.bf16.mxu0 0
      %3846 = vmatmul.mubr.bf16.gmra.mrb[0].mxu0 %v3205
      %v3847 = vpop.f32.mrb[0].mxu0
      %v3848 = vadd.f32 %v3042, %v3847
      %v3849 = vpop.f32.mrb[0].mxu0
      %v3850 = vpop.f32.mrb[0].mxu0
      %v3851 = vadd.f32 %v3042, %v3850
      %v3852 = vpop.f32.mrb[0].mxu0
      %3853 = vmatprep.mubr.bf16.mxu0 0
      %3854 = vmatmul.mubr.bf16.gmra.mrb[0].mxu0 %v3208
      %v3855 = vpop.f32.mrb[0].mxu0
      %v3856 = vadd.f32 %v3042, %v3855
      %v3857 = vpop.f32.mrb[0].mxu0
      %v3858 = vpop.f32.mrb[0].mxu0
      %v3859 = vadd.f32 %v3042, %v3858
      %v3860 = vpop.f32.mrb[0].mxu0
      %3861 = vmatprep.mubr.bf16.mxu0 0
      %3862 = vmatmul.mubr.bf16.gmra.mrb[0].mxu0 %v3211
      %v3863 = vpop.f32.mrb[0].mxu0
      %v3864 = vadd.f32 %v3042, %v3863
      %v3865 = vpop.f32.mrb[0].mxu0
      %v3866 = vpop.f32.mrb[0].mxu0
      %v3867 = vadd.f32 %v3042, %v3866
      %v3868 = vpop.f32.mrb[0].mxu0
      %3869 = vmatprep.mubr.bf16.mxu0 0
      %3870 = vmatmul.mubr.bf16.gmra.mrb[0].mxu0 %v3214
      %v3871 = vpop.f32.mrb[0].mxu0
      %v3872 = vadd.f32 %v3042, %v3871
      %v3873 = vpop.f32.mrb[0].mxu0
      %v3874 = vpop.f32.mrb[0].mxu0
      %v3875 = vadd.f32 %v3042, %v3874
      %v3876 = vpop.f32.mrb[0].mxu0
      %3877 = vmatprep.mubr.bf16.mxu0 0
      %3878 = vmatmul.mubr.bf16.gmra.mrb[0].mxu0 %v3217
      %v3879 = vpop.f32.mrb[0].mxu0
      %v3880 = vadd.f32 %v3042, %v3879
      %v3881 = vpop.f32.mrb[0].mxu0
      %v3882 = vpop.f32.mrb[0].mxu0
      %v3883 = vadd.f32 %v3042, %v3882
      %v3884 = vpop.f32.mrb[0].mxu0
      %3885 = vmatprep.mubr.bf16.mxu0 0
      %3886 = vmatmul.mubr.bf16.gmra.mrb[0].mxu0 %v3220
      %v3887 = vpop.f32.mrb[0].mxu0
      %v3888 = vadd.f32 %v3042, %v3887
      %v3889 = vpop.f32.mrb[0].mxu0
      %v3890 = vpop.f32.mrb[0].mxu0
      %v3891 = vadd.f32 %v3042, %v3890
      %v3892 = vpop.f32.mrb[0].mxu0
      %3893 = vmatprep.mubr.bf16.mxu0 0
      %3894 = vmatmul.mubr.bf16.gmra.mrb[0].mxu0 %v3223
      %v3895 = vpop.f32.mrb[0].mxu0
      %v3896 = vadd.f32 %v3042, %v3895
      %v3897 = vpop.f32.mrb[0].mxu0
      %v3898 = vpop.f32.mrb[0].mxu0
      %v3899 = vadd.f32 %v3042, %v3898
      %v3900 = vpop.f32.mrb[0].mxu0
      %3901 = vmatprep.mubr.bf16.mxu0 0
      %3902 = vmatmul.mubr.bf16.gmra.mrb[0].mxu0 %v3226
      %v3903 = vpop.f32.mrb[0].mxu0
      %v3904 = vadd.f32 %v3042, %v3903
      %v3905 = vpop.f32.mrb[0].mxu0
      %v3906 = vpop.f32.mrb[0].mxu0
      %v3907 = vadd.f32 %v3042, %v3906
      %v3908 = vpop.f32.mrb[0].mxu0
      %3909 = vmatprep.mubr.bf16.mxu0 0
      %3910 = vmatmul.mubr.bf16.gmra.mrb[0].mxu0 %v3229
      %v3911 = vpop.f32.mrb[0].mxu0
      %v3912 = vadd.f32 %v3042, %v3911
      %v3913 = vpop.f32.mrb[0].mxu0
      %v3914 = vpop.f32.mrb[0].mxu0
      %v3915 = vadd.f32 %v3042, %v3914
      %v3916 = vpop.f32.mrb[0].mxu0
      %3917 = vmatprep.mubr.bf16.mxu0 0
      %3918 = vmatmul.mubr.bf16.gmra.mrb[0].mxu0 %v3232
      %v3919 = vpop.f32.mrb[0].mxu0
      %v3920 = vadd.f32 %v3042, %v3919
      %v3921 = vpop.f32.mrb[0].mxu0
      %v3922 = vpop.f32.mrb[0].mxu0
      %v3923 = vadd.f32 %v3042, %v3922
      %v3924 = vpop.f32.mrb[0].mxu0
      %3925 = vmatprep.mubr.bf16.mxu0 0
      %3926 = vmatmul.mubr.bf16.gmra.mrb[0].mxu0 %v3235
      %v3927 = vpop.f32.mrb[0].mxu0
      %v3928 = vadd.f32 %v3042, %v3927
      %v3929 = vpop.f32.mrb[0].mxu0
      %v3930 = vpop.f32.mrb[0].mxu0
      %v3931 = vadd.f32 %v3042, %v3930
      %v3932 = vpop.f32.mrb[0].mxu0
      %3933 = vmatprep.mubr.bf16.mxu0 0
      %3934 = vmatmul.mubr.bf16.gmra.mrb[0].mxu0 %v3238
      %v3935 = vpop.f32.mrb[0].mxu0
      %v3936 = vadd.f32 %v3042, %v3935
      %v3937 = vpop.f32.mrb[0].mxu0
      %v3938 = vpop.f32.mrb[0].mxu0
      %v3939 = vadd.f32 %v3042, %v3938
      %v3940 = vpop.f32.mrb[0].mxu0
      %3941 = vmatprep.mubr.bf16.mxu0 0
      %3942 = vmatmul.mubr.bf16.gmra.mrb[0].mxu0 %v3241
      %v3943 = vpop.f32.mrb[0].mxu0
      %v3944 = vadd.f32 %v3042, %v3943
      %v3945 = vpop.f32.mrb[0].mxu0
      %v3946 = vpop.f32.mrb[0].mxu0
      %v3947 = vadd.f32 %v3042, %v3946
      %v3948 = vpop.f32.mrb[0].mxu0
      %3949 = vmatprep.mubr.bf16.mxu0 0
      %3950 = vmatmul.mubr.bf16.gmra.mrb[0].mxu0 %v3244
      %v3951 = vpop.f32.mrb[0].mxu0
      %v3952 = vadd.f32 %v3042, %v3951
      %v3953 = vpop.f32.mrb[0].mxu0
      %v3954 = vpop.f32.mrb[0].mxu0
      %v3955 = vadd.f32 %v3042, %v3954
      %v3956 = vpop.f32.mrb[0].mxu0
      %3957 = vmatprep.mubr.bf16.mxu0 0
      %3958 = vmatmul.mubr.bf16.gmra.mrb[0].mxu0 %v3247
      %v3959 = vpop.f32.mrb[0].mxu0
      %v3960 = vadd.f32 %v3042, %v3959
      %v3961 = vpop.f32.mrb[0].mxu0
      %v3962 = vpop.f32.mrb[0].mxu0
      %v3963 = vadd.f32 %v3042, %v3962
      %v3964 = vpop.f32.mrb[0].mxu0
      %3965 = vmatprep.mubr.bf16.mxu0 0
      %3966 = vmatmul.mubr.bf16.gmra.mrb[0].mxu0 %v3250
      %v3967 = vpop.f32.mrb[0].mxu0
      %v3968 = vadd.f32 %v3042, %v3967
      %v3969 = vpop.f32.mrb[0].mxu0
      %v3970 = vpop.f32.mrb[0].mxu0
      %v3971 = vadd.f32 %v3042, %v3970
      %v3972 = vpop.f32.mrb[0].mxu0
      %3973 = vmatprep.mubr.bf16.mxu0 0
      %3974 = vmatmul.mubr.bf16.gmra.mrb[0].mxu0 %v3253
      %v3975 = vpop.f32.mrb[0].mxu0
      %v3976 = vadd.f32 %v3042, %v3975
      %v3977 = vpop.f32.mrb[0].mxu0
      %v3978 = vpop.f32.mrb[0].mxu0
      %v3979 = vadd.f32 %v3042, %v3978
      %v3980 = vpop.f32.mrb[0].mxu0
      %3981 = vmatprep.mubr.bf16.mxu0 0
      %3982 = vmatmul.mubr.bf16.gmra.mrb[0].mxu0 %v3256
      %v3983 = vpop.f32.mrb[0].mxu0
      %v3984 = vadd.f32 %v3042, %v3983
      %v3985 = vpop.f32.mrb[0].mxu0
      %v3986 = vpop.f32.mrb[0].mxu0
      %v3987 = vadd.f32 %v3042, %v3986
      %v3988 = vpop.f32.mrb[0].mxu0
      %3989 = vmatprep.mubr.bf16.mxu0 0
      %3990 = vmatmul.mubr.bf16.gmra.mrb[0].mxu0 %v3259
      %v3991 = vpop.f32.mrb[0].mxu0
      %v3992 = vadd.f32 %v3042, %v3991
      %v3993 = vpop.f32.mrb[0].mxu0
      %v3994 = vpop.f32.mrb[0].mxu0
      %v3995 = vadd.f32 %v3042, %v3994
      %v3996 = vpop.f32.mrb[0].mxu0
      %3997 = vmatprep.mubr.bf16.mxu0 0
      %3998 = vmatmul.mubr.bf16.gmra.mrb[0].mxu0 %v3262
      %v3999 = vpop.f32.mrb[0].mxu0
      %v4000 = vadd.f32 %v3042, %v3999
      %v4001 = vpop.f32.mrb[0].mxu0
      %v4002 = vpop.f32.mrb[0].mxu0
      %v4003 = vadd.f32 %v3042, %v4002
      %v4004 = vpop.f32.mrb[0].mxu0
      %4005 = vmatprep.mubr.bf16.mxu0 0
      %4006 = vmatmul.mubr.bf16.gmra.mrb[0].mxu0 %v3265
      %v4007 = vpop.f32.mrb[0].mxu0
      %v4008 = vadd.f32 %v3042, %v4007
      %v4009 = vpop.f32.mrb[0].mxu0
      %v4010 = vpop.f32.mrb[0].mxu0
      %v4011 = vadd.f32 %v3042, %v4010
      %v4012 = vpop.f32.mrb[0].mxu0
      %4013 = vmatprep.mubr.bf16.mxu0 0
      %4014 = vmatmul.mubr.bf16.gmra.mrb[0].mxu0 %v3268
      %v4015 = vpop.f32.mrb[0].mxu0
      %v4016 = vadd.f32 %v3042, %v4015
      %v4017 = vpop.f32.mrb[0].mxu0
      %v4018 = vpop.f32.mrb[0].mxu0
      %v4019 = vadd.f32 %v3042, %v4018
      %v4020 = vpop.f32.mrb[0].mxu0
      %4021 = vmatprep.mubr.bf16.mxu0 0
      %4022 = vmatmul.mubr.bf16.gmra.mrb[0].mxu0 %v3271
      %v4023 = vpop.f32.mrb[0].mxu0
      %v4024 = vadd.f32 %v3042, %v4023
      %v4025 = vpop.f32.mrb[0].mxu0
      %v4026 = vpop.f32.mrb[0].mxu0
      %v4027 = vadd.f32 %v3042, %v4026
      %v4028 = vpop.f32.mrb[0].mxu0
      %4029 = vmatprep.mubr.bf16.mxu0 0
      %4030 = vmatmul.mubr.bf16.gmra.mrb[0].mxu0 %v3274
      %v4031 = vpop.f32.mrb[0].mxu0
      %v4032 = vadd.f32 %v3042, %v4031
      %v4033 = vpop.f32.mrb[0].mxu0
      %v4034 = vpop.f32.mrb[0].mxu0
      %v4035 = vadd.f32 %v3042, %v4034
      %v4036 = vpop.f32.mrb[0].mxu0
      %4037 = vmatprep.mubr.bf16.mxu0 0
      %4038 = vmatmul.mubr.bf16.gmra.mrb[0].mxu0 %v3277
      %v4039 = vpop.f32.mrb[0].mxu0
      %v4040 = vadd.f32 %v3042, %v4039
      %v4041 = vpop.f32.mrb[0].mxu0
      %v4042 = vpop.f32.mrb[0].mxu0
      %v4043 = vadd.f32 %v3042, %v4042
      %v4044 = vpop.f32.mrb[0].mxu0
      %4045 = vmatprep.mubr.bf16.mxu0 0
      %4046 = vmatmul.mubr.bf16.gmra.mrb[0].mxu0 %v3280
      %v4047 = vpop.f32.mrb[0].mxu0
      %v4048 = vadd.f32 %v3042, %v4047
      %v4049 = vpop.f32.mrb[0].mxu0
      %v4050 = vpop.f32.mrb[0].mxu0
      %v4051 = vadd.f32 %v3042, %v4050
      %v4052 = vpop.f32.mrb[0].mxu0
      %4053 = vmatprep.mubr.bf16.mxu0 0
      %4054 = vmatmul.mubr.bf16.gmra.mrb[0].mxu0 %v3283
      %v4055 = vpop.f32.mrb[0].mxu0
      %v4056 = vadd.f32 %v3042, %v4055
      %v4057 = vpop.f32.mrb[0].mxu0
      %v4058 = vpop.f32.mrb[0].mxu0
      %v4059 = vadd.f32 %v3042, %v4058
      %v4060 = vpop.f32.mrb[0].mxu0
      %4061 = vmatprep.mubr.bf16.mxu0 0
      %4062 = vmatmul.mubr.bf16.gmra.mrb[0].mxu0 %v3286
      %v4063 = vpop.f32.mrb[0].mxu0
      %v4064 = vadd.f32 %v3042, %v4063
      %v4065 = vpop.f32.mrb[0].mxu0
      %v4066 = vpop.f32.mrb[0].mxu0
      %v4067 = vadd.f32 %v3042, %v4066
      %v4068 = vpop.f32.mrb[0].mxu0
      %4069 = vmatprep.mubr.bf16.mxu0 0
      %4070 = vmatmul.mubr.bf16.gmra.mrb[0].mxu0 %v3289
      %v4071 = vpop.f32.mrb[0].mxu0
      %v4072 = vadd.f32 %v3042, %v4071
      %v4073 = vpop.f32.mrb[0].mxu0
      %v4074 = vpop.f32.mrb[0].mxu0
      %v4075 = vadd.f32 %v3042, %v4074
      %v4076 = vpop.f32.mrb[0].mxu0
      %4077 = vmatprep.mubr.bf16.mxu0 0
      %4078 = vmatmul.mubr.bf16.gmra.mrb[0].mxu0 %v3292
      %v4079 = vpop.f32.mrb[0].mxu0
      %v4080 = vadd.f32 %v3042, %v4079
      %v4081 = vpop.f32.mrb[0].mxu0
      %v4082 = vpop.f32.mrb[0].mxu0
      %v4083 = vadd.f32 %v3042, %v4082
      %v4084 = vpop.f32.mrb[0].mxu0
      %4085 = vmatprep.mubr.bf16.mxu0 0
      %4086 = vmatmul.mubr.bf16.gmra.mrb[0].mxu0 %v3295
      %v4087 = vpop.f32.mrb[0].mxu0
      %v4088 = vadd.f32 %v3042, %v4087
      %v4089 = vpop.f32.mrb[0].mxu0
      %v4090 = vpop.f32.mrb[0].mxu0
      %v4091 = vadd.f32 %v3042, %v4090
      %v4092 = vpop.f32.mrb[0].mxu0
      %4093 = vmatprep.mubr.bf16.mxu0 0
      %4094 = vmatmul.mubr.bf16.gmra.mrb[0].mxu0 %v3298
      %v4095 = vpop.f32.mrb[0].mxu0
      %v4096 = vadd.f32 %v3042, %v4095
      %v4097 = vpop.f32.mrb[0].mxu0
      %v4098 = vpop.f32.mrb[0].mxu0
      %v4099 = vadd.f32 %v3042, %v4098
      %v4100 = vpop.f32.mrb[0].mxu0
      %4101 = vmatprep.mubr.bf16.mxu0 0
      %4102 = vmatmul.mubr.bf16.gmra.mrb[0].mxu0 %v3301
      %v4103 = vpop.f32.mrb[0].mxu0
      %v4104 = vadd.f32 %v3042, %v4103
      %v4105 = vpop.f32.mrb[0].mxu0
      %v4106 = vpop.f32.mrb[0].mxu0
      %v4107 = vadd.f32 %v3042, %v4106
      %v4108 = vpop.f32.mrb[0].mxu0
      %4109 = vmatprep.mubr.bf16.mxu0 0
      %4110 = vmatmul.mubr.bf16.gmra.mrb[0].mxu0 %v3304
      %v4111 = vpop.f32.mrb[0].mxu0
      %v4112 = vadd.f32 %v3042, %v4111
      %v4113 = vpop.f32.mrb[0].mxu0
      %v4114 = vpop.f32.mrb[0].mxu0
      %v4115 = vadd.f32 %v3042, %v4114
      %v4116 = vpop.f32.mrb[0].mxu0
      %4117 = vmatprep.mubr.bf16.mxu0 0
      %4118 = vmatmul.mubr.bf16.gmra.mrb[0].mxu0 %v3307
      %v4119 = vpop.f32.mrb[0].mxu0
      %v4120 = vadd.f32 %v3042, %v4119
      %v4121 = vpop.f32.mrb[0].mxu0
      %v4122 = vpop.f32.mrb[0].mxu0
      %v4123 = vadd.f32 %v3042, %v4122
      %v4124 = vpop.f32.mrb[0].mxu0
      %4125 = vmatprep.mubr.bf16.mxu0 0
      %4126 = vmatmul.mubr.bf16.gmra.mrb[0].mxu0 %v3310
      %v4127 = vpop.f32.mrb[0].mxu0
      %v4128 = vadd.f32 %v3042, %v4127
      %v4129 = vpop.f32.mrb[0].mxu0
      %v4130 = vpop.f32.mrb[0].mxu0
      %v4131 = vadd.f32 %v3042, %v4130
      %v4132 = vpop.f32.mrb[0].mxu0
      %4133 = vmatprep.mubr.bf16.mxu0 0
      %4134 = vmatmul.mubr.bf16.gmra.mrb[0].mxu0 %v3313
      %v4135 = vpop.f32.mrb[0].mxu0
      %v4136 = vadd.f32 %v3042, %v4135
      %v4137 = vpop.f32.mrb[0].mxu0
      %v4138 = vpop.f32.mrb[0].mxu0
      %v4139 = vadd.f32 %v3042, %v4138
      %v4140 = vpop.f32.mrb[0].mxu0
      %4141 = vmatprep.mubr.bf16.mxu0 0
      %4142 = vmatmul.mubr.bf16.gmra.mrb[0].mxu0 %v3316
      %v4143 = vpop.f32.mrb[0].mxu0
      %v4144 = vadd.f32 %v3042, %v4143
      %v4145 = vpop.f32.mrb[0].mxu0
      %v4146 = vpop.f32.mrb[0].mxu0
      %v4147 = vadd.f32 %v3042, %v4146
      %v4148 = vpop.f32.mrb[0].mxu0
      %4149 = vmatprep.mubr.bf16.mxu0 0
      %4150 = vmatmul.mubr.bf16.gmra.mrb[0].mxu0 %v3319
      %v4151 = vpop.f32.mrb[0].mxu0
      %v4152 = vadd.f32 %v3042, %v4151
      %v4153 = vpop.f32.mrb[0].mxu0
      %v4154 = vpop.f32.mrb[0].mxu0
      %v4155 = vadd.f32 %v3042, %v4154
      %v4156 = vpop.f32.mrb[0].mxu0
      %4157 = vmatprep.mubr.bf16.mxu0 0
      %4158 = vmatmul.mubr.bf16.gmra.mrb[0].mxu0 %v3322
      %v4159 = vpop.f32.mrb[0].mxu0
      %v4160 = vadd.f32 %v3042, %v4159
      %v4161 = vpop.f32.mrb[0].mxu0
      %v4162 = vpop.f32.mrb[0].mxu0
      %v4163 = vadd.f32 %v3042, %v4162
      %v4164 = vpop.f32.mrb[0].mxu0
      %4165 = vmatprep.mubr.bf16.mxu0 0
      %4166 = vmatmul.mubr.bf16.gmra.mrb[0].mxu0 %v3325
      %v4167 = vpop.f32.mrb[0].mxu0
      %v4168 = vadd.f32 %v3042, %v4167
      %v4169 = vpop.f32.mrb[0].mxu0
      %v4170 = vpop.f32.mrb[0].mxu0
      %v4171 = vadd.f32 %v3042, %v4170
      %v4172 = vpop.f32.mrb[0].mxu0
      %4173 = vmatprep.mubr.bf16.mxu0 0
      %4174 = vmatmul.mubr.bf16.gmra.mrb[0].mxu0 %v3328
      %v4175 = vpop.f32.mrb[0].mxu0
      %v4176 = vadd.f32 %v3042, %v4175
      %v4177 = vpop.f32.mrb[0].mxu0
      %v4178 = vpop.f32.mrb[0].mxu0
      %v4179 = vadd.f32 %v3042, %v4178
      %v4180 = vpop.f32.mrb[0].mxu0
      %4181 = vmatprep.mubr.bf16.mxu0 0
      %4182 = vmatmul.mubr.bf16.gmra.mrb[0].mxu0 %v3331
      %v4183 = vpop.f32.mrb[0].mxu0
      %v4184 = vadd.f32 %v3042, %v4183
      %v4185 = vpop.f32.mrb[0].mxu0
      %v4186 = vpop.f32.mrb[0].mxu0
      %v4187 = vadd.f32 %v3042, %v4186
      %v4188 = vpop.f32.mrb[0].mxu0
      %4189 = vmatprep.mubr.bf16.mxu0 0
      %4190 = vmatmul.mubr.bf16.gmra.mrb[0].mxu0 %v3334
      %v4191 = vpop.f32.mrb[0].mxu0
      %v4192 = vadd.f32 %v3042, %v4191
      %v4193 = vpop.f32.mrb[0].mxu0
      %v4194 = vpop.f32.mrb[0].mxu0
      %v4195 = vadd.f32 %v3042, %v4194
      %v4196 = vpop.f32.mrb[0].mxu0
      %4197 = vmatprep.mubr.bf16.mxu0 0
      %4198 = vmatmul.mubr.bf16.gmra.mrb[0].mxu0 %v3337
      %v4199 = vpop.f32.mrb[0].mxu0
      %v4200 = vadd.f32 %v3042, %v4199
      %v4201 = vpop.f32.mrb[0].mxu0
      %v4202 = vpop.f32.mrb[0].mxu0
      %v4203 = vadd.f32 %v3042, %v4202
      %v4204 = vpop.f32.mrb[0].mxu0
      %4205 = vmatprep.mubr.bf16.mxu0 0
      %4206 = vmatmul.mubr.bf16.gmra.mrb[0].mxu0 %v3340
      %v4207 = vpop.f32.mrb[0].mxu0
      %v4208 = vadd.f32 %v3042, %v4207
      %v4209 = vpop.f32.mrb[0].mxu0
      %v4210 = vpop.f32.mrb[0].mxu0
      %v4211 = vadd.f32 %v3042, %v4210
      %v4212 = vpop.f32.mrb[0].mxu0
      %4213 = vmatprep.mubr.bf16.mxu0 0
      %4214 = vmatmul.mubr.bf16.gmra.mrb[0].mxu0 %v3343
      %v4215 = vpop.f32.mrb[0].mxu0
      %v4216 = vadd.f32 %v3042, %v4215
      %v4217 = vpop.f32.mrb[0].mxu0
      %v4218 = vpop.f32.mrb[0].mxu0
      %v4219 = vadd.f32 %v3042, %v4218
      %v4220 = vpop.f32.mrb[0].mxu0
      %4221 = vmatprep.mubr.bf16.mxu0 0
      %4222 = vmatmul.mubr.bf16.gmra.mrb[0].mxu0 %v3346
      %v4223 = vpop.f32.mrb[0].mxu0
      %v4224 = vadd.f32 %v3042, %v4223
      %v4225 = vpop.f32.mrb[0].mxu0
      %v4226 = vpop.f32.mrb[0].mxu0
      %v4227 = vadd.f32 %v3042, %v4226
      %v4228 = vpop.f32.mrb[0].mxu0
      %4229 = vmatprep.mubr.bf16.mxu0 0
      %4230 = vmatmul.mubr.bf16.gmra.mrb[0].mxu0 %v3349
      %v4231 = vpop.f32.mrb[0].mxu0
      %v4232 = vadd.f32 %v3042, %v4231
      %v4233 = vpop.f32.mrb[0].mxu0
      %v4234 = vpop.f32.mrb[0].mxu0
      %v4235 = vadd.f32 %v3042, %v4234
      %v4236 = vpop.f32.mrb[0].mxu0
      %4237 = vmatprep.mubr.bf16.mxu0 0
      %4238 = vmatmul.mubr.bf16.gmra.mrb[0].mxu0 %v3352
      %v4239 = vpop.f32.mrb[0].mxu0
      %v4240 = vadd.f32 %v3042, %v4239
      %v4241 = vpop.f32.mrb[0].mxu0
      %v4242 = vpop.f32.mrb[0].mxu0
      %v4243 = vadd.f32 %v3042, %v4242
      %v4244 = vpop.f32.mrb[0].mxu0
      %4245 = vmatprep.mubr.bf16.mxu0 0
      %4246 = vmatmul.mubr.bf16.gmra.mrb[0].mxu0 %v3355
      %v4247 = vpop.f32.mrb[0].mxu0
      %v4248 = vadd.f32 %v3042, %v4247
      %v4249 = vpop.f32.mrb[0].mxu0
      %v4250 = vpop.f32.mrb[0].mxu0
      %v4251 = vadd.f32 %v3042, %v4250
      %v4252 = vpop.f32.mrb[0].mxu0
      %4253 = vmatprep.mubr.bf16.mxu0 0
      %4254 = vmatmul.mubr.bf16.gmra.mrb[0].mxu0 %v3358
      %v4255 = vpop.f32.mrb[0].mxu0
      %v4256 = vadd.f32 %v3042, %v4255
      %v4257 = vpop.f32.mrb[0].mxu0
      %v4258 = vpop.f32.mrb[0].mxu0
      %v4259 = vadd.f32 %v3042, %v4258
      %v4260 = vpop.f32.mrb[0].mxu0
      %4261 = vmatprep.mubr.bf16.mxu0 0
      %4262 = vmatmul.mubr.bf16.gmra.mrb[0].mxu0 %v3361
      %v4263 = vpop.f32.mrb[0].mxu0
      %v4264 = vadd.f32 %v3042, %v4263
      %v4265 = vpop.f32.mrb[0].mxu0
      %v4266 = vpop.f32.mrb[0].mxu0
      %v4267 = vadd.f32 %v3042, %v4266
      %v4268 = vpop.f32.mrb[0].mxu0
      %4269 = vmatprep.mubr.bf16.mxu0 0
      %4270 = vmatmul.mubr.bf16.gmra.mrb[0].mxu0 %v3364
      %v4271 = vpop.f32.mrb[0].mxu0
      %v4272 = vadd.f32 %v3042, %v4271
      %v4273 = vpop.f32.mrb[0].mxu0
      %v4274 = vpop.f32.mrb[0].mxu0
      %v4275 = vadd.f32 %v3042, %v4274
      %v4276 = vpop.f32.mrb[0].mxu0
      %4277 = vmatprep.mubr.bf16.mxu0 0
      %4278 = vmatmul.mubr.bf16.gmra.mrb[0].mxu0 %v3367
      %v4279 = vpop.f32.mrb[0].mxu0
      %v4280 = vadd.f32 %v3042, %v4279
      %v4281 = vpop.f32.mrb[0].mxu0
      %v4282 = vpop.f32.mrb[0].mxu0
      %v4283 = vadd.f32 %v3042, %v4282
      %v4284 = vpop.f32.mrb[0].mxu0
      %4285 = vmatprep.mubr.bf16.mxu0 0
      %4286 = vmatmul.mubr.bf16.gmra.mrb[0].mxu0 %v3370
      %v4287 = vpop.f32.mrb[0].mxu0
      %v4288 = vadd.f32 %v3042, %v4287
      %v4289 = vpop.f32.mrb[0].mxu0
      %v4290 = vpop.f32.mrb[0].mxu0
      %v4291 = vadd.f32 %v3042, %v4290
      %v4292 = vpop.f32.mrb[0].mxu0
      %4293 = vmatprep.mubr.bf16.mxu0 0
      %4294 = vmatmul.mubr.bf16.gmra.mrb[0].mxu0 %v3373
      %v4295 = vpop.f32.mrb[0].mxu0
      %v4296 = vadd.f32 %v3042, %v4295
      %v4297 = vpop.f32.mrb[0].mxu0
      %v4298 = vpop.f32.mrb[0].mxu0
      %v4299 = vadd.f32 %v3042, %v4298
      %v4300 = vpop.f32.mrb[0].mxu0
      %4301 = vmatprep.mubr.bf16.mxu0 0
      %4302 = vmatmul.mubr.bf16.gmra.mrb[0].mxu0 %v3376
      %v4303 = vpop.f32.mrb[0].mxu0
      %v4304 = vadd.f32 %v3042, %v4303
      %v4305 = vpop.f32.mrb[0].mxu0
      %v4306 = vpop.f32.mrb[0].mxu0
      %v4307 = vadd.f32 %v3042, %v4306
      %v4308 = vpop.f32.mrb[0].mxu0
      %4309 = vmatprep.mubr.bf16.mxu0 0
      %4310 = vmatmul.mubr.bf16.gmra.mrb[0].mxu0 %v3379
      %v4311 = vpop.f32.mrb[0].mxu0
      %v4312 = vadd.f32 %v3042, %v4311
      %v4313 = vpop.f32.mrb[0].mxu0
      %v4314 = vpop.f32.mrb[0].mxu0
      %v4315 = vadd.f32 %v3042, %v4314
      %v4316 = vpop.f32.mrb[0].mxu0
      %4317 = vmatprep.mubr.bf16.mxu0 0
      %4318 = vmatmul.mubr.bf16.gmra.mrb[0].mxu0 %v3382
      %v4319 = vpop.f32.mrb[0].mxu0
      %v4320 = vadd.f32 %v3042, %v4319
      %v4321 = vpop.f32.mrb[0].mxu0
      %v4322 = vpop.f32.mrb[0].mxu0
      %v4323 = vadd.f32 %v3042, %v4322
      %v4324 = vpop.f32.mrb[0].mxu0
      %4325 = vmatprep.mubr.bf16.mxu0 0
      %4326 = vmatmul.mubr.bf16.gmra.mrb[0].mxu0 %v3385
      %v4327 = vpop.f32.mrb[0].mxu0
      %v4328 = vadd.f32 %v3042, %v4327
      %v4329 = vpop.f32.mrb[0].mxu0
      %v4330 = vpop.f32.mrb[0].mxu0
      %v4331 = vadd.f32 %v3042, %v4330
      %v4332 = vpop.f32.mrb[0].mxu0
      %4333 = vmatprep.mubr.bf16.mxu0 0
      %4334 = vmatmul.mubr.bf16.gmra.mrb[0].mxu0 %v3388
      %v4335 = vpop.f32.mrb[0].mxu0
      %v4336 = vadd.f32 %v3042, %v4335
      %v4337 = vpop.f32.mrb[0].mxu0
      %v4338 = vpop.f32.mrb[0].mxu0
      %v4339 = vadd.f32 %v3042, %v4338
      %v4340 = vpop.f32.mrb[0].mxu0
      %4341 = vmatprep.mubr.bf16.mxu0 0
      %4342 = vmatmul.mubr.bf16.gmra.mrb[0].mxu0 %v3391
      %v4343 = vpop.f32.mrb[0].mxu0
      %v4344 = vadd.f32 %v3042, %v4343
      %v4345 = vpop.f32.mrb[0].mxu0
      %v4346 = vpop.f32.mrb[0].mxu0
      %v4347 = vadd.f32 %v3042, %v4346
      %v4348 = vpop.f32.mrb[0].mxu0
      %4349 = vmatprep.mubr.bf16.mxu0 0
      %4350 = vmatmul.mubr.bf16.gmra.mrb[0].mxu0 %v3394
      %v4351 = vpop.f32.mrb[0].mxu0
      %v4352 = vadd.f32 %v3042, %v4351
      %v4353 = vpop.f32.mrb[0].mxu0
      %v4354 = vpop.f32.mrb[0].mxu0
      %v4355 = vadd.f32 %v3042, %v4354
      %v4356 = vpop.f32.mrb[0].mxu0
      %4357 = vmatprep.mubr.bf16.mxu0 0
      %4358 = vmatmul.mubr.bf16.gmra.mrb[0].mxu0 %v3397
      %v4359 = vpop.f32.mrb[0].mxu0
      %v4360 = vadd.f32 %v3042, %v4359
      %v4361 = vpop.f32.mrb[0].mxu0
      %v4362 = vpop.f32.mrb[0].mxu0
      %v4363 = vadd.f32 %v3042, %v4362
      %v4364 = vpop.f32.mrb[0].mxu0
      %4365 = vmatprep.mubr.bf16.mxu0 0
      %4366 = vmatmul.mubr.bf16.gmra.mrb[0].mxu0 %v3400
      %v4367 = vpop.f32.mrb[0].mxu0
      %v4368 = vadd.f32 %v3042, %v4367
      %v4369 = vpop.f32.mrb[0].mxu0
      %v4370 = vpop.f32.mrb[0].mxu0
      %v4371 = vadd.f32 %v3042, %v4370
      %v4372 = vpop.f32.mrb[0].mxu0
      %4373 = vmatprep.mubr.bf16.mxu0 0
      %4374 = vmatmul.mubr.bf16.gmra.mrb[0].mxu0 %v3403
      %v4375 = vpop.f32.mrb[0].mxu0
      %v4376 = vadd.f32 %v3042, %v4375
      %v4377 = vpop.f32.mrb[0].mxu0
      %v4378 = vpop.f32.mrb[0].mxu0
      %v4379 = vadd.f32 %v3042, %v4378
      %v4380 = vpop.f32.mrb[0].mxu0
      %4381 = vmatprep.mubr.bf16.mxu0 0
      %4382 = vmatmul.mubr.bf16.gmra.mrb[0].mxu0 %v3406
      %v4383 = vpop.f32.mrb[0].mxu0
      %v4384 = vadd.f32 %v3042, %v4383
      %v4385 = vpop.f32.mrb[0].mxu0
      %v4386 = vpop.f32.mrb[0].mxu0
      %v4387 = vadd.f32 %v3042, %v4386
      %v4388 = vpop.f32.mrb[0].mxu0
      %4389 = vmatprep.mubr.bf16.mxu0 0
      %4390 = vmatmul.mubr.bf16.gmra.mrb[0].mxu0 %v3409
      %v4391 = vpop.f32.mrb[0].mxu0
      %v4392 = vadd.f32 %v3042, %v4391
      %v4393 = vpop.f32.mrb[0].mxu0
      %v4394 = vpop.f32.mrb[0].mxu0
      %v4395 = vadd.f32 %v3042, %v4394
      %v4396 = vpop.f32.mrb[0].mxu0
      %4397 = vmatprep.mubr.bf16.mxu0 0
      %4398 = vmatmul.mubr.bf16.gmra.mrb[0].mxu0 %v3412
      %v4399 = vpop.f32.mrb[0].mxu0
      %v4400 = vadd.f32 %v3042, %v4399
      %v4401 = vpop.f32.mrb[0].mxu0
      %v4402 = vpop.f32.mrb[0].mxu0
      %v4403 = vadd.f32 %v3042, %v4402
      %v4404 = vpop.f32.mrb[0].mxu0
      %4405 = vmatprep.mubr.bf16.mxu0 0
      %4406 = vmatmul.mubr.bf16.gmra.mrb[0].mxu0 %v3415
      %v4407 = vpop.f32.mrb[0].mxu0
      %v4408 = vadd.f32 %v3042, %v4407
      %v4409 = vpop.f32.mrb[0].mxu0
      %v4410 = vpop.f32.mrb[0].mxu0
      %v4411 = vadd.f32 %v3042, %v4410
      %v4412 = vpop.f32.mrb[0].mxu0
      %4413 = vmatprep.mubr.bf16.mxu0 0
      %4414 = vmatmul.mubr.bf16.gmra.mrb[0].mxu0 %v3418
      %v4415 = vpop.f32.mrb[0].mxu0
      %v4416 = vadd.f32 %v3042, %v4415
      %v4417 = vpop.f32.mrb[0].mxu0
      %v4418 = vpop.f32.mrb[0].mxu0
      %v4419 = vadd.f32 %v3042, %v4418
      %v4420 = vpop.f32.mrb[0].mxu0
      %4421 = vmatprep.mubr.bf16.mxu0 0
      %4422 = vmatmul.mubr.bf16.gmra.mrb[0].mxu0 %v3421
      %v4423 = vpop.f32.mrb[0].mxu0
      %v4424 = vadd.f32 %v3042, %v4423
      %v4425 = vpop.f32.mrb[0].mxu0
      %v4426 = vpop.f32.mrb[0].mxu0
      %v4427 = vadd.f32 %v3042, %v4426
      %v4428 = vpop.f32.mrb[0].mxu0
      %4429 = vmatprep.mubr.bf16.mxu0 0
      %4430 = vmatmul.mubr.bf16.gmra.mrb[0].mxu0 %v3424
      %v4431 = vpop.f32.mrb[0].mxu0
      %v4432 = vadd.f32 %v3042, %v4431
      %v4433 = vpop.f32.mrb[0].mxu0
      %v4434 = vpop.f32.mrb[0].mxu0
      %v4435 = vadd.f32 %v3042, %v4434
      %v4436 = vpop.f32.mrb[0].mxu0
      %4437 = vmatprep.mubr.bf16.mxu0 0
      %4438 = vmatmul.mubr.bf16.gmra.mrb[0].mxu0 %v3427
      %v4439 = vpop.f32.mrb[0].mxu0
      %v4440 = vadd.f32 %v3042, %v4439
      %v4441 = vpop.f32.mrb[0].mxu0
      %v4442 = vpop.f32.mrb[0].mxu0
      %v4443 = vadd.f32 %v3042, %v4442
      %v4444 = vpop.f32.mrb[0].mxu0
      %4445 = vmatprep.mubr.bf16.mxu0 0
      %4446 = vmatmul.mubr.bf16.gmra.mrb[0].mxu0 %v3430
      %v4447 = vpop.f32.mrb[0].mxu0
      %v4448 = vadd.f32 %v3042, %v4447
      %v4449 = vpop.f32.mrb[0].mxu0
      %v4450 = vpop.f32.mrb[0].mxu0
      %v4451 = vadd.f32 %v3042, %v4450
      %v4452 = vpop.f32.mrb[0].mxu0
      %4453 = vmatprep.mubr.bf16.mxu0 0
      %4454 = vmatmul.mubr.bf16.gmra.mrb[0].mxu0 %v3433
      %v4455 = vpop.f32.mrb[0].mxu0
      %v4456 = vadd.f32 %v3042, %v4455
      %v4457 = vpop.f32.mrb[0].mxu0
      %v4458 = vpop.f32.mrb[0].mxu0
      %v4459 = vadd.f32 %v3042, %v4458
      %v4460 = vpop.f32.mrb[0].mxu0
      %4461 = vmatprep.mubr.bf16.mxu0 0
      %4462 = vmatmul.mubr.bf16.gmra.mrb[0].mxu0 %v3436
      %v4463 = vpop.f32.mrb[0].mxu0
      %v4464 = vadd.f32 %v3042, %v4463
      %v4465 = vpop.f32.mrb[0].mxu0
      %v4466 = vpop.f32.mrb[0].mxu0
      %v4467 = vadd.f32 %v3042, %v4466
      %v4468 = vpop.f32.mrb[0].mxu0
      %4469 = vmatprep.mubr.bf16.mxu0 0
      %4470 = vmatmul.mubr.bf16.gmra.mrb[0].mxu0 %v3439
      %v4471 = vpop.f32.mrb[0].mxu0
      %v4472 = vadd.f32 %v3042, %v4471
      %v4473 = vpop.f32.mrb[0].mxu0
      %v4474 = vpop.f32.mrb[0].mxu0
      %v4475 = vadd.f32 %v3042, %v4474
      %v4476 = vpop.f32.mrb[0].mxu0
      %4477 = vmatprep.mubr.bf16.mxu0 0
      %4478 = vmatmul.mubr.bf16.gmra.mrb[0].mxu0 %v3442
      %v4479 = vpop.f32.mrb[0].mxu0
      %v4480 = vadd.f32 %v3042, %v4479
      %v4481 = vpop.f32.mrb[0].mxu0
      %v4482 = vpop.f32.mrb[0].mxu0
      %v4483 = vadd.f32 %v3042, %v4482
      %v4484 = vpop.f32.mrb[0].mxu0
      %4485 = vmatprep.mubr.bf16.mxu0 0
      %4486 = vmatmul.mubr.bf16.gmra.mrb[0].mxu0 %v3445
      %v4487 = vpop.f32.mrb[0].mxu0
      %v4488 = vadd.f32 %v3042, %v4487
      %v4489 = vpop.f32.mrb[0].mxu0
      %v4490 = vpop.f32.mrb[0].mxu0
      %v4491 = vadd.f32 %v3042, %v4490
      %v4492 = vpop.f32.mrb[0].mxu0
      %4493 = vmatprep.mubr.bf16.mxu0 0
      %4494 = vmatmul.mubr.bf16.gmra.mrb[0].mxu0 %v3448
      %v4495 = vpop.f32.mrb[0].mxu0
      %v4496 = vadd.f32 %v3042, %v4495
      %v4497 = vpop.f32.mrb[0].mxu0
      %v4498 = vpop.f32.mrb[0].mxu0
      %v4499 = vadd.f32 %v3042, %v4498
      %v4500 = vpop.f32.mrb[0].mxu0
      %4501 = vmatprep.mubr.bf16.mxu0 0
      %4502 = vmatmul.mubr.bf16.gmra.mrb[0].mxu0 %v3451
      %v4503 = vpop.f32.mrb[0].mxu0
      %v4504 = vadd.f32 %v3042, %v4503
      %v4505 = vpop.f32.mrb[0].mxu0
      %v4506 = vpop.f32.mrb[0].mxu0
      %v4507 = vadd.f32 %v3042, %v4506
      %v4508 = vpop.f32.mrb[0].mxu0
      %4509 = vdwg.mxu0
      %v4510 = vmax.f32 %v3488, 0.0
      %v4511 = vmax.f32 %v3491, 0.0
      %v4512 = vmax.f32 %v3496, 0.0
      %v4513 = vmax.f32 %v3499, 0.0
      %v4514 = vmax.f32 %v3504, 0.0
      %v4515 = vmax.f32 %v3507, 0.0
      %v4516 = vmax.f32 %v3512, 0.0
      %v4517 = vmax.f32 %v3515, 0.0
      %v4518 = vmax.f32 %v3520, 0.0
      %v4519 = vmax.f32 %v3523, 0.0
      %v4520 = vmax.f32 %v3528, 0.0
      %v4521 = vmax.f32 %v3531, 0.0
      %v4522 = vmax.f32 %v3536, 0.0
      %v4523 = vmax.f32 %v3539, 0.0
      %v4524 = vmax.f32 %v3544, 0.0
      %v4525 = vmax.f32 %v3547, 0.0
      %v4526 = vmax.f32 %v3552, 0.0
      %v4527 = vmax.f32 %v3555, 0.0
      %v4528 = vmax.f32 %v3560, 0.0
      %v4529 = vmax.f32 %v3563, 0.0
      %v4530 = vmax.f32 %v3568, 0.0
      %v4531 = vmax.f32 %v3571, 0.0
      %v4532 = vmax.f32 %v3576, 0.0
      %v4533 = vmax.f32 %v3579, 0.0
      %v4534 = vmax.f32 %v3584, 0.0
      %v4535 = vmax.f32 %v3587, 0.0
      %v4536 = vmax.f32 %v3592, 0.0
      %v4537 = vmax.f32 %v3595, 0.0
      %v4538 = vmax.f32 %v3600, 0.0
      %v4539 = vmax.f32 %v3603, 0.0
      %v4540 = vmax.f32 %v3608, 0.0
      %v4541 = vmax.f32 %v3611, 0.0
      %v4542 = vmax.f32 %v3616, 0.0
      %v4543 = vmax.f32 %v3619, 0.0
      %v4544 = vmax.f32 %v3624, 0.0
      %v4545 = vmax.f32 %v3627, 0.0
      %v4546 = vmax.f32 %v3632, 0.0
      %v4547 = vmax.f32 %v3635, 0.0
      %v4548 = vmax.f32 %v3640, 0.0
      %v4549 = vmax.f32 %v3643, 0.0
      %v4550 = vmax.f32 %v3648, 0.0
      %v4551 = vmax.f32 %v3651, 0.0
      %v4552 = vmax.f32 %v3656, 0.0
      %v4553 = vmax.f32 %v3659, 0.0
      %v4554 = vmax.f32 %v3664, 0.0
      %v4555 = vmax.f32 %v3667, 0.0
      %v4556 = vmax.f32 %v3672, 0.0
      %v4557 = vmax.f32 %v3675, 0.0
      %v4558 = vmax.f32 %v3680, 0.0
      %v4559 = vmax.f32 %v3683, 0.0
      %v4560 = vmax.f32 %v3688, 0.0
      %v4561 = vmax.f32 %v3691, 0.0
      %v4562 = vmax.f32 %v3696, 0.0
      %v4563 = vmax.f32 %v3699, 0.0
      %v4564 = vmax.f32 %v3704, 0.0
      %v4565 = vmax.f32 %v3707, 0.0
      %v4566 = vmax.f32 %v3712, 0.0
      %v4567 = vmax.f32 %v3715, 0.0
      %v4568 = vmax.f32 %v3720, 0.0
      %v4569 = vmax.f32 %v3723, 0.0
      %v4570 = vmax.f32 %v3728, 0.0
      %v4571 = vmax.f32 %v3731, 0.0
      %v4572 = vmax.f32 %v3736, 0.0
      %v4573 = vmax.f32 %v3739, 0.0
      %v4574 = vmax.f32 %v3744, 0.0
      %v4575 = vmax.f32 %v3747, 0.0
      %v4576 = vmax.f32 %v3752, 0.0
      %v4577 = vmax.f32 %v3755, 0.0
      %v4578 = vmax.f32 %v3760, 0.0
      %v4579 = vmax.f32 %v3763, 0.0
      %v4580 = vmax.f32 %v3768, 0.0
      %v4581 = vmax.f32 %v3771, 0.0
      %v4582 = vmax.f32 %v3776, 0.0
      %v4583 = vmax.f32 %v3779, 0.0
      %v4584 = vmax.f32 %v3784, 0.0
      %v4585 = vmax.f32 %v3787, 0.0
      %v4586 = vmax.f32 %v3792, 0.0
      %v4587 = vmax.f32 %v3795, 0.0
      %v4588 = vmax.f32 %v3800, 0.0
      %v4589 = vmax.f32 %v3803, 0.0
      %v4590 = vmax.f32 %v3808, 0.0
      %v4591 = vmax.f32 %v3811, 0.0
      %v4592 = vmax.f32 %v3816, 0.0
      %v4593 = vmax.f32 %v3819, 0.0
      %v4594 = vmax.f32 %v3824, 0.0
      %v4595 = vmax.f32 %v3827, 0.0
      %v4596 = vmax.f32 %v3832, 0.0
      %v4597 = vmax.f32 %v3835, 0.0
      %v4598 = vmax.f32 %v3840, 0.0
      %v4599 = vmax.f32 %v3843, 0.0
      %v4600 = vmax.f32 %v3848, 0.0
      %v4601 = vmax.f32 %v3851, 0.0
      %v4602 = vmax.f32 %v3856, 0.0
      %v4603 = vmax.f32 %v3859, 0.0
      %v4604 = vmax.f32 %v3864, 0.0
      %v4605 = vmax.f32 %v3867, 0.0
      %v4606 = vmax.f32 %v3872, 0.0
      %v4607 = vmax.f32 %v3875, 0.0
      %v4608 = vmax.f32 %v3880, 0.0
      %v4609 = vmax.f32 %v3883, 0.0
      %v4610 = vmax.f32 %v3888, 0.0
      %v4611 = vmax.f32 %v3891, 0.0
      %v4612 = vmax.f32 %v3896, 0.0
      %v4613 = vmax.f32 %v3899, 0.0
      %v4614 = vmax.f32 %v3904, 0.0
      %v4615 = vmax.f32 %v3907, 0.0
      %v4616 = vmax.f32 %v3912, 0.0
      %v4617 = vmax.f32 %v3915, 0.0
      %v4618 = vmax.f32 %v3920, 0.0
      %v4619 = vmax.f32 %v3923, 0.0
      %v4620 = vmax.f32 %v3928, 0.0
      %v4621 = vmax.f32 %v3931, 0.0
      %v4622 = vmax.f32 %v3936, 0.0
      %v4623 = vmax.f32 %v3939, 0.0
      %v4624 = vmax.f32 %v3944, 0.0
      %v4625 = vmax.f32 %v3947, 0.0
      %v4626 = vmax.f32 %v3952, 0.0
      %v4627 = vmax.f32 %v3955, 0.0
      %v4628 = vmax.f32 %v3960, 0.0
      %v4629 = vmax.f32 %v3963, 0.0
      %v4630 = vmax.f32 %v3968, 0.0
      %v4631 = vmax.f32 %v3971, 0.0
      %v4632 = vmax.f32 %v3976, 0.0
      %v4633 = vmax.f32 %v3979, 0.0
      %v4634 = vmax.f32 %v3984, 0.0
      %v4635 = vmax.f32 %v3987, 0.0
      %v4636 = vmax.f32 %v3992, 0.0
      %v4637 = vmax.f32 %v3995, 0.0
      %v4638 = vmax.f32 %v4000, 0.0
      %v4639 = vmax.f32 %v4003, 0.0
      %v4640 = vmax.f32 %v4008, 0.0
      %v4641 = vmax.f32 %v4011, 0.0
      %v4642 = vmax.f32 %v4016, 0.0
      %v4643 = vmax.f32 %v4019, 0.0
      %v4644 = vmax.f32 %v4024, 0.0
      %v4645 = vmax.f32 %v4027, 0.0
      %v4646 = vmax.f32 %v4032, 0.0
      %v4647 = vmax.f32 %v4035, 0.0
      %v4648 = vmax.f32 %v4040, 0.0
      %v4649 = vmax.f32 %v4043, 0.0
      %v4650 = vmax.f32 %v4048, 0.0
      %v4651 = vmax.f32 %v4051, 0.0
      %v4652 = vmax.f32 %v4056, 0.0
      %v4653 = vmax.f32 %v4059, 0.0
      %v4654 = vmax.f32 %v4064, 0.0
      %v4655 = vmax.f32 %v4067, 0.0
      %v4656 = vmax.f32 %v4072, 0.0
      %v4657 = vmax.f32 %v4075, 0.0
      %v4658 = vmax.f32 %v4080, 0.0
      %v4659 = vmax.f32 %v4083, 0.0
      %v4660 = vmax.f32 %v4088, 0.0
      %v4661 = vmax.f32 %v4091, 0.0
      %v4662 = vmax.f32 %v4096, 0.0
      %v4663 = vmax.f32 %v4099, 0.0
      %v4664 = vmax.f32 %v4104, 0.0
      %v4665 = vmax.f32 %v4107, 0.0
      %v4666 = vmax.f32 %v4112, 0.0
      %v4667 = vmax.f32 %v4115, 0.0
      %v4668 = vmax.f32 %v4120, 0.0
      %v4669 = vmax.f32 %v4123, 0.0
      %v4670 = vmax.f32 %v4128, 0.0
      %v4671 = vmax.f32 %v4131, 0.0
      %v4672 = vmax.f32 %v4136, 0.0
      %v4673 = vmax.f32 %v4139, 0.0
      %v4674 = vmax.f32 %v4144, 0.0
      %v4675 = vmax.f32 %v4147, 0.0
      %v4676 = vmax.f32 %v4152, 0.0
      %v4677 = vmax.f32 %v4155, 0.0
      %v4678 = vmax.f32 %v4160, 0.0
      %v4679 = vmax.f32 %v4163, 0.0
      %v4680 = vmax.f32 %v4168, 0.0
      %v4681 = vmax.f32 %v4171, 0.0
      %v4682 = vmax.f32 %v4176, 0.0
      %v4683 = vmax.f32 %v4179, 0.0
      %v4684 = vmax.f32 %v4184, 0.0
      %v4685 = vmax.f32 %v4187, 0.0
      %v4686 = vmax.f32 %v4192, 0.0
      %v4687 = vmax.f32 %v4195, 0.0
      %v4688 = vmax.f32 %v4200, 0.0
      %v4689 = vmax.f32 %v4203, 0.0
      %v4690 = vmax.f32 %v4208, 0.0
      %v4691 = vmax.f32 %v4211, 0.0
      %v4692 = vmax.f32 %v4216, 0.0
      %v4693 = vmax.f32 %v4219, 0.0
      %v4694 = vmax.f32 %v4224, 0.0
      %v4695 = vmax.f32 %v4227, 0.0
      %v4696 = vmax.f32 %v4232, 0.0
      %v4697 = vmax.f32 %v4235, 0.0
      %v4698 = vmax.f32 %v4240, 0.0
      %v4699 = vmax.f32 %v4243, 0.0
      %v4700 = vmax.f32 %v4248, 0.0
      %v4701 = vmax.f32 %v4251, 0.0
      %v4702 = vmax.f32 %v4256, 0.0
      %v4703 = vmax.f32 %v4259, 0.0
      %v4704 = vmax.f32 %v4264, 0.0
      %v4705 = vmax.f32 %v4267, 0.0
      %v4706 = vmax.f32 %v4272, 0.0
      %v4707 = vmax.f32 %v4275, 0.0
      %v4708 = vmax.f32 %v4280, 0.0
      %v4709 = vmax.f32 %v4283, 0.0
      %v4710 = vmax.f32 %v4288, 0.0
      %v4711 = vmax.f32 %v4291, 0.0
      %v4712 = vmax.f32 %v4296, 0.0
      %v4713 = vmax.f32 %v4299, 0.0
      %v4714 = vmax.f32 %v4304, 0.0
      %v4715 = vmax.f32 %v4307, 0.0
      %v4716 = vmax.f32 %v4312, 0.0
      %v4717 = vmax.f32 %v4315, 0.0
      %v4718 = vmax.f32 %v4320, 0.0
      %v4719 = vmax.f32 %v4323, 0.0
      %v4720 = vmax.f32 %v4328, 0.0
      %v4721 = vmax.f32 %v4331, 0.0
      %v4722 = vmax.f32 %v4336, 0.0
      %v4723 = vmax.f32 %v4339, 0.0
      %v4724 = vmax.f32 %v4344, 0.0
      %v4725 = vmax.f32 %v4347, 0.0
      %v4726 = vmax.f32 %v4352, 0.0
      %v4727 = vmax.f32 %v4355, 0.0
      %v4728 = vmax.f32 %v4360, 0.0
      %v4729 = vmax.f32 %v4363, 0.0
      %v4730 = vmax.f32 %v4368, 0.0
      %v4731 = vmax.f32 %v4371, 0.0
      %v4732 = vmax.f32 %v4376, 0.0
      %v4733 = vmax.f32 %v4379, 0.0
      %v4734 = vmax.f32 %v4384, 0.0
      %v4735 = vmax.f32 %v4387, 0.0
      %v4736 = vmax.f32 %v4392, 0.0
      %v4737 = vmax.f32 %v4395, 0.0
      %v4738 = vmax.f32 %v4400, 0.0
      %v4739 = vmax.f32 %v4403, 0.0
      %v4740 = vmax.f32 %v4408, 0.0
      %v4741 = vmax.f32 %v4411, 0.0
      %v4742 = vmax.f32 %v4416, 0.0
      %v4743 = vmax.f32 %v4419, 0.0
      %v4744 = vmax.f32 %v4424, 0.0
      %v4745 = vmax.f32 %v4427, 0.0
      %v4746 = vmax.f32 %v4432, 0.0
      %v4747 = vmax.f32 %v4435, 0.0
      %v4748 = vmax.f32 %v4440, 0.0
      %v4749 = vmax.f32 %v4443, 0.0
      %v4750 = vmax.f32 %v4448, 0.0
      %v4751 = vmax.f32 %v4451, 0.0
      %v4752 = vmax.f32 %v4456, 0.0
      %v4753 = vmax.f32 %v4459, 0.0
      %v4754 = vmax.f32 %v4464, 0.0
      %v4755 = vmax.f32 %v4467, 0.0
      %v4756 = vmax.f32 %v4472, 0.0
      %v4757 = vmax.f32 %v4475, 0.0
      %v4758 = vmax.f32 %v4480, 0.0
      %v4759 = vmax.f32 %v4483, 0.0
      %v4760 = vmax.f32 %v4488, 0.0
      %v4761 = vmax.f32 %v4491, 0.0
      %v4762 = vmax.f32 %v4496, 0.0
      %v4763 = vmax.f32 %v4499, 0.0
      %v4764 = vmax.f32 %v4504, 0.0
      %v4765 = vmax.f32 %v4507, 0.0
      %v4766 = vpack.c.bf16 %v4511, %v4510
      %v4767 = vpack.c.bf16 %v4513, %v4512
      %v4768 = vpack.c.bf16 %v4515, %v4514
      %v4769 = vpack.c.bf16 %v4517, %v4516
      %v4770 = vpack.c.bf16 %v4519, %v4518
      %v4771 = vpack.c.bf16 %v4521, %v4520
      %v4772 = vpack.c.bf16 %v4523, %v4522
      %v4773 = vpack.c.bf16 %v4525, %v4524
      %v4774 = vpack.c.bf16 %v4527, %v4526
      %v4775 = vpack.c.bf16 %v4529, %v4528
      %v4776 = vpack.c.bf16 %v4531, %v4530
      %v4777 = vpack.c.bf16 %v4533, %v4532
      %v4778 = vpack.c.bf16 %v4535, %v4534
      %v4779 = vpack.c.bf16 %v4537, %v4536
      %v4780 = vpack.c.bf16 %v4539, %v4538
      %v4781 = vpack.c.bf16 %v4541, %v4540
      %v4782 = vpack.c.bf16 %v4543, %v4542
      %v4783 = vpack.c.bf16 %v4545, %v4544
      %v4784 = vpack.c.bf16 %v4547, %v4546
      %v4785 = vpack.c.bf16 %v4549, %v4548
      %v4786 = vpack.c.bf16 %v4551, %v4550
      %v4787 = vpack.c.bf16 %v4553, %v4552
      %v4788 = vpack.c.bf16 %v4555, %v4554
      %v4789 = vpack.c.bf16 %v4557, %v4556
      %v4790 = vpack.c.bf16 %v4559, %v4558
      %v4791 = vpack.c.bf16 %v4561, %v4560
      %v4792 = vpack.c.bf16 %v4563, %v4562
      %v4793 = vpack.c.bf16 %v4565, %v4564
      %v4794 = vpack.c.bf16 %v4567, %v4566
      %v4795 = vpack.c.bf16 %v4569, %v4568
      %v4796 = vpack.c.bf16 %v4571, %v4570
      %v4797 = vpack.c.bf16 %v4573, %v4572
      %v4798 = vpack.c.bf16 %v4575, %v4574
      %v4799 = vpack.c.bf16 %v4577, %v4576
      %v4800 = vpack.c.bf16 %v4579, %v4578
      %v4801 = vpack.c.bf16 %v4581, %v4580
      %v4802 = vpack.c.bf16 %v4583, %v4582
      %v4803 = vpack.c.bf16 %v4585, %v4584
      %v4804 = vpack.c.bf16 %v4587, %v4586
      %v4805 = vpack.c.bf16 %v4589, %v4588
      %v4806 = vpack.c.bf16 %v4591, %v4590
      %v4807 = vpack.c.bf16 %v4593, %v4592
      %v4808 = vpack.c.bf16 %v4595, %v4594
      %v4809 = vpack.c.bf16 %v4597, %v4596
      %v4810 = vpack.c.bf16 %v4599, %v4598
      %v4811 = vpack.c.bf16 %v4601, %v4600
      %v4812 = vpack.c.bf16 %v4603, %v4602
      %v4813 = vpack.c.bf16 %v4605, %v4604
      %v4814 = vpack.c.bf16 %v4607, %v4606
      %v4815 = vpack.c.bf16 %v4609, %v4608
      %v4816 = vpack.c.bf16 %v4611, %v4610
      %v4817 = vpack.c.bf16 %v4613, %v4612
      %v4818 = vpack.c.bf16 %v4615, %v4614
      %v4819 = vpack.c.bf16 %v4617, %v4616
      %v4820 = vpack.c.bf16 %v4619, %v4618
      %v4821 = vpack.c.bf16 %v4621, %v4620
      %v4822 = vpack.c.bf16 %v4623, %v4622
      %v4823 = vpack.c.bf16 %v4625, %v4624
      %v4824 = vpack.c.bf16 %v4627, %v4626
      %v4825 = vpack.c.bf16 %v4629, %v4628
      %v4826 = vpack.c.bf16 %v4631, %v4630
      %v4827 = vpack.c.bf16 %v4633, %v4632
      %v4828 = vpack.c.bf16 %v4635, %v4634
      %v4829 = vpack.c.bf16 %v4637, %v4636
      %v4830 = vpack.c.bf16 %v4639, %v4638
      %v4831 = vpack.c.bf16 %v4641, %v4640
      %v4832 = vpack.c.bf16 %v4643, %v4642
      %v4833 = vpack.c.bf16 %v4645, %v4644
      %v4834 = vpack.c.bf16 %v4647, %v4646
      %v4835 = vpack.c.bf16 %v4649, %v4648
      %v4836 = vpack.c.bf16 %v4651, %v4650
      %v4837 = vpack.c.bf16 %v4653, %v4652
      %v4838 = vpack.c.bf16 %v4655, %v4654
      %v4839 = vpack.c.bf16 %v4657, %v4656
      %v4840 = vpack.c.bf16 %v4659, %v4658
      %v4841 = vpack.c.bf16 %v4661, %v4660
      %v4842 = vpack.c.bf16 %v4663, %v4662
      %v4843 = vpack.c.bf16 %v4665, %v4664
      %v4844 = vpack.c.bf16 %v4667, %v4666
      %v4845 = vpack.c.bf16 %v4669, %v4668
      %v4846 = vpack.c.bf16 %v4671, %v4670
      %v4847 = vpack.c.bf16 %v4673, %v4672
      %v4848 = vpack.c.bf16 %v4675, %v4674
      %v4849 = vpack.c.bf16 %v4677, %v4676
      %v4850 = vpack.c.bf16 %v4679, %v4678
      %v4851 = vpack.c.bf16 %v4681, %v4680
      %v4852 = vpack.c.bf16 %v4683, %v4682
      %v4853 = vpack.c.bf16 %v4685, %v4684
      %v4854 = vpack.c.bf16 %v4687, %v4686
      %v4855 = vpack.c.bf16 %v4689, %v4688
      %v4856 = vpack.c.bf16 %v4691, %v4690
      %v4857 = vpack.c.bf16 %v4693, %v4692
      %v4858 = vpack.c.bf16 %v4695, %v4694
      %v4859 = vpack.c.bf16 %v4697, %v4696
      %v4860 = vpack.c.bf16 %v4699, %v4698
      %v4861 = vpack.c.bf16 %v4701, %v4700
      %v4862 = vpack.c.bf16 %v4703, %v4702
      %v4863 = vpack.c.bf16 %v4705, %v4704
      %v4864 = vpack.c.bf16 %v4707, %v4706
      %v4865 = vpack.c.bf16 %v4709, %v4708
      %v4866 = vpack.c.bf16 %v4711, %v4710
      %v4867 = vpack.c.bf16 %v4713, %v4712
      %v4868 = vpack.c.bf16 %v4715, %v4714
      %v4869 = vpack.c.bf16 %v4717, %v4716
      %v4870 = vpack.c.bf16 %v4719, %v4718
      %v4871 = vpack.c.bf16 %v4721, %v4720
      %v4872 = vpack.c.bf16 %v4723, %v4722
      %v4873 = vpack.c.bf16 %v4725, %v4724
      %v4874 = vpack.c.bf16 %v4727, %v4726
      %v4875 = vpack.c.bf16 %v4729, %v4728
      %v4876 = vpack.c.bf16 %v4731, %v4730
      %v4877 = vpack.c.bf16 %v4733, %v4732
      %v4878 = vpack.c.bf16 %v4735, %v4734
      %v4879 = vpack.c.bf16 %v4737, %v4736
      %v4880 = vpack.c.bf16 %v4739, %v4738
      %v4881 = vpack.c.bf16 %v4741, %v4740
      %v4882 = vpack.c.bf16 %v4743, %v4742
      %v4883 = vpack.c.bf16 %v4745, %v4744
      %v4884 = vpack.c.bf16 %v4747, %v4746
      %v4885 = vpack.c.bf16 %v4749, %v4748
      %v4886 = vpack.c.bf16 %v4751, %v4750
      %v4887 = vpack.c.bf16 %v4753, %v4752
      %v4888 = vpack.c.bf16 %v4755, %v4754
      %v4889 = vpack.c.bf16 %v4757, %v4756
      %v4890 = vpack.c.bf16 %v4759, %v4758
      %v4891 = vpack.c.bf16 %v4761, %v4760
      %v4892 = vpack.c.bf16 %v4763, %v4762
      %v4893 = vpack.c.bf16 %v4765, %v4764
      %v4895 = vlaneseq
      %v4896 = vshrl.u32 %v4895, 7
      %v4897 = vsub.s32 0, %v4896
      %v4898 = vrot.slane %v558, %v4897
      %v4908 = vunpack.c.l.b16 %v550
      %v4909 = vunpack.c.l.b16 %v551
      %v4910 = vunpack.c.l.b16 %v552
      %v4911 = vunpack.c.l.b16 %v553
      %v4912 = vunpack.c.l.b16 %v554
      %v4913 = vunpack.c.l.b16 %v555
      %v4914 = vunpack.c.l.b16 %v556
      %v4915 = vunpack.c.l.b16 %v557
      %v4916 = vpack.c.b16 %v4909, %v4908
      %v4917 = vpack.c.b16 %v4911, %v4910
      %v4918 = vpack.c.b16 %v4913, %v4912
      %v4919 = vpack.c.b16 %v4915, %v4914
      %v4925 = vsel %vm3068, %v4766, 0
      %v4928 = vsel %vm3068, %v4767, 0
      %v4931 = vsel %vm3068, %v4768, 0
      %v4934 = vsel %vm3068, %v4769, 0
      %v4937 = vsel %vm3068, %v4770, 0
      %v4940 = vsel %vm3068, %v4771, 0
      %v4943 = vsel %vm3068, %v4772, 0
      %v4946 = vsel %vm3068, %v4773, 0
      %v4949 = vsel %vm3068, %v4774, 0
      %v4952 = vsel %vm3068, %v4775, 0
      %v4955 = vsel %vm3068, %v4776, 0
      %v4958 = vsel %vm3068, %v4777, 0
      %v4961 = vsel %vm3068, %v4778, 0
      %v4964 = vsel %vm3068, %v4779, 0
      %v4967 = vsel %vm3068, %v4780, 0
      %v4970 = vsel %vm3068, %v4781, 0
      %v4973 = vsel %vm3068, %v4782, 0
      %v4976 = vsel %vm3068, %v4783, 0
      %v4979 = vsel %vm3068, %v4784, 0
      %v4982 = vsel %vm3068, %v4785, 0
      %v4985 = vsel %vm3068, %v4786, 0
      %v4988 = vsel %vm3068, %v4787, 0
      %v4991 = vsel %vm3068, %v4788, 0
      %v4994 = vsel %vm3068, %v4789, 0
      %v4997 = vsel %vm3068, %v4790, 0
      %v5000 = vsel %vm3068, %v4791, 0
      %v5003 = vsel %vm3068, %v4792, 0
      %v5006 = vsel %vm3068, %v4793, 0
      %v5009 = vsel %vm3068, %v4794, 0
      %v5012 = vsel %vm3068, %v4795, 0
      %v5015 = vsel %vm3068, %v4796, 0
      %v5018 = vsel %vm3068, %v4797, 0
      %v5021 = vsel %vm3068, %v4798, 0
      %v5024 = vsel %vm3068, %v4799, 0
      %v5027 = vsel %vm3068, %v4800, 0
      %v5030 = vsel %vm3068, %v4801, 0
      %v5033 = vsel %vm3068, %v4802, 0
      %v5036 = vsel %vm3068, %v4803, 0
      %v5039 = vsel %vm3068, %v4804, 0
      %v5042 = vsel %vm3068, %v4805, 0
      %v5045 = vsel %vm3068, %v4806, 0
      %v5048 = vsel %vm3068, %v4807, 0
      %v5051 = vsel %vm3068, %v4808, 0
      %v5054 = vsel %vm3068, %v4809, 0
      %v5057 = vsel %vm3068, %v4810, 0
      %v5060 = vsel %vm3068, %v4811, 0
      %v5063 = vsel %vm3068, %v4812, 0
      %v5066 = vsel %vm3068, %v4813, 0
      %v5069 = vsel %vm3068, %v4814, 0
      %v5072 = vsel %vm3068, %v4815, 0
      %v5075 = vsel %vm3068, %v4816, 0
      %v5078 = vsel %vm3068, %v4817, 0
      %v5081 = vsel %vm3068, %v4818, 0
      %v5084 = vsel %vm3068, %v4819, 0
      %v5087 = vsel %vm3068, %v4820, 0
      %v5090 = vsel %vm3068, %v4821, 0
      %v5093 = vsel %vm3068, %v4822, 0
      %v5096 = vsel %vm3068, %v4823, 0
      %v5099 = vsel %vm3068, %v4824, 0
      %v5102 = vsel %vm3068, %v4825, 0
      %v5105 = vsel %vm3068, %v4826, 0
      %v5108 = vsel %vm3068, %v4827, 0
      %v5111 = vsel %vm3068, %v4828, 0
      %v5114 = vsel %vm3068, %v4829, 0
      %v5117 = vsel %vm3068, %v4830, 0
      %v5120 = vsel %vm3068, %v4831, 0
      %v5123 = vsel %vm3068, %v4832, 0
      %v5126 = vsel %vm3068, %v4833, 0
      %v5129 = vsel %vm3068, %v4834, 0
      %v5132 = vsel %vm3068, %v4835, 0
      %v5135 = vsel %vm3068, %v4836, 0
      %v5138 = vsel %vm3068, %v4837, 0
      %v5141 = vsel %vm3068, %v4838, 0
      %v5144 = vsel %vm3068, %v4839, 0
      %v5147 = vsel %vm3068, %v4840, 0
      %v5150 = vsel %vm3068, %v4841, 0
      %v5153 = vsel %vm3068, %v4842, 0
      %v5156 = vsel %vm3068, %v4843, 0
      %v5159 = vsel %vm3068, %v4844, 0
      %v5162 = vsel %vm3068, %v4845, 0
      %v5165 = vsel %vm3068, %v4846, 0
      %v5168 = vsel %vm3068, %v4847, 0
      %v5171 = vsel %vm3068, %v4848, 0
      %v5174 = vsel %vm3068, %v4849, 0
      %v5177 = vsel %vm3068, %v4850, 0
      %v5180 = vsel %vm3068, %v4851, 0
      %v5183 = vsel %vm3068, %v4852, 0
      %v5186 = vsel %vm3068, %v4853, 0
      %v5189 = vsel %vm3068, %v4854, 0
      %v5192 = vsel %vm3068, %v4855, 0
      %v5195 = vsel %vm3068, %v4856, 0
      %v5198 = vsel %vm3068, %v4857, 0
      %v5201 = vsel %vm3068, %v4858, 0
      %v5204 = vsel %vm3068, %v4859, 0
      %v5207 = vsel %vm3068, %v4860, 0
      %v5210 = vsel %vm3068, %v4861, 0
      %v5213 = vsel %vm3068, %v4862, 0
      %v5216 = vsel %vm3068, %v4863, 0
      %v5219 = vsel %vm3068, %v4864, 0
      %v5222 = vsel %vm3068, %v4865, 0
      %v5225 = vsel %vm3068, %v4866, 0
      %v5228 = vsel %vm3068, %v4867, 0
      %v5231 = vsel %vm3068, %v4868, 0
      %v5234 = vsel %vm3068, %v4869, 0
      %v5237 = vsel %vm3068, %v4870, 0
      %v5240 = vsel %vm3068, %v4871, 0
      %v5243 = vsel %vm3068, %v4872, 0
      %v5246 = vsel %vm3068, %v4873, 0
      %v5249 = vsel %vm3068, %v4874, 0
      %v5252 = vsel %vm3068, %v4875, 0
      %v5255 = vsel %vm3068, %v4876, 0
      %v5258 = vsel %vm3068, %v4877, 0
      %v5261 = vsel %vm3068, %v4878, 0
      %v5264 = vsel %vm3068, %v4879, 0
      %v5267 = vsel %vm3068, %v4880, 0
      %v5270 = vsel %vm3068, %v4881, 0
      %v5273 = vsel %vm3068, %v4882, 0
      %v5276 = vsel %vm3068, %v4883, 0
      %v5279 = vsel %vm3068, %v4884, 0
      %v5282 = vsel %vm3068, %v4885, 0
      %v5285 = vsel %vm3068, %v4886, 0
      %v5288 = vsel %vm3068, %v4887, 0
      %v5291 = vsel %vm3068, %v4888, 0
      %v5294 = vsel %vm3068, %v4889, 0
      %v5297 = vsel %vm3068, %v4890, 0
      %v5300 = vsel %vm3068, %v4891, 0
      %v5303 = vsel %vm3068, %v4892, 0
      %v5306 = vsel %vm3068, %v4893, 0
      %5308 = vmatprep.subr.bf16.mxu0 0
      %5309 = vmatpush1.bf16.msra.mxu0 %v4916
      %5310 = vmatprep.subr.bf16.mxu0 0
      %5311 = vmatpush1.bf16.msra.mxu0 %v4917
      %5312 = vmatprep.subr.bf16.mxu0 0
      %5313 = vmatpush1.bf16.msra.mxu0 %v4918
      %5314 = vmatprep.subr.bf16.mxu0 0
      %5315 = vmatpush1.bf16.msra.mxu0 %v4919
      %5316 = vmatprep.subr.bf16.mxu0 0
      %5317 = vmatpush1.bf16.msra.mxu0 0
      %5318 = vmatprep.subr.bf16.mxu0 0
      %5319 = vmatpush1.bf16.msra.mxu0 0
      %5320 = vmatprep.subr.bf16.mxu0 0
      %5321 = vmatpush1.bf16.msra.mxu0 0
      %5322 = vmatprep.subr.bf16.mxu0 0
      %5323 = vmatpush1.bf16.msra.mxu0 0
      %5324 = vmatprep.subr.bf16.mxu0 0
      %5325 = vmatpush1.bf16.msra.mxu0 0
      %5326 = vmatprep.subr.bf16.mxu0 0
      %5327 = vmatpush1.bf16.msra.mxu0 0
      %5328 = vmatprep.subr.bf16.mxu0 0
      %5329 = vmatpush1.bf16.msra.mxu0 0
      %5330 = vmatprep.subr.bf16.mxu0 0
      %5331 = vmatpush1.bf16.msra.mxu0 0
      %5332 = vmatprep.subr.bf16.mxu0 0
      %5333 = vmatpush1.bf16.msra.mxu0 0
      %5334 = vmatprep.subr.bf16.mxu0 0
      %5335 = vmatpush1.bf16.msra.mxu0 0
      %5336 = vmatprep.subr.bf16.mxu0 0
      %5337 = vmatpush1.bf16.msra.mxu0 0
      %5338 = vmatprep.subr.bf16.mxu0 0
      %5339 = vmatpush1.bf16.msra.mxu0 0
      %5340 = vmatprep.mubr.bf16.mxu0 0
      %5341 = vmatmul.mubr.bf16.gmra.mrb[0].mxu0 %v4925
      %v5342 = vpop.f32.mrb[0].mxu0
      %v5343 = vadd.f32 %v4898, %v5342
      %v5344 = vpop.f32.mrb[0].mxu0
      %v5345 = vpop.f32.mrb[0].mxu0
      %v5346 = vadd.f32 %v4898, %v5345
      %v5347 = vpop.f32.mrb[0].mxu0
      %5348 = vmatprep.mubr.bf16.mxu0 0
      %5349 = vmatmul.mubr.bf16.gmra.mrb[0].mxu0 %v4928
      %v5350 = vpop.f32.mrb[0].mxu0
      %v5351 = vadd.f32 %v4898, %v5350
      %v5352 = vpop.f32.mrb[0].mxu0
      %v5353 = vpop.f32.mrb[0].mxu0
      %v5354 = vadd.f32 %v4898, %v5353
      %v5355 = vpop.f32.mrb[0].mxu0
      %5356 = vmatprep.mubr.bf16.mxu0 0
      %5357 = vmatmul.mubr.bf16.gmra.mrb[0].mxu0 %v4931
      %v5358 = vpop.f32.mrb[0].mxu0
      %v5359 = vadd.f32 %v4898, %v5358
      %v5360 = vpop.f32.mrb[0].mxu0
      %v5361 = vpop.f32.mrb[0].mxu0
      %v5362 = vadd.f32 %v4898, %v5361
      %v5363 = vpop.f32.mrb[0].mxu0
      %5364 = vmatprep.mubr.bf16.mxu0 0
      %5365 = vmatmul.mubr.bf16.gmra.mrb[0].mxu0 %v4934
      %v5366 = vpop.f32.mrb[0].mxu0
      %v5367 = vadd.f32 %v4898, %v5366
      %v5368 = vpop.f32.mrb[0].mxu0
      %v5369 = vpop.f32.mrb[0].mxu0
      %v5370 = vadd.f32 %v4898, %v5369
      %v5371 = vpop.f32.mrb[0].mxu0
      %5372 = vmatprep.mubr.bf16.mxu0 0
      %5373 = vmatmul.mubr.bf16.gmra.mrb[0].mxu0 %v4937
      %v5374 = vpop.f32.mrb[0].mxu0
      %v5375 = vadd.f32 %v4898, %v5374
      %v5376 = vpop.f32.mrb[0].mxu0
      %v5377 = vpop.f32.mrb[0].mxu0
      %v5378 = vadd.f32 %v4898, %v5377
      %v5379 = vpop.f32.mrb[0].mxu0
      %5380 = vmatprep.mubr.bf16.mxu0 0
      %5381 = vmatmul.mubr.bf16.gmra.mrb[0].mxu0 %v4940
      %v5382 = vpop.f32.mrb[0].mxu0
      %v5383 = vadd.f32 %v4898, %v5382
      %v5384 = vpop.f32.mrb[0].mxu0
      %v5385 = vpop.f32.mrb[0].mxu0
      %v5386 = vadd.f32 %v4898, %v5385
      %v5387 = vpop.f32.mrb[0].mxu0
      %5388 = vmatprep.mubr.bf16.mxu0 0
      %5389 = vmatmul.mubr.bf16.gmra.mrb[0].mxu0 %v4943
      %v5390 = vpop.f32.mrb[0].mxu0
      %v5391 = vadd.f32 %v4898, %v5390
      %v5392 = vpop.f32.mrb[0].mxu0
      %v5393 = vpop.f32.mrb[0].mxu0
      %v5394 = vadd.f32 %v4898, %v5393
      %v5395 = vpop.f32.mrb[0].mxu0
      %5396 = vmatprep.mubr.bf16.mxu0 0
      %5397 = vmatmul.mubr.bf16.gmra.mrb[0].mxu0 %v4946
      %v5398 = vpop.f32.mrb[0].mxu0
      %v5399 = vadd.f32 %v4898, %v5398
      %v5400 = vpop.f32.mrb[0].mxu0
      %v5401 = vpop.f32.mrb[0].mxu0
      %v5402 = vadd.f32 %v4898, %v5401
      %v5403 = vpop.f32.mrb[0].mxu0
      %5404 = vmatprep.mubr.bf16.mxu0 0
      %5405 = vmatmul.mubr.bf16.gmra.mrb[0].mxu0 %v4949
      %v5406 = vpop.f32.mrb[0].mxu0
      %v5407 = vadd.f32 %v4898, %v5406
      %v5408 = vpop.f32.mrb[0].mxu0
      %v5409 = vpop.f32.mrb[0].mxu0
      %v5410 = vadd.f32 %v4898, %v5409
      %v5411 = vpop.f32.mrb[0].mxu0
      %5412 = vmatprep.mubr.bf16.mxu0 0
      %5413 = vmatmul.mubr.bf16.gmra.mrb[0].mxu0 %v4952
      %v5414 = vpop.f32.mrb[0].mxu0
      %v5415 = vadd.f32 %v4898, %v5414
      %v5416 = vpop.f32.mrb[0].mxu0
      %v5417 = vpop.f32.mrb[0].mxu0
      %v5418 = vadd.f32 %v4898, %v5417
      %v5419 = vpop.f32.mrb[0].mxu0
      %5420 = vmatprep.mubr.bf16.mxu0 0
      %5421 = vmatmul.mubr.bf16.gmra.mrb[0].mxu0 %v4955
      %v5422 = vpop.f32.mrb[0].mxu0
      %v5423 = vadd.f32 %v4898, %v5422
      %v5424 = vpop.f32.mrb[0].mxu0
      %v5425 = vpop.f32.mrb[0].mxu0
      %v5426 = vadd.f32 %v4898, %v5425
      %v5427 = vpop.f32.mrb[0].mxu0
      %5428 = vmatprep.mubr.bf16.mxu0 0
      %5429 = vmatmul.mubr.bf16.gmra.mrb[0].mxu0 %v4958
      %v5430 = vpop.f32.mrb[0].mxu0
      %v5431 = vadd.f32 %v4898, %v5430
      %v5432 = vpop.f32.mrb[0].mxu0
      %v5433 = vpop.f32.mrb[0].mxu0
      %v5434 = vadd.f32 %v4898, %v5433
      %v5435 = vpop.f32.mrb[0].mxu0
      %5436 = vmatprep.mubr.bf16.mxu0 0
      %5437 = vmatmul.mubr.bf16.gmra.mrb[0].mxu0 %v4961
      %v5438 = vpop.f32.mrb[0].mxu0
      %v5439 = vadd.f32 %v4898, %v5438
      %v5440 = vpop.f32.mrb[0].mxu0
      %v5441 = vpop.f32.mrb[0].mxu0
      %v5442 = vadd.f32 %v4898, %v5441
      %v5443 = vpop.f32.mrb[0].mxu0
      %5444 = vmatprep.mubr.bf16.mxu0 0
      %5445 = vmatmul.mubr.bf16.gmra.mrb[0].mxu0 %v4964
      %v5446 = vpop.f32.mrb[0].mxu0
      %v5447 = vadd.f32 %v4898, %v5446
      %v5448 = vpop.f32.mrb[0].mxu0
      %v5449 = vpop.f32.mrb[0].mxu0
      %v5450 = vadd.f32 %v4898, %v5449
      %v5451 = vpop.f32.mrb[0].mxu0
      %5452 = vmatprep.mubr.bf16.mxu0 0
      %5453 = vmatmul.mubr.bf16.gmra.mrb[0].mxu0 %v4967
      %v5454 = vpop.f32.mrb[0].mxu0
      %v5455 = vadd.f32 %v4898, %v5454
      %v5456 = vpop.f32.mrb[0].mxu0
      %v5457 = vpop.f32.mrb[0].mxu0
      %v5458 = vadd.f32 %v4898, %v5457
      %v5459 = vpop.f32.mrb[0].mxu0
      %5460 = vmatprep.mubr.bf16.mxu0 0
      %5461 = vmatmul.mubr.bf16.gmra.mrb[0].mxu0 %v4970
      %v5462 = vpop.f32.mrb[0].mxu0
      %v5463 = vadd.f32 %v4898, %v5462
      %v5464 = vpop.f32.mrb[0].mxu0
      %v5465 = vpop.f32.mrb[0].mxu0
      %v5466 = vadd.f32 %v4898, %v5465
      %v5467 = vpop.f32.mrb[0].mxu0
      %5468 = vmatprep.mubr.bf16.mxu0 0
      %5469 = vmatmul.mubr.bf16.gmra.mrb[0].mxu0 %v4973
      %v5470 = vpop.f32.mrb[0].mxu0
      %v5471 = vadd.f32 %v4898, %v5470
      %v5472 = vpop.f32.mrb[0].mxu0
      %v5473 = vpop.f32.mrb[0].mxu0
      %v5474 = vadd.f32 %v4898, %v5473
      %v5475 = vpop.f32.mrb[0].mxu0
      %5476 = vmatprep.mubr.bf16.mxu0 0
      %5477 = vmatmul.mubr.bf16.gmra.mrb[0].mxu0 %v4976
      %v5478 = vpop.f32.mrb[0].mxu0
      %v5479 = vadd.f32 %v4898, %v5478
      %v5480 = vpop.f32.mrb[0].mxu0
      %v5481 = vpop.f32.mrb[0].mxu0
      %v5482 = vadd.f32 %v4898, %v5481
      %v5483 = vpop.f32.mrb[0].mxu0
      %5484 = vmatprep.mubr.bf16.mxu0 0
      %5485 = vmatmul.mubr.bf16.gmra.mrb[0].mxu0 %v4979
      %v5486 = vpop.f32.mrb[0].mxu0
      %v5487 = vadd.f32 %v4898, %v5486
      %v5488 = vpop.f32.mrb[0].mxu0
      %v5489 = vpop.f32.mrb[0].mxu0
      %v5490 = vadd.f32 %v4898, %v5489
      %v5491 = vpop.f32.mrb[0].mxu0
      %5492 = vmatprep.mubr.bf16.mxu0 0
      %5493 = vmatmul.mubr.bf16.gmra.mrb[0].mxu0 %v4982
      %v5494 = vpop.f32.mrb[0].mxu0
      %v5495 = vadd.f32 %v4898, %v5494
      %v5496 = vpop.f32.mrb[0].mxu0
      %v5497 = vpop.f32.mrb[0].mxu0
      %v5498 = vadd.f32 %v4898, %v5497
      %v5499 = vpop.f32.mrb[0].mxu0
      %5500 = vmatprep.mubr.bf16.mxu0 0
      %5501 = vmatmul.mubr.bf16.gmra.mrb[0].mxu0 %v4985
      %v5502 = vpop.f32.mrb[0].mxu0
      %v5503 = vadd.f32 %v4898, %v5502
      %v5504 = vpop.f32.mrb[0].mxu0
      %v5505 = vpop.f32.mrb[0].mxu0
      %v5506 = vadd.f32 %v4898, %v5505
      %v5507 = vpop.f32.mrb[0].mxu0
      %5508 = vmatprep.mubr.bf16.mxu0 0
      %5509 = vmatmul.mubr.bf16.gmra.mrb[0].mxu0 %v4988
      %v5510 = vpop.f32.mrb[0].mxu0
      %v5511 = vadd.f32 %v4898, %v5510
      %v5512 = vpop.f32.mrb[0].mxu0
      %v5513 = vpop.f32.mrb[0].mxu0
      %v5514 = vadd.f32 %v4898, %v5513
      %v5515 = vpop.f32.mrb[0].mxu0
      %5516 = vmatprep.mubr.bf16.mxu0 0
      %5517 = vmatmul.mubr.bf16.gmra.mrb[0].mxu0 %v4991
      %v5518 = vpop.f32.mrb[0].mxu0
      %v5519 = vadd.f32 %v4898, %v5518
      %v5520 = vpop.f32.mrb[0].mxu0
      %v5521 = vpop.f32.mrb[0].mxu0
      %v5522 = vadd.f32 %v4898, %v5521
      %v5523 = vpop.f32.mrb[0].mxu0
      %5524 = vmatprep.mubr.bf16.mxu0 0
      %5525 = vmatmul.mubr.bf16.gmra.mrb[0].mxu0 %v4994
      %v5526 = vpop.f32.mrb[0].mxu0
      %v5527 = vadd.f32 %v4898, %v5526
      %v5528 = vpop.f32.mrb[0].mxu0
      %v5529 = vpop.f32.mrb[0].mxu0
      %v5530 = vadd.f32 %v4898, %v5529
      %v5531 = vpop.f32.mrb[0].mxu0
      %5532 = vmatprep.mubr.bf16.mxu0 0
      %5533 = vmatmul.mubr.bf16.gmra.mrb[0].mxu0 %v4997
      %v5534 = vpop.f32.mrb[0].mxu0
      %v5535 = vadd.f32 %v4898, %v5534
      %v5536 = vpop.f32.mrb[0].mxu0
      %v5537 = vpop.f32.mrb[0].mxu0
      %v5538 = vadd.f32 %v4898, %v5537
      %v5539 = vpop.f32.mrb[0].mxu0
      %5540 = vmatprep.mubr.bf16.mxu0 0
      %5541 = vmatmul.mubr.bf16.gmra.mrb[0].mxu0 %v5000
      %v5542 = vpop.f32.mrb[0].mxu0
      %v5543 = vadd.f32 %v4898, %v5542
      %v5544 = vpop.f32.mrb[0].mxu0
      %v5545 = vpop.f32.mrb[0].mxu0
      %v5546 = vadd.f32 %v4898, %v5545
      %v5547 = vpop.f32.mrb[0].mxu0
      %5548 = vmatprep.mubr.bf16.mxu0 0
      %5549 = vmatmul.mubr.bf16.gmra.mrb[0].mxu0 %v5003
      %v5550 = vpop.f32.mrb[0].mxu0
      %v5551 = vadd.f32 %v4898, %v5550
      %v5552 = vpop.f32.mrb[0].mxu0
      %v5553 = vpop.f32.mrb[0].mxu0
      %v5554 = vadd.f32 %v4898, %v5553
      %v5555 = vpop.f32.mrb[0].mxu0
      %5556 = vmatprep.mubr.bf16.mxu0 0
      %5557 = vmatmul.mubr.bf16.gmra.mrb[0].mxu0 %v5006
      %v5558 = vpop.f32.mrb[0].mxu0
      %v5559 = vadd.f32 %v4898, %v5558
      %v5560 = vpop.f32.mrb[0].mxu0
      %v5561 = vpop.f32.mrb[0].mxu0
      %v5562 = vadd.f32 %v4898, %v5561
      %v5563 = vpop.f32.mrb[0].mxu0
      %5564 = vmatprep.mubr.bf16.mxu0 0
      %5565 = vmatmul.mubr.bf16.gmra.mrb[0].mxu0 %v5009
      %v5566 = vpop.f32.mrb[0].mxu0
      %v5567 = vadd.f32 %v4898, %v5566
      %v5568 = vpop.f32.mrb[0].mxu0
      %v5569 = vpop.f32.mrb[0].mxu0
      %v5570 = vadd.f32 %v4898, %v5569
      %v5571 = vpop.f32.mrb[0].mxu0
      %5572 = vmatprep.mubr.bf16.mxu0 0
      %5573 = vmatmul.mubr.bf16.gmra.mrb[0].mxu0 %v5012
      %v5574 = vpop.f32.mrb[0].mxu0
      %v5575 = vadd.f32 %v4898, %v5574
      %v5576 = vpop.f32.mrb[0].mxu0
      %v5577 = vpop.f32.mrb[0].mxu0
      %v5578 = vadd.f32 %v4898, %v5577
      %v5579 = vpop.f32.mrb[0].mxu0
      %5580 = vmatprep.mubr.bf16.mxu0 0
      %5581 = vmatmul.mubr.bf16.gmra.mrb[0].mxu0 %v5015
      %v5582 = vpop.f32.mrb[0].mxu0
      %v5583 = vadd.f32 %v4898, %v5582
      %v5584 = vpop.f32.mrb[0].mxu0
      %v5585 = vpop.f32.mrb[0].mxu0
      %v5586 = vadd.f32 %v4898, %v5585
      %v5587 = vpop.f32.mrb[0].mxu0
      %5588 = vmatprep.mubr.bf16.mxu0 0
      %5589 = vmatmul.mubr.bf16.gmra.mrb[0].mxu0 %v5018
      %v5590 = vpop.f32.mrb[0].mxu0
      %v5591 = vadd.f32 %v4898, %v5590
      %v5592 = vpop.f32.mrb[0].mxu0
      %v5593 = vpop.f32.mrb[0].mxu0
      %v5594 = vadd.f32 %v4898, %v5593
      %v5595 = vpop.f32.mrb[0].mxu0
      %5596 = vmatprep.mubr.bf16.mxu0 0
      %5597 = vmatmul.mubr.bf16.gmra.mrb[0].mxu0 %v5021
      %v5598 = vpop.f32.mrb[0].mxu0
      %v5599 = vadd.f32 %v4898, %v5598
      %v5600 = vpop.f32.mrb[0].mxu0
      %v5601 = vpop.f32.mrb[0].mxu0
      %v5602 = vadd.f32 %v4898, %v5601
      %v5603 = vpop.f32.mrb[0].mxu0
      %5604 = vmatprep.mubr.bf16.mxu0 0
      %5605 = vmatmul.mubr.bf16.gmra.mrb[0].mxu0 %v5024
      %v5606 = vpop.f32.mrb[0].mxu0
      %v5607 = vadd.f32 %v4898, %v5606
      %v5608 = vpop.f32.mrb[0].mxu0
      %v5609 = vpop.f32.mrb[0].mxu0
      %v5610 = vadd.f32 %v4898, %v5609
      %v5611 = vpop.f32.mrb[0].mxu0
      %5612 = vmatprep.mubr.bf16.mxu0 0
      %5613 = vmatmul.mubr.bf16.gmra.mrb[0].mxu0 %v5027
      %v5614 = vpop.f32.mrb[0].mxu0
      %v5615 = vadd.f32 %v4898, %v5614
      %v5616 = vpop.f32.mrb[0].mxu0
      %v5617 = vpop.f32.mrb[0].mxu0
      %v5618 = vadd.f32 %v4898, %v5617
      %v5619 = vpop.f32.mrb[0].mxu0
      %5620 = vmatprep.mubr.bf16.mxu0 0
      %5621 = vmatmul.mubr.bf16.gmra.mrb[0].mxu0 %v5030
      %v5622 = vpop.f32.mrb[0].mxu0
      %v5623 = vadd.f32 %v4898, %v5622
      %v5624 = vpop.f32.mrb[0].mxu0
      %v5625 = vpop.f32.mrb[0].mxu0
      %v5626 = vadd.f32 %v4898, %v5625
      %v5627 = vpop.f32.mrb[0].mxu0
      %5628 = vmatprep.mubr.bf16.mxu0 0
      %5629 = vmatmul.mubr.bf16.gmra.mrb[0].mxu0 %v5033
      %v5630 = vpop.f32.mrb[0].mxu0
      %v5631 = vadd.f32 %v4898, %v5630
      %v5632 = vpop.f32.mrb[0].mxu0
      %v5633 = vpop.f32.mrb[0].mxu0
      %v5634 = vadd.f32 %v4898, %v5633
      %v5635 = vpop.f32.mrb[0].mxu0
      %5636 = vmatprep.mubr.bf16.mxu0 0
      %5637 = vmatmul.mubr.bf16.gmra.mrb[0].mxu0 %v5036
      %v5638 = vpop.f32.mrb[0].mxu0
      %v5639 = vadd.f32 %v4898, %v5638
      %v5640 = vpop.f32.mrb[0].mxu0
      %v5641 = vpop.f32.mrb[0].mxu0
      %v5642 = vadd.f32 %v4898, %v5641
      %v5643 = vpop.f32.mrb[0].mxu0
      %5644 = vmatprep.mubr.bf16.mxu0 0
      %5645 = vmatmul.mubr.bf16.gmra.mrb[0].mxu0 %v5039
      %v5646 = vpop.f32.mrb[0].mxu0
      %v5647 = vadd.f32 %v4898, %v5646
      %v5648 = vpop.f32.mrb[0].mxu0
      %v5649 = vpop.f32.mrb[0].mxu0
      %v5650 = vadd.f32 %v4898, %v5649
      %v5651 = vpop.f32.mrb[0].mxu0
      %5652 = vmatprep.mubr.bf16.mxu0 0
      %5653 = vmatmul.mubr.bf16.gmra.mrb[0].mxu0 %v5042
      %v5654 = vpop.f32.mrb[0].mxu0
      %v5655 = vadd.f32 %v4898, %v5654
      %v5656 = vpop.f32.mrb[0].mxu0
      %v5657 = vpop.f32.mrb[0].mxu0
      %v5658 = vadd.f32 %v4898, %v5657
      %v5659 = vpop.f32.mrb[0].mxu0
      %5660 = vmatprep.mubr.bf16.mxu0 0
      %5661 = vmatmul.mubr.bf16.gmra.mrb[0].mxu0 %v5045
      %v5662 = vpop.f32.mrb[0].mxu0
      %v5663 = vadd.f32 %v4898, %v5662
      %v5664 = vpop.f32.mrb[0].mxu0
      %v5665 = vpop.f32.mrb[0].mxu0
      %v5666 = vadd.f32 %v4898, %v5665
      %v5667 = vpop.f32.mrb[0].mxu0
      %5668 = vmatprep.mubr.bf16.mxu0 0
      %5669 = vmatmul.mubr.bf16.gmra.mrb[0].mxu0 %v5048
      %v5670 = vpop.f32.mrb[0].mxu0
      %v5671 = vadd.f32 %v4898, %v5670
      %v5672 = vpop.f32.mrb[0].mxu0
      %v5673 = vpop.f32.mrb[0].mxu0
      %v5674 = vadd.f32 %v4898, %v5673
      %v5675 = vpop.f32.mrb[0].mxu0
      %5676 = vmatprep.mubr.bf16.mxu0 0
      %5677 = vmatmul.mubr.bf16.gmra.mrb[0].mxu0 %v5051
      %v5678 = vpop.f32.mrb[0].mxu0
      %v5679 = vadd.f32 %v4898, %v5678
      %v5680 = vpop.f32.mrb[0].mxu0
      %v5681 = vpop.f32.mrb[0].mxu0
      %v5682 = vadd.f32 %v4898, %v5681
      %v5683 = vpop.f32.mrb[0].mxu0
      %5684 = vmatprep.mubr.bf16.mxu0 0
      %5685 = vmatmul.mubr.bf16.gmra.mrb[0].mxu0 %v5054
      %v5686 = vpop.f32.mrb[0].mxu0
      %v5687 = vadd.f32 %v4898, %v5686
      %v5688 = vpop.f32.mrb[0].mxu0
      %v5689 = vpop.f32.mrb[0].mxu0
      %v5690 = vadd.f32 %v4898, %v5689
      %v5691 = vpop.f32.mrb[0].mxu0
      %5692 = vmatprep.mubr.bf16.mxu0 0
      %5693 = vmatmul.mubr.bf16.gmra.mrb[0].mxu0 %v5057
      %v5694 = vpop.f32.mrb[0].mxu0
      %v5695 = vadd.f32 %v4898, %v5694
      %v5696 = vpop.f32.mrb[0].mxu0
      %v5697 = vpop.f32.mrb[0].mxu0
      %v5698 = vadd.f32 %v4898, %v5697
      %v5699 = vpop.f32.mrb[0].mxu0
      %5700 = vmatprep.mubr.bf16.mxu0 0
      %5701 = vmatmul.mubr.bf16.gmra.mrb[0].mxu0 %v5060
      %v5702 = vpop.f32.mrb[0].mxu0
      %v5703 = vadd.f32 %v4898, %v5702
      %v5704 = vpop.f32.mrb[0].mxu0
      %v5705 = vpop.f32.mrb[0].mxu0
      %v5706 = vadd.f32 %v4898, %v5705
      %v5707 = vpop.f32.mrb[0].mxu0
      %5708 = vmatprep.mubr.bf16.mxu0 0
      %5709 = vmatmul.mubr.bf16.gmra.mrb[0].mxu0 %v5063
      %v5710 = vpop.f32.mrb[0].mxu0
      %v5711 = vadd.f32 %v4898, %v5710
      %v5712 = vpop.f32.mrb[0].mxu0
      %v5713 = vpop.f32.mrb[0].mxu0
      %v5714 = vadd.f32 %v4898, %v5713
      %v5715 = vpop.f32.mrb[0].mxu0
      %5716 = vmatprep.mubr.bf16.mxu0 0
      %5717 = vmatmul.mubr.bf16.gmra.mrb[0].mxu0 %v5066
      %v5718 = vpop.f32.mrb[0].mxu0
      %v5719 = vadd.f32 %v4898, %v5718
      %v5720 = vpop.f32.mrb[0].mxu0
      %v5721 = vpop.f32.mrb[0].mxu0
      %v5722 = vadd.f32 %v4898, %v5721
      %v5723 = vpop.f32.mrb[0].mxu0
      %5724 = vmatprep.mubr.bf16.mxu0 0
      %5725 = vmatmul.mubr.bf16.gmra.mrb[0].mxu0 %v5069
      %v5726 = vpop.f32.mrb[0].mxu0
      %v5727 = vadd.f32 %v4898, %v5726
      %v5728 = vpop.f32.mrb[0].mxu0
      %v5729 = vpop.f32.mrb[0].mxu0
      %v5730 = vadd.f32 %v4898, %v5729
      %v5731 = vpop.f32.mrb[0].mxu0
      %5732 = vmatprep.mubr.bf16.mxu0 0
      %5733 = vmatmul.mubr.bf16.gmra.mrb[0].mxu0 %v5072
      %v5734 = vpop.f32.mrb[0].mxu0
      %v5735 = vadd.f32 %v4898, %v5734
      %v5736 = vpop.f32.mrb[0].mxu0
      %v5737 = vpop.f32.mrb[0].mxu0
      %v5738 = vadd.f32 %v4898, %v5737
      %v5739 = vpop.f32.mrb[0].mxu0
      %5740 = vmatprep.mubr.bf16.mxu0 0
      %5741 = vmatmul.mubr.bf16.gmra.mrb[0].mxu0 %v5075
      %v5742 = vpop.f32.mrb[0].mxu0
      %v5743 = vadd.f32 %v4898, %v5742
      %v5744 = vpop.f32.mrb[0].mxu0
      %v5745 = vpop.f32.mrb[0].mxu0
      %v5746 = vadd.f32 %v4898, %v5745
      %v5747 = vpop.f32.mrb[0].mxu0
      %5748 = vmatprep.mubr.bf16.mxu0 0
      %5749 = vmatmul.mubr.bf16.gmra.mrb[0].mxu0 %v5078
      %v5750 = vpop.f32.mrb[0].mxu0
      %v5751 = vadd.f32 %v4898, %v5750
      %v5752 = vpop.f32.mrb[0].mxu0
      %v5753 = vpop.f32.mrb[0].mxu0
      %v5754 = vadd.f32 %v4898, %v5753
      %v5755 = vpop.f32.mrb[0].mxu0
      %5756 = vmatprep.mubr.bf16.mxu0 0
      %5757 = vmatmul.mubr.bf16.gmra.mrb[0].mxu0 %v5081
      %v5758 = vpop.f32.mrb[0].mxu0
      %v5759 = vadd.f32 %v4898, %v5758
      %v5760 = vpop.f32.mrb[0].mxu0
      %v5761 = vpop.f32.mrb[0].mxu0
      %v5762 = vadd.f32 %v4898, %v5761
      %v5763 = vpop.f32.mrb[0].mxu0
      %5764 = vmatprep.mubr.bf16.mxu0 0
      %5765 = vmatmul.mubr.bf16.gmra.mrb[0].mxu0 %v5084
      %v5766 = vpop.f32.mrb[0].mxu0
      %v5767 = vadd.f32 %v4898, %v5766
      %v5768 = vpop.f32.mrb[0].mxu0
      %v5769 = vpop.f32.mrb[0].mxu0
      %v5770 = vadd.f32 %v4898, %v5769
      %v5771 = vpop.f32.mrb[0].mxu0
      %5772 = vmatprep.mubr.bf16.mxu0 0
      %5773 = vmatmul.mubr.bf16.gmra.mrb[0].mxu0 %v5087
      %v5774 = vpop.f32.mrb[0].mxu0
      %v5775 = vadd.f32 %v4898, %v5774
      %v5776 = vpop.f32.mrb[0].mxu0
      %v5777 = vpop.f32.mrb[0].mxu0
      %v5778 = vadd.f32 %v4898, %v5777
      %v5779 = vpop.f32.mrb[0].mxu0
      %5780 = vmatprep.mubr.bf16.mxu0 0
      %5781 = vmatmul.mubr.bf16.gmra.mrb[0].mxu0 %v5090
      %v5782 = vpop.f32.mrb[0].mxu0
      %v5783 = vadd.f32 %v4898, %v5782
      %v5784 = vpop.f32.mrb[0].mxu0
      %v5785 = vpop.f32.mrb[0].mxu0
      %v5786 = vadd.f32 %v4898, %v5785
      %v5787 = vpop.f32.mrb[0].mxu0
      %5788 = vmatprep.mubr.bf16.mxu0 0
      %5789 = vmatmul.mubr.bf16.gmra.mrb[0].mxu0 %v5093
      %v5790 = vpop.f32.mrb[0].mxu0
      %v5791 = vadd.f32 %v4898, %v5790
      %v5792 = vpop.f32.mrb[0].mxu0
      %v5793 = vpop.f32.mrb[0].mxu0
      %v5794 = vadd.f32 %v4898, %v5793
      %v5795 = vpop.f32.mrb[0].mxu0
      %5796 = vmatprep.mubr.bf16.mxu0 0
      %5797 = vmatmul.mubr.bf16.gmra.mrb[0].mxu0 %v5096
      %v5798 = vpop.f32.mrb[0].mxu0
      %v5799 = vadd.f32 %v4898, %v5798
      %v5800 = vpop.f32.mrb[0].mxu0
      %v5801 = vpop.f32.mrb[0].mxu0
      %v5802 = vadd.f32 %v4898, %v5801
      %v5803 = vpop.f32.mrb[0].mxu0
      %5804 = vmatprep.mubr.bf16.mxu0 0
      %5805 = vmatmul.mubr.bf16.gmra.mrb[0].mxu0 %v5099
      %v5806 = vpop.f32.mrb[0].mxu0
      %v5807 = vadd.f32 %v4898, %v5806
      %v5808 = vpop.f32.mrb[0].mxu0
      %v5809 = vpop.f32.mrb[0].mxu0
      %v5810 = vadd.f32 %v4898, %v5809
      %v5811 = vpop.f32.mrb[0].mxu0
      %5812 = vmatprep.mubr.bf16.mxu0 0
      %5813 = vmatmul.mubr.bf16.gmra.mrb[0].mxu0 %v5102
      %v5814 = vpop.f32.mrb[0].mxu0
      %v5815 = vadd.f32 %v4898, %v5814
      %v5816 = vpop.f32.mrb[0].mxu0
      %v5817 = vpop.f32.mrb[0].mxu0
      %v5818 = vadd.f32 %v4898, %v5817
      %v5819 = vpop.f32.mrb[0].mxu0
      %5820 = vmatprep.mubr.bf16.mxu0 0
      %5821 = vmatmul.mubr.bf16.gmra.mrb[0].mxu0 %v5105
      %v5822 = vpop.f32.mrb[0].mxu0
      %v5823 = vadd.f32 %v4898, %v5822
      %v5824 = vpop.f32.mrb[0].mxu0
      %v5825 = vpop.f32.mrb[0].mxu0
      %v5826 = vadd.f32 %v4898, %v5825
      %v5827 = vpop.f32.mrb[0].mxu0
      %5828 = vmatprep.mubr.bf16.mxu0 0
      %5829 = vmatmul.mubr.bf16.gmra.mrb[0].mxu0 %v5108
      %v5830 = vpop.f32.mrb[0].mxu0
      %v5831 = vadd.f32 %v4898, %v5830
      %v5832 = vpop.f32.mrb[0].mxu0
      %v5833 = vpop.f32.mrb[0].mxu0
      %v5834 = vadd.f32 %v4898, %v5833
      %v5835 = vpop.f32.mrb[0].mxu0
      %5836 = vmatprep.mubr.bf16.mxu0 0
      %5837 = vmatmul.mubr.bf16.gmra.mrb[0].mxu0 %v5111
      %v5838 = vpop.f32.mrb[0].mxu0
      %v5839 = vadd.f32 %v4898, %v5838
      %v5840 = vpop.f32.mrb[0].mxu0
      %v5841 = vpop.f32.mrb[0].mxu0
      %v5842 = vadd.f32 %v4898, %v5841
      %v5843 = vpop.f32.mrb[0].mxu0
      %5844 = vmatprep.mubr.bf16.mxu0 0
      %5845 = vmatmul.mubr.bf16.gmra.mrb[0].mxu0 %v5114
      %v5846 = vpop.f32.mrb[0].mxu0
      %v5847 = vadd.f32 %v4898, %v5846
      %v5848 = vpop.f32.mrb[0].mxu0
      %v5849 = vpop.f32.mrb[0].mxu0
      %v5850 = vadd.f32 %v4898, %v5849
      %v5851 = vpop.f32.mrb[0].mxu0
      %5852 = vmatprep.mubr.bf16.mxu0 0
      %5853 = vmatmul.mubr.bf16.gmra.mrb[0].mxu0 %v5117
      %v5854 = vpop.f32.mrb[0].mxu0
      %v5855 = vadd.f32 %v4898, %v5854
      %v5856 = vpop.f32.mrb[0].mxu0
      %v5857 = vpop.f32.mrb[0].mxu0
      %v5858 = vadd.f32 %v4898, %v5857
      %v5859 = vpop.f32.mrb[0].mxu0
      %5860 = vmatprep.mubr.bf16.mxu0 0
      %5861 = vmatmul.mubr.bf16.gmra.mrb[0].mxu0 %v5120
      %v5862 = vpop.f32.mrb[0].mxu0
      %v5863 = vadd.f32 %v4898, %v5862
      %v5864 = vpop.f32.mrb[0].mxu0
      %v5865 = vpop.f32.mrb[0].mxu0
      %v5866 = vadd.f32 %v4898, %v5865
      %v5867 = vpop.f32.mrb[0].mxu0
      %5868 = vmatprep.mubr.bf16.mxu0 0
      %5869 = vmatmul.mubr.bf16.gmra.mrb[0].mxu0 %v5123
      %v5870 = vpop.f32.mrb[0].mxu0
      %v5871 = vadd.f32 %v4898, %v5870
      %v5872 = vpop.f32.mrb[0].mxu0
      %v5873 = vpop.f32.mrb[0].mxu0
      %v5874 = vadd.f32 %v4898, %v5873
      %v5875 = vpop.f32.mrb[0].mxu0
      %5876 = vmatprep.mubr.bf16.mxu0 0
      %5877 = vmatmul.mubr.bf16.gmra.mrb[0].mxu0 %v5126
      %v5878 = vpop.f32.mrb[0].mxu0
      %v5879 = vadd.f32 %v4898, %v5878
      %v5880 = vpop.f32.mrb[0].mxu0
      %v5881 = vpop.f32.mrb[0].mxu0
      %v5882 = vadd.f32 %v4898, %v5881
      %v5883 = vpop.f32.mrb[0].mxu0
      %5884 = vmatprep.mubr.bf16.mxu0 0
      %5885 = vmatmul.mubr.bf16.gmra.mrb[0].mxu0 %v5129
      %v5886 = vpop.f32.mrb[0].mxu0
      %v5887 = vadd.f32 %v4898, %v5886
      %v5888 = vpop.f32.mrb[0].mxu0
      %v5889 = vpop.f32.mrb[0].mxu0
      %v5890 = vadd.f32 %v4898, %v5889
      %v5891 = vpop.f32.mrb[0].mxu0
      %5892 = vmatprep.mubr.bf16.mxu0 0
      %5893 = vmatmul.mubr.bf16.gmra.mrb[0].mxu0 %v5132
      %v5894 = vpop.f32.mrb[0].mxu0
      %v5895 = vadd.f32 %v4898, %v5894
      %v5896 = vpop.f32.mrb[0].mxu0
      %v5897 = vpop.f32.mrb[0].mxu0
      %v5898 = vadd.f32 %v4898, %v5897
      %v5899 = vpop.f32.mrb[0].mxu0
      %5900 = vmatprep.mubr.bf16.mxu0 0
      %5901 = vmatmul.mubr.bf16.gmra.mrb[0].mxu0 %v5135
      %v5902 = vpop.f32.mrb[0].mxu0
      %v5903 = vadd.f32 %v4898, %v5902
      %v5904 = vpop.f32.mrb[0].mxu0
      %v5905 = vpop.f32.mrb[0].mxu0
      %v5906 = vadd.f32 %v4898, %v5905
      %v5907 = vpop.f32.mrb[0].mxu0
      %5908 = vmatprep.mubr.bf16.mxu0 0
      %5909 = vmatmul.mubr.bf16.gmra.mrb[0].mxu0 %v5138
      %v5910 = vpop.f32.mrb[0].mxu0
      %v5911 = vadd.f32 %v4898, %v5910
      %v5912 = vpop.f32.mrb[0].mxu0
      %v5913 = vpop.f32.mrb[0].mxu0
      %v5914 = vadd.f32 %v4898, %v5913
      %v5915 = vpop.f32.mrb[0].mxu0
      %5916 = vmatprep.mubr.bf16.mxu0 0
      %5917 = vmatmul.mubr.bf16.gmra.mrb[0].mxu0 %v5141
      %v5918 = vpop.f32.mrb[0].mxu0
      %v5919 = vadd.f32 %v4898, %v5918
      %v5920 = vpop.f32.mrb[0].mxu0
      %v5921 = vpop.f32.mrb[0].mxu0
      %v5922 = vadd.f32 %v4898, %v5921
      %v5923 = vpop.f32.mrb[0].mxu0
      %5924 = vmatprep.mubr.bf16.mxu0 0
      %5925 = vmatmul.mubr.bf16.gmra.mrb[0].mxu0 %v5144
      %v5926 = vpop.f32.mrb[0].mxu0
      %v5927 = vadd.f32 %v4898, %v5926
      %v5928 = vpop.f32.mrb[0].mxu0
      %v5929 = vpop.f32.mrb[0].mxu0
      %v5930 = vadd.f32 %v4898, %v5929
      %v5931 = vpop.f32.mrb[0].mxu0
      %5932 = vmatprep.mubr.bf16.mxu0 0
      %5933 = vmatmul.mubr.bf16.gmra.mrb[0].mxu0 %v5147
      %v5934 = vpop.f32.mrb[0].mxu0
      %v5935 = vadd.f32 %v4898, %v5934
      %v5936 = vpop.f32.mrb[0].mxu0
      %v5937 = vpop.f32.mrb[0].mxu0
      %v5938 = vadd.f32 %v4898, %v5937
      %v5939 = vpop.f32.mrb[0].mxu0
      %5940 = vmatprep.mubr.bf16.mxu0 0
      %5941 = vmatmul.mubr.bf16.gmra.mrb[0].mxu0 %v5150
      %v5942 = vpop.f32.mrb[0].mxu0
      %v5943 = vadd.f32 %v4898, %v5942
      %v5944 = vpop.f32.mrb[0].mxu0
      %v5945 = vpop.f32.mrb[0].mxu0
      %v5946 = vadd.f32 %v4898, %v5945
      %v5947 = vpop.f32.mrb[0].mxu0
      %5948 = vmatprep.mubr.bf16.mxu0 0
      %5949 = vmatmul.mubr.bf16.gmra.mrb[0].mxu0 %v5153
      %v5950 = vpop.f32.mrb[0].mxu0
      %v5951 = vadd.f32 %v4898, %v5950
      %v5952 = vpop.f32.mrb[0].mxu0
      %v5953 = vpop.f32.mrb[0].mxu0
      %v5954 = vadd.f32 %v4898, %v5953
      %v5955 = vpop.f32.mrb[0].mxu0
      %5956 = vmatprep.mubr.bf16.mxu0 0
      %5957 = vmatmul.mubr.bf16.gmra.mrb[0].mxu0 %v5156
      %v5958 = vpop.f32.mrb[0].mxu0
      %v5959 = vadd.f32 %v4898, %v5958
      %v5960 = vpop.f32.mrb[0].mxu0
      %v5961 = vpop.f32.mrb[0].mxu0
      %v5962 = vadd.f32 %v4898, %v5961
      %v5963 = vpop.f32.mrb[0].mxu0
      %5964 = vmatprep.mubr.bf16.mxu0 0
      %5965 = vmatmul.mubr.bf16.gmra.mrb[0].mxu0 %v5159
      %v5966 = vpop.f32.mrb[0].mxu0
      %v5967 = vadd.f32 %v4898, %v5966
      %v5968 = vpop.f32.mrb[0].mxu0
      %v5969 = vpop.f32.mrb[0].mxu0
      %v5970 = vadd.f32 %v4898, %v5969
      %v5971 = vpop.f32.mrb[0].mxu0
      %5972 = vmatprep.mubr.bf16.mxu0 0
      %5973 = vmatmul.mubr.bf16.gmra.mrb[0].mxu0 %v5162
      %v5974 = vpop.f32.mrb[0].mxu0
      %v5975 = vadd.f32 %v4898, %v5974
      %v5976 = vpop.f32.mrb[0].mxu0
      %v5977 = vpop.f32.mrb[0].mxu0
      %v5978 = vadd.f32 %v4898, %v5977
      %v5979 = vpop.f32.mrb[0].mxu0
      %5980 = vmatprep.mubr.bf16.mxu0 0
      %5981 = vmatmul.mubr.bf16.gmra.mrb[0].mxu0 %v5165
      %v5982 = vpop.f32.mrb[0].mxu0
      %v5983 = vadd.f32 %v4898, %v5982
      %v5984 = vpop.f32.mrb[0].mxu0
      %v5985 = vpop.f32.mrb[0].mxu0
      %v5986 = vadd.f32 %v4898, %v5985
      %v5987 = vpop.f32.mrb[0].mxu0
      %5988 = vmatprep.mubr.bf16.mxu0 0
      %5989 = vmatmul.mubr.bf16.gmra.mrb[0].mxu0 %v5168
      %v5990 = vpop.f32.mrb[0].mxu0
      %v5991 = vadd.f32 %v4898, %v5990
      %v5992 = vpop.f32.mrb[0].mxu0
      %v5993 = vpop.f32.mrb[0].mxu0
      %v5994 = vadd.f32 %v4898, %v5993
      %v5995 = vpop.f32.mrb[0].mxu0
      %5996 = vmatprep.mubr.bf16.mxu0 0
      %5997 = vmatmul.mubr.bf16.gmra.mrb[0].mxu0 %v5171
      %v5998 = vpop.f32.mrb[0].mxu0
      %v5999 = vadd.f32 %v4898, %v5998
      %v6000 = vpop.f32.mrb[0].mxu0
      %v6001 = vpop.f32.mrb[0].mxu0
      %v6002 = vadd.f32 %v4898, %v6001
      %v6003 = vpop.f32.mrb[0].mxu0
      %6004 = vmatprep.mubr.bf16.mxu0 0
      %6005 = vmatmul.mubr.bf16.gmra.mrb[0].mxu0 %v5174
      %v6006 = vpop.f32.mrb[0].mxu0
      %v6007 = vadd.f32 %v4898, %v6006
      %v6008 = vpop.f32.mrb[0].mxu0
      %v6009 = vpop.f32.mrb[0].mxu0
      %v6010 = vadd.f32 %v4898, %v6009
      %v6011 = vpop.f32.mrb[0].mxu0
      %6012 = vmatprep.mubr.bf16.mxu0 0
      %6013 = vmatmul.mubr.bf16.gmra.mrb[0].mxu0 %v5177
      %v6014 = vpop.f32.mrb[0].mxu0
      %v6015 = vadd.f32 %v4898, %v6014
      %v6016 = vpop.f32.mrb[0].mxu0
      %v6017 = vpop.f32.mrb[0].mxu0
      %v6018 = vadd.f32 %v4898, %v6017
      %v6019 = vpop.f32.mrb[0].mxu0
      %6020 = vmatprep.mubr.bf16.mxu0 0
      %6021 = vmatmul.mubr.bf16.gmra.mrb[0].mxu0 %v5180
      %v6022 = vpop.f32.mrb[0].mxu0
      %v6023 = vadd.f32 %v4898, %v6022
      %v6024 = vpop.f32.mrb[0].mxu0
      %v6025 = vpop.f32.mrb[0].mxu0
      %v6026 = vadd.f32 %v4898, %v6025
      %v6027 = vpop.f32.mrb[0].mxu0
      %6028 = vmatprep.mubr.bf16.mxu0 0
      %6029 = vmatmul.mubr.bf16.gmra.mrb[0].mxu0 %v5183
      %v6030 = vpop.f32.mrb[0].mxu0
      %v6031 = vadd.f32 %v4898, %v6030
      %v6032 = vpop.f32.mrb[0].mxu0
      %v6033 = vpop.f32.mrb[0].mxu0
      %v6034 = vadd.f32 %v4898, %v6033
      %v6035 = vpop.f32.mrb[0].mxu0
      %6036 = vmatprep.mubr.bf16.mxu0 0
      %6037 = vmatmul.mubr.bf16.gmra.mrb[0].mxu0 %v5186
      %v6038 = vpop.f32.mrb[0].mxu0
      %v6039 = vadd.f32 %v4898, %v6038
      %v6040 = vpop.f32.mrb[0].mxu0
      %v6041 = vpop.f32.mrb[0].mxu0
      %v6042 = vadd.f32 %v4898, %v6041
      %v6043 = vpop.f32.mrb[0].mxu0
      %6044 = vmatprep.mubr.bf16.mxu0 0
      %6045 = vmatmul.mubr.bf16.gmra.mrb[0].mxu0 %v5189
      %v6046 = vpop.f32.mrb[0].mxu0
      %v6047 = vadd.f32 %v4898, %v6046
      %v6048 = vpop.f32.mrb[0].mxu0
      %v6049 = vpop.f32.mrb[0].mxu0
      %v6050 = vadd.f32 %v4898, %v6049
      %v6051 = vpop.f32.mrb[0].mxu0
      %6052 = vmatprep.mubr.bf16.mxu0 0
      %6053 = vmatmul.mubr.bf16.gmra.mrb[0].mxu0 %v5192
      %v6054 = vpop.f32.mrb[0].mxu0
      %v6055 = vadd.f32 %v4898, %v6054
      %v6056 = vpop.f32.mrb[0].mxu0
      %v6057 = vpop.f32.mrb[0].mxu0
      %v6058 = vadd.f32 %v4898, %v6057
      %v6059 = vpop.f32.mrb[0].mxu0
      %6060 = vmatprep.mubr.bf16.mxu0 0
      %6061 = vmatmul.mubr.bf16.gmra.mrb[0].mxu0 %v5195
      %v6062 = vpop.f32.mrb[0].mxu0
      %v6063 = vadd.f32 %v4898, %v6062
      %v6064 = vpop.f32.mrb[0].mxu0
      %v6065 = vpop.f32.mrb[0].mxu0
      %v6066 = vadd.f32 %v4898, %v6065
      %v6067 = vpop.f32.mrb[0].mxu0
      %6068 = vmatprep.mubr.bf16.mxu0 0
      %6069 = vmatmul.mubr.bf16.gmra.mrb[0].mxu0 %v5198
      %v6070 = vpop.f32.mrb[0].mxu0
      %v6071 = vadd.f32 %v4898, %v6070
      %v6072 = vpop.f32.mrb[0].mxu0
      %v6073 = vpop.f32.mrb[0].mxu0
      %v6074 = vadd.f32 %v4898, %v6073
      %v6075 = vpop.f32.mrb[0].mxu0
      %6076 = vmatprep.mubr.bf16.mxu0 0
      %6077 = vmatmul.mubr.bf16.gmra.mrb[0].mxu0 %v5201
      %v6078 = vpop.f32.mrb[0].mxu0
      %v6079 = vadd.f32 %v4898, %v6078
      %v6080 = vpop.f32.mrb[0].mxu0
      %v6081 = vpop.f32.mrb[0].mxu0
      %v6082 = vadd.f32 %v4898, %v6081
      %v6083 = vpop.f32.mrb[0].mxu0
      %6084 = vmatprep.mubr.bf16.mxu0 0
      %6085 = vmatmul.mubr.bf16.gmra.mrb[0].mxu0 %v5204
      %v6086 = vpop.f32.mrb[0].mxu0
      %v6087 = vadd.f32 %v4898, %v6086
      %v6088 = vpop.f32.mrb[0].mxu0
      %v6089 = vpop.f32.mrb[0].mxu0
      %v6090 = vadd.f32 %v4898, %v6089
      %v6091 = vpop.f32.mrb[0].mxu0
      %6092 = vmatprep.mubr.bf16.mxu0 0
      %6093 = vmatmul.mubr.bf16.gmra.mrb[0].mxu0 %v5207
      %v6094 = vpop.f32.mrb[0].mxu0
      %v6095 = vadd.f32 %v4898, %v6094
      %v6096 = vpop.f32.mrb[0].mxu0
      %v6097 = vpop.f32.mrb[0].mxu0
      %v6098 = vadd.f32 %v4898, %v6097
      %v6099 = vpop.f32.mrb[0].mxu0
      %6100 = vmatprep.mubr.bf16.mxu0 0
      %6101 = vmatmul.mubr.bf16.gmra.mrb[0].mxu0 %v5210
      %v6102 = vpop.f32.mrb[0].mxu0
      %v6103 = vadd.f32 %v4898, %v6102
      %v6104 = vpop.f32.mrb[0].mxu0
      %v6105 = vpop.f32.mrb[0].mxu0
      %v6106 = vadd.f32 %v4898, %v6105
      %v6107 = vpop.f32.mrb[0].mxu0
      %6108 = vmatprep.mubr.bf16.mxu0 0
      %6109 = vmatmul.mubr.bf16.gmra.mrb[0].mxu0 %v5213
      %v6110 = vpop.f32.mrb[0].mxu0
      %v6111 = vadd.f32 %v4898, %v6110
      %v6112 = vpop.f32.mrb[0].mxu0
      %v6113 = vpop.f32.mrb[0].mxu0
      %v6114 = vadd.f32 %v4898, %v6113
      %v6115 = vpop.f32.mrb[0].mxu0
      %6116 = vmatprep.mubr.bf16.mxu0 0
      %6117 = vmatmul.mubr.bf16.gmra.mrb[0].mxu0 %v5216
      %v6118 = vpop.f32.mrb[0].mxu0
      %v6119 = vadd.f32 %v4898, %v6118
      %v6120 = vpop.f32.mrb[0].mxu0
      %v6121 = vpop.f32.mrb[0].mxu0
      %v6122 = vadd.f32 %v4898, %v6121
      %v6123 = vpop.f32.mrb[0].mxu0
      %6124 = vmatprep.mubr.bf16.mxu0 0
      %6125 = vmatmul.mubr.bf16.gmra.mrb[0].mxu0 %v5219
      %v6126 = vpop.f32.mrb[0].mxu0
      %v6127 = vadd.f32 %v4898, %v6126
      %v6128 = vpop.f32.mrb[0].mxu0
      %v6129 = vpop.f32.mrb[0].mxu0
      %v6130 = vadd.f32 %v4898, %v6129
      %v6131 = vpop.f32.mrb[0].mxu0
      %6132 = vmatprep.mubr.bf16.mxu0 0
      %6133 = vmatmul.mubr.bf16.gmra.mrb[0].mxu0 %v5222
      %v6134 = vpop.f32.mrb[0].mxu0
      %v6135 = vadd.f32 %v4898, %v6134
      %v6136 = vpop.f32.mrb[0].mxu0
      %v6137 = vpop.f32.mrb[0].mxu0
      %v6138 = vadd.f32 %v4898, %v6137
      %v6139 = vpop.f32.mrb[0].mxu0
      %6140 = vmatprep.mubr.bf16.mxu0 0
      %6141 = vmatmul.mubr.bf16.gmra.mrb[0].mxu0 %v5225
      %v6142 = vpop.f32.mrb[0].mxu0
      %v6143 = vadd.f32 %v4898, %v6142
      %v6144 = vpop.f32.mrb[0].mxu0
      %v6145 = vpop.f32.mrb[0].mxu0
      %v6146 = vadd.f32 %v4898, %v6145
      %v6147 = vpop.f32.mrb[0].mxu0
      %6148 = vmatprep.mubr.bf16.mxu0 0
      %6149 = vmatmul.mubr.bf16.gmra.mrb[0].mxu0 %v5228
      %v6150 = vpop.f32.mrb[0].mxu0
      %v6151 = vadd.f32 %v4898, %v6150
      %v6152 = vpop.f32.mrb[0].mxu0
      %v6153 = vpop.f32.mrb[0].mxu0
      %v6154 = vadd.f32 %v4898, %v6153
      %v6155 = vpop.f32.mrb[0].mxu0
      %6156 = vmatprep.mubr.bf16.mxu0 0
      %6157 = vmatmul.mubr.bf16.gmra.mrb[0].mxu0 %v5231
      %v6158 = vpop.f32.mrb[0].mxu0
      %v6159 = vadd.f32 %v4898, %v6158
      %v6160 = vpop.f32.mrb[0].mxu0
      %v6161 = vpop.f32.mrb[0].mxu0
      %v6162 = vadd.f32 %v4898, %v6161
      %v6163 = vpop.f32.mrb[0].mxu0
      %6164 = vmatprep.mubr.bf16.mxu0 0
      %6165 = vmatmul.mubr.bf16.gmra.mrb[0].mxu0 %v5234
      %v6166 = vpop.f32.mrb[0].mxu0
      %v6167 = vadd.f32 %v4898, %v6166
      %v6168 = vpop.f32.mrb[0].mxu0
      %v6169 = vpop.f32.mrb[0].mxu0
      %v6170 = vadd.f32 %v4898, %v6169
      %v6171 = vpop.f32.mrb[0].mxu0
      %6172 = vmatprep.mubr.bf16.mxu0 0
      %6173 = vmatmul.mubr.bf16.gmra.mrb[0].mxu0 %v5237
      %v6174 = vpop.f32.mrb[0].mxu0
      %v6175 = vadd.f32 %v4898, %v6174
      %v6176 = vpop.f32.mrb[0].mxu0
      %v6177 = vpop.f32.mrb[0].mxu0
      %v6178 = vadd.f32 %v4898, %v6177
      %v6179 = vpop.f32.mrb[0].mxu0
      %6180 = vmatprep.mubr.bf16.mxu0 0
      %6181 = vmatmul.mubr.bf16.gmra.mrb[0].mxu0 %v5240
      %v6182 = vpop.f32.mrb[0].mxu0
      %v6183 = vadd.f32 %v4898, %v6182
      %v6184 = vpop.f32.mrb[0].mxu0
      %v6185 = vpop.f32.mrb[0].mxu0
      %v6186 = vadd.f32 %v4898, %v6185
      %v6187 = vpop.f32.mrb[0].mxu0
      %6188 = vmatprep.mubr.bf16.mxu0 0
      %6189 = vmatmul.mubr.bf16.gmra.mrb[0].mxu0 %v5243
      %v6190 = vpop.f32.mrb[0].mxu0
      %v6191 = vadd.f32 %v4898, %v6190
      %v6192 = vpop.f32.mrb[0].mxu0
      %v6193 = vpop.f32.mrb[0].mxu0
      %v6194 = vadd.f32 %v4898, %v6193
      %v6195 = vpop.f32.mrb[0].mxu0
      %6196 = vmatprep.mubr.bf16.mxu0 0
      %6197 = vmatmul.mubr.bf16.gmra.mrb[0].mxu0 %v5246
      %v6198 = vpop.f32.mrb[0].mxu0
      %v6199 = vadd.f32 %v4898, %v6198
      %v6200 = vpop.f32.mrb[0].mxu0
      %v6201 = vpop.f32.mrb[0].mxu0
      %v6202 = vadd.f32 %v4898, %v6201
      %v6203 = vpop.f32.mrb[0].mxu0
      %6204 = vmatprep.mubr.bf16.mxu0 0
      %6205 = vmatmul.mubr.bf16.gmra.mrb[0].mxu0 %v5249
      %v6206 = vpop.f32.mrb[0].mxu0
      %v6207 = vadd.f32 %v4898, %v6206
      %v6208 = vpop.f32.mrb[0].mxu0
      %v6209 = vpop.f32.mrb[0].mxu0
      %v6210 = vadd.f32 %v4898, %v6209
      %v6211 = vpop.f32.mrb[0].mxu0
      %6212 = vmatprep.mubr.bf16.mxu0 0
      %6213 = vmatmul.mubr.bf16.gmra.mrb[0].mxu0 %v5252
      %v6214 = vpop.f32.mrb[0].mxu0
      %v6215 = vadd.f32 %v4898, %v6214
      %v6216 = vpop.f32.mrb[0].mxu0
      %v6217 = vpop.f32.mrb[0].mxu0
      %v6218 = vadd.f32 %v4898, %v6217
      %v6219 = vpop.f32.mrb[0].mxu0
      %6220 = vmatprep.mubr.bf16.mxu0 0
      %6221 = vmatmul.mubr.bf16.gmra.mrb[0].mxu0 %v5255
      %v6222 = vpop.f32.mrb[0].mxu0
      %v6223 = vadd.f32 %v4898, %v6222
      %v6224 = vpop.f32.mrb[0].mxu0
      %v6225 = vpop.f32.mrb[0].mxu0
      %v6226 = vadd.f32 %v4898, %v6225
      %v6227 = vpop.f32.mrb[0].mxu0
      %6228 = vmatprep.mubr.bf16.mxu0 0
      %6229 = vmatmul.mubr.bf16.gmra.mrb[0].mxu0 %v5258
      %v6230 = vpop.f32.mrb[0].mxu0
      %v6231 = vadd.f32 %v4898, %v6230
      %v6232 = vpop.f32.mrb[0].mxu0
      %v6233 = vpop.f32.mrb[0].mxu0
      %v6234 = vadd.f32 %v4898, %v6233
      %v6235 = vpop.f32.mrb[0].mxu0
      %6236 = vmatprep.mubr.bf16.mxu0 0
      %6237 = vmatmul.mubr.bf16.gmra.mrb[0].mxu0 %v5261
      %v6238 = vpop.f32.mrb[0].mxu0
      %v6239 = vadd.f32 %v4898, %v6238
      %v6240 = vpop.f32.mrb[0].mxu0
      %v6241 = vpop.f32.mrb[0].mxu0
      %v6242 = vadd.f32 %v4898, %v6241
      %v6243 = vpop.f32.mrb[0].mxu0
      %6244 = vmatprep.mubr.bf16.mxu0 0
      %6245 = vmatmul.mubr.bf16.gmra.mrb[0].mxu0 %v5264
      %v6246 = vpop.f32.mrb[0].mxu0
      %v6247 = vadd.f32 %v4898, %v6246
      %v6248 = vpop.f32.mrb[0].mxu0
      %v6249 = vpop.f32.mrb[0].mxu0
      %v6250 = vadd.f32 %v4898, %v6249
      %v6251 = vpop.f32.mrb[0].mxu0
      %6252 = vmatprep.mubr.bf16.mxu0 0
      %6253 = vmatmul.mubr.bf16.gmra.mrb[0].mxu0 %v5267
      %v6254 = vpop.f32.mrb[0].mxu0
      %v6255 = vadd.f32 %v4898, %v6254
      %v6256 = vpop.f32.mrb[0].mxu0
      %v6257 = vpop.f32.mrb[0].mxu0
      %v6258 = vadd.f32 %v4898, %v6257
      %v6259 = vpop.f32.mrb[0].mxu0
      %6260 = vmatprep.mubr.bf16.mxu0 0
      %6261 = vmatmul.mubr.bf16.gmra.mrb[0].mxu0 %v5270
      %v6262 = vpop.f32.mrb[0].mxu0
      %v6263 = vadd.f32 %v4898, %v6262
      %v6264 = vpop.f32.mrb[0].mxu0
      %v6265 = vpop.f32.mrb[0].mxu0
      %v6266 = vadd.f32 %v4898, %v6265
      %v6267 = vpop.f32.mrb[0].mxu0
      %6268 = vmatprep.mubr.bf16.mxu0 0
      %6269 = vmatmul.mubr.bf16.gmra.mrb[0].mxu0 %v5273
      %v6270 = vpop.f32.mrb[0].mxu0
      %v6271 = vadd.f32 %v4898, %v6270
      %v6272 = vpop.f32.mrb[0].mxu0
      %v6273 = vpop.f32.mrb[0].mxu0
      %v6274 = vadd.f32 %v4898, %v6273
      %v6275 = vpop.f32.mrb[0].mxu0
      %6276 = vmatprep.mubr.bf16.mxu0 0
      %6277 = vmatmul.mubr.bf16.gmra.mrb[0].mxu0 %v5276
      %v6278 = vpop.f32.mrb[0].mxu0
      %v6279 = vadd.f32 %v4898, %v6278
      %v6280 = vpop.f32.mrb[0].mxu0
      %v6281 = vpop.f32.mrb[0].mxu0
      %v6282 = vadd.f32 %v4898, %v6281
      %v6283 = vpop.f32.mrb[0].mxu0
      %6284 = vmatprep.mubr.bf16.mxu0 0
      %6285 = vmatmul.mubr.bf16.gmra.mrb[0].mxu0 %v5279
      %v6286 = vpop.f32.mrb[0].mxu0
      %v6287 = vadd.f32 %v4898, %v6286
      %v6288 = vpop.f32.mrb[0].mxu0
      %v6289 = vpop.f32.mrb[0].mxu0
      %v6290 = vadd.f32 %v4898, %v6289
      %v6291 = vpop.f32.mrb[0].mxu0
      %6292 = vmatprep.mubr.bf16.mxu0 0
      %6293 = vmatmul.mubr.bf16.gmra.mrb[0].mxu0 %v5282
      %v6294 = vpop.f32.mrb[0].mxu0
      %v6295 = vadd.f32 %v4898, %v6294
      %v6296 = vpop.f32.mrb[0].mxu0
      %v6297 = vpop.f32.mrb[0].mxu0
      %v6298 = vadd.f32 %v4898, %v6297
      %v6299 = vpop.f32.mrb[0].mxu0
      %6300 = vmatprep.mubr.bf16.mxu0 0
      %6301 = vmatmul.mubr.bf16.gmra.mrb[0].mxu0 %v5285
      %v6302 = vpop.f32.mrb[0].mxu0
      %v6303 = vadd.f32 %v4898, %v6302
      %v6304 = vpop.f32.mrb[0].mxu0
      %v6305 = vpop.f32.mrb[0].mxu0
      %v6306 = vadd.f32 %v4898, %v6305
      %v6307 = vpop.f32.mrb[0].mxu0
      %6308 = vmatprep.mubr.bf16.mxu0 0
      %6309 = vmatmul.mubr.bf16.gmra.mrb[0].mxu0 %v5288
      %v6310 = vpop.f32.mrb[0].mxu0
      %v6311 = vadd.f32 %v4898, %v6310
      %v6312 = vpop.f32.mrb[0].mxu0
      %v6313 = vpop.f32.mrb[0].mxu0
      %v6314 = vadd.f32 %v4898, %v6313
      %v6315 = vpop.f32.mrb[0].mxu0
      %6316 = vmatprep.mubr.bf16.mxu0 0
      %6317 = vmatmul.mubr.bf16.gmra.mrb[0].mxu0 %v5291
      %v6318 = vpop.f32.mrb[0].mxu0
      %v6319 = vadd.f32 %v4898, %v6318
      %v6320 = vpop.f32.mrb[0].mxu0
      %v6321 = vpop.f32.mrb[0].mxu0
      %v6322 = vadd.f32 %v4898, %v6321
      %v6323 = vpop.f32.mrb[0].mxu0
      %6324 = vmatprep.mubr.bf16.mxu0 0
      %6325 = vmatmul.mubr.bf16.gmra.mrb[0].mxu0 %v5294
      %v6326 = vpop.f32.mrb[0].mxu0
      %v6327 = vadd.f32 %v4898, %v6326
      %v6328 = vpop.f32.mrb[0].mxu0
      %v6329 = vpop.f32.mrb[0].mxu0
      %v6330 = vadd.f32 %v4898, %v6329
      %v6331 = vpop.f32.mrb[0].mxu0
      %6332 = vmatprep.mubr.bf16.mxu0 0
      %6333 = vmatmul.mubr.bf16.gmra.mrb[0].mxu0 %v5297
      %v6334 = vpop.f32.mrb[0].mxu0
      %v6335 = vadd.f32 %v4898, %v6334
      %v6336 = vpop.f32.mrb[0].mxu0
      %v6337 = vpop.f32.mrb[0].mxu0
      %v6338 = vadd.f32 %v4898, %v6337
      %v6339 = vpop.f32.mrb[0].mxu0
      %6340 = vmatprep.mubr.bf16.mxu0 0
      %6341 = vmatmul.mubr.bf16.gmra.mrb[0].mxu0 %v5300
      %v6342 = vpop.f32.mrb[0].mxu0
      %v6343 = vadd.f32 %v4898, %v6342
      %v6344 = vpop.f32.mrb[0].mxu0
      %v6345 = vpop.f32.mrb[0].mxu0
      %v6346 = vadd.f32 %v4898, %v6345
      %v6347 = vpop.f32.mrb[0].mxu0
      %6348 = vmatprep.mubr.bf16.mxu0 0
      %6349 = vmatmul.mubr.bf16.gmra.mrb[0].mxu0 %v5303
      %v6350 = vpop.f32.mrb[0].mxu0
      %v6351 = vadd.f32 %v4898, %v6350
      %v6352 = vpop.f32.mrb[0].mxu0
      %v6353 = vpop.f32.mrb[0].mxu0
      %v6354 = vadd.f32 %v4898, %v6353
      %v6355 = vpop.f32.mrb[0].mxu0
      %6356 = vmatprep.mubr.bf16.mxu0 0
      %6357 = vmatmul.mubr.bf16.gmra.mrb[0].mxu0 %v5306
      %v6358 = vpop.f32.mrb[0].mxu0
      %v6359 = vadd.f32 %v4898, %v6358
      %v6360 = vpop.f32.mrb[0].mxu0
      %v6361 = vpop.f32.mrb[0].mxu0
      %v6362 = vadd.f32 %v4898, %v6361
      %v6363 = vpop.f32.mrb[0].mxu0
      %6364 = vdwg.mxu0
      %v6365 = vmax.f32 %v5343, %v5855
      %v6366 = vmax.f32 %v5346, %v5858
      %v6367 = vmax.f32 %v5351, %v5863
      %v6368 = vmax.f32 %v5354, %v5866
      %v6369 = vmax.f32 %v5359, %v5871
      %v6370 = vmax.f32 %v5362, %v5874
      %v6371 = vmax.f32 %v5367, %v5879
      %v6372 = vmax.f32 %v5370, %v5882
      %v6373 = vmax.f32 %v5375, %v5887
      %v6374 = vmax.f32 %v5378, %v5890
      %v6375 = vmax.f32 %v5383, %v5895
      %v6376 = vmax.f32 %v5386, %v5898
      %v6377 = vmax.f32 %v5391, %v5903
      %v6378 = vmax.f32 %v5394, %v5906
      %v6379 = vmax.f32 %v5399, %v5911
      %v6380 = vmax.f32 %v5402, %v5914
      %v6381 = vmax.f32 %v5407, %v5919
      %v6382 = vmax.f32 %v5410, %v5922
      %v6383 = vmax.f32 %v5415, %v5927
      %v6384 = vmax.f32 %v5418, %v5930
      %v6385 = vmax.f32 %v5423, %v5935
      %v6386 = vmax.f32 %v5426, %v5938
      %v6387 = vmax.f32 %v5431, %v5943
      %v6388 = vmax.f32 %v5434, %v5946
      %v6389 = vmax.f32 %v5439, %v5951
      %v6390 = vmax.f32 %v5442, %v5954
      %v6391 = vmax.f32 %v5447, %v5959
      %v6392 = vmax.f32 %v5450, %v5962
      %v6393 = vmax.f32 %v5455, %v5967
      %v6394 = vmax.f32 %v5458, %v5970
      %v6395 = vmax.f32 %v5463, %v5975
      %v6396 = vmax.f32 %v5466, %v5978
      %v6397 = vmax.f32 %v5471, %v5983
      %v6398 = vmax.f32 %v5474, %v5986
      %v6399 = vmax.f32 %v5479, %v5991
      %v6400 = vmax.f32 %v5482, %v5994
      %v6401 = vmax.f32 %v5487, %v5999
      %v6402 = vmax.f32 %v5490, %v6002
      %v6403 = vmax.f32 %v5495, %v6007
      %v6404 = vmax.f32 %v5498, %v6010
      %v6405 = vmax.f32 %v5503, %v6015
      %v6406 = vmax.f32 %v5506, %v6018
      %v6407 = vmax.f32 %v5511, %v6023
      %v6408 = vmax.f32 %v5514, %v6026
      %v6409 = vmax.f32 %v5519, %v6031
      %v6410 = vmax.f32 %v5522, %v6034
      %v6411 = vmax.f32 %v5527, %v6039
      %v6412 = vmax.f32 %v5530, %v6042
      %v6413 = vmax.f32 %v5535, %v6047
      %v6414 = vmax.f32 %v5538, %v6050
      %v6415 = vmax.f32 %v5543, %v6055
      %v6416 = vmax.f32 %v5546, %v6058
      %v6417 = vmax.f32 %v5551, %v6063
      %v6418 = vmax.f32 %v5554, %v6066
      %v6419 = vmax.f32 %v5559, %v6071
      %v6420 = vmax.f32 %v5562, %v6074
      %v6421 = vmax.f32 %v5567, %v6079
      %v6422 = vmax.f32 %v5570, %v6082
      %v6423 = vmax.f32 %v5575, %v6087
      %v6424 = vmax.f32 %v5578, %v6090
      %v6425 = vmax.f32 %v5583, %v6095
      %v6426 = vmax.f32 %v5586, %v6098
      %v6427 = vmax.f32 %v5591, %v6103
      %v6428 = vmax.f32 %v5594, %v6106
      %v6429 = vmax.f32 %v5599, %v6111
      %v6430 = vmax.f32 %v5602, %v6114
      %v6431 = vmax.f32 %v5607, %v6119
      %v6432 = vmax.f32 %v5610, %v6122
      %v6433 = vmax.f32 %v5615, %v6127
      %v6434 = vmax.f32 %v5618, %v6130
      %v6435 = vmax.f32 %v5623, %v6135
      %v6436 = vmax.f32 %v5626, %v6138
      %v6437 = vmax.f32 %v5631, %v6143
      %v6438 = vmax.f32 %v5634, %v6146
      %v6439 = vmax.f32 %v5639, %v6151
      %v6440 = vmax.f32 %v5642, %v6154
      %v6441 = vmax.f32 %v5647, %v6159
      %v6442 = vmax.f32 %v5650, %v6162
      %v6443 = vmax.f32 %v5655, %v6167
      %v6444 = vmax.f32 %v5658, %v6170
      %v6445 = vmax.f32 %v5663, %v6175
      %v6446 = vmax.f32 %v5666, %v6178
      %v6447 = vmax.f32 %v5671, %v6183
      %v6448 = vmax.f32 %v5674, %v6186
      %v6449 = vmax.f32 %v5679, %v6191
      %v6450 = vmax.f32 %v5682, %v6194
      %v6451 = vmax.f32 %v5687, %v6199
      %v6452 = vmax.f32 %v5690, %v6202
      %v6453 = vmax.f32 %v5695, %v6207
      %v6454 = vmax.f32 %v5698, %v6210
      %v6455 = vmax.f32 %v5703, %v6215
      %v6456 = vmax.f32 %v5706, %v6218
      %v6457 = vmax.f32 %v5711, %v6223
      %v6458 = vmax.f32 %v5714, %v6226
      %v6459 = vmax.f32 %v5719, %v6231
      %v6460 = vmax.f32 %v5722, %v6234
      %v6461 = vmax.f32 %v5727, %v6239
      %v6462 = vmax.f32 %v5730, %v6242
      %v6463 = vmax.f32 %v5735, %v6247
      %v6464 = vmax.f32 %v5738, %v6250
      %v6465 = vmax.f32 %v5743, %v6255
      %v6466 = vmax.f32 %v5746, %v6258
      %v6467 = vmax.f32 %v5751, %v6263
      %v6468 = vmax.f32 %v5754, %v6266
      %v6469 = vmax.f32 %v5759, %v6271
      %v6470 = vmax.f32 %v5762, %v6274
      %v6471 = vmax.f32 %v5767, %v6279
      %v6472 = vmax.f32 %v5770, %v6282
      %v6473 = vmax.f32 %v5775, %v6287
      %v6474 = vmax.f32 %v5778, %v6290
      %v6475 = vmax.f32 %v5783, %v6295
      %v6476 = vmax.f32 %v5786, %v6298
      %v6477 = vmax.f32 %v5791, %v6303
      %v6478 = vmax.f32 %v5794, %v6306
      %v6479 = vmax.f32 %v5799, %v6311
      %v6480 = vmax.f32 %v5802, %v6314
      %v6481 = vmax.f32 %v5807, %v6319
      %v6482 = vmax.f32 %v5810, %v6322
      %v6483 = vmax.f32 %v5815, %v6327
      %v6484 = vmax.f32 %v5818, %v6330
      %v6485 = vmax.f32 %v5823, %v6335
      %v6486 = vmax.f32 %v5826, %v6338
      %v6487 = vmax.f32 %v5831, %v6343
      %v6488 = vmax.f32 %v5834, %v6346
      %v6489 = vmax.f32 %v5839, %v6351
      %v6490 = vmax.f32 %v5842, %v6354
      %v6491 = vmax.f32 %v5847, %v6359
      %v6492 = vmax.f32 %v5850, %v6362
      %v6493 = vmax.f32 %v6365, %v6429
      %v6494 = vmax.f32 %v6366, %v6430
      %v6495 = vmax.f32 %v6367, %v6431
      %v6496 = vmax.f32 %v6368, %v6432
      %v6497 = vmax.f32 %v6369, %v6433
      %v6498 = vmax.f32 %v6370, %v6434
      %v6499 = vmax.f32 %v6371, %v6435
      %v6500 = vmax.f32 %v6372, %v6436
      %v6501 = vmax.f32 %v6373, %v6437
      %v6502 = vmax.f32 %v6374, %v6438
      %v6503 = vmax.f32 %v6375, %v6439
      %v6504 = vmax.f32 %v6376, %v6440
      %v6505 = vmax.f32 %v6377, %v6441
      %v6506 = vmax.f32 %v6378, %v6442
      %v6507 = vmax.f32 %v6379, %v6443
      %v6508 = vmax.f32 %v6380, %v6444
      %v6509 = vmax.f32 %v6381, %v6445
      %v6510 = vmax.f32 %v6382, %v6446
      %v6511 = vmax.f32 %v6383, %v6447
      %v6512 = vmax.f32 %v6384, %v6448
      %v6513 = vmax.f32 %v6385, %v6449
      %v6514 = vmax.f32 %v6386, %v6450
      %v6515 = vmax.f32 %v6387, %v6451
      %v6516 = vmax.f32 %v6388, %v6452
      %v6517 = vmax.f32 %v6389, %v6453
      %v6518 = vmax.f32 %v6390, %v6454
      %v6519 = vmax.f32 %v6391, %v6455
      %v6520 = vmax.f32 %v6392, %v6456
      %v6521 = vmax.f32 %v6393, %v6457
      %v6522 = vmax.f32 %v6394, %v6458
      %v6523 = vmax.f32 %v6395, %v6459
      %v6524 = vmax.f32 %v6396, %v6460
      %v6525 = vmax.f32 %v6397, %v6461
      %v6526 = vmax.f32 %v6398, %v6462
      %v6527 = vmax.f32 %v6399, %v6463
      %v6528 = vmax.f32 %v6400, %v6464
      %v6529 = vmax.f32 %v6401, %v6465
      %v6530 = vmax.f32 %v6402, %v6466
      %v6531 = vmax.f32 %v6403, %v6467
      %v6532 = vmax.f32 %v6404, %v6468
      %v6533 = vmax.f32 %v6405, %v6469
      %v6534 = vmax.f32 %v6406, %v6470
      %v6535 = vmax.f32 %v6407, %v6471
      %v6536 = vmax.f32 %v6408, %v6472
      %v6537 = vmax.f32 %v6409, %v6473
      %v6538 = vmax.f32 %v6410, %v6474
      %v6539 = vmax.f32 %v6411, %v6475
      %v6540 = vmax.f32 %v6412, %v6476
      %v6541 = vmax.f32 %v6413, %v6477
      %v6542 = vmax.f32 %v6414, %v6478
      %v6543 = vmax.f32 %v6415, %v6479
      %v6544 = vmax.f32 %v6416, %v6480
      %v6545 = vmax.f32 %v6417, %v6481
      %v6546 = vmax.f32 %v6418, %v6482
      %v6547 = vmax.f32 %v6419, %v6483
      %v6548 = vmax.f32 %v6420, %v6484
      %v6549 = vmax.f32 %v6421, %v6485
      %v6550 = vmax.f32 %v6422, %v6486
      %v6551 = vmax.f32 %v6423, %v6487
      %v6552 = vmax.f32 %v6424, %v6488
      %v6553 = vmax.f32 %v6425, %v6489
      %v6554 = vmax.f32 %v6426, %v6490
      %v6555 = vmax.f32 %v6427, %v6491
      %v6556 = vmax.f32 %v6428, %v6492
      %v6557 = vmax.f32 %v6493, %v6525
      %v6558 = vmax.f32 %v6494, %v6526
      %v6559 = vmax.f32 %v6495, %v6527
      %v6560 = vmax.f32 %v6496, %v6528
      %v6561 = vmax.f32 %v6497, %v6529
      %v6562 = vmax.f32 %v6498, %v6530
      %v6563 = vmax.f32 %v6499, %v6531
      %v6564 = vmax.f32 %v6500, %v6532
      %v6565 = vmax.f32 %v6501, %v6533
      %v6566 = vmax.f32 %v6502, %v6534
      %v6567 = vmax.f32 %v6503, %v6535
      %v6568 = vmax.f32 %v6504, %v6536
      %v6569 = vmax.f32 %v6505, %v6537
      %v6570 = vmax.f32 %v6506, %v6538
      %v6571 = vmax.f32 %v6507, %v6539
      %v6572 = vmax.f32 %v6508, %v6540
      %v6573 = vmax.f32 %v6509, %v6541
      %v6574 = vmax.f32 %v6510, %v6542
      %v6575 = vmax.f32 %v6511, %v6543
      %v6576 = vmax.f32 %v6512, %v6544
      %v6577 = vmax.f32 %v6513, %v6545
      %v6578 = vmax.f32 %v6514, %v6546
      %v6579 = vmax.f32 %v6515, %v6547
      %v6580 = vmax.f32 %v6516, %v6548
      %v6581 = vmax.f32 %v6517, %v6549
      %v6582 = vmax.f32 %v6518, %v6550
      %v6583 = vmax.f32 %v6519, %v6551
      %v6584 = vmax.f32 %v6520, %v6552
      %v6585 = vmax.f32 %v6521, %v6553
      %v6586 = vmax.f32 %v6522, %v6554
      %v6587 = vmax.f32 %v6523, %v6555
      %v6588 = vmax.f32 %v6524, %v6556
      %v6589 = vmax.f32 %v6557, %v6573
      %v6590 = vmax.f32 %v6558, %v6574
      %v6591 = vmax.f32 %v6559, %v6575
      %v6592 = vmax.f32 %v6560, %v6576
      %v6593 = vmax.f32 %v6561, %v6577
      %v6594 = vmax.f32 %v6562, %v6578
      %v6595 = vmax.f32 %v6563, %v6579
      %v6596 = vmax.f32 %v6564, %v6580
      %v6597 = vmax.f32 %v6565, %v6581
      %v6598 = vmax.f32 %v6566, %v6582
      %v6599 = vmax.f32 %v6567, %v6583
      %v6600 = vmax.f32 %v6568, %v6584
      %v6601 = vmax.f32 %v6569, %v6585
      %v6602 = vmax.f32 %v6570, %v6586
      %v6603 = vmax.f32 %v6571, %v6587
      %v6604 = vmax.f32 %v6572, %v6588
      %v6605 = vmax.f32 %v6589, %v6597
      %v6606 = vmax.f32 %v6590, %v6598
      %v6607 = vmax.f32 %v6591, %v6599
      %v6608 = vmax.f32 %v6592, %v6600
      %v6609 = vmax.f32 %v6593, %v6601
      %v6610 = vmax.f32 %v6594, %v6602
      %v6611 = vmax.f32 %v6595, %v6603
      %v6612 = vmax.f32 %v6596, %v6604
      %v6613 = vmax.f32 %v6605, %v6609
      %v6614 = vmax.f32 %v6606, %v6610
      %v6615 = vmax.f32 %v6607, %v6611
      %v6616 = vmax.f32 %v6608, %v6612
      %6617 = vst [vmem:[%s280] sm:$0xff] %v6613
      %6618 = vst [vmem:[%s280 + $0x8] sm:$0xff] %v6614
      %6619 = vst [vmem:[%s280 + $0x10] sm:$0xff] %v6615
      %6620 = vst [vmem:[%s280 + $0x18] sm:$0xff] %v6616
      %s6621 = smul.u32 4, %s18
      %p6622 = scmp.lt.s32.totalorder %s6621, 7
      %s6623 = scalar_select %p6622, %s6621, 7
      %s6624 = smul.addr %s6623, 8
      %s6625 = scalar_lea.vmem %s7, %s6624
      // Predicated region
      $region49: #{pointnet2_forward.3} parent=47 // pred_check
        %p6626 = pneg %p188
      $region50: #{pointnet2_forward.3} parent=47 // pred_check_branch
        %6628 = sbr.rel (%p6626) target = $region52
      $region51: #{pointnet2_forward.3} parent=47 // pred_region
        %s6629 = smul.u32 4, %s18
      $region52: #{pointnet2_forward.3} parent=47 // pred_fallthru
        _
    $region48: #{pointnet2_forward.3} parent=5 // pred_fallthru
      _
    %p6630 = scmp.le.s32.totalorder 2, %s13
    // Predicated region
    $region53: #{pointnet2_forward.3} parent=5 // pred_check
      %p6631 = pneg %p6630
    $region54: #{pointnet2_forward.3} parent=5 // pred_check_branch
      %6633 = sbr.rel (%p6631) target = $region56
    $region55: #{pointnet2_forward.3} parent=5 // pred_region
      %s6634 = ssub.s32 %s13, 2
      // Predicated region
      $region57: #{pointnet2_forward.3} parent=55 // pred_check
        %p6635 = pneg %p194
      $region58: #{pointnet2_forward.3} parent=55 // pred_check_branch
        %6637 = sbr.rel (%p6635) target = $region60
      $region59: #{pointnet2_forward.3} parent=55 // pred_region
        %s6638 = smul.u32 4, %s19
        %p6639 = scmp.lt.s32.totalorder %s6638, 7
        %s6640 = scalar_select %p6639, %s6638, 7
        %s6641 = smul.addr %s6640, 8
        %s6642 = scalar_lea.vmem %s7, %s6641
      $region60: #{pointnet2_forward.3} parent=55 // pred_fallthru
        _
    $region56: #{pointnet2_forward.3} parent=5 // pred_fallthru
      _
  $region6: #{pointnet2_forward.3} parent=0 // loop_footer
    %s17 = sadd.s32 1, %s13
  $region7: #{pointnet2_forward.3} parent=0 // loop_footer_branch
    %12 = sbr.rel target = $region3
  $region8: #{pointnet2_forward.3} parent=0 // loop_exit
    _

// kernel: pointnet2_forward.5
$region0: #{pointnet2_forward.5}
  #allocation0 [shape = 'u32[]', space=smem, size = 0x4, offset = 0x4, fixed_abs, tag = 'smem constant byte address 0x4 - core index']
  #allocation1 [shape = 'u32[144,128]{1,0:T(1,128)}', space=vmem, size = 0x12000, scoped, tag = 'internal scratch']
  %s0 = inlined_call_operand.vmem [shape: bf16[64,259], index: 0, kind: input, shape index: {}]
  %s1 = inlined_call_operand.vmem [shape: bf16[259,256], index: 1, kind: input, shape index: {}]
  %s2 = inlined_call_operand.vmem [shape: f32[1,256], index: 2, kind: input, shape index: {}]
  %s3 = inlined_call_operand.vmem [shape: bf16[256,512], index: 3, kind: input, shape index: {}]
  %s4 = inlined_call_operand.vmem [shape: f32[1,512], index: 4, kind: input, shape index: {}]
  %s5 = inlined_call_operand.vmem [shape: bf16[512,1024], index: 5, kind: input, shape index: {}]
  %s6 = inlined_call_operand.vmem [shape: f32[1,1024], index: 6, kind: input, shape index: {}]
  %s7 = inlined_call_operand.vmem [shape: bf16[1024,512], index: 7, kind: input, shape index: {}]
  %s8 = inlined_call_operand.vmem [shape: f32[1,512], index: 8, kind: input, shape index: {}]
  %s9 = inlined_call_operand.vmem [shape: bf16[512,256], index: 9, kind: input, shape index: {}]
  %s10 = inlined_call_operand.vmem [shape: f32[1,256], index: 10, kind: input, shape index: {}]
  %s11 = inlined_call_operand.vmem [shape: bf16[256,10], index: 11, kind: input, shape index: {}]
  %s12 = inlined_call_operand.vmem [shape: f32[1,10], index: 12, kind: input, shape index: {}]
  %s13 = inlined_call_operand.vmem [shape: f32[8,10], index: 13, kind: output, shape index: {}]
  %s14 = sld [smem:[#allocation0]]
  $region62: #{pointnet2_forward.5} parent=0
    _
  %s16 = ssub.s32 1, %s14
  %s17 = scalar_select 0, %s16, %s14
  // Predicated region
  $region2: #{pointnet2_forward.5} parent=0 // pred_check
    _
  $region3: #{pointnet2_forward.5} parent=0 // pred_check_branch
    %19 = sbr.rel (0) target = $region5
  $region4: #{pointnet2_forward.5} parent=0 // pred_region
    _
  $region5: #{pointnet2_forward.5} parent=0 // pred_fallthru
    _
  // Predicated region
  $region6: #{pointnet2_forward.5} parent=0 // pred_check
    _
  $region7: #{pointnet2_forward.5} parent=0 // pred_check_branch
    %21 = sbr.rel (0) target = $region9
  $region8: #{pointnet2_forward.5} parent=0 // pred_region
    _
  $region9: #{pointnet2_forward.5} parent=0 // pred_fallthru
    _
  // Predicated region
  $region10: #{pointnet2_forward.5} parent=0 // pred_check
    _
  $region11: #{pointnet2_forward.5} parent=0 // pred_check_branch
    %23 = sbr.rel (0) target = $region13
  $region12: #{pointnet2_forward.5} parent=0 // pred_region
    _
  $region13: #{pointnet2_forward.5} parent=0 // pred_fallthru
    _
  // Predicated region
  $region14: #{pointnet2_forward.5} parent=0 // pred_check
    _
  $region15: #{pointnet2_forward.5} parent=0 // pred_check_branch
    %25 = sbr.rel (0) target = $region17
  $region16: #{pointnet2_forward.5} parent=0 // pred_region
    _
  $region17: #{pointnet2_forward.5} parent=0 // pred_fallthru
    _
  // Predicated region
  $region18: #{pointnet2_forward.5} parent=0 // pred_check
    _
  $region19: #{pointnet2_forward.5} parent=0 // pred_check_branch
    %27 = sbr.rel (0) target = $region21
  $region20: #{pointnet2_forward.5} parent=0 // pred_region
    _
  $region21: #{pointnet2_forward.5} parent=0 // pred_fallthru
    _
  // Predicated region
  $region22: #{pointnet2_forward.5} parent=0 // pred_check
    _
  $region23: #{pointnet2_forward.5} parent=0 // pred_check_branch
    %29 = sbr.rel (0) target = $region25
  $region24: #{pointnet2_forward.5} parent=0 // pred_region
    _
  $region25: #{pointnet2_forward.5} parent=0 // pred_fallthru
    _
  // Predicated region
  $region26: #{pointnet2_forward.5} parent=0 // pred_check
    _
  $region27: #{pointnet2_forward.5} parent=0 // pred_check_branch
    %31 = sbr.rel (0) target = $region29
  $region28: #{pointnet2_forward.5} parent=0 // pred_region
    _
  $region29: #{pointnet2_forward.5} parent=0 // pred_fallthru
    _
  // Predicated region
  $region30: #{pointnet2_forward.5} parent=0 // pred_check
    _
  $region31: #{pointnet2_forward.5} parent=0 // pred_check_branch
    %33 = sbr.rel (0) target = $region33
  $region32: #{pointnet2_forward.5} parent=0 // pred_region
    _
  $region33: #{pointnet2_forward.5} parent=0 // pred_fallthru
    _
  // Predicated region
  $region34: #{pointnet2_forward.5} parent=0 // pred_check
    _
  $region35: #{pointnet2_forward.5} parent=0 // pred_check_branch
    %35 = sbr.rel (0) target = $region37
  $region36: #{pointnet2_forward.5} parent=0 // pred_region
    _
  $region37: #{pointnet2_forward.5} parent=0 // pred_fallthru
    _
  // Predicated region
  $region38: #{pointnet2_forward.5} parent=0 // pred_check
    _
  $region39: #{pointnet2_forward.5} parent=0 // pred_check_branch
    %37 = sbr.rel (0) target = $region41
  $region40: #{pointnet2_forward.5} parent=0 // pred_region
    _
  $region41: #{pointnet2_forward.5} parent=0 // pred_fallthru
    _
  // Predicated region
  $region42: #{pointnet2_forward.5} parent=0 // pred_check
    _
  $region43: #{pointnet2_forward.5} parent=0 // pred_check_branch
    %39 = sbr.rel (0) target = $region45
  $region44: #{pointnet2_forward.5} parent=0 // pred_region
    _
  $region45: #{pointnet2_forward.5} parent=0 // pred_fallthru
    _
  // Predicated region
  $region46: #{pointnet2_forward.5} parent=0 // pred_check
    _
  $region47: #{pointnet2_forward.5} parent=0 // pred_check_branch
    %41 = sbr.rel (0) target = $region49
  $region48: #{pointnet2_forward.5} parent=0 // pred_region
    _
  $region49: #{pointnet2_forward.5} parent=0 // pred_fallthru
    _
  // Predicated region
  $region50: #{pointnet2_forward.5} parent=0 // pred_check
    _
  $region51: #{pointnet2_forward.5} parent=0 // pred_check_branch
    %43 = sbr.rel (0) target = $region53
  $region52: #{pointnet2_forward.5} parent=0 // pred_region
    _
  $region53: #{pointnet2_forward.5} parent=0 // pred_fallthru
    _
  %v45 = vld [vmem:[%s0] sm:$0xff]
  %v46 = vld [vmem:[%s0 + $0x8] sm:$0xf]
  %v47 = vld [vmem:[%s0 + $0xc] sm:$0xff]
  %v48 = vld [vmem:[%s0 + $0x14] sm:$0xf]
  %v49 = vld [vmem:[%s0 + $0x18] sm:$0xff]
  %v50 = vld [vmem:[%s0 + $0x20] sm:$0xf]
  %v51 = vld [vmem:[%s0 + $0x24] sm:$0xff]
  %v52 = vld [vmem:[%s0 + $0x2c] sm:$0xf]
  %v53 = vld [vmem:[%s0 + $0x30] sm:$0xff]
  %v54 = vld [vmem:[%s0 + $0x38] sm:$0xf]
  %v55 = vld [vmem:[%s0 + $0x3c] sm:$0xff]
  %v56 = vld [vmem:[%s0 + $0x44] sm:$0xf]
  %v57 = vld [vmem:[%s0 + $0x48] sm:$0xff]
  %v58 = vld [vmem:[%s0 + $0x50] sm:$0xf]
  %v59 = vld [vmem:[%s0 + $0x54] sm:$0xff]
  %v60 = vld [vmem:[%s0 + $0x5c] sm:$0xf]
  %v61 = vld [vmem:[%s1] sm:$0xff]
  %v62 = vld [vmem:[%s1 + $0x8] sm:$0xff]
  %v63 = vld [vmem:[%s1 + $0x10] sm:$0xff]
  %v64 = vld [vmem:[%s1 + $0x18] sm:$0xff]
  %v65 = vld [vmem:[%s1 + $0x20] sm:$0xff]
  %v66 = vld [vmem:[%s1 + $0x28] sm:$0xff]
  %v67 = vld [vmem:[%s1 + $0x30] sm:$0xff]
  %v68 = vld [vmem:[%s1 + $0x38] sm:$0xff]
  %v69 = vld [vmem:[%s1 + $0x40] sm:$0xff]
  %v70 = vld [vmem:[%s1 + $0x48] sm:$0xff]
  %v71 = vld [vmem:[%s1 + $0x50] sm:$0xff]
  %v72 = vld [vmem:[%s1 + $0x58] sm:$0xff]
  %v73 = vld [vmem:[%s1 + $0x60] sm:$0xff]
  %v74 = vld [vmem:[%s1 + $0x68] sm:$0xff]
  %v75 = vld [vmem:[%s1 + $0x70] sm:$0xff]
  %v76 = vld [vmem:[%s1 + $0x78] sm:$0xff]
  %v77 = vld [vmem:[%s1 + $0x80] sm:$0xff]
  %v78 = vld [vmem:[%s1 + $0x88] sm:$0xff]
  %v79 = vld [vmem:[%s1 + $0x90] sm:$0xff]
  %v80 = vld [vmem:[%s1 + $0x98] sm:$0xff]
  %v81 = vld [vmem:[%s1 + $0xa0] sm:$0xff]
  %v82 = vld [vmem:[%s1 + $0xa8] sm:$0xff]
  %v83 = vld [vmem:[%s1 + $0xb0] sm:$0xff]
  %v84 = vld [vmem:[%s1 + $0xb8] sm:$0xff]
  %v85 = vld [vmem:[%s1 + $0xc0] sm:$0xff]
  %v86 = vld [vmem:[%s1 + $0xc8] sm:$0xff]
  %v87 = vld [vmem:[%s1 + $0xd0] sm:$0xff]
  %v88 = vld [vmem:[%s1 + $0xd8] sm:$0xff]
  %v89 = vld [vmem:[%s1 + $0xe0] sm:$0xff]
  %v90 = vld [vmem:[%s1 + $0xe8] sm:$0xff]
  %v91 = vld [vmem:[%s1 + $0xf0] sm:$0xff]
  %v92 = vld [vmem:[%s1 + $0xf8] sm:$0xff]
  %v93 = vld [vmem:[%s1 + $0x100] sm:$0x33]
  %v94 = vld [vmem:[%s2] sm:$0x3]
  %v95 = vld [vmem:[%s3] sm:$0xff]
  %v96 = vld [vmem:[%s3 + $0x8] sm:$0xff]
  %v97 = vld [vmem:[%s3 + $0x10] sm:$0xff]
  %v98 = vld [vmem:[%s3 + $0x18] sm:$0xff]
  %v99 = vld [vmem:[%s3 + $0x20] sm:$0xff]
  %v100 = vld [vmem:[%s3 + $0x28] sm:$0xff]
  %v101 = vld [vmem:[%s3 + $0x30] sm:$0xff]
  %v102 = vld [vmem:[%s3 + $0x38] sm:$0xff]
  %v103 = vld [vmem:[%s3 + $0x40] sm:$0xff]
  %v104 = vld [vmem:[%s3 + $0x48] sm:$0xff]
  %v105 = vld [vmem:[%s3 + $0x50] sm:$0xff]
  %v106 = vld [vmem:[%s3 + $0x58] sm:$0xff]
  %v107 = vld [vmem:[%s3 + $0x60] sm:$0xff]
  %v108 = vld [vmem:[%s3 + $0x68] sm:$0xff]
  %v109 = vld [vmem:[%s3 + $0x70] sm:$0xff]
  %v110 = vld [vmem:[%s3 + $0x78] sm:$0xff]
  %v111 = vld [vmem:[%s3 + $0x80] sm:$0xff]
  %v112 = vld [vmem:[%s3 + $0x88] sm:$0xff]
  %v113 = vld [vmem:[%s3 + $0x90] sm:$0xff]
  %v114 = vld [vmem:[%s3 + $0x98] sm:$0xff]
  %v115 = vld [vmem:[%s3 + $0xa0] sm:$0xff]
  %v116 = vld [vmem:[%s3 + $0xa8] sm:$0xff]
  %v117 = vld [vmem:[%s3 + $0xb0] sm:$0xff]
  %v118 = vld [vmem:[%s3 + $0xb8] sm:$0xff]
  %v119 = vld [vmem:[%s3 + $0xc0] sm:$0xff]
  %v120 = vld [vmem:[%s3 + $0xc8] sm:$0xff]
  %v121 = vld [vmem:[%s3 + $0xd0] sm:$0xff]
  %v122 = vld [vmem:[%s3 + $0xd8] sm:$0xff]
  %v123 = vld [vmem:[%s3 + $0xe0] sm:$0xff]
  %v124 = vld [vmem:[%s3 + $0xe8] sm:$0xff]
  %v125 = vld [vmem:[%s3 + $0xf0] sm:$0xff]
  %v126 = vld [vmem:[%s3 + $0xf8] sm:$0xff]
  %v127 = vld [vmem:[%s3 + $0x100] sm:$0xff]
  %v128 = vld [vmem:[%s3 + $0x108] sm:$0xff]
  %v129 = vld [vmem:[%s3 + $0x110] sm:$0xff]
  %v130 = vld [vmem:[%s3 + $0x118] sm:$0xff]
  %v131 = vld [vmem:[%s3 + $0x120] sm:$0xff]
  %v132 = vld [vmem:[%s3 + $0x128] sm:$0xff]
  %v133 = vld [vmem:[%s3 + $0x130] sm:$0xff]
  %v134 = vld [vmem:[%s3 + $0x138] sm:$0xff]
  %v135 = vld [vmem:[%s3 + $0x140] sm:$0xff]
  %v136 = vld [vmem:[%s3 + $0x148] sm:$0xff]
  %v137 = vld [vmem:[%s3 + $0x150] sm:$0xff]
  %v138 = vld [vmem:[%s3 + $0x158] sm:$0xff]
  %v139 = vld [vmem:[%s3 + $0x160] sm:$0xff]
  %v140 = vld [vmem:[%s3 + $0x168] sm:$0xff]
  %v141 = vld [vmem:[%s3 + $0x170] sm:$0xff]
  %v142 = vld [vmem:[%s3 + $0x178] sm:$0xff]
  %v143 = vld [vmem:[%s3 + $0x180] sm:$0xff]
  %v144 = vld [vmem:[%s3 + $0x188] sm:$0xff]
  %v145 = vld [vmem:[%s3 + $0x190] sm:$0xff]
  %v146 = vld [vmem:[%s3 + $0x198] sm:$0xff]
  %v147 = vld [vmem:[%s3 + $0x1a0] sm:$0xff]
  %v148 = vld [vmem:[%s3 + $0x1a8] sm:$0xff]
  %v149 = vld [vmem:[%s3 + $0x1b0] sm:$0xff]
  %v150 = vld [vmem:[%s3 + $0x1b8] sm:$0xff]
  %v151 = vld [vmem:[%s3 + $0x1c0] sm:$0xff]
  %v152 = vld [vmem:[%s3 + $0x1c8] sm:$0xff]
  %v153 = vld [vmem:[%s3 + $0x1d0] sm:$0xff]
  %v154 = vld [vmem:[%s3 + $0x1d8] sm:$0xff]
  %v155 = vld [vmem:[%s3 + $0x1e0] sm:$0xff]
  %v156 = vld [vmem:[%s3 + $0x1e8] sm:$0xff]
  %v157 = vld [vmem:[%s3 + $0x1f0] sm:$0xff]
  %v158 = vld [vmem:[%s3 + $0x1f8] sm:$0xff]
  %v159 = vld [vmem:[%s4] sm:$0xf]
  %v160 = vld [vmem:[%s5] sm:$0xff]
  %v161 = vld [vmem:[%s5 + $0x8] sm:$0xff]
  %v162 = vld [vmem:[%s5 + $0x10] sm:$0xff]
  %v163 = vld [vmem:[%s5 + $0x18] sm:$0xff]
  %v164 = vld [vmem:[%s5 + $0x20] sm:$0xff]
  %v165 = vld [vmem:[%s5 + $0x28] sm:$0xff]
  %v166 = vld [vmem:[%s5 + $0x30] sm:$0xff]
  %v167 = vld [vmem:[%s5 + $0x38] sm:$0xff]
  %v168 = vld [vmem:[%s5 + $0x40] sm:$0xff]
  %v169 = vld [vmem:[%s5 + $0x48] sm:$0xff]
  %v170 = vld [vmem:[%s5 + $0x50] sm:$0xff]
  %v171 = vld [vmem:[%s5 + $0x58] sm:$0xff]
  %v172 = vld [vmem:[%s5 + $0x60] sm:$0xff]
  %v173 = vld [vmem:[%s5 + $0x68] sm:$0xff]
  %v174 = vld [vmem:[%s5 + $0x70] sm:$0xff]
  %v175 = vld [vmem:[%s5 + $0x78] sm:$0xff]
  %v176 = vld [vmem:[%s5 + $0x80] sm:$0xff]
  %v177 = vld [vmem:[%s5 + $0x88] sm:$0xff]
  %v178 = vld [vmem:[%s5 + $0x90] sm:$0xff]
  %v179 = vld [vmem:[%s5 + $0x98] sm:$0xff]
  %v180 = vld [vmem:[%s5 + $0xa0] sm:$0xff]
  %v181 = vld [vmem:[%s5 + $0xa8] sm:$0xff]
  %v182 = vld [vmem:[%s5 + $0xb0] sm:$0xff]
  %v183 = vld [vmem:[%s5 + $0xb8] sm:$0xff]
  %v184 = vld [vmem:[%s5 + $0xc0] sm:$0xff]
  %v185 = vld [vmem:[%s5 + $0xc8] sm:$0xff]
  %v186 = vld [vmem:[%s5 + $0xd0] sm:$0xff]
  %v187 = vld [vmem:[%s5 + $0xd8] sm:$0xff]
  %v188 = vld [vmem:[%s5 + $0xe0] sm:$0xff]
  %v189 = vld [vmem:[%s5 + $0xe8] sm:$0xff]
  %v190 = vld [vmem:[%s5 + $0xf0] sm:$0xff]
  %v191 = vld [vmem:[%s5 + $0xf8] sm:$0xff]
  %v192 = vld [vmem:[%s5 + $0x100] sm:$0xff]
  %v193 = vld [vmem:[%s5 + $0x108] sm:$0xff]
  %v194 = vld [vmem:[%s5 + $0x110] sm:$0xff]
  %v195 = vld [vmem:[%s5 + $0x118] sm:$0xff]
  %v196 = vld [vmem:[%s5 + $0x120] sm:$0xff]
  %v197 = vld [vmem:[%s5 + $0x128] sm:$0xff]
  %v198 = vld [vmem:[%s5 + $0x130] sm:$0xff]
  %v199 = vld [vmem:[%s5 + $0x138] sm:$0xff]
  %v200 = vld [vmem:[%s5 + $0x140] sm:$0xff]
  %v201 = vld [vmem:[%s5 + $0x148] sm:$0xff]
  %v202 = vld [vmem:[%s5 + $0x150] sm:$0xff]
  %v203 = vld [vmem:[%s5 + $0x158] sm:$0xff]
  %v204 = vld [vmem:[%s5 + $0x160] sm:$0xff]
  %v205 = vld [vmem:[%s5 + $0x168] sm:$0xff]
  %v206 = vld [vmem:[%s5 + $0x170] sm:$0xff]
  %v207 = vld [vmem:[%s5 + $0x178] sm:$0xff]
  %v208 = vld [vmem:[%s5 + $0x180] sm:$0xff]
  %v209 = vld [vmem:[%s5 + $0x188] sm:$0xff]
  %v210 = vld [vmem:[%s5 + $0x190] sm:$0xff]
  %v211 = vld [vmem:[%s5 + $0x198] sm:$0xff]
  %v212 = vld [vmem:[%s5 + $0x1a0] sm:$0xff]
  %v213 = vld [vmem:[%s5 + $0x1a8] sm:$0xff]
  %v214 = vld [vmem:[%s5 + $0x1b0] sm:$0xff]
  %v215 = vld [vmem:[%s5 + $0x1b8] sm:$0xff]
  %v216 = vld [vmem:[%s5 + $0x1c0] sm:$0xff]
  %v217 = vld [vmem:[%s5 + $0x1c8] sm:$0xff]
  %v218 = vld [vmem:[%s5 + $0x1d0] sm:$0xff]
  %v219 = vld [vmem:[%s5 + $0x1d8] sm:$0xff]
  %v220 = vld [vmem:[%s5 + $0x1e0] sm:$0xff]
  %v221 = vld [vmem:[%s5 + $0x1e8] sm:$0xff]
  %v222 = vld [vmem:[%s5 + $0x1f0] sm:$0xff]
  %v223 = vld [vmem:[%s5 + $0x1f8] sm:$0xff]
  %v224 = vld [vmem:[%s5 + $0x200] sm:$0xff]
  %v225 = vld [vmem:[%s5 + $0x208] sm:$0xff]
  %v226 = vld [vmem:[%s5 + $0x210] sm:$0xff]
  %v227 = vld [vmem:[%s5 + $0x218] sm:$0xff]
  %v228 = vld [vmem:[%s5 + $0x220] sm:$0xff]
  %v229 = vld [vmem:[%s5 + $0x228] sm:$0xff]
  %v230 = vld [vmem:[%s5 + $0x230] sm:$0xff]
  %v231 = vld [vmem:[%s5 + $0x238] sm:$0xff]
  %v232 = vld [vmem:[%s5 + $0x240] sm:$0xff]
  %v233 = vld [vmem:[%s5 + $0x248] sm:$0xff]
  %v234 = vld [vmem:[%s5 + $0x250] sm:$0xff]
  %v235 = vld [vmem:[%s5 + $0x258] sm:$0xff]
  %v236 = vld [vmem:[%s5 + $0x260] sm:$0xff]
  %v237 = vld [vmem:[%s5 + $0x268] sm:$0xff]
  %v238 = vld [vmem:[%s5 + $0x270] sm:$0xff]
  %v239 = vld [vmem:[%s5 + $0x278] sm:$0xff]
  %v240 = vld [vmem:[%s5 + $0x280] sm:$0xff]
  %v241 = vld [vmem:[%s5 + $0x288] sm:$0xff]
  %v242 = vld [vmem:[%s5 + $0x290] sm:$0xff]
  %v243 = vld [vmem:[%s5 + $0x298] sm:$0xff]
  %v244 = vld [vmem:[%s5 + $0x2a0] sm:$0xff]
  %v245 = vld [vmem:[%s5 + $0x2a8] sm:$0xff]
  %v246 = vld [vmem:[%s5 + $0x2b0] sm:$0xff]
  %v247 = vld [vmem:[%s5 + $0x2b8] sm:$0xff]
  %v248 = vld [vmem:[%s5 + $0x2c0] sm:$0xff]
  %v249 = vld [vmem:[%s5 + $0x2c8] sm:$0xff]
  %v250 = vld [vmem:[%s5 + $0x2d0] sm:$0xff]
  %v251 = vld [vmem:[%s5 + $0x2d8] sm:$0xff]
  %v252 = vld [vmem:[%s5 + $0x2e0] sm:$0xff]
  %v253 = vld [vmem:[%s5 + $0x2e8] sm:$0xff]
  %v254 = vld [vmem:[%s5 + $0x2f0] sm:$0xff]
  %v255 = vld [vmem:[%s5 + $0x2f8] sm:$0xff]
  %v256 = vld [vmem:[%s5 + $0x300] sm:$0xff]
  %v257 = vld [vmem:[%s5 + $0x308] sm:$0xff]
  %v258 = vld [vmem:[%s5 + $0x310] sm:$0xff]
  %v259 = vld [vmem:[%s5 + $0x318] sm:$0xff]
  %v260 = vld [vmem:[%s5 + $0x320] sm:$0xff]
  %v261 = vld [vmem:[%s5 + $0x328] sm:$0xff]
  %v262 = vld [vmem:[%s5 + $0x330] sm:$0xff]
  %v263 = vld [vmem:[%s5 + $0x338] sm:$0xff]
  %v264 = vld [vmem:[%s5 + $0x340] sm:$0xff]
  %v265 = vld [vmem:[%s5 + $0x348] sm:$0xff]
  %v266 = vld [vmem:[%s5 + $0x350] sm:$0xff]
  %v267 = vld [vmem:[%s5 + $0x358] sm:$0xff]
  %v268 = vld [vmem:[%s5 + $0x360] sm:$0xff]
  %v269 = vld [vmem:[%s5 + $0x368] sm:$0xff]
  %v270 = vld [vmem:[%s5 + $0x370] sm:$0xff]
  %v271 = vld [vmem:[%s5 + $0x378] sm:$0xff]
  %v272 = vld [vmem:[%s5 + $0x380] sm:$0xff]
  %v273 = vld [vmem:[%s5 + $0x388] sm:$0xff]
  %v274 = vld [vmem:[%s5 + $0x390] sm:$0xff]
  %v275 = vld [vmem:[%s5 + $0x398] sm:$0xff]
  %v276 = vld [vmem:[%s5 + $0x3a0] sm:$0xff]
  %v277 = vld [vmem:[%s5 + $0x3a8] sm:$0xff]
  %v278 = vld [vmem:[%s5 + $0x3b0] sm:$0xff]
  %v279 = vld [vmem:[%s5 + $0x3b8] sm:$0xff]
  %v280 = vld [vmem:[%s5 + $0x3c0] sm:$0xff]
  %v281 = vld [vmem:[%s5 + $0x3c8] sm:$0xff]
  %v282 = vld [vmem:[%s5 + $0x3d0] sm:$0xff]
  %v283 = vld [vmem:[%s5 + $0x3d8] sm:$0xff]
  %v284 = vld [vmem:[%s5 + $0x3e0] sm:$0xff]
  %v285 = vld [vmem:[%s5 + $0x3e8] sm:$0xff]
  %v286 = vld [vmem:[%s5 + $0x3f0] sm:$0xff]
  %v287 = vld [vmem:[%s5 + $0x3f8] sm:$0xff]
  %v288 = vld [vmem:[%s5 + $0x400] sm:$0xff]
  %v289 = vld [vmem:[%s5 + $0x408] sm:$0xff]
  %v290 = vld [vmem:[%s5 + $0x410] sm:$0xff]
  %v291 = vld [vmem:[%s5 + $0x418] sm:$0xff]
  %v292 = vld [vmem:[%s5 + $0x420] sm:$0xff]
  %v293 = vld [vmem:[%s5 + $0x428] sm:$0xff]
  %v294 = vld [vmem:[%s5 + $0x430] sm:$0xff]
  %v295 = vld [vmem:[%s5 + $0x438] sm:$0xff]
  %v296 = vld [vmem:[%s5 + $0x440] sm:$0xff]
  %v297 = vld [vmem:[%s5 + $0x448] sm:$0xff]
  %v298 = vld [vmem:[%s5 + $0x450] sm:$0xff]
  %v299 = vld [vmem:[%s5 + $0x458] sm:$0xff]
  %v300 = vld [vmem:[%s5 + $0x460] sm:$0xff]
  %v301 = vld [vmem:[%s5 + $0x468] sm:$0xff]
  %v302 = vld [vmem:[%s5 + $0x470] sm:$0xff]
  %v303 = vld [vmem:[%s5 + $0x478] sm:$0xff]
  %v304 = vld [vmem:[%s5 + $0x480] sm:$0xff]
  %v305 = vld [vmem:[%s5 + $0x488] sm:$0xff]
  %v306 = vld [vmem:[%s5 + $0x490] sm:$0xff]
  %v307 = vld [vmem:[%s5 + $0x498] sm:$0xff]
  %v308 = vld [vmem:[%s5 + $0x4a0] sm:$0xff]
  %v309 = vld [vmem:[%s5 + $0x4a8] sm:$0xff]
  %v310 = vld [vmem:[%s5 + $0x4b0] sm:$0xff]
  %v311 = vld [vmem:[%s5 + $0x4b8] sm:$0xff]
  %v312 = vld [vmem:[%s5 + $0x4c0] sm:$0xff]
  %v313 = vld [vmem:[%s5 + $0x4c8] sm:$0xff]
  %v314 = vld [vmem:[%s5 + $0x4d0] sm:$0xff]
  %v315 = vld [vmem:[%s5 + $0x4d8] sm:$0xff]
  %v316 = vld [vmem:[%s5 + $0x4e0] sm:$0xff]
  %v317 = vld [vmem:[%s5 + $0x4e8] sm:$0xff]
  %v318 = vld [vmem:[%s5 + $0x4f0] sm:$0xff]
  %v319 = vld [vmem:[%s5 + $0x4f8] sm:$0xff]
  %v320 = vld [vmem:[%s5 + $0x500] sm:$0xff]
  %v321 = vld [vmem:[%s5 + $0x508] sm:$0xff]
  %v322 = vld [vmem:[%s5 + $0x510] sm:$0xff]
  %v323 = vld [vmem:[%s5 + $0x518] sm:$0xff]
  %v324 = vld [vmem:[%s5 + $0x520] sm:$0xff]
  %v325 = vld [vmem:[%s5 + $0x528] sm:$0xff]
  %v326 = vld [vmem:[%s5 + $0x530] sm:$0xff]
  %v327 = vld [vmem:[%s5 + $0x538] sm:$0xff]
  %v328 = vld [vmem:[%s5 + $0x540] sm:$0xff]
  %v329 = vld [vmem:[%s5 + $0x548] sm:$0xff]
  %v330 = vld [vmem:[%s5 + $0x550] sm:$0xff]
  %v331 = vld [vmem:[%s5 + $0x558] sm:$0xff]
  %v332 = vld [vmem:[%s5 + $0x560] sm:$0xff]
  %v333 = vld [vmem:[%s5 + $0x568] sm:$0xff]
  %v334 = vld [vmem:[%s5 + $0x570] sm:$0xff]
  %v335 = vld [vmem:[%s5 + $0x578] sm:$0xff]
  %v336 = vld [vmem:[%s5 + $0x580] sm:$0xff]
  %v337 = vld [vmem:[%s5 + $0x588] sm:$0xff]
  %v338 = vld [vmem:[%s5 + $0x590] sm:$0xff]
  %v339 = vld [vmem:[%s5 + $0x598] sm:$0xff]
  %v340 = vld [vmem:[%s5 + $0x5a0] sm:$0xff]
  %v341 = vld [vmem:[%s5 + $0x5a8] sm:$0xff]
  %v342 = vld [vmem:[%s5 + $0x5b0] sm:$0xff]
  %v343 = vld [vmem:[%s5 + $0x5b8] sm:$0xff]
  %v344 = vld [vmem:[%s5 + $0x5c0] sm:$0xff]
  %v345 = vld [vmem:[%s5 + $0x5c8] sm:$0xff]
  %v346 = vld [vmem:[%s5 + $0x5d0] sm:$0xff]
  %v347 = vld [vmem:[%s5 + $0x5d8] sm:$0xff]
  %v348 = vld [vmem:[%s5 + $0x5e0] sm:$0xff]
  %v349 = vld [vmem:[%s5 + $0x5e8] sm:$0xff]
  %v350 = vld [vmem:[%s5 + $0x5f0] sm:$0xff]
  %v351 = vld [vmem:[%s5 + $0x5f8] sm:$0xff]
  %v352 = vld [vmem:[%s5 + $0x600] sm:$0xff]
  %v353 = vld [vmem:[%s5 + $0x608] sm:$0xff]
  %v354 = vld [vmem:[%s5 + $0x610] sm:$0xff]
  %v355 = vld [vmem:[%s5 + $0x618] sm:$0xff]
  %v356 = vld [vmem:[%s5 + $0x620] sm:$0xff]
  %v357 = vld [vmem:[%s5 + $0x628] sm:$0xff]
  %v358 = vld [vmem:[%s5 + $0x630] sm:$0xff]
  %v359 = vld [vmem:[%s5 + $0x638] sm:$0xff]
  %v360 = vld [vmem:[%s5 + $0x640] sm:$0xff]
  %v361 = vld [vmem:[%s5 + $0x648] sm:$0xff]
  %v362 = vld [vmem:[%s5 + $0x650] sm:$0xff]
  %v363 = vld [vmem:[%s5 + $0x658] sm:$0xff]
  %v364 = vld [vmem:[%s5 + $0x660] sm:$0xff]
  %v365 = vld [vmem:[%s5 + $0x668] sm:$0xff]
  %v366 = vld [vmem:[%s5 + $0x670] sm:$0xff]
  %v367 = vld [vmem:[%s5 + $0x678] sm:$0xff]
  %v368 = vld [vmem:[%s5 + $0x680] sm:$0xff]
  %v369 = vld [vmem:[%s5 + $0x688] sm:$0xff]
  %v370 = vld [vmem:[%s5 + $0x690] sm:$0xff]
  %v371 = vld [vmem:[%s5 + $0x698] sm:$0xff]
  %v372 = vld [vmem:[%s5 + $0x6a0] sm:$0xff]
  %v373 = vld [vmem:[%s5 + $0x6a8] sm:$0xff]
  %v374 = vld [vmem:[%s5 + $0x6b0] sm:$0xff]
  %v375 = vld [vmem:[%s5 + $0x6b8] sm:$0xff]
  %v376 = vld [vmem:[%s5 + $0x6c0] sm:$0xff]
  %v377 = vld [vmem:[%s5 + $0x6c8] sm:$0xff]
  %v378 = vld [vmem:[%s5 + $0x6d0] sm:$0xff]
  %v379 = vld [vmem:[%s5 + $0x6d8] sm:$0xff]
  %v380 = vld [vmem:[%s5 + $0x6e0] sm:$0xff]
  %v381 = vld [vmem:[%s5 + $0x6e8] sm:$0xff]
  %v382 = vld [vmem:[%s5 + $0x6f0] sm:$0xff]
  %v383 = vld [vmem:[%s5 + $0x6f8] sm:$0xff]
  %v384 = vld [vmem:[%s5 + $0x700] sm:$0xff]
  %v385 = vld [vmem:[%s5 + $0x708] sm:$0xff]
  %v386 = vld [vmem:[%s5 + $0x710] sm:$0xff]
  %v387 = vld [vmem:[%s5 + $0x718] sm:$0xff]
  %v388 = vld [vmem:[%s5 + $0x720] sm:$0xff]
  %v389 = vld [vmem:[%s5 + $0x728] sm:$0xff]
  %v390 = vld [vmem:[%s5 + $0x730] sm:$0xff]
  %v391 = vld [vmem:[%s5 + $0x738] sm:$0xff]
  %v392 = vld [vmem:[%s5 + $0x740] sm:$0xff]
  %v393 = vld [vmem:[%s5 + $0x748] sm:$0xff]
  %v394 = vld [vmem:[%s5 + $0x750] sm:$0xff]
  %v395 = vld [vmem:[%s5 + $0x758] sm:$0xff]
  %v396 = vld [vmem:[%s5 + $0x760] sm:$0xff]
  %v397 = vld [vmem:[%s5 + $0x768] sm:$0xff]
  %v398 = vld [vmem:[%s5 + $0x770] sm:$0xff]
  %v399 = vld [vmem:[%s5 + $0x778] sm:$0xff]
  %v400 = vld [vmem:[%s5 + $0x780] sm:$0xff]
  %v401 = vld [vmem:[%s5 + $0x788] sm:$0xff]
  %v402 = vld [vmem:[%s5 + $0x790] sm:$0xff]
  %v403 = vld [vmem:[%s5 + $0x798] sm:$0xff]
  %v404 = vld [vmem:[%s5 + $0x7a0] sm:$0xff]
  %v405 = vld [vmem:[%s5 + $0x7a8] sm:$0xff]
  %v406 = vld [vmem:[%s5 + $0x7b0] sm:$0xff]
  %v407 = vld [vmem:[%s5 + $0x7b8] sm:$0xff]
  %v408 = vld [vmem:[%s5 + $0x7c0] sm:$0xff]
  %v409 = vld [vmem:[%s5 + $0x7c8] sm:$0xff]
  %v410 = vld [vmem:[%s5 + $0x7d0] sm:$0xff]
  %v411 = vld [vmem:[%s5 + $0x7d8] sm:$0xff]
  %v412 = vld [vmem:[%s5 + $0x7e0] sm:$0xff]
  %v413 = vld [vmem:[%s5 + $0x7e8] sm:$0xff]
  %v414 = vld [vmem:[%s5 + $0x7f0] sm:$0xff]
  %v415 = vld [vmem:[%s5 + $0x7f8] sm:$0xff]
  %v416 = vld [vmem:[%s6] sm:$0xff]
  %v418 = vlaneseq
  %v419 = vshrl.u32 %v418, 7
  %v420 = vsub.s32 0, %v419
  %v421 = vrot.slane %v94, %v420
  %v422 = vlaneseq
  %v423 = vshrl.u32 %v422, 7
  %v424 = vsub.s32 1, %v423
  %v425 = vrot.slane %v94, %v424
  %v444 = vunpack.c.l.b16 %v45
  %v445 = vunpack.c.h.b16 %v45
  %v446 = vunpack.c.l.b16 %v46
  %v447 = vunpack.c.l.b16 %v47
  %v448 = vunpack.c.h.b16 %v47
  %v449 = vunpack.c.l.b16 %v48
  %v450 = vunpack.c.l.b16 %v49
  %v451 = vunpack.c.h.b16 %v49
  %v452 = vunpack.c.l.b16 %v50
  %v453 = vunpack.c.l.b16 %v51
  %v454 = vunpack.c.h.b16 %v51
  %v455 = vunpack.c.l.b16 %v52
  %v456 = vunpack.c.l.b16 %v53
  %v457 = vunpack.c.h.b16 %v53
  %v458 = vunpack.c.l.b16 %v54
  %v459 = vunpack.c.l.b16 %v55
  %v460 = vunpack.c.h.b16 %v55
  %v461 = vunpack.c.l.b16 %v56
  %v462 = vunpack.c.l.b16 %v57
  %v463 = vunpack.c.h.b16 %v57
  %v464 = vunpack.c.l.b16 %v58
  %v465 = vunpack.c.l.b16 %v59
  %v466 = vunpack.c.h.b16 %v59
  %v467 = vunpack.c.l.b16 %v60
  %v468 = vpack.c.b16 %v447, %v444
  %v469 = vpack.c.b16 %v448, %v445
  %v470 = vpack.c.b16 %v449, %v446
  %v471 = vpack.c.b16 %v453, %v450
  %v472 = vpack.c.b16 %v454, %v451
  %v473 = vpack.c.b16 %v455, %v452
  %v474 = vpack.c.b16 %v459, %v456
  %v475 = vpack.c.b16 %v460, %v457
  %v476 = vpack.c.b16 %v461, %v458
  %v477 = vpack.c.b16 %v465, %v462
  %v478 = vpack.c.b16 %v466, %v463
  %v479 = vpack.c.b16 %v467, %v464
  %v521 = vunpack.c.l.b16 %v61
  %v522 = vunpack.c.h.b16 %v61
  %v523 = vunpack.c.l.b16 %v62
  %v524 = vunpack.c.h.b16 %v62
  %v525 = vunpack.c.l.b16 %v63
  %v526 = vunpack.c.h.b16 %v63
  %v527 = vunpack.c.l.b16 %v64
  %v528 = vunpack.c.h.b16 %v64
  %v529 = vunpack.c.l.b16 %v65
  %v530 = vunpack.c.h.b16 %v65
  %v531 = vunpack.c.l.b16 %v66
  %v532 = vunpack.c.h.b16 %v66
  %v533 = vunpack.c.l.b16 %v67
  %v534 = vunpack.c.h.b16 %v67
  %v535 = vunpack.c.l.b16 %v68
  %v536 = vunpack.c.h.b16 %v68
  %v537 = vunpack.c.l.b16 %v69
  %v538 = vunpack.c.h.b16 %v69
  %v539 = vunpack.c.l.b16 %v70
  %v540 = vunpack.c.h.b16 %v70
  %v541 = vunpack.c.l.b16 %v71
  %v542 = vunpack.c.h.b16 %v71
  %v543 = vunpack.c.l.b16 %v72
  %v544 = vunpack.c.h.b16 %v72
  %v545 = vunpack.c.l.b16 %v73
  %v546 = vunpack.c.h.b16 %v73
  %v547 = vunpack.c.l.b16 %v74
  %v548 = vunpack.c.h.b16 %v74
  %v549 = vunpack.c.l.b16 %v75
  %v550 = vunpack.c.h.b16 %v75
  %v551 = vunpack.c.l.b16 %v76
  %v552 = vunpack.c.h.b16 %v76
  %v553 = vunpack.c.l.b16 %v77
  %v554 = vunpack.c.h.b16 %v77
  %v555 = vunpack.c.l.b16 %v78
  %v556 = vunpack.c.h.b16 %v78
  %v557 = vunpack.c.l.b16 %v79
  %v558 = vunpack.c.h.b16 %v79
  %v559 = vunpack.c.l.b16 %v80
  %v560 = vunpack.c.h.b16 %v80
  %v561 = vunpack.c.l.b16 %v81
  %v562 = vunpack.c.h.b16 %v81
  %v563 = vunpack.c.l.b16 %v82
  %v564 = vunpack.c.h.b16 %v82
  %v565 = vunpack.c.l.b16 %v83
  %v566 = vunpack.c.h.b16 %v83
  %v567 = vunpack.c.l.b16 %v84
  %v568 = vunpack.c.h.b16 %v84
  %v569 = vunpack.c.l.b16 %v85
  %v570 = vunpack.c.h.b16 %v85
  %v571 = vunpack.c.l.b16 %v86
  %v572 = vunpack.c.h.b16 %v86
  %v573 = vunpack.c.l.b16 %v87
  %v574 = vunpack.c.h.b16 %v87
  %v575 = vunpack.c.l.b16 %v88
  %v576 = vunpack.c.h.b16 %v88
  %v577 = vunpack.c.l.b16 %v89
  %v578 = vunpack.c.h.b16 %v89
  %v579 = vunpack.c.l.b16 %v90
  %v580 = vunpack.c.h.b16 %v90
  %v581 = vunpack.c.l.b16 %v91
  %v582 = vunpack.c.h.b16 %v91
  %v583 = vunpack.c.l.b16 %v92
  %v584 = vunpack.c.h.b16 %v92
  %v585 = vunpack.c.l.b16 %v93
  %v586 = vunpack.c.h.b16 %v93
  %v587 = vpack.c.b16 %v523, %v521
  %v588 = vpack.c.b16 %v524, %v522
  %v589 = vpack.c.b16 %v527, %v525
  %v590 = vpack.c.b16 %v528, %v526
  %v591 = vpack.c.b16 %v531, %v529
  %v592 = vpack.c.b16 %v532, %v530
  %v593 = vpack.c.b16 %v535, %v533
  %v594 = vpack.c.b16 %v536, %v534
  %v595 = vpack.c.b16 %v539, %v537
  %v596 = vpack.c.b16 %v540, %v538
  %v597 = vpack.c.b16 %v543, %v541
  %v598 = vpack.c.b16 %v544, %v542
  %v599 = vpack.c.b16 %v547, %v545
  %v600 = vpack.c.b16 %v548, %v546
  %v601 = vpack.c.b16 %v551, %v549
  %v602 = vpack.c.b16 %v552, %v550
  %v603 = vpack.c.b16 %v555, %v553
  %v604 = vpack.c.b16 %v556, %v554
  %v605 = vpack.c.b16 %v559, %v557
  %v606 = vpack.c.b16 %v560, %v558
  %v607 = vpack.c.b16 %v563, %v561
  %v608 = vpack.c.b16 %v564, %v562
  %v609 = vpack.c.b16 %v567, %v565
  %v610 = vpack.c.b16 %v568, %v566
  %v611 = vpack.c.b16 %v571, %v569
  %v612 = vpack.c.b16 %v572, %v570
  %v613 = vpack.c.b16 %v575, %v573
  %v614 = vpack.c.b16 %v576, %v574
  %v615 = vpack.c.b16 %v579, %v577
  %v616 = vpack.c.b16 %v580, %v578
  %v617 = vpack.c.b16 %v583, %v581
  %v618 = vpack.c.b16 %v584, %v582
  %v619 = vpack.c.b16 %v585, %v585
  %v620 = vpack.c.b16 %v586, %v586
  %vm653 = vcmask 23552
  %v655 = vsel %vm653, %v470, 0
  %v658 = vsel %vm653, %v473, 0
  %v661 = vsel %vm653, %v476, 0
  %v664 = vsel %vm653, %v479, 0
  %vm666 = vcmask 1040384
  %vm667 = vcmask 1041408
  %v668 = vsel %vm666, 4294967295, 65535
  %v669 = vsel %vm667, %v668, 0
  %v671 = vand.u32 %v619, %v669
  %v674 = vand.u32 %v620, %v669
  %676 = vmatprep.subr.bf16.mxu0 %v588
  %677 = vmatpush1.bf16.msra.mxu0 %v587
  %678 = vmatprep.subr.bf16.mxu0 %v590
  %679 = vmatpush1.bf16.msra.mxu0 %v589
  %680 = vmatprep.subr.bf16.mxu0 %v592
  %681 = vmatpush1.bf16.msra.mxu0 %v591
  %682 = vmatprep.subr.bf16.mxu0 %v594
  %683 = vmatpush1.bf16.msra.mxu0 %v593
  %684 = vmatprep.subr.bf16.mxu0 %v596
  %685 = vmatpush1.bf16.msra.mxu0 %v595
  %686 = vmatprep.subr.bf16.mxu0 %v598
  %687 = vmatpush1.bf16.msra.mxu0 %v597
  %688 = vmatprep.subr.bf16.mxu0 %v600
  %689 = vmatpush1.bf16.msra.mxu0 %v599
  %690 = vmatprep.subr.bf16.mxu0 %v602
  %691 = vmatpush1.bf16.msra.mxu0 %v601
  %692 = vmatprep.subr.bf16.mxu0 %v604
  %693 = vmatpush1.bf16.msra.mxu0 %v603
  %694 = vmatprep.subr.bf16.mxu0 %v606
  %695 = vmatpush1.bf16.msra.mxu0 %v605
  %696 = vmatprep.subr.bf16.mxu0 %v608
  %697 = vmatpush1.bf16.msra.mxu0 %v607
  %698 = vmatprep.subr.bf16.mxu0 %v610
  %699 = vmatpush1.bf16.msra.mxu0 %v609
  %700 = vmatprep.subr.bf16.mxu0 %v612
  %701 = vmatpush1.bf16.msra.mxu0 %v611
  %702 = vmatprep.subr.bf16.mxu0 %v614
  %703 = vmatpush1.bf16.msra.mxu0 %v613
  %704 = vmatprep.subr.bf16.mxu0 %v616
  %705 = vmatpush1.bf16.msra.mxu0 %v615
  %706 = vmatprep.subr.bf16.mxu0 %v618
  %707 = vmatpush1.bf16.msra.mxu0 %v617
  %708 = vmatprep.mubr.bf16.mxu0 %v469
  %709 = vmatmul.mubr.bf16.gmra.mrb[0].mxu0 %v468
  %v710 = vpop.f32.mrb[0].mxu0
  %v711 = vadd.f32 %v421, %v710
  %v712 = vpop.f32.mrb[0].mxu0
  %v713 = vadd.f32 %v425, %v712
  %v714 = vpop.f32.mrb[0].mxu0
  %v715 = vadd.f32 %v421, %v714
  %v716 = vpop.f32.mrb[0].mxu0
  %v717 = vadd.f32 %v425, %v716
  %718 = vmatprep.mubr.bf16.mxu0 %v472
  %719 = vmatmul.mubr.bf16.gmra.mrb[0].mxu0 %v471
  %v720 = vpop.f32.mrb[0].mxu0
  %v721 = vadd.f32 %v421, %v720
  %v722 = vpop.f32.mrb[0].mxu0
  %v723 = vadd.f32 %v425, %v722
  %v724 = vpop.f32.mrb[0].mxu0
  %v725 = vadd.f32 %v421, %v724
  %v726 = vpop.f32.mrb[0].mxu0
  %v727 = vadd.f32 %v425, %v726
  %728 = vmatprep.mubr.bf16.mxu0 %v475
  %729 = vmatmul.mubr.bf16.gmra.mrb[0].mxu0 %v474
  %v730 = vpop.f32.mrb[0].mxu0
  %v731 = vadd.f32 %v421, %v730
  %v732 = vpop.f32.mrb[0].mxu0
  %v733 = vadd.f32 %v425, %v732
  %v734 = vpop.f32.mrb[0].mxu0
  %v735 = vadd.f32 %v421, %v734
  %v736 = vpop.f32.mrb[0].mxu0
  %v737 = vadd.f32 %v425, %v736
  %738 = vmatprep.mubr.bf16.mxu0 %v478
  %739 = vmatmul.mubr.bf16.gmra.mrb[0].mxu0 %v477
  %v740 = vpop.f32.mrb[0].mxu0
  %v741 = vadd.f32 %v421, %v740
  %v742 = vpop.f32.mrb[0].mxu0
  %v743 = vadd.f32 %v425, %v742
  %v744 = vpop.f32.mrb[0].mxu0
  %v745 = vadd.f32 %v421, %v744
  %v746 = vpop.f32.mrb[0].mxu0
  %v747 = vadd.f32 %v425, %v746
  %748 = vdwg.mxu0
  %749 = vmatprep.subr.bf16.mxu0 %v674
  %750 = vmatpush1.bf16.msra.mxu0 %v671
  %751 = vmatprep.subr.bf16.mxu0 0
  %752 = vmatpush1.bf16.msra.mxu0 0
  %753 = vmatprep.subr.bf16.mxu0 0
  %754 = vmatpush1.bf16.msra.mxu0 0
  %755 = vmatprep.subr.bf16.mxu0 0
  %756 = vmatpush1.bf16.msra.mxu0 0
  %757 = vmatprep.subr.bf16.mxu0 0
  %758 = vmatpush1.bf16.msra.mxu0 0
  %759 = vmatprep.subr.bf16.mxu0 0
  %760 = vmatpush1.bf16.msra.mxu0 0
  %761 = vmatprep.subr.bf16.mxu0 0
  %762 = vmatpush1.bf16.msra.mxu0 0
  %763 = vmatprep.subr.bf16.mxu0 0
  %764 = vmatpush1.bf16.msra.mxu0 0
  %765 = vmatprep.subr.bf16.mxu0 0
  %766 = vmatpush1.bf16.msra.mxu0 0
  %767 = vmatprep.subr.bf16.mxu0 0
  %768 = vmatpush1.bf16.msra.mxu0 0
  %769 = vmatprep.subr.bf16.mxu0 0
  %770 = vmatpush1.bf16.msra.mxu0 0
  %771 = vmatprep.subr.bf16.mxu0 0
  %772 = vmatpush1.bf16.msra.mxu0 0
  %773 = vmatprep.subr.bf16.mxu0 0
  %774 = vmatpush1.bf16.msra.mxu0 0
  %775 = vmatprep.subr.bf16.mxu0 0
  %776 = vmatpush1.bf16.msra.mxu0 0
  %777 = vmatprep.subr.bf16.mxu0 0
  %778 = vmatpush1.bf16.msra.mxu0 0
  %779 = vmatprep.subr.bf16.mxu0 0
  %780 = vmatpush1.bf16.msra.mxu0 0
  %781 = vmatprep.mubr.bf16.mxu0 0
  %782 = vmatmul.mubr.bf16.gmra.mrb[0].mxu0 %v655
  %v783 = vpop.f32.mrb[0].mxu0
  %v784 = vadd.f32 %v711, %v783
  %v785 = vpop.f32.mrb[0].mxu0
  %v786 = vadd.f32 %v713, %v785
  %v787 = vpop.f32.mrb[0].mxu0
  %v788 = vadd.f32 %v715, %v787
  %v789 = vpop.f32.mrb[0].mxu0
  %v790 = vadd.f32 %v717, %v789
  %791 = vmatprep.mubr.bf16.mxu0 0
  %792 = vmatmul.mubr.bf16.gmra.mrb[0].mxu0 %v658
  %v793 = vpop.f32.mrb[0].mxu0
  %v794 = vadd.f32 %v721, %v793
  %v795 = vpop.f32.mrb[0].mxu0
  %v796 = vadd.f32 %v723, %v795
  %v797 = vpop.f32.mrb[0].mxu0
  %v798 = vadd.f32 %v725, %v797
  %v799 = vpop.f32.mrb[0].mxu0
  %v800 = vadd.f32 %v727, %v799
  %801 = vmatprep.mubr.bf16.mxu0 0
  %802 = vmatmul.mubr.bf16.gmra.mrb[0].mxu0 %v661
  %v803 = vpop.f32.mrb[0].mxu0
  %v804 = vadd.f32 %v731, %v803
  %v805 = vpop.f32.mrb[0].mxu0
  %v806 = vadd.f32 %v733, %v805
  %v807 = vpop.f32.mrb[0].mxu0
  %v808 = vadd.f32 %v735, %v807
  %v809 = vpop.f32.mrb[0].mxu0
  %v810 = vadd.f32 %v737, %v809
  %811 = vmatprep.mubr.bf16.mxu0 0
  %812 = vmatmul.mubr.bf16.gmra.mrb[0].mxu0 %v664
  %v813 = vpop.f32.mrb[0].mxu0
  %v814 = vadd.f32 %v741, %v813
  %v815 = vpop.f32.mrb[0].mxu0
  %v816 = vadd.f32 %v743, %v815
  %v817 = vpop.f32.mrb[0].mxu0
  %v818 = vadd.f32 %v745, %v817
  %v819 = vpop.f32.mrb[0].mxu0
  %v820 = vadd.f32 %v747, %v819
  %821 = vdwg.mxu0
  %v822 = vmax.f32 %v784, 0.0
  %v823 = vmax.f32 %v786, 0.0
  %v824 = vmax.f32 %v788, 0.0
  %v825 = vmax.f32 %v790, 0.0
  %v826 = vmax.f32 %v794, 0.0
  %v827 = vmax.f32 %v796, 0.0
  %v828 = vmax.f32 %v798, 0.0
  %v829 = vmax.f32 %v800, 0.0
  %v830 = vmax.f32 %v804, 0.0
  %v831 = vmax.f32 %v806, 0.0
  %v832 = vmax.f32 %v808, 0.0
  %v833 = vmax.f32 %v810, 0.0
  %v834 = vmax.f32 %v814, 0.0
  %v835 = vmax.f32 %v816, 0.0
  %v836 = vmax.f32 %v818, 0.0
  %v837 = vmax.f32 %v820, 0.0
  %v838 = vpack.c.bf16 %v824, %v822
  %v839 = vpack.c.bf16 %v825, %v823
  %v840 = vpack.c.bf16 %v828, %v826
  %v841 = vpack.c.bf16 %v829, %v827
  %v842 = vpack.c.bf16 %v832, %v830
  %v843 = vpack.c.bf16 %v833, %v831
  %v844 = vpack.c.bf16 %v836, %v834
  %v845 = vpack.c.bf16 %v837, %v835
  %v847 = vlaneseq
  %v848 = vshrl.u32 %v847, 7
  %v849 = vsub.s32 0, %v848
  %v850 = vrot.slane %v159, %v849
  %v851 = vlaneseq
  %v852 = vshrl.u32 %v851, 7
  %v853 = vsub.s32 1, %v852
  %v854 = vrot.slane %v159, %v853
  %v855 = vlaneseq
  %v856 = vshrl.u32 %v855, 7
  %v857 = vsub.s32 2, %v856
  %v858 = vrot.slane %v159, %v857
  %v859 = vlaneseq
  %v860 = vshrl.u32 %v859, 7
  %v861 = vsub.s32 3, %v860
  %v862 = vrot.slane %v159, %v861
  %v931 = vunpack.c.l.b16 %v95
  %v932 = vunpack.c.h.b16 %v95
  %v933 = vunpack.c.l.b16 %v96
  %v934 = vunpack.c.h.b16 %v96
  %v935 = vunpack.c.l.b16 %v97
  %v936 = vunpack.c.h.b16 %v97
  %v937 = vunpack.c.l.b16 %v98
  %v938 = vunpack.c.h.b16 %v98
  %v939 = vunpack.c.l.b16 %v99
  %v940 = vunpack.c.h.b16 %v99
  %v941 = vunpack.c.l.b16 %v100
  %v942 = vunpack.c.h.b16 %v100
  %v943 = vunpack.c.l.b16 %v101
  %v944 = vunpack.c.h.b16 %v101
  %v945 = vunpack.c.l.b16 %v102
  %v946 = vunpack.c.h.b16 %v102
  %v947 = vunpack.c.l.b16 %v103
  %v948 = vunpack.c.h.b16 %v103
  %v949 = vunpack.c.l.b16 %v104
  %v950 = vunpack.c.h.b16 %v104
  %v951 = vunpack.c.l.b16 %v105
  %v952 = vunpack.c.h.b16 %v105
  %v953 = vunpack.c.l.b16 %v106
  %v954 = vunpack.c.h.b16 %v106
  %v955 = vunpack.c.l.b16 %v107
  %v956 = vunpack.c.h.b16 %v107
  %v957 = vunpack.c.l.b16 %v108
  %v958 = vunpack.c.h.b16 %v108
  %v959 = vunpack.c.l.b16 %v109
  %v960 = vunpack.c.h.b16 %v109
  %v961 = vunpack.c.l.b16 %v110
  %v962 = vunpack.c.h.b16 %v110
  %v963 = vunpack.c.l.b16 %v111
  %v964 = vunpack.c.h.b16 %v111
  %v965 = vunpack.c.l.b16 %v112
  %v966 = vunpack.c.h.b16 %v112
  %v967 = vunpack.c.l.b16 %v113
  %v968 = vunpack.c.h.b16 %v113
  %v969 = vunpack.c.l.b16 %v114
  %v970 = vunpack.c.h.b16 %v114
  %v971 = vunpack.c.l.b16 %v115
  %v972 = vunpack.c.h.b16 %v115
  %v973 = vunpack.c.l.b16 %v116
  %v974 = vunpack.c.h.b16 %v116
  %v975 = vunpack.c.l.b16 %v117
  %v976 = vunpack.c.h.b16 %v117
  %v977 = vunpack.c.l.b16 %v118
  %v978 = vunpack.c.h.b16 %v118
  %v979 = vunpack.c.l.b16 %v119
  %v980 = vunpack.c.h.b16 %v119
  %v981 = vunpack.c.l.b16 %v120
  %v982 = vunpack.c.h.b16 %v120
  %v983 = vunpack.c.l.b16 %v121
  %v984 = vunpack.c.h.b16 %v121
  %v985 = vunpack.c.l.b16 %v122
  %v986 = vunpack.c.h.b16 %v122
  %v987 = vunpack.c.l.b16 %v123
  %v988 = vunpack.c.h.b16 %v123
  %v989 = vunpack.c.l.b16 %v124
  %v990 = vunpack.c.h.b16 %v124
  %v991 = vunpack.c.l.b16 %v125
  %v992 = vunpack.c.h.b16 %v125
  %v993 = vunpack.c.l.b16 %v126
  %v994 = vunpack.c.h.b16 %v126
  %v995 = vunpack.c.l.b16 %v127
  %v996 = vunpack.c.h.b16 %v127
  %v997 = vunpack.c.l.b16 %v128
  %v998 = vunpack.c.h.b16 %v128
  %v999 = vunpack.c.l.b16 %v129
  %v1000 = vunpack.c.h.b16 %v129
  %v1001 = vunpack.c.l.b16 %v130
  %v1002 = vunpack.c.h.b16 %v130
  %v1003 = vunpack.c.l.b16 %v131
  %v1004 = vunpack.c.h.b16 %v131
  %v1005 = vunpack.c.l.b16 %v132
  %v1006 = vunpack.c.h.b16 %v132
  %v1007 = vunpack.c.l.b16 %v133
  %v1008 = vunpack.c.h.b16 %v133
  %v1009 = vunpack.c.l.b16 %v134
  %v1010 = vunpack.c.h.b16 %v134
  %v1011 = vunpack.c.l.b16 %v135
  %v1012 = vunpack.c.h.b16 %v135
  %v1013 = vunpack.c.l.b16 %v136
  %v1014 = vunpack.c.h.b16 %v136
  %v1015 = vunpack.c.l.b16 %v137
  %v1016 = vunpack.c.h.b16 %v137
  %v1017 = vunpack.c.l.b16 %v138
  %v1018 = vunpack.c.h.b16 %v138
  %v1019 = vunpack.c.l.b16 %v139
  %v1020 = vunpack.c.h.b16 %v139
  %v1021 = vunpack.c.l.b16 %v140
  %v1022 = vunpack.c.h.b16 %v140
  %v1023 = vunpack.c.l.b16 %v141
  %v1024 = vunpack.c.h.b16 %v141
  %v1025 = vunpack.c.l.b16 %v142
  %v1026 = vunpack.c.h.b16 %v142
  %v1027 = vunpack.c.l.b16 %v143
  %v1028 = vunpack.c.h.b16 %v143
  %v1029 = vunpack.c.l.b16 %v144
  %v1030 = vunpack.c.h.b16 %v144
  %v1031 = vunpack.c.l.b16 %v145
  %v1032 = vunpack.c.h.b16 %v145
  %v1033 = vunpack.c.l.b16 %v146
  %v1034 = vunpack.c.h.b16 %v146
  %v1035 = vunpack.c.l.b16 %v147
  %v1036 = vunpack.c.h.b16 %v147
  %v1037 = vunpack.c.l.b16 %v148
  %v1038 = vunpack.c.h.b16 %v148
  %v1039 = vunpack.c.l.b16 %v149
  %v1040 = vunpack.c.h.b16 %v149
  %v1041 = vunpack.c.l.b16 %v150
  %v1042 = vunpack.c.h.b16 %v150
  %v1043 = vunpack.c.l.b16 %v151
  %v1044 = vunpack.c.h.b16 %v151
  %v1045 = vunpack.c.l.b16 %v152
  %v1046 = vunpack.c.h.b16 %v152
  %v1047 = vunpack.c.l.b16 %v153
  %v1048 = vunpack.c.h.b16 %v153
  %v1049 = vunpack.c.l.b16 %v154
  %v1050 = vunpack.c.h.b16 %v154
  %v1051 = vunpack.c.l.b16 %v155
  %v1052 = vunpack.c.h.b16 %v155
  %v1053 = vunpack.c.l.b16 %v156
  %v1054 = vunpack.c.h.b16 %v156
  %v1055 = vunpack.c.l.b16 %v157
  %v1056 = vunpack.c.h.b16 %v157
  %v1057 = vunpack.c.l.b16 %v158
  %v1058 = vunpack.c.h.b16 %v158
  %v1059 = vpack.c.b16 %v935, %v931
  %v1060 = vpack.c.b16 %v936, %v932
  %v1061 = vpack.c.b16 %v937, %v933
  %v1062 = vpack.c.b16 %v938, %v934
  %v1063 = vpack.c.b16 %v943, %v939
  %v1064 = vpack.c.b16 %v944, %v940
  %v1065 = vpack.c.b16 %v945, %v941
  %v1066 = vpack.c.b16 %v946, %v942
  %v1067 = vpack.c.b16 %v951, %v947
  %v1068 = vpack.c.b16 %v952, %v948
  %v1069 = vpack.c.b16 %v953, %v949
  %v1070 = vpack.c.b16 %v954, %v950
  %v1071 = vpack.c.b16 %v959, %v955
  %v1072 = vpack.c.b16 %v960, %v956
  %v1073 = vpack.c.b16 %v961, %v957
  %v1074 = vpack.c.b16 %v962, %v958
  %v1075 = vpack.c.b16 %v967, %v963
  %v1076 = vpack.c.b16 %v968, %v964
  %v1077 = vpack.c.b16 %v969, %v965
  %v1078 = vpack.c.b16 %v970, %v966
  %v1079 = vpack.c.b16 %v975, %v971
  %v1080 = vpack.c.b16 %v976, %v972
  %v1081 = vpack.c.b16 %v977, %v973
  %v1082 = vpack.c.b16 %v978, %v974
  %v1083 = vpack.c.b16 %v983, %v979
  %v1084 = vpack.c.b16 %v984, %v980
  %v1085 = vpack.c.b16 %v985, %v981
  %v1086 = vpack.c.b16 %v986, %v982
  %v1087 = vpack.c.b16 %v991, %v987
  %v1088 = vpack.c.b16 %v992, %v988
  %v1089 = vpack.c.b16 %v993, %v989
  %v1090 = vpack.c.b16 %v994, %v990
  %v1091 = vpack.c.b16 %v999, %v995
  %v1092 = vpack.c.b16 %v1000, %v996
  %v1093 = vpack.c.b16 %v1001, %v997
  %v1094 = vpack.c.b16 %v1002, %v998
  %v1095 = vpack.c.b16 %v1007, %v1003
  %v1096 = vpack.c.b16 %v1008, %v1004
  %v1097 = vpack.c.b16 %v1009, %v1005
  %v1098 = vpack.c.b16 %v1010, %v1006
  %v1099 = vpack.c.b16 %v1015, %v1011
  %v1100 = vpack.c.b16 %v1016, %v1012
  %v1101 = vpack.c.b16 %v1017, %v1013
  %v1102 = vpack.c.b16 %v1018, %v1014
  %v1103 = vpack.c.b16 %v1023, %v1019
  %v1104 = vpack.c.b16 %v1024, %v1020
  %v1105 = vpack.c.b16 %v1025, %v1021
  %v1106 = vpack.c.b16 %v1026, %v1022
  %v1107 = vpack.c.b16 %v1031, %v1027
  %v1108 = vpack.c.b16 %v1032, %v1028
  %v1109 = vpack.c.b16 %v1033, %v1029
  %v1110 = vpack.c.b16 %v1034, %v1030
  %v1111 = vpack.c.b16 %v1039, %v1035
  %v1112 = vpack.c.b16 %v1040, %v1036
  %v1113 = vpack.c.b16 %v1041, %v1037
  %v1114 = vpack.c.b16 %v1042, %v1038
  %v1115 = vpack.c.b16 %v1047, %v1043
  %v1116 = vpack.c.b16 %v1048, %v1044
  %v1117 = vpack.c.b16 %v1049, %v1045
  %v1118 = vpack.c.b16 %v1050, %v1046
  %v1119 = vpack.c.b16 %v1055, %v1051
  %v1120 = vpack.c.b16 %v1056, %v1052
  %v1121 = vpack.c.b16 %v1057, %v1053
  %v1122 = vpack.c.b16 %v1058, %v1054
  %1187 = vmatprep.subr.bf16.mxu0 %v1060
  %1188 = vmatpush1.bf16.msra.mxu0 %v1059
  %1189 = vmatprep.subr.bf16.mxu0 %v1064
  %1190 = vmatpush1.bf16.msra.mxu0 %v1063
  %1191 = vmatprep.subr.bf16.mxu0 %v1068
  %1192 = vmatpush1.bf16.msra.mxu0 %v1067
  %1193 = vmatprep.subr.bf16.mxu0 %v1072
  %1194 = vmatpush1.bf16.msra.mxu0 %v1071
  %1195 = vmatprep.subr.bf16.mxu0 %v1076
  %1196 = vmatpush1.bf16.msra.mxu0 %v1075
  %1197 = vmatprep.subr.bf16.mxu0 %v1080
  %1198 = vmatpush1.bf16.msra.mxu0 %v1079
  %1199 = vmatprep.subr.bf16.mxu0 %v1084
  %1200 = vmatpush1.bf16.msra.mxu0 %v1083
  %1201 = vmatprep.subr.bf16.mxu0 %v1088
  %1202 = vmatpush1.bf16.msra.mxu0 %v1087
  %1203 = vmatprep.subr.bf16.mxu0 %v1092
  %1204 = vmatpush1.bf16.msra.mxu0 %v1091
  %1205 = vmatprep.subr.bf16.mxu0 %v1096
  %1206 = vmatpush1.bf16.msra.mxu0 %v1095
  %1207 = vmatprep.subr.bf16.mxu0 %v1100
  %1208 = vmatpush1.bf16.msra.mxu0 %v1099
  %1209 = vmatprep.subr.bf16.mxu0 %v1104
  %1210 = vmatpush1.bf16.msra.mxu0 %v1103
  %1211 = vmatprep.subr.bf16.mxu0 %v1108
  %1212 = vmatpush1.bf16.msra.mxu0 %v1107
  %1213 = vmatprep.subr.bf16.mxu0 %v1112
  %1214 = vmatpush1.bf16.msra.mxu0 %v1111
  %1215 = vmatprep.subr.bf16.mxu0 %v1116
  %1216 = vmatpush1.bf16.msra.mxu0 %v1115
  %1217 = vmatprep.subr.bf16.mxu0 %v1120
  %1218 = vmatpush1.bf16.msra.mxu0 %v1119
  %1219 = vmatprep.mubr.bf16.mxu0 %v839
  %1220 = vmatmul.mubr.bf16.gmra.mrb[0].mxu0 %v838
  %v1221 = vpop.f32.mrb[0].mxu0
  %v1222 = vadd.f32 %v850, %v1221
  %v1223 = vpop.f32.mrb[0].mxu0
  %v1224 = vadd.f32 %v854, %v1223
  %v1225 = vpop.f32.mrb[0].mxu0
  %v1226 = vadd.f32 %v850, %v1225
  %v1227 = vpop.f32.mrb[0].mxu0
  %v1228 = vadd.f32 %v854, %v1227
  %1229 = vmatprep.mubr.bf16.mxu0 %v841
  %1230 = vmatmul.mubr.bf16.gmra.mrb[0].mxu0 %v840
  %v1231 = vpop.f32.mrb[0].mxu0
  %v1232 = vadd.f32 %v850, %v1231
  %v1233 = vpop.f32.mrb[0].mxu0
  %v1234 = vadd.f32 %v854, %v1233
  %v1235 = vpop.f32.mrb[0].mxu0
  %v1236 = vadd.f32 %v850, %v1235
  %v1237 = vpop.f32.mrb[0].mxu0
  %v1238 = vadd.f32 %v854, %v1237
  %1239 = vmatprep.mubr.bf16.mxu0 %v843
  %1240 = vmatmul.mubr.bf16.gmra.mrb[0].mxu0 %v842
  %v1241 = vpop.f32.mrb[0].mxu0
  %v1242 = vadd.f32 %v850, %v1241
  %v1243 = vpop.f32.mrb[0].mxu0
  %v1244 = vadd.f32 %v854, %v1243
  %v1245 = vpop.f32.mrb[0].mxu0
  %v1246 = vadd.f32 %v850, %v1245
  %v1247 = vpop.f32.mrb[0].mxu0
  %v1248 = vadd.f32 %v854, %v1247
  %1249 = vmatprep.mubr.bf16.mxu0 %v845
  %1250 = vmatmul.mubr.bf16.gmra.mrb[0].mxu0 %v844
  %v1251 = vpop.f32.mrb[0].mxu0
  %v1252 = vadd.f32 %v850, %v1251
  %v1253 = vpop.f32.mrb[0].mxu0
  %v1254 = vadd.f32 %v854, %v1253
  %v1255 = vpop.f32.mrb[0].mxu0
  %v1256 = vadd.f32 %v850, %v1255
  %v1257 = vpop.f32.mrb[0].mxu0
  %v1258 = vadd.f32 %v854, %v1257
  %1259 = vdwg.mxu0
  %1260 = vmatprep.subr.bf16.mxu0 %v1062
  %1261 = vmatpush1.bf16.msra.mxu0 %v1061
  %1262 = vmatprep.subr.bf16.mxu0 %v1066
  %1263 = vmatpush1.bf16.msra.mxu0 %v1065
  %1264 = vmatprep.subr.bf16.mxu0 %v1070
  %1265 = vmatpush1.bf16.msra.mxu0 %v1069
  %1266 = vmatprep.subr.bf16.mxu0 %v1074
  %1267 = vmatpush1.bf16.msra.mxu0 %v1073
  %1268 = vmatprep.subr.bf16.mxu0 %v1078
  %1269 = vmatpush1.bf16.msra.mxu0 %v1077
  %1270 = vmatprep.subr.bf16.mxu0 %v1082
  %1271 = vmatpush1.bf16.msra.mxu0 %v1081
  %1272 = vmatprep.subr.bf16.mxu0 %v1086
  %1273 = vmatpush1.bf16.msra.mxu0 %v1085
  %1274 = vmatprep.subr.bf16.mxu0 %v1090
  %1275 = vmatpush1.bf16.msra.mxu0 %v1089
  %1276 = vmatprep.subr.bf16.mxu0 %v1094
  %1277 = vmatpush1.bf16.msra.mxu0 %v1093
  %1278 = vmatprep.subr.bf16.mxu0 %v1098
  %1279 = vmatpush1.bf16.msra.mxu0 %v1097
  %1280 = vmatprep.subr.bf16.mxu0 %v1102
  %1281 = vmatpush1.bf16.msra.mxu0 %v1101
  %1282 = vmatprep.subr.bf16.mxu0 %v1106
  %1283 = vmatpush1.bf16.msra.mxu0 %v1105
  %1284 = vmatprep.subr.bf16.mxu0 %v1110
  %1285 = vmatpush1.bf16.msra.mxu0 %v1109
  %1286 = vmatprep.subr.bf16.mxu0 %v1114
  %1287 = vmatpush1.bf16.msra.mxu0 %v1113
  %1288 = vmatprep.subr.bf16.mxu0 %v1118
  %1289 = vmatpush1.bf16.msra.mxu0 %v1117
  %1290 = vmatprep.subr.bf16.mxu0 %v1122
  %1291 = vmatpush1.bf16.msra.mxu0 %v1121
  %1292 = vmatprep.mubr.bf16.mxu0 %v839
  %1293 = vmatmul.mubr.bf16.gmra.mrb[0].mxu0 %v838
  %v1294 = vpop.f32.mrb[0].mxu0
  %v1295 = vadd.f32 %v858, %v1294
  %v1296 = vpop.f32.mrb[0].mxu0
  %v1297 = vadd.f32 %v862, %v1296
  %v1298 = vpop.f32.mrb[0].mxu0
  %v1299 = vadd.f32 %v858, %v1298
  %v1300 = vpop.f32.mrb[0].mxu0
  %v1301 = vadd.f32 %v862, %v1300
  %1302 = vmatprep.mubr.bf16.mxu0 %v841
  %1303 = vmatmul.mubr.bf16.gmra.mrb[0].mxu0 %v840
  %v1304 = vpop.f32.mrb[0].mxu0
  %v1305 = vadd.f32 %v858, %v1304
  %v1306 = vpop.f32.mrb[0].mxu0
  %v1307 = vadd.f32 %v862, %v1306
  %v1308 = vpop.f32.mrb[0].mxu0
  %v1309 = vadd.f32 %v858, %v1308
  %v1310 = vpop.f32.mrb[0].mxu0
  %v1311 = vadd.f32 %v862, %v1310
  %1312 = vmatprep.mubr.bf16.mxu0 %v843
  %1313 = vmatmul.mubr.bf16.gmra.mrb[0].mxu0 %v842
  %v1314 = vpop.f32.mrb[0].mxu0
  %v1315 = vadd.f32 %v858, %v1314
  %v1316 = vpop.f32.mrb[0].mxu0
  %v1317 = vadd.f32 %v862, %v1316
  %v1318 = vpop.f32.mrb[0].mxu0
  %v1319 = vadd.f32 %v858, %v1318
  %v1320 = vpop.f32.mrb[0].mxu0
  %v1321 = vadd.f32 %v862, %v1320
  %1322 = vmatprep.mubr.bf16.mxu0 %v845
  %1323 = vmatmul.mubr.bf16.gmra.mrb[0].mxu0 %v844
  %v1324 = vpop.f32.mrb[0].mxu0
  %v1325 = vadd.f32 %v858, %v1324
  %v1326 = vpop.f32.mrb[0].mxu0
  %v1327 = vadd.f32 %v862, %v1326
  %v1328 = vpop.f32.mrb[0].mxu0
  %v1329 = vadd.f32 %v858, %v1328
  %v1330 = vpop.f32.mrb[0].mxu0
  %v1331 = vadd.f32 %v862, %v1330
  %1332 = vdwg.mxu0
  %v1333 = vmax.f32 %v1222, 0.0
  %v1334 = vmax.f32 %v1224, 0.0
  %v1335 = vmax.f32 %v1295, 0.0
  %v1336 = vmax.f32 %v1297, 0.0
  %v1337 = vmax.f32 %v1226, 0.0
  %v1338 = vmax.f32 %v1228, 0.0
  %v1339 = vmax.f32 %v1299, 0.0
  %v1340 = vmax.f32 %v1301, 0.0
  %v1341 = vmax.f32 %v1232, 0.0
  %v1342 = vmax.f32 %v1234, 0.0
  %v1343 = vmax.f32 %v1305, 0.0
  %v1344 = vmax.f32 %v1307, 0.0
  %v1345 = vmax.f32 %v1236, 0.0
  %v1346 = vmax.f32 %v1238, 0.0
  %v1347 = vmax.f32 %v1309, 0.0
  %v1348 = vmax.f32 %v1311, 0.0
  %v1349 = vmax.f32 %v1242, 0.0
  %v1350 = vmax.f32 %v1244, 0.0
  %v1351 = vmax.f32 %v1315, 0.0
  %v1352 = vmax.f32 %v1317, 0.0
  %v1353 = vmax.f32 %v1246, 0.0
  %v1354 = vmax.f32 %v1248, 0.0
  %v1355 = vmax.f32 %v1319, 0.0
  %v1356 = vmax.f32 %v1321, 0.0
  %v1357 = vmax.f32 %v1252, 0.0
  %v1358 = vmax.f32 %v1254, 0.0
  %v1359 = vmax.f32 %v1325, 0.0
  %v1360 = vmax.f32 %v1327, 0.0
  %v1361 = vmax.f32 %v1256, 0.0
  %v1362 = vmax.f32 %v1258, 0.0
  %v1363 = vmax.f32 %v1329, 0.0
  %v1364 = vmax.f32 %v1331, 0.0
  %v1365 = vpack.c.bf16 %v1337, %v1333
  %v1366 = vpack.c.bf16 %v1338, %v1334
  %v1367 = vpack.c.bf16 %v1339, %v1335
  %v1368 = vpack.c.bf16 %v1340, %v1336
  %v1369 = vpack.c.bf16 %v1345, %v1341
  %v1370 = vpack.c.bf16 %v1346, %v1342
  %v1371 = vpack.c.bf16 %v1347, %v1343
  %v1372 = vpack.c.bf16 %v1348, %v1344
  %v1373 = vpack.c.bf16 %v1353, %v1349
  %v1374 = vpack.c.bf16 %v1354, %v1350
  %v1375 = vpack.c.bf16 %v1355, %v1351
  %v1376 = vpack.c.bf16 %v1356, %v1352
  %v1377 = vpack.c.bf16 %v1361, %v1357
  %v1378 = vpack.c.bf16 %v1362, %v1358
  %v1379 = vpack.c.bf16 %v1363, %v1359
  %v1380 = vpack.c.bf16 %v1364, %v1360
  %v1382 = vlaneseq
  %v1383 = vshrl.u32 %v1382, 7
  %v1384 = vsub.s32 0, %v1383
  %v1385 = vrot.slane %v416, %v1384
  %v1386 = vlaneseq
  %v1387 = vshrl.u32 %v1386, 7
  %v1388 = vsub.s32 1, %v1387
  %v1389 = vrot.slane %v416, %v1388
  %v1390 = vlaneseq
  %v1391 = vshrl.u32 %v1390, 7
  %v1392 = vsub.s32 2, %v1391
  %v1393 = vrot.slane %v416, %v1392
  %v1394 = vlaneseq
  %v1395 = vshrl.u32 %v1394, 7
  %v1396 = vsub.s32 3, %v1395
  %v1397 = vrot.slane %v416, %v1396
  %v1398 = vlaneseq
  %v1399 = vshrl.u32 %v1398, 7
  %v1400 = vsub.s32 4, %v1399
  %v1401 = vrot.slane %v416, %v1400
  %v1402 = vlaneseq
  %v1403 = vshrl.u32 %v1402, 7
  %v1404 = vsub.s32 5, %v1403
  %v1405 = vrot.slane %v416, %v1404
  %v1406 = vlaneseq
  %v1407 = vshrl.u32 %v1406, 7
  %v1408 = vsub.s32 6, %v1407
  %v1409 = vrot.slane %v416, %v1408
  %v1410 = vlaneseq
  %v1411 = vshrl.u32 %v1410, 7
  %v1412 = vsub.s32 7, %v1411
  %v1413 = vrot.slane %v416, %v1412
  %v1678 = vunpack.c.l.b16 %v160
  %v1679 = vunpack.c.h.b16 %v160
  %v1680 = vunpack.c.l.b16 %v161
  %v1681 = vunpack.c.h.b16 %v161
  %v1682 = vunpack.c.l.b16 %v162
  %v1683 = vunpack.c.h.b16 %v162
  %v1684 = vunpack.c.l.b16 %v163
  %v1685 = vunpack.c.h.b16 %v163
  %v1686 = vunpack.c.l.b16 %v164
  %v1687 = vunpack.c.h.b16 %v164
  %v1688 = vunpack.c.l.b16 %v165
  %v1689 = vunpack.c.h.b16 %v165
  %v1690 = vunpack.c.l.b16 %v166
  %v1691 = vunpack.c.h.b16 %v166
  %v1692 = vunpack.c.l.b16 %v167
  %v1693 = vunpack.c.h.b16 %v167
  %v1694 = vunpack.c.l.b16 %v168
  %v1695 = vunpack.c.h.b16 %v168
  %v1696 = vunpack.c.l.b16 %v169
  %v1697 = vunpack.c.h.b16 %v169
  %v1698 = vunpack.c.l.b16 %v170
  %v1699 = vunpack.c.h.b16 %v170
  %v1700 = vunpack.c.l.b16 %v171
  %v1701 = vunpack.c.h.b16 %v171
  %v1702 = vunpack.c.l.b16 %v172
  %v1703 = vunpack.c.h.b16 %v172
  %v1704 = vunpack.c.l.b16 %v173
  %v1705 = vunpack.c.h.b16 %v173
  %v1706 = vunpack.c.l.b16 %v174
  %v1707 = vunpack.c.h.b16 %v174
  %v1708 = vunpack.c.l.b16 %v175
  %v1709 = vunpack.c.h.b16 %v175
  %v1710 = vunpack.c.l.b16 %v176
  %v1711 = vunpack.c.h.b16 %v176
  %v1712 = vunpack.c.l.b16 %v177
  %v1713 = vunpack.c.h.b16 %v177
  %v1714 = vunpack.c.l.b16 %v178
  %v1715 = vunpack.c.h.b16 %v178
  %v1716 = vunpack.c.l.b16 %v179
  %v1717 = vunpack.c.h.b16 %v179
  %v1718 = vunpack.c.l.b16 %v180
  %v1719 = vunpack.c.h.b16 %v180
  %v1720 = vunpack.c.l.b16 %v181
  %v1721 = vunpack.c.h.b16 %v181
  %v1722 = vunpack.c.l.b16 %v182
  %v1723 = vunpack.c.h.b16 %v182
  %v1724 = vunpack.c.l.b16 %v183
  %v1725 = vunpack.c.h.b16 %v183
  %v1726 = vunpack.c.l.b16 %v184
  %v1727 = vunpack.c.h.b16 %v184
  %v1728 = vunpack.c.l.b16 %v185
  %v1729 = vunpack.c.h.b16 %v185
  %v1730 = vunpack.c.l.b16 %v186
  %v1731 = vunpack.c.h.b16 %v186
  %v1732 = vunpack.c.l.b16 %v187
  %v1733 = vunpack.c.h.b16 %v187
  %v1734 = vunpack.c.l.b16 %v188
  %v1735 = vunpack.c.h.b16 %v188
  %v1736 = vunpack.c.l.b16 %v189
  %v1737 = vunpack.c.h.b16 %v189
  %v1738 = vunpack.c.l.b16 %v190
  %v1739 = vunpack.c.h.b16 %v190
  %v1740 = vunpack.c.l.b16 %v191
  %v1741 = vunpack.c.h.b16 %v191
  %v1742 = vunpack.c.l.b16 %v192
  %v1743 = vunpack.c.h.b16 %v192
  %v1744 = vunpack.c.l.b16 %v193
  %v1745 = vunpack.c.h.b16 %v193
  %v1746 = vunpack.c.l.b16 %v194
  %v1747 = vunpack.c.h.b16 %v194
  %v1748 = vunpack.c.l.b16 %v195
  %v1749 = vunpack.c.h.b16 %v195
  %v1750 = vunpack.c.l.b16 %v196
  %v1751 = vunpack.c.h.b16 %v196
  %v1752 = vunpack.c.l.b16 %v197
  %v1753 = vunpack.c.h.b16 %v197
  %v1754 = vunpack.c.l.b16 %v198
  %v1755 = vunpack.c.h.b16 %v198
  %v1756 = vunpack.c.l.b16 %v199
  %v1757 = vunpack.c.h.b16 %v199
  %v1758 = vunpack.c.l.b16 %v200
  %v1759 = vunpack.c.h.b16 %v200
  %v1760 = vunpack.c.l.b16 %v201
  %v1761 = vunpack.c.h.b16 %v201
  %v1762 = vunpack.c.l.b16 %v202
  %v1763 = vunpack.c.h.b16 %v202
  %v1764 = vunpack.c.l.b16 %v203
  %v1765 = vunpack.c.h.b16 %v203
  %v1766 = vunpack.c.l.b16 %v204
  %v1767 = vunpack.c.h.b16 %v204
  %v1768 = vunpack.c.l.b16 %v205
  %v1769 = vunpack.c.h.b16 %v205
  %v1770 = vunpack.c.l.b16 %v206
  %v1771 = vunpack.c.h.b16 %v206
  %v1772 = vunpack.c.l.b16 %v207
  %v1773 = vunpack.c.h.b16 %v207
  %v1774 = vunpack.c.l.b16 %v208
  %v1775 = vunpack.c.h.b16 %v208
  %v1776 = vunpack.c.l.b16 %v209
  %v1777 = vunpack.c.h.b16 %v209
  %v1778 = vunpack.c.l.b16 %v210
  %v1779 = vunpack.c.h.b16 %v210
  %v1780 = vunpack.c.l.b16 %v211
  %v1781 = vunpack.c.h.b16 %v211
  %v1782 = vunpack.c.l.b16 %v212
  %v1783 = vunpack.c.h.b16 %v212
  %v1784 = vunpack.c.l.b16 %v213
  %v1785 = vunpack.c.h.b16 %v213
  %v1786 = vunpack.c.l.b16 %v214
  %v1787 = vunpack.c.h.b16 %v214
  %v1788 = vunpack.c.l.b16 %v215
  %v1789 = vunpack.c.h.b16 %v215
  %v1790 = vunpack.c.l.b16 %v216
  %v1791 = vunpack.c.h.b16 %v216
  %v1792 = vunpack.c.l.b16 %v217
  %v1793 = vunpack.c.h.b16 %v217
  %v1794 = vunpack.c.l.b16 %v218
  %v1795 = vunpack.c.h.b16 %v218
  %v1796 = vunpack.c.l.b16 %v219
  %v1797 = vunpack.c.h.b16 %v219
  %v1798 = vunpack.c.l.b16 %v220
  %v1799 = vunpack.c.h.b16 %v220
  %v1800 = vunpack.c.l.b16 %v221
  %v1801 = vunpack.c.h.b16 %v221
  %v1802 = vunpack.c.l.b16 %v222
  %v1803 = vunpack.c.h.b16 %v222
  %v1804 = vunpack.c.l.b16 %v223
  %v1805 = vunpack.c.h.b16 %v223
  %v1806 = vunpack.c.l.b16 %v224
  %v1807 = vunpack.c.h.b16 %v224
  %v1808 = vunpack.c.l.b16 %v225
  %v1809 = vunpack.c.h.b16 %v225
  %v1810 = vunpack.c.l.b16 %v226
  %v1811 = vunpack.c.h.b16 %v226
  %v1812 = vunpack.c.l.b16 %v227
  %v1813 = vunpack.c.h.b16 %v227
  %v1814 = vunpack.c.l.b16 %v228
  %v1815 = vunpack.c.h.b16 %v228
  %v1816 = vunpack.c.l.b16 %v229
  %v1817 = vunpack.c.h.b16 %v229
  %v1818 = vunpack.c.l.b16 %v230
  %v1819 = vunpack.c.h.b16 %v230
  %v1820 = vunpack.c.l.b16 %v231
  %v1821 = vunpack.c.h.b16 %v231
  %v1822 = vunpack.c.l.b16 %v232
  %v1823 = vunpack.c.h.b16 %v232
  %v1824 = vunpack.c.l.b16 %v233
  %v1825 = vunpack.c.h.b16 %v233
  %v1826 = vunpack.c.l.b16 %v234
  %v1827 = vunpack.c.h.b16 %v234
  %v1828 = vunpack.c.l.b16 %v235
  %v1829 = vunpack.c.h.b16 %v235
  %v1830 = vunpack.c.l.b16 %v236
  %v1831 = vunpack.c.h.b16 %v236
  %v1832 = vunpack.c.l.b16 %v237
  %v1833 = vunpack.c.h.b16 %v237
  %v1834 = vunpack.c.l.b16 %v238
  %v1835 = vunpack.c.h.b16 %v238
  %v1836 = vunpack.c.l.b16 %v239
  %v1837 = vunpack.c.h.b16 %v239
  %v1838 = vunpack.c.l.b16 %v240
  %v1839 = vunpack.c.h.b16 %v240
  %v1840 = vunpack.c.l.b16 %v241
  %v1841 = vunpack.c.h.b16 %v241
  %v1842 = vunpack.c.l.b16 %v242
  %v1843 = vunpack.c.h.b16 %v242
  %v1844 = vunpack.c.l.b16 %v243
  %v1845 = vunpack.c.h.b16 %v243
  %v1846 = vunpack.c.l.b16 %v244
  %v1847 = vunpack.c.h.b16 %v244
  %v1848 = vunpack.c.l.b16 %v245
  %v1849 = vunpack.c.h.b16 %v245
  %v1850 = vunpack.c.l.b16 %v246
  %v1851 = vunpack.c.h.b16 %v246
  %v1852 = vunpack.c.l.b16 %v247
  %v1853 = vunpack.c.h.b16 %v247
  %v1854 = vunpack.c.l.b16 %v248
  %v1855 = vunpack.c.h.b16 %v248
  %v1856 = vunpack.c.l.b16 %v249
  %v1857 = vunpack.c.h.b16 %v249
  %v1858 = vunpack.c.l.b16 %v250
  %v1859 = vunpack.c.h.b16 %v250
  %v1860 = vunpack.c.l.b16 %v251
  %v1861 = vunpack.c.h.b16 %v251
  %v1862 = vunpack.c.l.b16 %v252
  %v1863 = vunpack.c.h.b16 %v252
  %v1864 = vunpack.c.l.b16 %v253
  %v1865 = vunpack.c.h.b16 %v253
  %v1866 = vunpack.c.l.b16 %v254
  %v1867 = vunpack.c.h.b16 %v254
  %v1868 = vunpack.c.l.b16 %v255
  %v1869 = vunpack.c.h.b16 %v255
  %v1870 = vunpack.c.l.b16 %v256
  %v1871 = vunpack.c.h.b16 %v256
  %v1872 = vunpack.c.l.b16 %v257
  %v1873 = vunpack.c.h.b16 %v257
  %v1874 = vunpack.c.l.b16 %v258
  %v1875 = vunpack.c.h.b16 %v258
  %v1876 = vunpack.c.l.b16 %v259
  %v1877 = vunpack.c.h.b16 %v259
  %v1878 = vunpack.c.l.b16 %v260
  %v1879 = vunpack.c.h.b16 %v260
  %v1880 = vunpack.c.l.b16 %v261
  %v1881 = vunpack.c.h.b16 %v261
  %v1882 = vunpack.c.l.b16 %v262
  %v1883 = vunpack.c.h.b16 %v262
  %v1884 = vunpack.c.l.b16 %v263
  %v1885 = vunpack.c.h.b16 %v263
  %v1886 = vunpack.c.l.b16 %v264
  %v1887 = vunpack.c.h.b16 %v264
  %v1888 = vunpack.c.l.b16 %v265
  %v1889 = vunpack.c.h.b16 %v265
  %v1890 = vunpack.c.l.b16 %v266
  %v1891 = vunpack.c.h.b16 %v266
  %v1892 = vunpack.c.l.b16 %v267
  %v1893 = vunpack.c.h.b16 %v267
  %v1894 = vunpack.c.l.b16 %v268
  %v1895 = vunpack.c.h.b16 %v268
  %v1896 = vunpack.c.l.b16 %v269
  %v1897 = vunpack.c.h.b16 %v269
  %v1898 = vunpack.c.l.b16 %v270
  %v1899 = vunpack.c.h.b16 %v270
  %v1900 = vunpack.c.l.b16 %v271
  %v1901 = vunpack.c.h.b16 %v271
  %v1902 = vunpack.c.l.b16 %v272
  %v1903 = vunpack.c.h.b16 %v272
  %v1904 = vunpack.c.l.b16 %v273
  %v1905 = vunpack.c.h.b16 %v273
  %v1906 = vunpack.c.l.b16 %v274
  %v1907 = vunpack.c.h.b16 %v274
  %v1908 = vunpack.c.l.b16 %v275
  %v1909 = vunpack.c.h.b16 %v275
  %v1910 = vunpack.c.l.b16 %v276
  %v1911 = vunpack.c.h.b16 %v276
  %v1912 = vunpack.c.l.b16 %v277
  %v1913 = vunpack.c.h.b16 %v277
  %v1914 = vunpack.c.l.b16 %v278
  %v1915 = vunpack.c.h.b16 %v278
  %v1916 = vunpack.c.l.b16 %v279
  %v1917 = vunpack.c.h.b16 %v279
  %v1918 = vunpack.c.l.b16 %v280
  %v1919 = vunpack.c.h.b16 %v280
  %v1920 = vunpack.c.l.b16 %v281
  %v1921 = vunpack.c.h.b16 %v281
  %v1922 = vunpack.c.l.b16 %v282
  %v1923 = vunpack.c.h.b16 %v282
  %v1924 = vunpack.c.l.b16 %v283
  %v1925 = vunpack.c.h.b16 %v283
  %v1926 = vunpack.c.l.b16 %v284
  %v1927 = vunpack.c.h.b16 %v284
  %v1928 = vunpack.c.l.b16 %v285
  %v1929 = vunpack.c.h.b16 %v285
  %v1930 = vunpack.c.l.b16 %v286
  %v1931 = vunpack.c.h.b16 %v286
  %v1932 = vunpack.c.l.b16 %v287
  %v1933 = vunpack.c.h.b16 %v287
  %v1934 = vunpack.c.l.b16 %v288
  %v1935 = vunpack.c.h.b16 %v288
  %v1936 = vunpack.c.l.b16 %v289
  %v1937 = vunpack.c.h.b16 %v289
  %v1938 = vunpack.c.l.b16 %v290
  %v1939 = vunpack.c.h.b16 %v290
  %v1940 = vunpack.c.l.b16 %v291
  %v1941 = vunpack.c.h.b16 %v291
  %v1942 = vunpack.c.l.b16 %v292
  %v1943 = vunpack.c.h.b16 %v292
  %v1944 = vunpack.c.l.b16 %v293
  %v1945 = vunpack.c.h.b16 %v293
  %v1946 = vunpack.c.l.b16 %v294
  %v1947 = vunpack.c.h.b16 %v294
  %v1948 = vunpack.c.l.b16 %v295
  %v1949 = vunpack.c.h.b16 %v295
  %v1950 = vunpack.c.l.b16 %v296
  %v1951 = vunpack.c.h.b16 %v296
  %v1952 = vunpack.c.l.b16 %v297
  %v1953 = vunpack.c.h.b16 %v297
  %v1954 = vunpack.c.l.b16 %v298
  %v1955 = vunpack.c.h.b16 %v298
  %v1956 = vunpack.c.l.b16 %v299
  %v1957 = vunpack.c.h.b16 %v299
  %v1958 = vunpack.c.l.b16 %v300
  %v1959 = vunpack.c.h.b16 %v300
  %v1960 = vunpack.c.l.b16 %v301
  %v1961 = vunpack.c.h.b16 %v301
  %v1962 = vunpack.c.l.b16 %v302
  %v1963 = vunpack.c.h.b16 %v302
  %v1964 = vunpack.c.l.b16 %v303
  %v1965 = vunpack.c.h.b16 %v303
  %v1966 = vunpack.c.l.b16 %v304
  %v1967 = vunpack.c.h.b16 %v304
  %v1968 = vunpack.c.l.b16 %v305
  %v1969 = vunpack.c.h.b16 %v305
  %v1970 = vunpack.c.l.b16 %v306
  %v1971 = vunpack.c.h.b16 %v306
  %v1972 = vunpack.c.l.b16 %v307
  %v1973 = vunpack.c.h.b16 %v307
  %v1974 = vunpack.c.l.b16 %v308
  %v1975 = vunpack.c.h.b16 %v308
  %v1976 = vunpack.c.l.b16 %v309
  %v1977 = vunpack.c.h.b16 %v309
  %v1978 = vunpack.c.l.b16 %v310
  %v1979 = vunpack.c.h.b16 %v310
  %v1980 = vunpack.c.l.b16 %v311
  %v1981 = vunpack.c.h.b16 %v311
  %v1982 = vunpack.c.l.b16 %v312
  %v1983 = vunpack.c.h.b16 %v312
  %v1984 = vunpack.c.l.b16 %v313
  %v1985 = vunpack.c.h.b16 %v313
  %v1986 = vunpack.c.l.b16 %v314
  %v1987 = vunpack.c.h.b16 %v314
  %v1988 = vunpack.c.l.b16 %v315
  %v1989 = vunpack.c.h.b16 %v315
  %v1990 = vunpack.c.l.b16 %v316
  %v1991 = vunpack.c.h.b16 %v316
  %v1992 = vunpack.c.l.b16 %v317
  %v1993 = vunpack.c.h.b16 %v317
  %v1994 = vunpack.c.l.b16 %v318
  %v1995 = vunpack.c.h.b16 %v318
  %v1996 = vunpack.c.l.b16 %v319
  %v1997 = vunpack.c.h.b16 %v319
  %v1998 = vunpack.c.l.b16 %v320
  %v1999 = vunpack.c.h.b16 %v320
  %v2000 = vunpack.c.l.b16 %v321
  %v2001 = vunpack.c.h.b16 %v321
  %v2002 = vunpack.c.l.b16 %v322
  %v2003 = vunpack.c.h.b16 %v322
  %v2004 = vunpack.c.l.b16 %v323
  %v2005 = vunpack.c.h.b16 %v323
  %v2006 = vunpack.c.l.b16 %v324
  %v2007 = vunpack.c.h.b16 %v324
  %v2008 = vunpack.c.l.b16 %v325
  %v2009 = vunpack.c.h.b16 %v325
  %v2010 = vunpack.c.l.b16 %v326
  %v2011 = vunpack.c.h.b16 %v326
  %v2012 = vunpack.c.l.b16 %v327
  %v2013 = vunpack.c.h.b16 %v327
  %v2014 = vunpack.c.l.b16 %v328
  %v2015 = vunpack.c.h.b16 %v328
  %v2016 = vunpack.c.l.b16 %v329
  %v2017 = vunpack.c.h.b16 %v329
  %v2018 = vunpack.c.l.b16 %v330
  %v2019 = vunpack.c.h.b16 %v330
  %v2020 = vunpack.c.l.b16 %v331
  %v2021 = vunpack.c.h.b16 %v331
  %v2022 = vunpack.c.l.b16 %v332
  %v2023 = vunpack.c.h.b16 %v332
  %v2024 = vunpack.c.l.b16 %v333
  %v2025 = vunpack.c.h.b16 %v333
  %v2026 = vunpack.c.l.b16 %v334
  %v2027 = vunpack.c.h.b16 %v334
  %v2028 = vunpack.c.l.b16 %v335
  %v2029 = vunpack.c.h.b16 %v335
  %v2030 = vunpack.c.l.b16 %v336
  %v2031 = vunpack.c.h.b16 %v336
  %v2032 = vunpack.c.l.b16 %v337
  %v2033 = vunpack.c.h.b16 %v337
  %v2034 = vunpack.c.l.b16 %v338
  %v2035 = vunpack.c.h.b16 %v338
  %v2036 = vunpack.c.l.b16 %v339
  %v2037 = vunpack.c.h.b16 %v339
  %v2038 = vunpack.c.l.b16 %v340
  %v2039 = vunpack.c.h.b16 %v340
  %v2040 = vunpack.c.l.b16 %v341
  %v2041 = vunpack.c.h.b16 %v341
  %v2042 = vunpack.c.l.b16 %v342
  %v2043 = vunpack.c.h.b16 %v342
  %v2044 = vunpack.c.l.b16 %v343
  %v2045 = vunpack.c.h.b16 %v343
  %v2046 = vunpack.c.l.b16 %v344
  %v2047 = vunpack.c.h.b16 %v344
  %v2048 = vunpack.c.l.b16 %v345
  %v2049 = vunpack.c.h.b16 %v345
  %v2050 = vunpack.c.l.b16 %v346
  %v2051 = vunpack.c.h.b16 %v346
  %v2052 = vunpack.c.l.b16 %v347
  %v2053 = vunpack.c.h.b16 %v347
  %v2054 = vunpack.c.l.b16 %v348
  %v2055 = vunpack.c.h.b16 %v348
  %v2056 = vunpack.c.l.b16 %v349
  %v2057 = vunpack.c.h.b16 %v349
  %v2058 = vunpack.c.l.b16 %v350
  %v2059 = vunpack.c.h.b16 %v350
  %v2060 = vunpack.c.l.b16 %v351
  %v2061 = vunpack.c.h.b16 %v351
  %v2062 = vunpack.c.l.b16 %v352
  %v2063 = vunpack.c.h.b16 %v352
  %v2064 = vunpack.c.l.b16 %v353
  %v2065 = vunpack.c.h.b16 %v353
  %v2066 = vunpack.c.l.b16 %v354
  %v2067 = vunpack.c.h.b16 %v354
  %v2068 = vunpack.c.l.b16 %v355
  %v2069 = vunpack.c.h.b16 %v355
  %v2070 = vunpack.c.l.b16 %v356
  %v2071 = vunpack.c.h.b16 %v356
  %v2072 = vunpack.c.l.b16 %v357
  %v2073 = vunpack.c.h.b16 %v357
  %v2074 = vunpack.c.l.b16 %v358
  %v2075 = vunpack.c.h.b16 %v358
  %v2076 = vunpack.c.l.b16 %v359
  %v2077 = vunpack.c.h.b16 %v359
  %v2078 = vunpack.c.l.b16 %v360
  %v2079 = vunpack.c.h.b16 %v360
  %v2080 = vunpack.c.l.b16 %v361
  %v2081 = vunpack.c.h.b16 %v361
  %v2082 = vunpack.c.l.b16 %v362
  %v2083 = vunpack.c.h.b16 %v362
  %v2084 = vunpack.c.l.b16 %v363
  %v2085 = vunpack.c.h.b16 %v363
  %v2086 = vunpack.c.l.b16 %v364
  %v2087 = vunpack.c.h.b16 %v364
  %v2088 = vunpack.c.l.b16 %v365
  %v2089 = vunpack.c.h.b16 %v365
  %v2090 = vunpack.c.l.b16 %v366
  %v2091 = vunpack.c.h.b16 %v366
  %v2092 = vunpack.c.l.b16 %v367
  %v2093 = vunpack.c.h.b16 %v367
  %v2094 = vunpack.c.l.b16 %v368
  %v2095 = vunpack.c.h.b16 %v368
  %v2096 = vunpack.c.l.b16 %v369
  %v2097 = vunpack.c.h.b16 %v369
  %v2098 = vunpack.c.l.b16 %v370
  %v2099 = vunpack.c.h.b16 %v370
  %v2100 = vunpack.c.l.b16 %v371
  %v2101 = vunpack.c.h.b16 %v371
  %v2102 = vunpack.c.l.b16 %v372
  %v2103 = vunpack.c.h.b16 %v372
  %v2104 = vunpack.c.l.b16 %v373
  %v2105 = vunpack.c.h.b16 %v373
  %v2106 = vunpack.c.l.b16 %v374
  %v2107 = vunpack.c.h.b16 %v374
  %v2108 = vunpack.c.l.b16 %v375
  %v2109 = vunpack.c.h.b16 %v375
  %v2110 = vunpack.c.l.b16 %v376
  %v2111 = vunpack.c.h.b16 %v376
  %v2112 = vunpack.c.l.b16 %v377
  %v2113 = vunpack.c.h.b16 %v377
  %v2114 = vunpack.c.l.b16 %v378
  %v2115 = vunpack.c.h.b16 %v378
  %v2116 = vunpack.c.l.b16 %v379
  %v2117 = vunpack.c.h.b16 %v379
  %v2118 = vunpack.c.l.b16 %v380
  %v2119 = vunpack.c.h.b16 %v380
  %v2120 = vunpack.c.l.b16 %v381
  %v2121 = vunpack.c.h.b16 %v381
  %v2122 = vunpack.c.l.b16 %v382
  %v2123 = vunpack.c.h.b16 %v382
  %v2124 = vunpack.c.l.b16 %v383
  %v2125 = vunpack.c.h.b16 %v383
  %v2126 = vunpack.c.l.b16 %v384
  %v2127 = vunpack.c.h.b16 %v384
  %v2128 = vunpack.c.l.b16 %v385
  %v2129 = vunpack.c.h.b16 %v385
  %v2130 = vunpack.c.l.b16 %v386
  %v2131 = vunpack.c.h.b16 %v386
  %v2132 = vunpack.c.l.b16 %v387
  %v2133 = vunpack.c.h.b16 %v387
  %v2134 = vunpack.c.l.b16 %v388
  %v2135 = vunpack.c.h.b16 %v388
  %v2136 = vunpack.c.l.b16 %v389
  %v2137 = vunpack.c.h.b16 %v389
  %v2138 = vunpack.c.l.b16 %v390
  %v2139 = vunpack.c.h.b16 %v390
  %v2140 = vunpack.c.l.b16 %v391
  %v2141 = vunpack.c.h.b16 %v391
  %v2142 = vunpack.c.l.b16 %v392
  %v2143 = vunpack.c.h.b16 %v392
  %v2144 = vunpack.c.l.b16 %v393
  %v2145 = vunpack.c.h.b16 %v393
  %v2146 = vunpack.c.l.b16 %v394
  %v2147 = vunpack.c.h.b16 %v394
  %v2148 = vunpack.c.l.b16 %v395
  %v2149 = vunpack.c.h.b16 %v395
  %v2150 = vunpack.c.l.b16 %v396
  %v2151 = vunpack.c.h.b16 %v396
  %v2152 = vunpack.c.l.b16 %v397
  %v2153 = vunpack.c.h.b16 %v397
  %v2154 = vunpack.c.l.b16 %v398
  %v2155 = vunpack.c.h.b16 %v398
  %v2156 = vunpack.c.l.b16 %v399
  %v2157 = vunpack.c.h.b16 %v399
  %v2158 = vunpack.c.l.b16 %v400
  %v2159 = vunpack.c.h.b16 %v400
  %v2160 = vunpack.c.l.b16 %v401
  %v2161 = vunpack.c.h.b16 %v401
  %v2162 = vunpack.c.l.b16 %v402
  %v2163 = vunpack.c.h.b16 %v402
  %v2164 = vunpack.c.l.b16 %v403
  %v2165 = vunpack.c.h.b16 %v403
  %v2166 = vunpack.c.l.b16 %v404
  %v2167 = vunpack.c.h.b16 %v404
  %v2168 = vunpack.c.l.b16 %v405
  %v2169 = vunpack.c.h.b16 %v405
  %v2170 = vunpack.c.l.b16 %v406
  %v2171 = vunpack.c.h.b16 %v406
  %v2172 = vunpack.c.l.b16 %v407
  %v2173 = vunpack.c.h.b16 %v407
  %v2174 = vunpack.c.l.b16 %v408
  %v2175 = vunpack.c.h.b16 %v408
  %v2176 = vunpack.c.l.b16 %v409
  %v2177 = vunpack.c.h.b16 %v409
  %v2178 = vunpack.c.l.b16 %v410
  %v2179 = vunpack.c.h.b16 %v410
  %v2180 = vunpack.c.l.b16 %v411
  %v2181 = vunpack.c.h.b16 %v411
  %v2182 = vunpack.c.l.b16 %v412
  %v2183 = vunpack.c.h.b16 %v412
  %v2184 = vunpack.c.l.b16 %v413
  %v2185 = vunpack.c.h.b16 %v413
  %v2186 = vunpack.c.l.b16 %v414
  %v2187 = vunpack.c.h.b16 %v414
  %v2188 = vunpack.c.l.b16 %v415
  %v2189 = vunpack.c.h.b16 %v415
  %v2190 = vpack.c.b16 %v1686, %v1678
  %v2191 = vpack.c.b16 %v1687, %v1679
  %v2192 = vpack.c.b16 %v1688, %v1680
  %v2193 = vpack.c.b16 %v1689, %v1681
  %v2194 = vpack.c.b16 %v1690, %v1682
  %v2195 = vpack.c.b16 %v1691, %v1683
  %v2196 = vpack.c.b16 %v1692, %v1684
  %v2197 = vpack.c.b16 %v1693, %v1685
  %v2198 = vpack.c.b16 %v1702, %v1694
  %v2199 = vpack.c.b16 %v1703, %v1695
  %v2200 = vpack.c.b16 %v1704, %v1696
  %v2201 = vpack.c.b16 %v1705, %v1697
  %v2202 = vpack.c.b16 %v1706, %v1698
  %v2203 = vpack.c.b16 %v1707, %v1699
  %v2204 = vpack.c.b16 %v1708, %v1700
  %v2205 = vpack.c.b16 %v1709, %v1701
  %v2206 = vpack.c.b16 %v1718, %v1710
  %v2207 = vpack.c.b16 %v1719, %v1711
  %v2208 = vpack.c.b16 %v1720, %v1712
  %v2209 = vpack.c.b16 %v1721, %v1713
  %v2210 = vpack.c.b16 %v1722, %v1714
  %v2211 = vpack.c.b16 %v1723, %v1715
  %v2212 = vpack.c.b16 %v1724, %v1716
  %v2213 = vpack.c.b16 %v1725, %v1717
  %v2214 = vpack.c.b16 %v1734, %v1726
  %v2215 = vpack.c.b16 %v1735, %v1727
  %v2216 = vpack.c.b16 %v1736, %v1728
  %v2217 = vpack.c.b16 %v1737, %v1729
  %v2218 = vpack.c.b16 %v1738, %v1730
  %v2219 = vpack.c.b16 %v1739, %v1731
  %v2220 = vpack.c.b16 %v1740, %v1732
  %v2221 = vpack.c.b16 %v1741, %v1733
  %v2222 = vpack.c.b16 %v1750, %v1742
  %v2223 = vpack.c.b16 %v1751, %v1743
  %v2224 = vpack.c.b16 %v1752, %v1744
  %v2225 = vpack.c.b16 %v1753, %v1745
  %v2226 = vpack.c.b16 %v1754, %v1746
  %v2227 = vpack.c.b16 %v1755, %v1747
  %v2228 = vpack.c.b16 %v1756, %v1748
  %v2229 = vpack.c.b16 %v1757, %v1749
  %v2230 = vpack.c.b16 %v1766, %v1758
  %v2231 = vpack.c.b16 %v1767, %v1759
  %v2232 = vpack.c.b16 %v1768, %v1760
  %v2233 = vpack.c.b16 %v1769, %v1761
  %v2234 = vpack.c.b16 %v1770, %v1762
  %v2235 = vpack.c.b16 %v1771, %v1763
  %v2236 = vpack.c.b16 %v1772, %v1764
  %v2237 = vpack.c.b16 %v1773, %v1765
  %v2238 = vpack.c.b16 %v1782, %v1774
  %v2239 = vpack.c.b16 %v1783, %v1775
  %v2240 = vpack.c.b16 %v1784, %v1776
  %v2241 = vpack.c.b16 %v1785, %v1777
  %v2242 = vpack.c.b16 %v1786, %v1778
  %v2243 = vpack.c.b16 %v1787, %v1779
  %v2244 = vpack.c.b16 %v1788, %v1780
  %v2245 = vpack.c.b16 %v1789, %v1781
  %v2246 = vpack.c.b16 %v1798, %v1790
  %v2247 = vpack.c.b16 %v1799, %v1791
  %v2248 = vpack.c.b16 %v1800, %v1792
  %v2249 = vpack.c.b16 %v1801, %v1793
  %v2250 = vpack.c.b16 %v1802, %v1794
  %v2251 = vpack.c.b16 %v1803, %v1795
  %v2252 = vpack.c.b16 %v1804, %v1796
  %v2253 = vpack.c.b16 %v1805, %v1797
  %v2254 = vpack.c.b16 %v1814, %v1806
  %v2255 = vpack.c.b16 %v1815, %v1807
  %v2256 = vpack.c.b16 %v1816, %v1808
  %v2257 = vpack.c.b16 %v1817, %v1809
  %v2258 = vpack.c.b16 %v1818, %v1810
  %v2259 = vpack.c.b16 %v1819, %v1811
  %v2260 = vpack.c.b16 %v1820, %v1812
  %v2261 = vpack.c.b16 %v1821, %v1813
  %v2262 = vpack.c.b16 %v1830, %v1822
  %v2263 = vpack.c.b16 %v1831, %v1823
  %v2264 = vpack.c.b16 %v1832, %v1824
  %v2265 = vpack.c.b16 %v1833, %v1825
  %v2266 = vpack.c.b16 %v1834, %v1826
  %v2267 = vpack.c.b16 %v1835, %v1827
  %v2268 = vpack.c.b16 %v1836, %v1828
  %v2269 = vpack.c.b16 %v1837, %v1829
  %v2270 = vpack.c.b16 %v1846, %v1838
  %v2271 = vpack.c.b16 %v1847, %v1839
  %v2272 = vpack.c.b16 %v1848, %v1840
  %v2273 = vpack.c.b16 %v1849, %v1841
  %v2274 = vpack.c.b16 %v1850, %v1842
  %v2275 = vpack.c.b16 %v1851, %v1843
  %v2276 = vpack.c.b16 %v1852, %v1844
  %v2277 = vpack.c.b16 %v1853, %v1845
  %v2278 = vpack.c.b16 %v1862, %v1854
  %v2279 = vpack.c.b16 %v1863, %v1855
  %v2280 = vpack.c.b16 %v1864, %v1856
  %v2281 = vpack.c.b16 %v1865, %v1857
  %v2282 = vpack.c.b16 %v1866, %v1858
  %v2283 = vpack.c.b16 %v1867, %v1859
  %v2284 = vpack.c.b16 %v1868, %v1860
  %v2285 = vpack.c.b16 %v1869, %v1861
  %v2286 = vpack.c.b16 %v1878, %v1870
  %v2287 = vpack.c.b16 %v1879, %v1871
  %v2288 = vpack.c.b16 %v1880, %v1872
  %v2289 = vpack.c.b16 %v1881, %v1873
  %v2290 = vpack.c.b16 %v1882, %v1874
  %v2291 = vpack.c.b16 %v1883, %v1875
  %v2292 = vpack.c.b16 %v1884, %v1876
  %v2293 = vpack.c.b16 %v1885, %v1877
  %v2294 = vpack.c.b16 %v1894, %v1886
  %v2295 = vpack.c.b16 %v1895, %v1887
  %v2296 = vpack.c.b16 %v1896, %v1888
  %v2297 = vpack.c.b16 %v1897, %v1889
  %v2298 = vpack.c.b16 %v1898, %v1890
  %v2299 = vpack.c.b16 %v1899, %v1891
  %v2300 = vpack.c.b16 %v1900, %v1892
  %v2301 = vpack.c.b16 %v1901, %v1893
  %v2302 = vpack.c.b16 %v1910, %v1902
  %v2303 = vpack.c.b16 %v1911, %v1903
  %v2304 = vpack.c.b16 %v1912, %v1904
  %v2305 = vpack.c.b16 %v1913, %v1905
  %v2306 = vpack.c.b16 %v1914, %v1906
  %v2307 = vpack.c.b16 %v1915, %v1907
  %v2308 = vpack.c.b16 %v1916, %v1908
  %v2309 = vpack.c.b16 %v1917, %v1909
  %v2310 = vpack.c.b16 %v1926, %v1918
  %v2311 = vpack.c.b16 %v1927, %v1919
  %v2312 = vpack.c.b16 %v1928, %v1920
  %v2313 = vpack.c.b16 %v1929, %v1921
  %v2314 = vpack.c.b16 %v1930, %v1922
  %v2315 = vpack.c.b16 %v1931, %v1923
  %v2316 = vpack.c.b16 %v1932, %v1924
  %v2317 = vpack.c.b16 %v1933, %v1925
  %v2318 = vpack.c.b16 %v1942, %v1934
  %v2319 = vpack.c.b16 %v1943, %v1935
  %v2320 = vpack.c.b16 %v1944, %v1936
  %v2321 = vpack.c.b16 %v1945, %v1937
  %v2322 = vpack.c.b16 %v1946, %v1938
  %v2323 = vpack.c.b16 %v1947, %v1939
  %v2324 = vpack.c.b16 %v1948, %v1940
  %v2325 = vpack.c.b16 %v1949, %v1941
  %v2326 = vpack.c.b16 %v1958, %v1950
  %v2327 = vpack.c.b16 %v1959, %v1951
  %v2328 = vpack.c.b16 %v1960, %v1952
  %v2329 = vpack.c.b16 %v1961, %v1953
  %v2330 = vpack.c.b16 %v1962, %v1954
  %v2331 = vpack.c.b16 %v1963, %v1955
  %v2332 = vpack.c.b16 %v1964, %v1956
  %v2333 = vpack.c.b16 %v1965, %v1957
  %v2334 = vpack.c.b16 %v1974, %v1966
  %v2335 = vpack.c.b16 %v1975, %v1967
  %v2336 = vpack.c.b16 %v1976, %v1968
  %v2337 = vpack.c.b16 %v1977, %v1969
  %v2338 = vpack.c.b16 %v1978, %v1970
  %v2339 = vpack.c.b16 %v1979, %v1971
  %v2340 = vpack.c.b16 %v1980, %v1972
  %v2341 = vpack.c.b16 %v1981, %v1973
  %v2342 = vpack.c.b16 %v1990, %v1982
  %v2343 = vpack.c.b16 %v1991, %v1983
  %v2344 = vpack.c.b16 %v1992, %v1984
  %v2345 = vpack.c.b16 %v1993, %v1985
  %v2346 = vpack.c.b16 %v1994, %v1986
  %v2347 = vpack.c.b16 %v1995, %v1987
  %v2348 = vpack.c.b16 %v1996, %v1988
  %v2349 = vpack.c.b16 %v1997, %v1989
  %v2350 = vpack.c.b16 %v2006, %v1998
  %v2351 = vpack.c.b16 %v2007, %v1999
  %v2352 = vpack.c.b16 %v2008, %v2000
  %v2353 = vpack.c.b16 %v2009, %v2001
  %v2354 = vpack.c.b16 %v2010, %v2002
  %v2355 = vpack.c.b16 %v2011, %v2003
  %v2356 = vpack.c.b16 %v2012, %v2004
  %v2357 = vpack.c.b16 %v2013, %v2005
  %v2358 = vpack.c.b16 %v2022, %v2014
  %v2359 = vpack.c.b16 %v2023, %v2015
  %v2360 = vpack.c.b16 %v2024, %v2016
  %v2361 = vpack.c.b16 %v2025, %v2017
  %v2362 = vpack.c.b16 %v2026, %v2018
  %v2363 = vpack.c.b16 %v2027, %v2019
  %v2364 = vpack.c.b16 %v2028, %v2020
  %v2365 = vpack.c.b16 %v2029, %v2021
  %v2366 = vpack.c.b16 %v2038, %v2030
  %v2367 = vpack.c.b16 %v2039, %v2031
  %v2368 = vpack.c.b16 %v2040, %v2032
  %v2369 = vpack.c.b16 %v2041, %v2033
  %v2370 = vpack.c.b16 %v2042, %v2034
  %v2371 = vpack.c.b16 %v2043, %v2035
  %v2372 = vpack.c.b16 %v2044, %v2036
  %v2373 = vpack.c.b16 %v2045, %v2037
  %v2374 = vpack.c.b16 %v2054, %v2046
  %v2375 = vpack.c.b16 %v2055, %v2047
  %v2376 = vpack.c.b16 %v2056, %v2048
  %v2377 = vpack.c.b16 %v2057, %v2049
  %v2378 = vpack.c.b16 %v2058, %v2050
  %v2379 = vpack.c.b16 %v2059, %v2051
  %v2380 = vpack.c.b16 %v2060, %v2052
  %v2381 = vpack.c.b16 %v2061, %v2053
  %v2382 = vpack.c.b16 %v2070, %v2062
  %v2383 = vpack.c.b16 %v2071, %v2063
  %v2384 = vpack.c.b16 %v2072, %v2064
  %v2385 = vpack.c.b16 %v2073, %v2065
  %v2386 = vpack.c.b16 %v2074, %v2066
  %v2387 = vpack.c.b16 %v2075, %v2067
  %v2388 = vpack.c.b16 %v2076, %v2068
  %v2389 = vpack.c.b16 %v2077, %v2069
  %v2390 = vpack.c.b16 %v2086, %v2078
  %v2391 = vpack.c.b16 %v2087, %v2079
  %v2392 = vpack.c.b16 %v2088, %v2080
  %v2393 = vpack.c.b16 %v2089, %v2081
  %v2394 = vpack.c.b16 %v2090, %v2082
  %v2395 = vpack.c.b16 %v2091, %v2083
  %v2396 = vpack.c.b16 %v2092, %v2084
  %v2397 = vpack.c.b16 %v2093, %v2085
  %v2398 = vpack.c.b16 %v2102, %v2094
  %v2399 = vpack.c.b16 %v2103, %v2095
  %v2400 = vpack.c.b16 %v2104, %v2096
  %v2401 = vpack.c.b16 %v2105, %v2097
  %v2402 = vpack.c.b16 %v2106, %v2098
  %v2403 = vpack.c.b16 %v2107, %v2099
  %v2404 = vpack.c.b16 %v2108, %v2100
  %v2405 = vpack.c.b16 %v2109, %v2101
  %v2406 = vpack.c.b16 %v2118, %v2110
  %v2407 = vpack.c.b16 %v2119, %v2111
  %v2408 = vpack.c.b16 %v2120, %v2112
  %v2409 = vpack.c.b16 %v2121, %v2113
  %v2410 = vpack.c.b16 %v2122, %v2114
  %v2411 = vpack.c.b16 %v2123, %v2115
  %v2412 = vpack.c.b16 %v2124, %v2116
  %v2413 = vpack.c.b16 %v2125, %v2117
  %v2414 = vpack.c.b16 %v2134, %v2126
  %v2415 = vpack.c.b16 %v2135, %v2127
  %v2416 = vpack.c.b16 %v2136, %v2128
  %v2417 = vpack.c.b16 %v2137, %v2129
  %v2418 = vpack.c.b16 %v2138, %v2130
  %v2419 = vpack.c.b16 %v2139, %v2131
  %v2420 = vpack.c.b16 %v2140, %v2132
  %v2421 = vpack.c.b16 %v2141, %v2133
  %v2422 = vpack.c.b16 %v2150, %v2142
  %v2423 = vpack.c.b16 %v2151, %v2143
  %v2424 = vpack.c.b16 %v2152, %v2144
  %v2425 = vpack.c.b16 %v2153, %v2145
  %v2426 = vpack.c.b16 %v2154, %v2146
  %v2427 = vpack.c.b16 %v2155, %v2147
  %v2428 = vpack.c.b16 %v2156, %v2148
  %v2429 = vpack.c.b16 %v2157, %v2149
  %v2430 = vpack.c.b16 %v2166, %v2158
  %v2431 = vpack.c.b16 %v2167, %v2159
  %v2432 = vpack.c.b16 %v2168, %v2160
  %v2433 = vpack.c.b16 %v2169, %v2161
  %v2434 = vpack.c.b16 %v2170, %v2162
  %v2435 = vpack.c.b16 %v2171, %v2163
  %v2436 = vpack.c.b16 %v2172, %v2164
  %v2437 = vpack.c.b16 %v2173, %v2165
  %v2438 = vpack.c.b16 %v2182, %v2174
  %v2439 = vpack.c.b16 %v2183, %v2175
  %v2440 = vpack.c.b16 %v2184, %v2176
  %v2441 = vpack.c.b16 %v2185, %v2177
  %v2442 = vpack.c.b16 %v2186, %v2178
  %v2443 = vpack.c.b16 %v2187, %v2179
  %v2444 = vpack.c.b16 %v2188, %v2180
  %v2445 = vpack.c.b16 %v2189, %v2181
  %2702 = vmatprep.subr.bf16.mxu0 %v2191
  %2703 = vmatpush1.bf16.msra.mxu0 %v2190
  %2704 = vmatprep.subr.bf16.mxu0 %v2199
  %2705 = vmatpush1.bf16.msra.mxu0 %v2198
  %2706 = vmatprep.subr.bf16.mxu0 %v2207
  %2707 = vmatpush1.bf16.msra.mxu0 %v2206
  %2708 = vmatprep.subr.bf16.mxu0 %v2215
  %2709 = vmatpush1.bf16.msra.mxu0 %v2214
  %2710 = vmatprep.subr.bf16.mxu0 %v2223
  %2711 = vmatpush1.bf16.msra.mxu0 %v2222
  %2712 = vmatprep.subr.bf16.mxu0 %v2231
  %2713 = vmatpush1.bf16.msra.mxu0 %v2230
  %2714 = vmatprep.subr.bf16.mxu0 %v2239
  %2715 = vmatpush1.bf16.msra.mxu0 %v2238
  %2716 = vmatprep.subr.bf16.mxu0 %v2247
  %2717 = vmatpush1.bf16.msra.mxu0 %v2246
  %2718 = vmatprep.subr.bf16.mxu0 %v2255
  %2719 = vmatpush1.bf16.msra.mxu0 %v2254
  %2720 = vmatprep.subr.bf16.mxu0 %v2263
  %2721 = vmatpush1.bf16.msra.mxu0 %v2262
  %2722 = vmatprep.subr.bf16.mxu0 %v2271
  %2723 = vmatpush1.bf16.msra.mxu0 %v2270
  %2724 = vmatprep.subr.bf16.mxu0 %v2279
  %2725 = vmatpush1.bf16.msra.mxu0 %v2278
  %2726 = vmatprep.subr.bf16.mxu0 %v2287
  %2727 = vmatpush1.bf16.msra.mxu0 %v2286
  %2728 = vmatprep.subr.bf16.mxu0 %v2295
  %2729 = vmatpush1.bf16.msra.mxu0 %v2294
  %2730 = vmatprep.subr.bf16.mxu0 %v2303
  %2731 = vmatpush1.bf16.msra.mxu0 %v2302
  %2732 = vmatprep.subr.bf16.mxu0 %v2311
  %2733 = vmatpush1.bf16.msra.mxu0 %v2310
  %2734 = vmatprep.mubr.bf16.mxu0 %v1366
  %2735 = vmatmul.mubr.bf16.gmra.mrb[0].mxu0 %v1365
  %v2736 = vpop.f32.mrb[0].mxu0
  %v2737 = vadd.f32 %v1385, %v2736
  %v2738 = vpop.f32.mrb[0].mxu0
  %v2739 = vadd.f32 %v1389, %v2738
  %v2740 = vpop.f32.mrb[0].mxu0
  %v2741 = vadd.f32 %v1385, %v2740
  %v2742 = vpop.f32.mrb[0].mxu0
  %v2743 = vadd.f32 %v1389, %v2742
  %2744 = vmatprep.mubr.bf16.mxu0 %v1370
  %2745 = vmatmul.mubr.bf16.gmra.mrb[0].mxu0 %v1369
  %v2746 = vpop.f32.mrb[0].mxu0
  %v2747 = vadd.f32 %v1385, %v2746
  %v2748 = vpop.f32.mrb[0].mxu0
  %v2749 = vadd.f32 %v1389, %v2748
  %v2750 = vpop.f32.mrb[0].mxu0
  %v2751 = vadd.f32 %v1385, %v2750
  %v2752 = vpop.f32.mrb[0].mxu0
  %v2753 = vadd.f32 %v1389, %v2752
  %2754 = vmatprep.mubr.bf16.mxu0 %v1374
  %2755 = vmatmul.mubr.bf16.gmra.mrb[0].mxu0 %v1373
  %v2756 = vpop.f32.mrb[0].mxu0
  %v2757 = vadd.f32 %v1385, %v2756
  %v2758 = vpop.f32.mrb[0].mxu0
  %v2759 = vadd.f32 %v1389, %v2758
  %v2760 = vpop.f32.mrb[0].mxu0
  %v2761 = vadd.f32 %v1385, %v2760
  %v2762 = vpop.f32.mrb[0].mxu0
  %v2763 = vadd.f32 %v1389, %v2762
  %2764 = vmatprep.mubr.bf16.mxu0 %v1378
  %2765 = vmatmul.mubr.bf16.gmra.mrb[0].mxu0 %v1377
  %v2766 = vpop.f32.mrb[0].mxu0
  %v2767 = vadd.f32 %v1385, %v2766
  %v2768 = vpop.f32.mrb[0].mxu0
  %v2769 = vadd.f32 %v1389, %v2768
  %v2770 = vpop.f32.mrb[0].mxu0
  %v2771 = vadd.f32 %v1385, %v2770
  %v2772 = vpop.f32.mrb[0].mxu0
  %v2773 = vadd.f32 %v1389, %v2772
  %2774 = vdwg.mxu0
  %2775 = vmatprep.subr.bf16.mxu0 %v2319
  %2776 = vmatpush1.bf16.msra.mxu0 %v2318
  %2777 = vmatprep.subr.bf16.mxu0 %v2327
  %2778 = vmatpush1.bf16.msra.mxu0 %v2326
  %2779 = vmatprep.subr.bf16.mxu0 %v2335
  %2780 = vmatpush1.bf16.msra.mxu0 %v2334
  %2781 = vmatprep.subr.bf16.mxu0 %v2343
  %2782 = vmatpush1.bf16.msra.mxu0 %v2342
  %2783 = vmatprep.subr.bf16.mxu0 %v2351
  %2784 = vmatpush1.bf16.msra.mxu0 %v2350
  %2785 = vmatprep.subr.bf16.mxu0 %v2359
  %2786 = vmatpush1.bf16.msra.mxu0 %v2358
  %2787 = vmatprep.subr.bf16.mxu0 %v2367
  %2788 = vmatpush1.bf16.msra.mxu0 %v2366
  %2789 = vmatprep.subr.bf16.mxu0 %v2375
  %2790 = vmatpush1.bf16.msra.mxu0 %v2374
  %2791 = vmatprep.subr.bf16.mxu0 %v2383
  %2792 = vmatpush1.bf16.msra.mxu0 %v2382
  %2793 = vmatprep.subr.bf16.mxu0 %v2391
  %2794 = vmatpush1.bf16.msra.mxu0 %v2390
  %2795 = vmatprep.subr.bf16.mxu0 %v2399
  %2796 = vmatpush1.bf16.msra.mxu0 %v2398
  %2797 = vmatprep.subr.bf16.mxu0 %v2407
  %2798 = vmatpush1.bf16.msra.mxu0 %v2406
  %2799 = vmatprep.subr.bf16.mxu0 %v2415
  %2800 = vmatpush1.bf16.msra.mxu0 %v2414
  %2801 = vmatprep.subr.bf16.mxu0 %v2423
  %2802 = vmatpush1.bf16.msra.mxu0 %v2422
  %2803 = vmatprep.subr.bf16.mxu0 %v2431
  %2804 = vmatpush1.bf16.msra.mxu0 %v2430
  %2805 = vmatprep.subr.bf16.mxu0 %v2439
  %2806 = vmatpush1.bf16.msra.mxu0 %v2438
  %2807 = vmatprep.mubr.bf16.mxu0 %v1368
  %2808 = vmatmul.mubr.bf16.gmra.mrb[0].mxu0 %v1367
  %v2809 = vpop.f32.mrb[0].mxu0
  %v2810 = vadd.f32 %v2737, %v2809
  %v2811 = vpop.f32.mrb[0].mxu0
  %v2812 = vadd.f32 %v2739, %v2811
  %v2813 = vpop.f32.mrb[0].mxu0
  %v2814 = vadd.f32 %v2741, %v2813
  %v2815 = vpop.f32.mrb[0].mxu0
  %v2816 = vadd.f32 %v2743, %v2815
  %2817 = vmatprep.mubr.bf16.mxu0 %v1372
  %2818 = vmatmul.mubr.bf16.gmra.mrb[0].mxu0 %v1371
  %v2819 = vpop.f32.mrb[0].mxu0
  %v2820 = vadd.f32 %v2747, %v2819
  %v2821 = vpop.f32.mrb[0].mxu0
  %v2822 = vadd.f32 %v2749, %v2821
  %v2823 = vpop.f32.mrb[0].mxu0
  %v2824 = vadd.f32 %v2751, %v2823
  %v2825 = vpop.f32.mrb[0].mxu0
  %v2826 = vadd.f32 %v2753, %v2825
  %2827 = vmatprep.mubr.bf16.mxu0 %v1376
  %2828 = vmatmul.mubr.bf16.gmra.mrb[0].mxu0 %v1375
  %v2829 = vpop.f32.mrb[0].mxu0
  %v2830 = vadd.f32 %v2757, %v2829
  %v2831 = vpop.f32.mrb[0].mxu0
  %v2832 = vadd.f32 %v2759, %v2831
  %v2833 = vpop.f32.mrb[0].mxu0
  %v2834 = vadd.f32 %v2761, %v2833
  %v2835 = vpop.f32.mrb[0].mxu0
  %v2836 = vadd.f32 %v2763, %v2835
  %2837 = vmatprep.mubr.bf16.mxu0 %v1380
  %2838 = vmatmul.mubr.bf16.gmra.mrb[0].mxu0 %v1379
  %v2839 = vpop.f32.mrb[0].mxu0
  %v2840 = vadd.f32 %v2767, %v2839
  %v2841 = vpop.f32.mrb[0].mxu0
  %v2842 = vadd.f32 %v2769, %v2841
  %v2843 = vpop.f32.mrb[0].mxu0
  %v2844 = vadd.f32 %v2771, %v2843
  %v2845 = vpop.f32.mrb[0].mxu0
  %v2846 = vadd.f32 %v2773, %v2845
  %2847 = vdwg.mxu0
  %2848 = vmatprep.subr.bf16.mxu0 %v2193
  %2849 = vmatpush1.bf16.msra.mxu0 %v2192
  %2850 = vmatprep.subr.bf16.mxu0 %v2201
  %2851 = vmatpush1.bf16.msra.mxu0 %v2200
  %2852 = vmatprep.subr.bf16.mxu0 %v2209
  %2853 = vmatpush1.bf16.msra.mxu0 %v2208
  %2854 = vmatprep.subr.bf16.mxu0 %v2217
  %2855 = vmatpush1.bf16.msra.mxu0 %v2216
  %2856 = vmatprep.subr.bf16.mxu0 %v2225
  %2857 = vmatpush1.bf16.msra.mxu0 %v2224
  %2858 = vmatprep.subr.bf16.mxu0 %v2233
  %2859 = vmatpush1.bf16.msra.mxu0 %v2232
  %2860 = vmatprep.subr.bf16.mxu0 %v2241
  %2861 = vmatpush1.bf16.msra.mxu0 %v2240
  %2862 = vmatprep.subr.bf16.mxu0 %v2249
  %2863 = vmatpush1.bf16.msra.mxu0 %v2248
  %2864 = vmatprep.subr.bf16.mxu0 %v2257
  %2865 = vmatpush1.bf16.msra.mxu0 %v2256
  %2866 = vmatprep.subr.bf16.mxu0 %v2265
  %2867 = vmatpush1.bf16.msra.mxu0 %v2264
  %2868 = vmatprep.subr.bf16.mxu0 %v2273
  %2869 = vmatpush1.bf16.msra.mxu0 %v2272
  %2870 = vmatprep.subr.bf16.mxu0 %v2281
  %2871 = vmatpush1.bf16.msra.mxu0 %v2280
  %2872 = vmatprep.subr.bf16.mxu0 %v2289
  %2873 = vmatpush1.bf16.msra.mxu0 %v2288
  %2874 = vmatprep.subr.bf16.mxu0 %v2297
  %2875 = vmatpush1.bf16.msra.mxu0 %v2296
  %2876 = vmatprep.subr.bf16.mxu0 %v2305
  %2877 = vmatpush1.bf16.msra.mxu0 %v2304
  %2878 = vmatprep.subr.bf16.mxu0 %v2313
  %2879 = vmatpush1.bf16.msra.mxu0 %v2312
  %2880 = vmatprep.mubr.bf16.mxu0 %v1366
  %2881 = vmatmul.mubr.bf16.gmra.mrb[0].mxu0 %v1365
  %v2882 = vpop.f32.mrb[0].mxu0
  %v2883 = vadd.f32 %v1393, %v2882
  %v2884 = vpop.f32.mrb[0].mxu0
  %v2885 = vadd.f32 %v1397, %v2884
  %v2886 = vpop.f32.mrb[0].mxu0
  %v2887 = vadd.f32 %v1393, %v2886
  %v2888 = vpop.f32.mrb[0].mxu0
  %v2889 = vadd.f32 %v1397, %v2888
  %2890 = vmatprep.mubr.bf16.mxu0 %v1370
  %2891 = vmatmul.mubr.bf16.gmra.mrb[0].mxu0 %v1369
  %v2892 = vpop.f32.mrb[0].mxu0
  %v2893 = vadd.f32 %v1393, %v2892
  %v2894 = vpop.f32.mrb[0].mxu0
  %v2895 = vadd.f32 %v1397, %v2894
  %v2896 = vpop.f32.mrb[0].mxu0
  %v2897 = vadd.f32 %v1393, %v2896
  %v2898 = vpop.f32.mrb[0].mxu0
  %v2899 = vadd.f32 %v1397, %v2898
  %2900 = vmatprep.mubr.bf16.mxu0 %v1374
  %2901 = vmatmul.mubr.bf16.gmra.mrb[0].mxu0 %v1373
  %v2902 = vpop.f32.mrb[0].mxu0
  %v2903 = vadd.f32 %v1393, %v2902
  %v2904 = vpop.f32.mrb[0].mxu0
  %v2905 = vadd.f32 %v1397, %v2904
  %v2906 = vpop.f32.mrb[0].mxu0
  %v2907 = vadd.f32 %v1393, %v2906
  %v2908 = vpop.f32.mrb[0].mxu0
  %v2909 = vadd.f32 %v1397, %v2908
  %2910 = vmatprep.mubr.bf16.mxu0 %v1378
  %2911 = vmatmul.mubr.bf16.gmra.mrb[0].mxu0 %v1377
  %v2912 = vpop.f32.mrb[0].mxu0
  %v2913 = vadd.f32 %v1393, %v2912
  %v2914 = vpop.f32.mrb[0].mxu0
  %v2915 = vadd.f32 %v1397, %v2914
  %v2916 = vpop.f32.mrb[0].mxu0
  %v2917 = vadd.f32 %v1393, %v2916
  %v2918 = vpop.f32.mrb[0].mxu0
  %v2919 = vadd.f32 %v1397, %v2918
  %2920 = vdwg.mxu0
  %2921 = vmatprep.subr.bf16.mxu0 %v2321
  %2922 = vmatpush1.bf16.msra.mxu0 %v2320
  %2923 = vmatprep.subr.bf16.mxu0 %v2329
  %2924 = vmatpush1.bf16.msra.mxu0 %v2328
  %2925 = vmatprep.subr.bf16.mxu0 %v2337
  %2926 = vmatpush1.bf16.msra.mxu0 %v2336
  %2927 = vmatprep.subr.bf16.mxu0 %v2345
  %2928 = vmatpush1.bf16.msra.mxu0 %v2344
  %2929 = vmatprep.subr.bf16.mxu0 %v2353
  %2930 = vmatpush1.bf16.msra.mxu0 %v2352
  %2931 = vmatprep.subr.bf16.mxu0 %v2361
  %2932 = vmatpush1.bf16.msra.mxu0 %v2360
  %2933 = vmatprep.subr.bf16.mxu0 %v2369
  %2934 = vmatpush1.bf16.msra.mxu0 %v2368
  %2935 = vmatprep.subr.bf16.mxu0 %v2377
  %2936 = vmatpush1.bf16.msra.mxu0 %v2376
  %2937 = vmatprep.subr.bf16.mxu0 %v2385
  %2938 = vmatpush1.bf16.msra.mxu0 %v2384
  %2939 = vmatprep.subr.bf16.mxu0 %v2393
  %2940 = vmatpush1.bf16.msra.mxu0 %v2392
  %2941 = vmatprep.subr.bf16.mxu0 %v2401
  %2942 = vmatpush1.bf16.msra.mxu0 %v2400
  %2943 = vmatprep.subr.bf16.mxu0 %v2409
  %2944 = vmatpush1.bf16.msra.mxu0 %v2408
  %2945 = vmatprep.subr.bf16.mxu0 %v2417
  %2946 = vmatpush1.bf16.msra.mxu0 %v2416
  %2947 = vmatprep.subr.bf16.mxu0 %v2425
  %2948 = vmatpush1.bf16.msra.mxu0 %v2424
  %2949 = vmatprep.subr.bf16.mxu0 %v2433
  %2950 = vmatpush1.bf16.msra.mxu0 %v2432
  %2951 = vmatprep.subr.bf16.mxu0 %v2441
  %2952 = vmatpush1.bf16.msra.mxu0 %v2440
  %2953 = vmatprep.mubr.bf16.mxu0 %v1368
  %2954 = vmatmul.mubr.bf16.gmra.mrb[0].mxu0 %v1367
  %v2955 = vpop.f32.mrb[0].mxu0
  %v2956 = vadd.f32 %v2883, %v2955
  %v2957 = vpop.f32.mrb[0].mxu0
  %v2958 = vadd.f32 %v2885, %v2957
  %v2959 = vpop.f32.mrb[0].mxu0
  %v2960 = vadd.f32 %v2887, %v2959
  %v2961 = vpop.f32.mrb[0].mxu0
  %v2962 = vadd.f32 %v2889, %v2961
  %2963 = vmatprep.mubr.bf16.mxu0 %v1372
  %2964 = vmatmul.mubr.bf16.gmra.mrb[0].mxu0 %v1371
  %v2965 = vpop.f32.mrb[0].mxu0
  %v2966 = vadd.f32 %v2893, %v2965
  %v2967 = vpop.f32.mrb[0].mxu0
  %v2968 = vadd.f32 %v2895, %v2967
  %v2969 = vpop.f32.mrb[0].mxu0
  %v2970 = vadd.f32 %v2897, %v2969
  %v2971 = vpop.f32.mrb[0].mxu0
  %v2972 = vadd.f32 %v2899, %v2971
  %2973 = vmatprep.mubr.bf16.mxu0 %v1376
  %2974 = vmatmul.mubr.bf16.gmra.mrb[0].mxu0 %v1375
  %v2975 = vpop.f32.mrb[0].mxu0
  %v2976 = vadd.f32 %v2903, %v2975
  %v2977 = vpop.f32.mrb[0].mxu0
  %v2978 = vadd.f32 %v2905, %v2977
  %v2979 = vpop.f32.mrb[0].mxu0
  %v2980 = vadd.f32 %v2907, %v2979
  %v2981 = vpop.f32.mrb[0].mxu0
  %v2982 = vadd.f32 %v2909, %v2981
  %2983 = vmatprep.mubr.bf16.mxu0 %v1380
  %2984 = vmatmul.mubr.bf16.gmra.mrb[0].mxu0 %v1379
  %v2985 = vpop.f32.mrb[0].mxu0
  %v2986 = vadd.f32 %v2913, %v2985
  %v2987 = vpop.f32.mrb[0].mxu0
  %v2988 = vadd.f32 %v2915, %v2987
  %v2989 = vpop.f32.mrb[0].mxu0
  %v2990 = vadd.f32 %v2917, %v2989
  %v2991 = vpop.f32.mrb[0].mxu0
  %v2992 = vadd.f32 %v2919, %v2991
  %2993 = vdwg.mxu0
  %2994 = vmatprep.subr.bf16.mxu0 %v2195
  %2995 = vmatpush1.bf16.msra.mxu0 %v2194
  %2996 = vmatprep.subr.bf16.mxu0 %v2203
  %2997 = vmatpush1.bf16.msra.mxu0 %v2202
  %2998 = vmatprep.subr.bf16.mxu0 %v2211
  %2999 = vmatpush1.bf16.msra.mxu0 %v2210
  %3000 = vmatprep.subr.bf16.mxu0 %v2219
  %3001 = vmatpush1.bf16.msra.mxu0 %v2218
  %3002 = vmatprep.subr.bf16.mxu0 %v2227
  %3003 = vmatpush1.bf16.msra.mxu0 %v2226
  %3004 = vmatprep.subr.bf16.mxu0 %v2235
  %3005 = vmatpush1.bf16.msra.mxu0 %v2234
  %3006 = vmatprep.subr.bf16.mxu0 %v2243
  %3007 = vmatpush1.bf16.msra.mxu0 %v2242
  %3008 = vmatprep.subr.bf16.mxu0 %v2251
  %3009 = vmatpush1.bf16.msra.mxu0 %v2250
  %3010 = vmatprep.subr.bf16.mxu0 %v2259
  %3011 = vmatpush1.bf16.msra.mxu0 %v2258
  %3012 = vmatprep.subr.bf16.mxu0 %v2267
  %3013 = vmatpush1.bf16.msra.mxu0 %v2266
  %3014 = vmatprep.subr.bf16.mxu0 %v2275
  %3015 = vmatpush1.bf16.msra.mxu0 %v2274
  %3016 = vmatprep.subr.bf16.mxu0 %v2283
  %3017 = vmatpush1.bf16.msra.mxu0 %v2282
  %3018 = vmatprep.subr.bf16.mxu0 %v2291
  %3019 = vmatpush1.bf16.msra.mxu0 %v2290
  %3020 = vmatprep.subr.bf16.mxu0 %v2299
  %3021 = vmatpush1.bf16.msra.mxu0 %v2298
  %3022 = vmatprep.subr.bf16.mxu0 %v2307
  %3023 = vmatpush1.bf16.msra.mxu0 %v2306
  %3024 = vmatprep.subr.bf16.mxu0 %v2315
  %3025 = vmatpush1.bf16.msra.mxu0 %v2314
  %3026 = vmatprep.mubr.bf16.mxu0 %v1366
  %3027 = vmatmul.mubr.bf16.gmra.mrb[0].mxu0 %v1365
  %v3028 = vpop.f32.mrb[0].mxu0
  %v3029 = vadd.f32 %v1401, %v3028
  %v3030 = vpop.f32.mrb[0].mxu0
  %v3031 = vadd.f32 %v1405, %v3030
  %v3032 = vpop.f32.mrb[0].mxu0
  %v3033 = vadd.f32 %v1401, %v3032
  %v3034 = vpop.f32.mrb[0].mxu0
  %v3035 = vadd.f32 %v1405, %v3034
  %3036 = vmatprep.mubr.bf16.mxu0 %v1370
  %3037 = vmatmul.mubr.bf16.gmra.mrb[0].mxu0 %v1369
  %v3038 = vpop.f32.mrb[0].mxu0
  %v3039 = vadd.f32 %v1401, %v3038
  %v3040 = vpop.f32.mrb[0].mxu0
  %v3041 = vadd.f32 %v1405, %v3040
  %v3042 = vpop.f32.mrb[0].mxu0
  %v3043 = vadd.f32 %v1401, %v3042
  %v3044 = vpop.f32.mrb[0].mxu0
  %v3045 = vadd.f32 %v1405, %v3044
  %3046 = vmatprep.mubr.bf16.mxu0 %v1374
  %3047 = vmatmul.mubr.bf16.gmra.mrb[0].mxu0 %v1373
  %v3048 = vpop.f32.mrb[0].mxu0
  %v3049 = vadd.f32 %v1401, %v3048
  %v3050 = vpop.f32.mrb[0].mxu0
  %v3051 = vadd.f32 %v1405, %v3050
  %v3052 = vpop.f32.mrb[0].mxu0
  %v3053 = vadd.f32 %v1401, %v3052
  %v3054 = vpop.f32.mrb[0].mxu0
  %v3055 = vadd.f32 %v1405, %v3054
  %3056 = vmatprep.mubr.bf16.mxu0 %v1378
  %3057 = vmatmul.mubr.bf16.gmra.mrb[0].mxu0 %v1377
  %v3058 = vpop.f32.mrb[0].mxu0
  %v3059 = vadd.f32 %v1401, %v3058
  %v3060 = vpop.f32.mrb[0].mxu0
  %v3061 = vadd.f32 %v1405, %v3060
  %v3062 = vpop.f32.mrb[0].mxu0
  %v3063 = vadd.f32 %v1401, %v3062
  %v3064 = vpop.f32.mrb[0].mxu0
  %v3065 = vadd.f32 %v1405, %v3064
  %3066 = vdwg.mxu0
  %3067 = vmatprep.subr.bf16.mxu0 %v2323
  %3068 = vmatpush1.bf16.msra.mxu0 %v2322
  %3069 = vmatprep.subr.bf16.mxu0 %v2331
  %3070 = vmatpush1.bf16.msra.mxu0 %v2330
  %3071 = vmatprep.subr.bf16.mxu0 %v2339
  %3072 = vmatpush1.bf16.msra.mxu0 %v2338
  %3073 = vmatprep.subr.bf16.mxu0 %v2347
  %3074 = vmatpush1.bf16.msra.mxu0 %v2346
  %3075 = vmatprep.subr.bf16.mxu0 %v2355
  %3076 = vmatpush1.bf16.msra.mxu0 %v2354
  %3077 = vmatprep.subr.bf16.mxu0 %v2363
  %3078 = vmatpush1.bf16.msra.mxu0 %v2362
  %3079 = vmatprep.subr.bf16.mxu0 %v2371
  %3080 = vmatpush1.bf16.msra.mxu0 %v2370
  %3081 = vmatprep.subr.bf16.mxu0 %v2379
  %3082 = vmatpush1.bf16.msra.mxu0 %v2378
  %3083 = vmatprep.subr.bf16.mxu0 %v2387
  %3084 = vmatpush1.bf16.msra.mxu0 %v2386
  %3085 = vmatprep.subr.bf16.mxu0 %v2395
  %3086 = vmatpush1.bf16.msra.mxu0 %v2394
  %3087 = vmatprep.subr.bf16.mxu0 %v2403
  %3088 = vmatpush1.bf16.msra.mxu0 %v2402
  %3089 = vmatprep.subr.bf16.mxu0 %v2411
  %3090 = vmatpush1.bf16.msra.mxu0 %v2410
  %3091 = vmatprep.subr.bf16.mxu0 %v2419
  %3092 = vmatpush1.bf16.msra.mxu0 %v2418
  %3093 = vmatprep.subr.bf16.mxu0 %v2427
  %3094 = vmatpush1.bf16.msra.mxu0 %v2426
  %3095 = vmatprep.subr.bf16.mxu0 %v2435
  %3096 = vmatpush1.bf16.msra.mxu0 %v2434
  %3097 = vmatprep.subr.bf16.mxu0 %v2443
  %3098 = vmatpush1.bf16.msra.mxu0 %v2442
  %3099 = vmatprep.mubr.bf16.mxu0 %v1368
  %3100 = vmatmul.mubr.bf16.gmra.mrb[0].mxu0 %v1367
  %v3101 = vpop.f32.mrb[0].mxu0
  %v3102 = vadd.f32 %v3029, %v3101
  %v3103 = vpop.f32.mrb[0].mxu0
  %v3104 = vadd.f32 %v3031, %v3103
  %v3105 = vpop.f32.mrb[0].mxu0
  %v3106 = vadd.f32 %v3033, %v3105
  %v3107 = vpop.f32.mrb[0].mxu0
  %v3108 = vadd.f32 %v3035, %v3107
  %3109 = vmatprep.mubr.bf16.mxu0 %v1372
  %3110 = vmatmul.mubr.bf16.gmra.mrb[0].mxu0 %v1371
  %v3111 = vpop.f32.mrb[0].mxu0
  %v3112 = vadd.f32 %v3039, %v3111
  %v3113 = vpop.f32.mrb[0].mxu0
  %v3114 = vadd.f32 %v3041, %v3113
  %v3115 = vpop.f32.mrb[0].mxu0
  %v3116 = vadd.f32 %v3043, %v3115
  %v3117 = vpop.f32.mrb[0].mxu0
  %v3118 = vadd.f32 %v3045, %v3117
  %3119 = vmatprep.mubr.bf16.mxu0 %v1376
  %3120 = vmatmul.mubr.bf16.gmra.mrb[0].mxu0 %v1375
  %v3121 = vpop.f32.mrb[0].mxu0
  %v3122 = vadd.f32 %v3049, %v3121
  %v3123 = vpop.f32.mrb[0].mxu0
  %v3124 = vadd.f32 %v3051, %v3123
  %v3125 = vpop.f32.mrb[0].mxu0
  %v3126 = vadd.f32 %v3053, %v3125
  %v3127 = vpop.f32.mrb[0].mxu0
  %v3128 = vadd.f32 %v3055, %v3127
  %3129 = vmatprep.mubr.bf16.mxu0 %v1380
  %3130 = vmatmul.mubr.bf16.gmra.mrb[0].mxu0 %v1379
  %v3131 = vpop.f32.mrb[0].mxu0
  %v3132 = vadd.f32 %v3059, %v3131
  %v3133 = vpop.f32.mrb[0].mxu0
  %v3134 = vadd.f32 %v3061, %v3133
  %v3135 = vpop.f32.mrb[0].mxu0
  %v3136 = vadd.f32 %v3063, %v3135
  %v3137 = vpop.f32.mrb[0].mxu0
  %v3138 = vadd.f32 %v3065, %v3137
  %3139 = vdwg.mxu0
  %3140 = vmatprep.subr.bf16.mxu0 %v2197
  %3141 = vmatpush1.bf16.msra.mxu0 %v2196
  %3142 = vmatprep.subr.bf16.mxu0 %v2205
  %3143 = vmatpush1.bf16.msra.mxu0 %v2204
  %3144 = vmatprep.subr.bf16.mxu0 %v2213
  %3145 = vmatpush1.bf16.msra.mxu0 %v2212
  %3146 = vmatprep.subr.bf16.mxu0 %v2221
  %3147 = vmatpush1.bf16.msra.mxu0 %v2220
  %3148 = vmatprep.subr.bf16.mxu0 %v2229
  %3149 = vmatpush1.bf16.msra.mxu0 %v2228
  %3150 = vmatprep.subr.bf16.mxu0 %v2237
  %3151 = vmatpush1.bf16.msra.mxu0 %v2236
  %3152 = vmatprep.subr.bf16.mxu0 %v2245
  %3153 = vmatpush1.bf16.msra.mxu0 %v2244
  %3154 = vmatprep.subr.bf16.mxu0 %v2253
  %3155 = vmatpush1.bf16.msra.mxu0 %v2252
  %3156 = vmatprep.subr.bf16.mxu0 %v2261
  %3157 = vmatpush1.bf16.msra.mxu0 %v2260
  %3158 = vmatprep.subr.bf16.mxu0 %v2269
  %3159 = vmatpush1.bf16.msra.mxu0 %v2268
  %3160 = vmatprep.subr.bf16.mxu0 %v2277
  %3161 = vmatpush1.bf16.msra.mxu0 %v2276
  %3162 = vmatprep.subr.bf16.mxu0 %v2285
  %3163 = vmatpush1.bf16.msra.mxu0 %v2284
  %3164 = vmatprep.subr.bf16.mxu0 %v2293
  %3165 = vmatpush1.bf16.msra.mxu0 %v2292
  %3166 = vmatprep.subr.bf16.mxu0 %v2301
  %3167 = vmatpush1.bf16.msra.mxu0 %v2300
  %3168 = vmatprep.subr.bf16.mxu0 %v2309
  %3169 = vmatpush1.bf16.msra.mxu0 %v2308
  %3170 = vmatprep.subr.bf16.mxu0 %v2317
  %3171 = vmatpush1.bf16.msra.mxu0 %v2316
  %3172 = vmatprep.mubr.bf16.mxu0 %v1366
  %3173 = vmatmul.mubr.bf16.gmra.mrb[0].mxu0 %v1365
  %v3174 = vpop.f32.mrb[0].mxu0
  %v3175 = vadd.f32 %v1409, %v3174
  %v3176 = vpop.f32.mrb[0].mxu0
  %v3177 = vadd.f32 %v1413, %v3176
  %v3178 = vpop.f32.mrb[0].mxu0
  %v3179 = vadd.f32 %v1409, %v3178
  %v3180 = vpop.f32.mrb[0].mxu0
  %v3181 = vadd.f32 %v1413, %v3180
  %3182 = vmatprep.mubr.bf16.mxu0 %v1370
  %3183 = vmatmul.mubr.bf16.gmra.mrb[0].mxu0 %v1369
  %v3184 = vpop.f32.mrb[0].mxu0
  %v3185 = vadd.f32 %v1409, %v3184
  %v3186 = vpop.f32.mrb[0].mxu0
  %v3187 = vadd.f32 %v1413, %v3186
  %v3188 = vpop.f32.mrb[0].mxu0
  %v3189 = vadd.f32 %v1409, %v3188
  %v3190 = vpop.f32.mrb[0].mxu0
  %v3191 = vadd.f32 %v1413, %v3190
  %3192 = vmatprep.mubr.bf16.mxu0 %v1374
  %3193 = vmatmul.mubr.bf16.gmra.mrb[0].mxu0 %v1373
  %v3194 = vpop.f32.mrb[0].mxu0
  %v3195 = vadd.f32 %v1409, %v3194
  %v3196 = vpop.f32.mrb[0].mxu0
  %v3197 = vadd.f32 %v1413, %v3196
  %v3198 = vpop.f32.mrb[0].mxu0
  %v3199 = vadd.f32 %v1409, %v3198
  %v3200 = vpop.f32.mrb[0].mxu0
  %v3201 = vadd.f32 %v1413, %v3200
  %3202 = vmatprep.mubr.bf16.mxu0 %v1378
  %3203 = vmatmul.mubr.bf16.gmra.mrb[0].mxu0 %v1377
  %v3204 = vpop.f32.mrb[0].mxu0
  %v3205 = vadd.f32 %v1409, %v3204
  %v3206 = vpop.f32.mrb[0].mxu0
  %v3207 = vadd.f32 %v1413, %v3206
  %v3208 = vpop.f32.mrb[0].mxu0
  %v3209 = vadd.f32 %v1409, %v3208
  %v3210 = vpop.f32.mrb[0].mxu0
  %v3211 = vadd.f32 %v1413, %v3210
  %3212 = vdwg.mxu0
  %3213 = vmatprep.subr.bf16.mxu0 %v2325
  %3214 = vmatpush1.bf16.msra.mxu0 %v2324
  %3215 = vmatprep.subr.bf16.mxu0 %v2333
  %3216 = vmatpush1.bf16.msra.mxu0 %v2332
  %3217 = vmatprep.subr.bf16.mxu0 %v2341
  %3218 = vmatpush1.bf16.msra.mxu0 %v2340
  %3219 = vmatprep.subr.bf16.mxu0 %v2349
  %3220 = vmatpush1.bf16.msra.mxu0 %v2348
  %3221 = vmatprep.subr.bf16.mxu0 %v2357
  %3222 = vmatpush1.bf16.msra.mxu0 %v2356
  %3223 = vmatprep.subr.bf16.mxu0 %v2365
  %3224 = vmatpush1.bf16.msra.mxu0 %v2364
  %3225 = vmatprep.subr.bf16.mxu0 %v2373
  %3226 = vmatpush1.bf16.msra.mxu0 %v2372
  %3227 = vmatprep.subr.bf16.mxu0 %v2381
  %3228 = vmatpush1.bf16.msra.mxu0 %v2380
  %3229 = vmatprep.subr.bf16.mxu0 %v2389
  %3230 = vmatpush1.bf16.msra.mxu0 %v2388
  %3231 = vmatprep.subr.bf16.mxu0 %v2397
  %3232 = vmatpush1.bf16.msra.mxu0 %v2396
  %3233 = vmatprep.subr.bf16.mxu0 %v2405
  %3234 = vmatpush1.bf16.msra.mxu0 %v2404
  %3235 = vmatprep.subr.bf16.mxu0 %v2413
  %3236 = vmatpush1.bf16.msra.mxu0 %v2412
  %3237 = vmatprep.subr.bf16.mxu0 %v2421
  %3238 = vmatpush1.bf16.msra.mxu0 %v2420
  %3239 = vmatprep.subr.bf16.mxu0 %v2429
  %3240 = vmatpush1.bf16.msra.mxu0 %v2428
  %3241 = vmatprep.subr.bf16.mxu0 %v2437
  %3242 = vmatpush1.bf16.msra.mxu0 %v2436
  %3243 = vmatprep.subr.bf16.mxu0 %v2445
  %3244 = vmatpush1.bf16.msra.mxu0 %v2444
  %3245 = vmatprep.mubr.bf16.mxu0 %v1368
  %3246 = vmatmul.mubr.bf16.gmra.mrb[0].mxu0 %v1367
  %v3247 = vpop.f32.mrb[0].mxu0
  %v3248 = vadd.f32 %v3175, %v3247
  %v3249 = vpop.f32.mrb[0].mxu0
  %v3250 = vadd.f32 %v3177, %v3249
  %v3251 = vpop.f32.mrb[0].mxu0
  %v3252 = vadd.f32 %v3179, %v3251
  %v3253 = vpop.f32.mrb[0].mxu0
  %v3254 = vadd.f32 %v3181, %v3253
  %3255 = vmatprep.mubr.bf16.mxu0 %v1372
  %3256 = vmatmul.mubr.bf16.gmra.mrb[0].mxu0 %v1371
  %v3257 = vpop.f32.mrb[0].mxu0
  %v3258 = vadd.f32 %v3185, %v3257
  %v3259 = vpop.f32.mrb[0].mxu0
  %v3260 = vadd.f32 %v3187, %v3259
  %v3261 = vpop.f32.mrb[0].mxu0
  %v3262 = vadd.f32 %v3189, %v3261
  %v3263 = vpop.f32.mrb[0].mxu0
  %v3264 = vadd.f32 %v3191, %v3263
  %3265 = vmatprep.mubr.bf16.mxu0 %v1376
  %3266 = vmatmul.mubr.bf16.gmra.mrb[0].mxu0 %v1375
  %v3267 = vpop.f32.mrb[0].mxu0
  %v3268 = vadd.f32 %v3195, %v3267
  %v3269 = vpop.f32.mrb[0].mxu0
  %v3270 = vadd.f32 %v3197, %v3269
  %v3271 = vpop.f32.mrb[0].mxu0
  %v3272 = vadd.f32 %v3199, %v3271
  %v3273 = vpop.f32.mrb[0].mxu0
  %v3274 = vadd.f32 %v3201, %v3273
  %3275 = vmatprep.mubr.bf16.mxu0 %v1380
  %3276 = vmatmul.mubr.bf16.gmra.mrb[0].mxu0 %v1379
  %v3277 = vpop.f32.mrb[0].mxu0
  %v3278 = vadd.f32 %v3205, %v3277
  %v3279 = vpop.f32.mrb[0].mxu0
  %v3280 = vadd.f32 %v3207, %v3279
  %v3281 = vpop.f32.mrb[0].mxu0
  %v3282 = vadd.f32 %v3209, %v3281
  %v3283 = vpop.f32.mrb[0].mxu0
  %v3284 = vadd.f32 %v3211, %v3283
  %3285 = vdwg.mxu0
  %v3286 = vmax.f32 %v2810, %v2830
  %v3287 = vmax.f32 %v2812, %v2832
  %v3288 = vmax.f32 %v2956, %v2976
  %v3289 = vmax.f32 %v2958, %v2978
  %v3290 = vmax.f32 %v3102, %v3122
  %v3291 = vmax.f32 %v3104, %v3124
  %v3292 = vmax.f32 %v3248, %v3268
  %v3293 = vmax.f32 %v3250, %v3270
  %v3294 = vmax.f32 %v2814, %v2834
  %v3295 = vmax.f32 %v2816, %v2836
  %v3296 = vmax.f32 %v2960, %v2980
  %v3297 = vmax.f32 %v2962, %v2982
  %v3298 = vmax.f32 %v3106, %v3126
  %v3299 = vmax.f32 %v3108, %v3128
  %v3300 = vmax.f32 %v3252, %v3272
  %v3301 = vmax.f32 %v3254, %v3274
  %v3302 = vmax.f32 %v2820, %v2840
  %v3303 = vmax.f32 %v2822, %v2842
  %v3304 = vmax.f32 %v2966, %v2986
  %v3305 = vmax.f32 %v2968, %v2988
  %v3306 = vmax.f32 %v3112, %v3132
  %v3307 = vmax.f32 %v3114, %v3134
  %v3308 = vmax.f32 %v3258, %v3278
  %v3309 = vmax.f32 %v3260, %v3280
  %v3310 = vmax.f32 %v2824, %v2844
  %v3311 = vmax.f32 %v2826, %v2846
  %v3312 = vmax.f32 %v2970, %v2990
  %v3313 = vmax.f32 %v2972, %v2992
  %v3314 = vmax.f32 %v3116, %v3136
  %v3315 = vmax.f32 %v3118, %v3138
  %v3316 = vmax.f32 %v3262, %v3282
  %v3317 = vmax.f32 %v3264, %v3284
  %v3318 = vmax.f32 %v3286, %v3302
  %v3319 = vmax.f32 %v3287, %v3303
  %v3320 = vmax.f32 %v3288, %v3304
  %v3321 = vmax.f32 %v3289, %v3305
  %v3322 = vmax.f32 %v3290, %v3306
  %v3323 = vmax.f32 %v3291, %v3307
  %v3324 = vmax.f32 %v3292, %v3308
  %v3325 = vmax.f32 %v3293, %v3309
  %v3326 = vmax.f32 %v3294, %v3310
  %v3327 = vmax.f32 %v3295, %v3311
  %v3328 = vmax.f32 %v3296, %v3312
  %v3329 = vmax.f32 %v3297, %v3313
  %v3330 = vmax.f32 %v3298, %v3314
  %v3331 = vmax.f32 %v3299, %v3315
  %v3332 = vmax.f32 %v3300, %v3316
  %v3333 = vmax.f32 %v3301, %v3317
  %v3334 = vmax.f32 %v3318, %v3326
  %v3335 = vmax.f32 %v3319, %v3327
  %v3336 = vmax.f32 %v3320, %v3328
  %v3337 = vmax.f32 %v3321, %v3329
  %v3338 = vmax.f32 %v3322, %v3330
  %v3339 = vmax.f32 %v3323, %v3331
  %v3340 = vmax.f32 %v3324, %v3332
  %v3341 = vmax.f32 %v3325, %v3333
  %v3342 = vpack.c.bf16 %v3334, %v3334
  %v3343 = vpack.c.bf16 %v3335, %v3335
  %v3344 = vpack.c.bf16 %v3336, %v3336
  %v3345 = vpack.c.bf16 %v3337, %v3337
  %v3346 = vpack.c.bf16 %v3338, %v3338
  %v3347 = vpack.c.bf16 %v3339, %v3339
  %v3348 = vpack.c.bf16 %v3340, %v3340
  %v3349 = vpack.c.bf16 %v3341, %v3341
  %v3350 = vld [vmem:[%s7] sm:$0xff]
  %v3351 = vld [vmem:[%s7 + $0x8] sm:$0xff]
  %v3352 = vld [vmem:[%s7 + $0x10] sm:$0xff]
  %v3353 = vld [vmem:[%s7 + $0x18] sm:$0xff]
  %v3354 = vld [vmem:[%s7 + $0x20] sm:$0xff]
  %v3355 = vld [vmem:[%s7 + $0x28] sm:$0xff]
  %v3356 = vld [vmem:[%s7 + $0x30] sm:$0xff]
  %v3357 = vld [vmem:[%s7 + $0x38] sm:$0xff]
  %v3358 = vld [vmem:[%s7 + $0x40] sm:$0xff]
  %v3359 = vld [vmem:[%s7 + $0x48] sm:$0xff]
  %v3360 = vld [vmem:[%s7 + $0x50] sm:$0xff]
  %v3361 = vld [vmem:[%s7 + $0x58] sm:$0xff]
  %v3362 = vld [vmem:[%s7 + $0x60] sm:$0xff]
  %v3363 = vld [vmem:[%s7 + $0x68] sm:$0xff]
  %v3364 = vld [vmem:[%s7 + $0x70] sm:$0xff]
  %v3365 = vld [vmem:[%s7 + $0x78] sm:$0xff]
  %v3366 = vld [vmem:[%s7 + $0x80] sm:$0xff]
  %v3367 = vld [vmem:[%s7 + $0x88] sm:$0xff]
  %v3368 = vld [vmem:[%s7 + $0x90] sm:$0xff]
  %v3369 = vld [vmem:[%s7 + $0x98] sm:$0xff]
  %v3370 = vld [vmem:[%s7 + $0xa0] sm:$0xff]
  %v3371 = vld [vmem:[%s7 + $0xa8] sm:$0xff]
  %v3372 = vld [vmem:[%s7 + $0xb0] sm:$0xff]
  %v3373 = vld [vmem:[%s7 + $0xb8] sm:$0xff]
  %v3374 = vld [vmem:[%s7 + $0xc0] sm:$0xff]
  %v3375 = vld [vmem:[%s7 + $0xc8] sm:$0xff]
  %v3376 = vld [vmem:[%s7 + $0xd0] sm:$0xff]
  %v3377 = vld [vmem:[%s7 + $0xd8] sm:$0xff]
  %v3378 = vld [vmem:[%s7 + $0xe0] sm:$0xff]
  %v3379 = vld [vmem:[%s7 + $0xe8] sm:$0xff]
  %v3380 = vld [vmem:[%s7 + $0xf0] sm:$0xff]
  %v3381 = vld [vmem:[%s7 + $0xf8] sm:$0xff]
  %v3382 = vld [vmem:[%s7 + $0x100] sm:$0xff]
  %v3383 = vld [vmem:[%s7 + $0x108] sm:$0xff]
  %v3384 = vld [vmem:[%s7 + $0x110] sm:$0xff]
  %v3385 = vld [vmem:[%s7 + $0x118] sm:$0xff]
  %v3386 = vld [vmem:[%s7 + $0x120] sm:$0xff]
  %v3387 = vld [vmem:[%s7 + $0x128] sm:$0xff]
  %v3388 = vld [vmem:[%s7 + $0x130] sm:$0xff]
  %v3389 = vld [vmem:[%s7 + $0x138] sm:$0xff]
  %v3390 = vld [vmem:[%s7 + $0x140] sm:$0xff]
  %v3391 = vld [vmem:[%s7 + $0x148] sm:$0xff]
  %v3392 = vld [vmem:[%s7 + $0x150] sm:$0xff]
  %v3393 = vld [vmem:[%s7 + $0x158] sm:$0xff]
  %v3394 = vld [vmem:[%s7 + $0x160] sm:$0xff]
  %v3395 = vld [vmem:[%s7 + $0x168] sm:$0xff]
  %v3396 = vld [vmem:[%s7 + $0x170] sm:$0xff]
  %v3397 = vld [vmem:[%s7 + $0x178] sm:$0xff]
  %v3398 = vld [vmem:[%s7 + $0x180] sm:$0xff]
  %v3399 = vld [vmem:[%s7 + $0x188] sm:$0xff]
  %v3400 = vld [vmem:[%s7 + $0x190] sm:$0xff]
  %v3401 = vld [vmem:[%s7 + $0x198] sm:$0xff]
  %v3402 = vld [vmem:[%s7 + $0x1a0] sm:$0xff]
  %v3403 = vld [vmem:[%s7 + $0x1a8] sm:$0xff]
  %v3404 = vld [vmem:[%s7 + $0x1b0] sm:$0xff]
  %v3405 = vld [vmem:[%s7 + $0x1b8] sm:$0xff]
  %v3406 = vld [vmem:[%s7 + $0x1c0] sm:$0xff]
  %v3407 = vld [vmem:[%s7 + $0x1c8] sm:$0xff]
  %v3408 = vld [vmem:[%s7 + $0x1d0] sm:$0xff]
  %v3409 = vld [vmem:[%s7 + $0x1d8] sm:$0xff]
  %v3410 = vld [vmem:[%s7 + $0x1e0] sm:$0xff]
  %v3411 = vld [vmem:[%s7 + $0x1e8] sm:$0xff]
  %v3412 = vld [vmem:[%s7 + $0x1f0] sm:$0xff]
  %v3413 = vld [vmem:[%s7 + $0x1f8] sm:$0xff]
  %v3414 = vld [vmem:[%s7 + $0x200] sm:$0xff]
  %v3415 = vld [vmem:[%s7 + $0x208] sm:$0xff]
  %v3416 = vld [vmem:[%s7 + $0x210] sm:$0xff]
  %v3417 = vld [vmem:[%s7 + $0x218] sm:$0xff]
  %v3418 = vld [vmem:[%s7 + $0x220] sm:$0xff]
  %v3419 = vld [vmem:[%s7 + $0x228] sm:$0xff]
  %v3420 = vld [vmem:[%s7 + $0x230] sm:$0xff]
  %v3421 = vld [vmem:[%s7 + $0x238] sm:$0xff]
  %v3422 = vld [vmem:[%s7 + $0x240] sm:$0xff]
  %v3423 = vld [vmem:[%s7 + $0x248] sm:$0xff]
  %v3424 = vld [vmem:[%s7 + $0x250] sm:$0xff]
  %v3425 = vld [vmem:[%s7 + $0x258] sm:$0xff]
  %v3426 = vld [vmem:[%s7 + $0x260] sm:$0xff]
  %v3427 = vld [vmem:[%s7 + $0x268] sm:$0xff]
  %v3428 = vld [vmem:[%s7 + $0x270] sm:$0xff]
  %v3429 = vld [vmem:[%s7 + $0x278] sm:$0xff]
  %v3430 = vld [vmem:[%s7 + $0x280] sm:$0xff]
  %v3431 = vld [vmem:[%s7 + $0x288] sm:$0xff]
  %v3432 = vld [vmem:[%s7 + $0x290] sm:$0xff]
  %v3433 = vld [vmem:[%s7 + $0x298] sm:$0xff]
  %v3434 = vld [vmem:[%s7 + $0x2a0] sm:$0xff]
  %v3435 = vld [vmem:[%s7 + $0x2a8] sm:$0xff]
  %v3436 = vld [vmem:[%s7 + $0x2b0] sm:$0xff]
  %v3437 = vld [vmem:[%s7 + $0x2b8] sm:$0xff]
  %v3438 = vld [vmem:[%s7 + $0x2c0] sm:$0xff]
  %v3439 = vld [vmem:[%s7 + $0x2c8] sm:$0xff]
  %v3440 = vld [vmem:[%s7 + $0x2d0] sm:$0xff]
  %v3441 = vld [vmem:[%s7 + $0x2d8] sm:$0xff]
  %v3442 = vld [vmem:[%s7 + $0x2e0] sm:$0xff]
  %v3443 = vld [vmem:[%s7 + $0x2e8] sm:$0xff]
  %v3444 = vld [vmem:[%s7 + $0x2f0] sm:$0xff]
  %v3445 = vld [vmem:[%s7 + $0x2f8] sm:$0xff]
  %v3446 = vld [vmem:[%s7 + $0x300] sm:$0xff]
  %v3447 = vld [vmem:[%s7 + $0x308] sm:$0xff]
  %v3448 = vld [vmem:[%s7 + $0x310] sm:$0xff]
  %v3449 = vld [vmem:[%s7 + $0x318] sm:$0xff]
  %v3450 = vld [vmem:[%s7 + $0x320] sm:$0xff]
  %v3451 = vld [vmem:[%s7 + $0x328] sm:$0xff]
  %v3452 = vld [vmem:[%s7 + $0x330] sm:$0xff]
  %v3453 = vld [vmem:[%s7 + $0x338] sm:$0xff]
  %v3454 = vld [vmem:[%s7 + $0x340] sm:$0xff]
  %v3455 = vld [vmem:[%s7 + $0x348] sm:$0xff]
  %v3456 = vld [vmem:[%s7 + $0x350] sm:$0xff]
  %v3457 = vld [vmem:[%s7 + $0x358] sm:$0xff]
  %v3458 = vld [vmem:[%s7 + $0x360] sm:$0xff]
  %v3459 = vld [vmem:[%s7 + $0x368] sm:$0xff]
  %v3460 = vld [vmem:[%s7 + $0x370] sm:$0xff]
  %v3461 = vld [vmem:[%s7 + $0x378] sm:$0xff]
  %v3462 = vld [vmem:[%s7 + $0x380] sm:$0xff]
  %v3463 = vld [vmem:[%s7 + $0x388] sm:$0xff]
  %v3464 = vld [vmem:[%s7 + $0x390] sm:$0xff]
  %v3465 = vld [vmem:[%s7 + $0x398] sm:$0xff]
  %v3466 = vld [vmem:[%s7 + $0x3a0] sm:$0xff]
  %v3467 = vld [vmem:[%s7 + $0x3a8] sm:$0xff]
  %v3468 = vld [vmem:[%s7 + $0x3b0] sm:$0xff]
  %v3469 = vld [vmem:[%s7 + $0x3b8] sm:$0xff]
  %v3470 = vld [vmem:[%s7 + $0x3c0] sm:$0xff]
  %v3471 = vld [vmem:[%s7 + $0x3c8] sm:$0xff]
  %v3472 = vld [vmem:[%s7 + $0x3d0] sm:$0xff]
  %v3473 = vld [vmem:[%s7 + $0x3d8] sm:$0xff]
  %v3474 = vld [vmem:[%s7 + $0x3e0] sm:$0xff]
  %v3475 = vld [vmem:[%s7 + $0x3e8] sm:$0xff]
  %v3476 = vld [vmem:[%s7 + $0x3f0] sm:$0xff]
  %v3477 = vld [vmem:[%s7 + $0x3f8] sm:$0xff]
  %v3478 = vld [vmem:[%s7 + $0x400] sm:$0xff]
  %v3479 = vld [vmem:[%s7 + $0x408] sm:$0xff]
  %v3480 = vld [vmem:[%s7 + $0x410] sm:$0xff]
  %v3481 = vld [vmem:[%s7 + $0x418] sm:$0xff]
  %v3482 = vld [vmem:[%s7 + $0x420] sm:$0xff]
  %v3483 = vld [vmem:[%s7 + $0x428] sm:$0xff]
  %v3484 = vld [vmem:[%s7 + $0x430] sm:$0xff]
  %v3485 = vld [vmem:[%s7 + $0x438] sm:$0xff]
  %v3486 = vld [vmem:[%s7 + $0x440] sm:$0xff]
  %v3487 = vld [vmem:[%s7 + $0x448] sm:$0xff]
  %v3488 = vld [vmem:[%s7 + $0x450] sm:$0xff]
  %v3489 = vld [vmem:[%s7 + $0x458] sm:$0xff]
  %v3490 = vld [vmem:[%s7 + $0x460] sm:$0xff]
  %v3491 = vld [vmem:[%s7 + $0x468] sm:$0xff]
  %v3492 = vld [vmem:[%s7 + $0x470] sm:$0xff]
  %v3493 = vld [vmem:[%s7 + $0x478] sm:$0xff]
  %v3494 = vld [vmem:[%s7 + $0x480] sm:$0xff]
  %v3495 = vld [vmem:[%s7 + $0x488] sm:$0xff]
  %v3496 = vld [vmem:[%s7 + $0x490] sm:$0xff]
  %v3497 = vld [vmem:[%s7 + $0x498] sm:$0xff]
  %v3498 = vld [vmem:[%s7 + $0x4a0] sm:$0xff]
  %v3499 = vld [vmem:[%s7 + $0x4a8] sm:$0xff]
  %v3500 = vld [vmem:[%s7 + $0x4b0] sm:$0xff]
  %v3501 = vld [vmem:[%s7 + $0x4b8] sm:$0xff]
  %v3502 = vld [vmem:[%s7 + $0x4c0] sm:$0xff]
  %v3503 = vld [vmem:[%s7 + $0x4c8] sm:$0xff]
  %v3504 = vld [vmem:[%s7 + $0x4d0] sm:$0xff]
  %v3505 = vld [vmem:[%s7 + $0x4d8] sm:$0xff]
  %v3506 = vld [vmem:[%s7 + $0x4e0] sm:$0xff]
  %v3507 = vld [vmem:[%s7 + $0x4e8] sm:$0xff]
  %v3508 = vld [vmem:[%s7 + $0x4f0] sm:$0xff]
  %v3509 = vld [vmem:[%s7 + $0x4f8] sm:$0xff]
  %v3510 = vld [vmem:[%s7 + $0x500] sm:$0xff]
  %v3511 = vld [vmem:[%s7 + $0x508] sm:$0xff]
  %v3512 = vld [vmem:[%s7 + $0x510] sm:$0xff]
  %v3513 = vld [vmem:[%s7 + $0x518] sm:$0xff]
  %v3514 = vld [vmem:[%s7 + $0x520] sm:$0xff]
  %v3515 = vld [vmem:[%s7 + $0x528] sm:$0xff]
  %v3516 = vld [vmem:[%s7 + $0x530] sm:$0xff]
  %v3517 = vld [vmem:[%s7 + $0x538] sm:$0xff]
  %v3518 = vld [vmem:[%s7 + $0x540] sm:$0xff]
  %v3519 = vld [vmem:[%s7 + $0x548] sm:$0xff]
  %v3520 = vld [vmem:[%s7 + $0x550] sm:$0xff]
  %v3521 = vld [vmem:[%s7 + $0x558] sm:$0xff]
  %v3522 = vld [vmem:[%s7 + $0x560] sm:$0xff]
  %v3523 = vld [vmem:[%s7 + $0x568] sm:$0xff]
  %v3524 = vld [vmem:[%s7 + $0x570] sm:$0xff]
  %v3525 = vld [vmem:[%s7 + $0x578] sm:$0xff]
  %v3526 = vld [vmem:[%s7 + $0x580] sm:$0xff]
  %v3527 = vld [vmem:[%s7 + $0x588] sm:$0xff]
  %v3528 = vld [vmem:[%s7 + $0x590] sm:$0xff]
  %v3529 = vld [vmem:[%s7 + $0x598] sm:$0xff]
  %v3530 = vld [vmem:[%s7 + $0x5a0] sm:$0xff]
  %v3531 = vld [vmem:[%s7 + $0x5a8] sm:$0xff]
  %v3532 = vld [vmem:[%s7 + $0x5b0] sm:$0xff]
  %v3533 = vld [vmem:[%s7 + $0x5b8] sm:$0xff]
  %v3534 = vld [vmem:[%s7 + $0x5c0] sm:$0xff]
  %v3535 = vld [vmem:[%s7 + $0x5c8] sm:$0xff]
  %v3536 = vld [vmem:[%s7 + $0x5d0] sm:$0xff]
  %v3537 = vld [vmem:[%s7 + $0x5d8] sm:$0xff]
  %v3538 = vld [vmem:[%s7 + $0x5e0] sm:$0xff]
  %v3539 = vld [vmem:[%s7 + $0x5e8] sm:$0xff]
  %v3540 = vld [vmem:[%s7 + $0x5f0] sm:$0xff]
  %v3541 = vld [vmem:[%s7 + $0x5f8] sm:$0xff]
  %v3542 = vld [vmem:[%s7 + $0x600] sm:$0xff]
  %v3543 = vld [vmem:[%s7 + $0x608] sm:$0xff]
  %v3544 = vld [vmem:[%s7 + $0x610] sm:$0xff]
  %v3545 = vld [vmem:[%s7 + $0x618] sm:$0xff]
  %v3546 = vld [vmem:[%s7 + $0x620] sm:$0xff]
  %v3547 = vld [vmem:[%s7 + $0x628] sm:$0xff]
  %v3548 = vld [vmem:[%s7 + $0x630] sm:$0xff]
  %v3549 = vld [vmem:[%s7 + $0x638] sm:$0xff]
  %v3550 = vld [vmem:[%s7 + $0x640] sm:$0xff]
  %v3551 = vld [vmem:[%s7 + $0x648] sm:$0xff]
  %v3552 = vld [vmem:[%s7 + $0x650] sm:$0xff]
  %v3553 = vld [vmem:[%s7 + $0x658] sm:$0xff]
  %v3554 = vld [vmem:[%s7 + $0x660] sm:$0xff]
  %v3555 = vld [vmem:[%s7 + $0x668] sm:$0xff]
  %v3556 = vld [vmem:[%s7 + $0x670] sm:$0xff]
  %v3557 = vld [vmem:[%s7 + $0x678] sm:$0xff]
  %v3558 = vld [vmem:[%s7 + $0x680] sm:$0xff]
  %v3559 = vld [vmem:[%s7 + $0x688] sm:$0xff]
  %v3560 = vld [vmem:[%s7 + $0x690] sm:$0xff]
  %v3561 = vld [vmem:[%s7 + $0x698] sm:$0xff]
  %v3562 = vld [vmem:[%s7 + $0x6a0] sm:$0xff]
  %v3563 = vld [vmem:[%s7 + $0x6a8] sm:$0xff]
  %v3564 = vld [vmem:[%s7 + $0x6b0] sm:$0xff]
  %v3565 = vld [vmem:[%s7 + $0x6b8] sm:$0xff]
  %v3566 = vld [vmem:[%s7 + $0x6c0] sm:$0xff]
  %v3567 = vld [vmem:[%s7 + $0x6c8] sm:$0xff]
  %v3568 = vld [vmem:[%s7 + $0x6d0] sm:$0xff]
  %v3569 = vld [vmem:[%s7 + $0x6d8] sm:$0xff]
  %v3570 = vld [vmem:[%s7 + $0x6e0] sm:$0xff]
  %v3571 = vld [vmem:[%s7 + $0x6e8] sm:$0xff]
  %v3572 = vld [vmem:[%s7 + $0x6f0] sm:$0xff]
  %v3573 = vld [vmem:[%s7 + $0x6f8] sm:$0xff]
  %v3574 = vld [vmem:[%s7 + $0x700] sm:$0xff]
  %v3575 = vld [vmem:[%s7 + $0x708] sm:$0xff]
  %v3576 = vld [vmem:[%s7 + $0x710] sm:$0xff]
  %v3577 = vld [vmem:[%s7 + $0x718] sm:$0xff]
  %v3578 = vld [vmem:[%s7 + $0x720] sm:$0xff]
  %v3579 = vld [vmem:[%s7 + $0x728] sm:$0xff]
  %v3580 = vld [vmem:[%s7 + $0x730] sm:$0xff]
  %v3581 = vld [vmem:[%s7 + $0x738] sm:$0xff]
  %v3582 = vld [vmem:[%s7 + $0x740] sm:$0xff]
  %v3583 = vld [vmem:[%s7 + $0x748] sm:$0xff]
  %v3584 = vld [vmem:[%s7 + $0x750] sm:$0xff]
  %v3585 = vld [vmem:[%s7 + $0x758] sm:$0xff]
  %v3586 = vld [vmem:[%s7 + $0x760] sm:$0xff]
  %v3587 = vld [vmem:[%s7 + $0x768] sm:$0xff]
  %v3588 = vld [vmem:[%s7 + $0x770] sm:$0xff]
  %v3589 = vld [vmem:[%s7 + $0x778] sm:$0xff]
  %v3590 = vld [vmem:[%s7 + $0x780] sm:$0xff]
  %v3591 = vld [vmem:[%s7 + $0x788] sm:$0xff]
  %v3592 = vld [vmem:[%s7 + $0x790] sm:$0xff]
  %v3593 = vld [vmem:[%s7 + $0x798] sm:$0xff]
  %v3594 = vld [vmem:[%s7 + $0x7a0] sm:$0xff]
  %v3595 = vld [vmem:[%s7 + $0x7a8] sm:$0xff]
  %v3596 = vld [vmem:[%s7 + $0x7b0] sm:$0xff]
  %v3597 = vld [vmem:[%s7 + $0x7b8] sm:$0xff]
  %v3598 = vld [vmem:[%s7 + $0x7c0] sm:$0xff]
  %v3599 = vld [vmem:[%s7 + $0x7c8] sm:$0xff]
  %v3600 = vld [vmem:[%s7 + $0x7d0] sm:$0xff]
  %v3601 = vld [vmem:[%s7 + $0x7d8] sm:$0xff]
  %v3602 = vld [vmem:[%s7 + $0x7e0] sm:$0xff]
  %v3603 = vld [vmem:[%s7 + $0x7e8] sm:$0xff]
  %v3604 = vld [vmem:[%s7 + $0x7f0] sm:$0xff]
  %v3605 = vld [vmem:[%s7 + $0x7f8] sm:$0xff]
  %v3606 = vld [vmem:[%s8] sm:$0xf]
  %v3607 = vld [vmem:[%s9] sm:$0xff]
  %v3608 = vld [vmem:[%s9 + $0x8] sm:$0xff]
  %v3609 = vld [vmem:[%s9 + $0x10] sm:$0xff]
  %v3610 = vld [vmem:[%s9 + $0x18] sm:$0xff]
  %v3611 = vld [vmem:[%s9 + $0x20] sm:$0xff]
  %v3612 = vld [vmem:[%s9 + $0x28] sm:$0xff]
  %v3613 = vld [vmem:[%s9 + $0x30] sm:$0xff]
  %v3614 = vld [vmem:[%s9 + $0x38] sm:$0xff]
  %v3615 = vld [vmem:[%s9 + $0x40] sm:$0xff]
  %v3616 = vld [vmem:[%s9 + $0x48] sm:$0xff]
  %v3617 = vld [vmem:[%s9 + $0x50] sm:$0xff]
  %v3618 = vld [vmem:[%s9 + $0x58] sm:$0xff]
  %v3619 = vld [vmem:[%s9 + $0x60] sm:$0xff]
  %v3620 = vld [vmem:[%s9 + $0x68] sm:$0xff]
  %v3621 = vld [vmem:[%s9 + $0x70] sm:$0xff]
  %v3622 = vld [vmem:[%s9 + $0x78] sm:$0xff]
  %v3623 = vld [vmem:[%s9 + $0x80] sm:$0xff]
  %v3624 = vld [vmem:[%s9 + $0x88] sm:$0xff]
  %v3625 = vld [vmem:[%s9 + $0x90] sm:$0xff]
  %v3626 = vld [vmem:[%s9 + $0x98] sm:$0xff]
  %v3627 = vld [vmem:[%s9 + $0xa0] sm:$0xff]
  %v3628 = vld [vmem:[%s9 + $0xa8] sm:$0xff]
  %v3629 = vld [vmem:[%s9 + $0xb0] sm:$0xff]
  %v3630 = vld [vmem:[%s9 + $0xb8] sm:$0xff]
  %v3631 = vld [vmem:[%s9 + $0xc0] sm:$0xff]
  %v3632 = vld [vmem:[%s9 + $0xc8] sm:$0xff]
  %v3633 = vld [vmem:[%s9 + $0xd0] sm:$0xff]
  %v3634 = vld [vmem:[%s9 + $0xd8] sm:$0xff]
  %v3635 = vld [vmem:[%s9 + $0xe0] sm:$0xff]
  %v3636 = vld [vmem:[%s9 + $0xe8] sm:$0xff]
  %v3637 = vld [vmem:[%s9 + $0xf0] sm:$0xff]
  %v3638 = vld [vmem:[%s9 + $0xf8] sm:$0xff]
  %v3639 = vld [vmem:[%s9 + $0x100] sm:$0xff]
  %v3640 = vld [vmem:[%s9 + $0x108] sm:$0xff]
  %v3641 = vld [vmem:[%s9 + $0x110] sm:$0xff]
  %v3642 = vld [vmem:[%s9 + $0x118] sm:$0xff]
  %v3643 = vld [vmem:[%s9 + $0x120] sm:$0xff]
  %v3644 = vld [vmem:[%s9 + $0x128] sm:$0xff]
  %v3645 = vld [vmem:[%s9 + $0x130] sm:$0xff]
  %v3646 = vld [vmem:[%s9 + $0x138] sm:$0xff]
  %v3647 = vld [vmem:[%s9 + $0x140] sm:$0xff]
  %v3648 = vld [vmem:[%s9 + $0x148] sm:$0xff]
  %v3649 = vld [vmem:[%s9 + $0x150] sm:$0xff]
  %v3650 = vld [vmem:[%s9 + $0x158] sm:$0xff]
  %v3651 = vld [vmem:[%s9 + $0x160] sm:$0xff]
  %v3652 = vld [vmem:[%s9 + $0x168] sm:$0xff]
  %v3653 = vld [vmem:[%s9 + $0x170] sm:$0xff]
  %v3654 = vld [vmem:[%s9 + $0x178] sm:$0xff]
  %v3655 = vld [vmem:[%s9 + $0x180] sm:$0xff]
  %v3656 = vld [vmem:[%s9 + $0x188] sm:$0xff]
  %v3657 = vld [vmem:[%s9 + $0x190] sm:$0xff]
  %v3658 = vld [vmem:[%s9 + $0x198] sm:$0xff]
  %v3659 = vld [vmem:[%s9 + $0x1a0] sm:$0xff]
  %v3660 = vld [vmem:[%s9 + $0x1a8] sm:$0xff]
  %v3661 = vld [vmem:[%s9 + $0x1b0] sm:$0xff]
  %v3662 = vld [vmem:[%s9 + $0x1b8] sm:$0xff]
  %v3663 = vld [vmem:[%s9 + $0x1c0] sm:$0xff]
  %v3664 = vld [vmem:[%s9 + $0x1c8] sm:$0xff]
  %v3665 = vld [vmem:[%s9 + $0x1d0] sm:$0xff]
  %v3666 = vld [vmem:[%s9 + $0x1d8] sm:$0xff]
  %v3667 = vld [vmem:[%s9 + $0x1e0] sm:$0xff]
  %v3668 = vld [vmem:[%s9 + $0x1e8] sm:$0xff]
  %v3669 = vld [vmem:[%s9 + $0x1f0] sm:$0xff]
  %v3670 = vld [vmem:[%s9 + $0x1f8] sm:$0xff]
  %v3671 = vld [vmem:[%s10] sm:$0x3]
  %v3672 = vld [vmem:[%s11] sm:$0xf]
  %v3673 = vld [vmem:[%s11 + $0x4] sm:$0xf]
  %v3674 = vld [vmem:[%s11 + $0x8] sm:$0xf]
  %v3675 = vld [vmem:[%s11 + $0xc] sm:$0xf]
  %v3676 = vld [vmem:[%s11 + $0x10] sm:$0xf]
  %v3677 = vld [vmem:[%s11 + $0x14] sm:$0xf]
  %v3678 = vld [vmem:[%s11 + $0x18] sm:$0xf]
  %v3679 = vld [vmem:[%s11 + $0x1c] sm:$0xf]
  %v3680 = vld [vmem:[%s11 + $0x20] sm:$0xf]
  %v3681 = vld [vmem:[%s11 + $0x24] sm:$0xf]
  %v3682 = vld [vmem:[%s11 + $0x28] sm:$0xf]
  %v3683 = vld [vmem:[%s11 + $0x2c] sm:$0xf]
  %v3684 = vld [vmem:[%s11 + $0x30] sm:$0xf]
  %v3685 = vld [vmem:[%s11 + $0x34] sm:$0xf]
  %v3686 = vld [vmem:[%s11 + $0x38] sm:$0xf]
  %v3687 = vld [vmem:[%s11 + $0x3c] sm:$0xf]
  %v3688 = vld [vmem:[%s11 + $0x40] sm:$0xf]
  %v3689 = vld [vmem:[%s11 + $0x44] sm:$0xf]
  %v3690 = vld [vmem:[%s11 + $0x48] sm:$0xf]
  %v3691 = vld [vmem:[%s11 + $0x4c] sm:$0xf]
  %v3692 = vld [vmem:[%s11 + $0x50] sm:$0xf]
  %v3693 = vld [vmem:[%s11 + $0x54] sm:$0xf]
  %v3694 = vld [vmem:[%s11 + $0x58] sm:$0xf]
  %v3695 = vld [vmem:[%s11 + $0x5c] sm:$0xf]
  %v3696 = vld [vmem:[%s11 + $0x60] sm:$0xf]
  %v3697 = vld [vmem:[%s11 + $0x64] sm:$0xf]
  %v3698 = vld [vmem:[%s11 + $0x68] sm:$0xf]
  %v3699 = vld [vmem:[%s11 + $0x6c] sm:$0xf]
  %v3700 = vld [vmem:[%s11 + $0x70] sm:$0xf]
  %v3701 = vld [vmem:[%s11 + $0x74] sm:$0xf]
  %v3702 = vld [vmem:[%s11 + $0x78] sm:$0xf]
  %v3703 = vld [vmem:[%s11 + $0x7c] sm:$0xf]
  %v3704 = vld [vmem:[%s12] sm:$0x1]
  %v3706 = vlaneseq
  %v3707 = vshrl.u32 %v3706, 7
  %v3708 = vsub.s32 0, %v3707
  %v3709 = vrot.slane %v3606, %v3708
  %v3710 = vlaneseq
  %v3711 = vshrl.u32 %v3710, 7
  %v3712 = vsub.s32 1, %v3711
  %v3713 = vrot.slane %v3606, %v3712
  %v3714 = vlaneseq
  %v3715 = vshrl.u32 %v3714, 7
  %v3716 = vsub.s32 2, %v3715
  %v3717 = vrot.slane %v3606, %v3716
  %v3718 = vlaneseq
  %v3719 = vshrl.u32 %v3718, 7
  %v3720 = vsub.s32 3, %v3719
  %v3721 = vrot.slane %v3606, %v3720
  %v3982 = vunpack.c.l.b16 %v3350
  %v3983 = vunpack.c.h.b16 %v3350
  %v3984 = vunpack.c.l.b16 %v3351
  %v3985 = vunpack.c.h.b16 %v3351
  %v3986 = vunpack.c.l.b16 %v3352
  %v3987 = vunpack.c.h.b16 %v3352
  %v3988 = vunpack.c.l.b16 %v3353
  %v3989 = vunpack.c.h.b16 %v3353
  %v3990 = vunpack.c.l.b16 %v3354
  %v3991 = vunpack.c.h.b16 %v3354
  %v3992 = vunpack.c.l.b16 %v3355
  %v3993 = vunpack.c.h.b16 %v3355
  %v3994 = vunpack.c.l.b16 %v3356
  %v3995 = vunpack.c.h.b16 %v3356
  %v3996 = vunpack.c.l.b16 %v3357
  %v3997 = vunpack.c.h.b16 %v3357
  %v3998 = vunpack.c.l.b16 %v3358
  %v3999 = vunpack.c.h.b16 %v3358
  %v4000 = vunpack.c.l.b16 %v3359
  %v4001 = vunpack.c.h.b16 %v3359
  %v4002 = vunpack.c.l.b16 %v3360
  %v4003 = vunpack.c.h.b16 %v3360
  %v4004 = vunpack.c.l.b16 %v3361
  %v4005 = vunpack.c.h.b16 %v3361
  %v4006 = vunpack.c.l.b16 %v3362
  %v4007 = vunpack.c.h.b16 %v3362
  %v4008 = vunpack.c.l.b16 %v3363
  %v4009 = vunpack.c.h.b16 %v3363
  %v4010 = vunpack.c.l.b16 %v3364
  %v4011 = vunpack.c.h.b16 %v3364
  %v4012 = vunpack.c.l.b16 %v3365
  %v4013 = vunpack.c.h.b16 %v3365
  %v4014 = vunpack.c.l.b16 %v3366
  %v4015 = vunpack.c.h.b16 %v3366
  %v4016 = vunpack.c.l.b16 %v3367
  %v4017 = vunpack.c.h.b16 %v3367
  %v4018 = vunpack.c.l.b16 %v3368
  %v4019 = vunpack.c.h.b16 %v3368
  %v4020 = vunpack.c.l.b16 %v3369
  %v4021 = vunpack.c.h.b16 %v3369
  %v4022 = vunpack.c.l.b16 %v3370
  %v4023 = vunpack.c.h.b16 %v3370
  %v4024 = vunpack.c.l.b16 %v3371
  %v4025 = vunpack.c.h.b16 %v3371
  %v4026 = vunpack.c.l.b16 %v3372
  %v4027 = vunpack.c.h.b16 %v3372
  %v4028 = vunpack.c.l.b16 %v3373
  %v4029 = vunpack.c.h.b16 %v3373
  %v4030 = vunpack.c.l.b16 %v3374
  %v4031 = vunpack.c.h.b16 %v3374
  %v4032 = vunpack.c.l.b16 %v3375
  %v4033 = vunpack.c.h.b16 %v3375
  %v4034 = vunpack.c.l.b16 %v3376
  %v4035 = vunpack.c.h.b16 %v3376
  %v4036 = vunpack.c.l.b16 %v3377
  %v4037 = vunpack.c.h.b16 %v3377
  %v4038 = vunpack.c.l.b16 %v3378
  %v4039 = vunpack.c.h.b16 %v3378
  %v4040 = vunpack.c.l.b16 %v3379
  %v4041 = vunpack.c.h.b16 %v3379
  %v4042 = vunpack.c.l.b16 %v3380
  %v4043 = vunpack.c.h.b16 %v3380
  %v4044 = vunpack.c.l.b16 %v3381
  %v4045 = vunpack.c.h.b16 %v3381
  %v4046 = vunpack.c.l.b16 %v3382
  %v4047 = vunpack.c.h.b16 %v3382
  %v4048 = vunpack.c.l.b16 %v3383
  %v4049 = vunpack.c.h.b16 %v3383
  %v4050 = vunpack.c.l.b16 %v3384
  %v4051 = vunpack.c.h.b16 %v3384
  %v4052 = vunpack.c.l.b16 %v3385
  %v4053 = vunpack.c.h.b16 %v3385
  %v4054 = vunpack.c.l.b16 %v3386
  %v4055 = vunpack.c.h.b16 %v3386
  %v4056 = vunpack.c.l.b16 %v3387
  %v4057 = vunpack.c.h.b16 %v3387
  %v4058 = vunpack.c.l.b16 %v3388
  %v4059 = vunpack.c.h.b16 %v3388
  %v4060 = vunpack.c.l.b16 %v3389
  %v4061 = vunpack.c.h.b16 %v3389
  %v4062 = vunpack.c.l.b16 %v3390
  %v4063 = vunpack.c.h.b16 %v3390
  %v4064 = vunpack.c.l.b16 %v3391
  %v4065 = vunpack.c.h.b16 %v3391
  %v4066 = vunpack.c.l.b16 %v3392
  %v4067 = vunpack.c.h.b16 %v3392
  %v4068 = vunpack.c.l.b16 %v3393
  %v4069 = vunpack.c.h.b16 %v3393
  %v4070 = vunpack.c.l.b16 %v3394
  %v4071 = vunpack.c.h.b16 %v3394
  %v4072 = vunpack.c.l.b16 %v3395
  %v4073 = vunpack.c.h.b16 %v3395
  %v4074 = vunpack.c.l.b16 %v3396
  %v4075 = vunpack.c.h.b16 %v3396
  %v4076 = vunpack.c.l.b16 %v3397
  %v4077 = vunpack.c.h.b16 %v3397
  %v4078 = vunpack.c.l.b16 %v3398
  %v4079 = vunpack.c.h.b16 %v3398
  %v4080 = vunpack.c.l.b16 %v3399
  %v4081 = vunpack.c.h.b16 %v3399
  %v4082 = vunpack.c.l.b16 %v3400
  %v4083 = vunpack.c.h.b16 %v3400
  %v4084 = vunpack.c.l.b16 %v3401
  %v4085 = vunpack.c.h.b16 %v3401
  %v4086 = vunpack.c.l.b16 %v3402
  %v4087 = vunpack.c.h.b16 %v3402
  %v4088 = vunpack.c.l.b16 %v3403
  %v4089 = vunpack.c.h.b16 %v3403
  %v4090 = vunpack.c.l.b16 %v3404
  %v4091 = vunpack.c.h.b16 %v3404
  %v4092 = vunpack.c.l.b16 %v3405
  %v4093 = vunpack.c.h.b16 %v3405
  %v4094 = vunpack.c.l.b16 %v3406
  %v4095 = vunpack.c.h.b16 %v3406
  %v4096 = vunpack.c.l.b16 %v3407
  %v4097 = vunpack.c.h.b16 %v3407
  %v4098 = vunpack.c.l.b16 %v3408
  %v4099 = vunpack.c.h.b16 %v3408
  %v4100 = vunpack.c.l.b16 %v3409
  %v4101 = vunpack.c.h.b16 %v3409
  %v4102 = vunpack.c.l.b16 %v3410
  %v4103 = vunpack.c.h.b16 %v3410
  %v4104 = vunpack.c.l.b16 %v3411
  %v4105 = vunpack.c.h.b16 %v3411
  %v4106 = vunpack.c.l.b16 %v3412
  %v4107 = vunpack.c.h.b16 %v3412
  %v4108 = vunpack.c.l.b16 %v3413
  %v4109 = vunpack.c.h.b16 %v3413
  %v4110 = vunpack.c.l.b16 %v3414
  %v4111 = vunpack.c.h.b16 %v3414
  %v4112 = vunpack.c.l.b16 %v3415
  %v4113 = vunpack.c.h.b16 %v3415
  %v4114 = vunpack.c.l.b16 %v3416
  %v4115 = vunpack.c.h.b16 %v3416
  %v4116 = vunpack.c.l.b16 %v3417
  %v4117 = vunpack.c.h.b16 %v3417
  %v4118 = vunpack.c.l.b16 %v3418
  %v4119 = vunpack.c.h.b16 %v3418
  %v4120 = vunpack.c.l.b16 %v3419
  %v4121 = vunpack.c.h.b16 %v3419
  %v4122 = vunpack.c.l.b16 %v3420
  %v4123 = vunpack.c.h.b16 %v3420
  %v4124 = vunpack.c.l.b16 %v3421
  %v4125 = vunpack.c.h.b16 %v3421
  %v4126 = vunpack.c.l.b16 %v3422
  %v4127 = vunpack.c.h.b16 %v3422
  %v4128 = vunpack.c.l.b16 %v3423
  %v4129 = vunpack.c.h.b16 %v3423
  %v4130 = vunpack.c.l.b16 %v3424
  %v4131 = vunpack.c.h.b16 %v3424
  %v4132 = vunpack.c.l.b16 %v3425
  %v4133 = vunpack.c.h.b16 %v3425
  %v4134 = vunpack.c.l.b16 %v3426
  %v4135 = vunpack.c.h.b16 %v3426
  %v4136 = vunpack.c.l.b16 %v3427
  %v4137 = vunpack.c.h.b16 %v3427
  %v4138 = vunpack.c.l.b16 %v3428
  %v4139 = vunpack.c.h.b16 %v3428
  %v4140 = vunpack.c.l.b16 %v3429
  %v4141 = vunpack.c.h.b16 %v3429
  %v4142 = vunpack.c.l.b16 %v3430
  %v4143 = vunpack.c.h.b16 %v3430
  %v4144 = vunpack.c.l.b16 %v3431
  %v4145 = vunpack.c.h.b16 %v3431
  %v4146 = vunpack.c.l.b16 %v3432
  %v4147 = vunpack.c.h.b16 %v3432
  %v4148 = vunpack.c.l.b16 %v3433
  %v4149 = vunpack.c.h.b16 %v3433
  %v4150 = vunpack.c.l.b16 %v3434
  %v4151 = vunpack.c.h.b16 %v3434
  %v4152 = vunpack.c.l.b16 %v3435
  %v4153 = vunpack.c.h.b16 %v3435
  %v4154 = vunpack.c.l.b16 %v3436
  %v4155 = vunpack.c.h.b16 %v3436
  %v4156 = vunpack.c.l.b16 %v3437
  %v4157 = vunpack.c.h.b16 %v3437
  %v4158 = vunpack.c.l.b16 %v3438
  %v4159 = vunpack.c.h.b16 %v3438
  %v4160 = vunpack.c.l.b16 %v3439
  %v4161 = vunpack.c.h.b16 %v3439
  %v4162 = vunpack.c.l.b16 %v3440
  %v4163 = vunpack.c.h.b16 %v3440
  %v4164 = vunpack.c.l.b16 %v3441
  %v4165 = vunpack.c.h.b16 %v3441
  %v4166 = vunpack.c.l.b16 %v3442
  %v4167 = vunpack.c.h.b16 %v3442
  %v4168 = vunpack.c.l.b16 %v3443
  %v4169 = vunpack.c.h.b16 %v3443
  %v4170 = vunpack.c.l.b16 %v3444
  %v4171 = vunpack.c.h.b16 %v3444
  %v4172 = vunpack.c.l.b16 %v3445
  %v4173 = vunpack.c.h.b16 %v3445
  %v4174 = vunpack.c.l.b16 %v3446
  %v4175 = vunpack.c.h.b16 %v3446
  %v4176 = vunpack.c.l.b16 %v3447
  %v4177 = vunpack.c.h.b16 %v3447
  %v4178 = vunpack.c.l.b16 %v3448
  %v4179 = vunpack.c.h.b16 %v3448
  %v4180 = vunpack.c.l.b16 %v3449
  %v4181 = vunpack.c.h.b16 %v3449
  %v4182 = vunpack.c.l.b16 %v3450
  %v4183 = vunpack.c.h.b16 %v3450
  %v4184 = vunpack.c.l.b16 %v3451
  %v4185 = vunpack.c.h.b16 %v3451
  %v4186 = vunpack.c.l.b16 %v3452
  %v4187 = vunpack.c.h.b16 %v3452
  %v4188 = vunpack.c.l.b16 %v3453
  %v4189 = vunpack.c.h.b16 %v3453
  %v4190 = vunpack.c.l.b16 %v3454
  %v4191 = vunpack.c.h.b16 %v3454
  %v4192 = vunpack.c.l.b16 %v3455
  %v4193 = vunpack.c.h.b16 %v3455
  %v4194 = vunpack.c.l.b16 %v3456
  %v4195 = vunpack.c.h.b16 %v3456
  %v4196 = vunpack.c.l.b16 %v3457
  %v4197 = vunpack.c.h.b16 %v3457
  %v4198 = vunpack.c.l.b16 %v3458
  %v4199 = vunpack.c.h.b16 %v3458
  %v4200 = vunpack.c.l.b16 %v3459
  %v4201 = vunpack.c.h.b16 %v3459
  %v4202 = vunpack.c.l.b16 %v3460
  %v4203 = vunpack.c.h.b16 %v3460
  %v4204 = vunpack.c.l.b16 %v3461
  %v4205 = vunpack.c.h.b16 %v3461
  %v4206 = vunpack.c.l.b16 %v3462
  %v4207 = vunpack.c.h.b16 %v3462
  %v4208 = vunpack.c.l.b16 %v3463
  %v4209 = vunpack.c.h.b16 %v3463
  %v4210 = vunpack.c.l.b16 %v3464
  %v4211 = vunpack.c.h.b16 %v3464
  %v4212 = vunpack.c.l.b16 %v3465
  %v4213 = vunpack.c.h.b16 %v3465
  %v4214 = vunpack.c.l.b16 %v3466
  %v4215 = vunpack.c.h.b16 %v3466
  %v4216 = vunpack.c.l.b16 %v3467
  %v4217 = vunpack.c.h.b16 %v3467
  %v4218 = vunpack.c.l.b16 %v3468
  %v4219 = vunpack.c.h.b16 %v3468
  %v4220 = vunpack.c.l.b16 %v3469
  %v4221 = vunpack.c.h.b16 %v3469
  %v4222 = vunpack.c.l.b16 %v3470
  %v4223 = vunpack.c.h.b16 %v3470
  %v4224 = vunpack.c.l.b16 %v3471
  %v4225 = vunpack.c.h.b16 %v3471
  %v4226 = vunpack.c.l.b16 %v3472
  %v4227 = vunpack.c.h.b16 %v3472
  %v4228 = vunpack.c.l.b16 %v3473
  %v4229 = vunpack.c.h.b16 %v3473
  %v4230 = vunpack.c.l.b16 %v3474
  %v4231 = vunpack.c.h.b16 %v3474
  %v4232 = vunpack.c.l.b16 %v3475
  %v4233 = vunpack.c.h.b16 %v3475
  %v4234 = vunpack.c.l.b16 %v3476
  %v4235 = vunpack.c.h.b16 %v3476
  %v4236 = vunpack.c.l.b16 %v3477
  %v4237 = vunpack.c.h.b16 %v3477
  %v4238 = vunpack.c.l.b16 %v3478
  %v4239 = vunpack.c.h.b16 %v3478
  %v4240 = vunpack.c.l.b16 %v3479
  %v4241 = vunpack.c.h.b16 %v3479
  %v4242 = vunpack.c.l.b16 %v3480
  %v4243 = vunpack.c.h.b16 %v3480
  %v4244 = vunpack.c.l.b16 %v3481
  %v4245 = vunpack.c.h.b16 %v3481
  %v4246 = vunpack.c.l.b16 %v3482
  %v4247 = vunpack.c.h.b16 %v3482
  %v4248 = vunpack.c.l.b16 %v3483
  %v4249 = vunpack.c.h.b16 %v3483
  %v4250 = vunpack.c.l.b16 %v3484
  %v4251 = vunpack.c.h.b16 %v3484
  %v4252 = vunpack.c.l.b16 %v3485
  %v4253 = vunpack.c.h.b16 %v3485
  %v4254 = vunpack.c.l.b16 %v3486
  %v4255 = vunpack.c.h.b16 %v3486
  %v4256 = vunpack.c.l.b16 %v3487
  %v4257 = vunpack.c.h.b16 %v3487
  %v4258 = vunpack.c.l.b16 %v3488
  %v4259 = vunpack.c.h.b16 %v3488
  %v4260 = vunpack.c.l.b16 %v3489
  %v4261 = vunpack.c.h.b16 %v3489
  %v4262 = vunpack.c.l.b16 %v3490
  %v4263 = vunpack.c.h.b16 %v3490
  %v4264 = vunpack.c.l.b16 %v3491
  %v4265 = vunpack.c.h.b16 %v3491
  %v4266 = vunpack.c.l.b16 %v3492
  %v4267 = vunpack.c.h.b16 %v3492
  %v4268 = vunpack.c.l.b16 %v3493
  %v4269 = vunpack.c.h.b16 %v3493
  %v4270 = vunpack.c.l.b16 %v3494
  %v4271 = vunpack.c.h.b16 %v3494
  %v4272 = vunpack.c.l.b16 %v3495
  %v4273 = vunpack.c.h.b16 %v3495
  %v4274 = vunpack.c.l.b16 %v3496
  %v4275 = vunpack.c.h.b16 %v3496
  %v4276 = vunpack.c.l.b16 %v3497
  %v4277 = vunpack.c.h.b16 %v3497
  %v4278 = vunpack.c.l.b16 %v3498
  %v4279 = vunpack.c.h.b16 %v3498
  %v4280 = vunpack.c.l.b16 %v3499
  %v4281 = vunpack.c.h.b16 %v3499
  %v4282 = vunpack.c.l.b16 %v3500
  %v4283 = vunpack.c.h.b16 %v3500
  %v4284 = vunpack.c.l.b16 %v3501
  %v4285 = vunpack.c.h.b16 %v3501
  %v4286 = vunpack.c.l.b16 %v3502
  %v4287 = vunpack.c.h.b16 %v3502
  %v4288 = vunpack.c.l.b16 %v3503
  %v4289 = vunpack.c.h.b16 %v3503
  %v4290 = vunpack.c.l.b16 %v3504
  %v4291 = vunpack.c.h.b16 %v3504
  %v4292 = vunpack.c.l.b16 %v3505
  %v4293 = vunpack.c.h.b16 %v3505
  %v4294 = vunpack.c.l.b16 %v3506
  %v4295 = vunpack.c.h.b16 %v3506
  %v4296 = vunpack.c.l.b16 %v3507
  %v4297 = vunpack.c.h.b16 %v3507
  %v4298 = vunpack.c.l.b16 %v3508
  %v4299 = vunpack.c.h.b16 %v3508
  %v4300 = vunpack.c.l.b16 %v3509
  %v4301 = vunpack.c.h.b16 %v3509
  %v4302 = vunpack.c.l.b16 %v3510
  %v4303 = vunpack.c.h.b16 %v3510
  %v4304 = vunpack.c.l.b16 %v3511
  %v4305 = vunpack.c.h.b16 %v3511
  %v4306 = vunpack.c.l.b16 %v3512
  %v4307 = vunpack.c.h.b16 %v3512
  %v4308 = vunpack.c.l.b16 %v3513
  %v4309 = vunpack.c.h.b16 %v3513
  %v4310 = vunpack.c.l.b16 %v3514
  %v4311 = vunpack.c.h.b16 %v3514
  %v4312 = vunpack.c.l.b16 %v3515
  %v4313 = vunpack.c.h.b16 %v3515
  %v4314 = vunpack.c.l.b16 %v3516
  %v4315 = vunpack.c.h.b16 %v3516
  %v4316 = vunpack.c.l.b16 %v3517
  %v4317 = vunpack.c.h.b16 %v3517
  %v4318 = vunpack.c.l.b16 %v3518
  %v4319 = vunpack.c.h.b16 %v3518
  %v4320 = vunpack.c.l.b16 %v3519
  %v4321 = vunpack.c.h.b16 %v3519
  %v4322 = vunpack.c.l.b16 %v3520
  %v4323 = vunpack.c.h.b16 %v3520
  %v4324 = vunpack.c.l.b16 %v3521
  %v4325 = vunpack.c.h.b16 %v3521
  %v4326 = vunpack.c.l.b16 %v3522
  %v4327 = vunpack.c.h.b16 %v3522
  %v4328 = vunpack.c.l.b16 %v3523
  %v4329 = vunpack.c.h.b16 %v3523
  %v4330 = vunpack.c.l.b16 %v3524
  %v4331 = vunpack.c.h.b16 %v3524
  %v4332 = vunpack.c.l.b16 %v3525
  %v4333 = vunpack.c.h.b16 %v3525
  %v4334 = vunpack.c.l.b16 %v3526
  %v4335 = vunpack.c.h.b16 %v3526
  %v4336 = vunpack.c.l.b16 %v3527
  %v4337 = vunpack.c.h.b16 %v3527
  %v4338 = vunpack.c.l.b16 %v3528
  %v4339 = vunpack.c.h.b16 %v3528
  %v4340 = vunpack.c.l.b16 %v3529
  %v4341 = vunpack.c.h.b16 %v3529
  %v4342 = vunpack.c.l.b16 %v3530
  %v4343 = vunpack.c.h.b16 %v3530
  %v4344 = vunpack.c.l.b16 %v3531
  %v4345 = vunpack.c.h.b16 %v3531
  %v4346 = vunpack.c.l.b16 %v3532
  %v4347 = vunpack.c.h.b16 %v3532
  %v4348 = vunpack.c.l.b16 %v3533
  %v4349 = vunpack.c.h.b16 %v3533
  %v4350 = vunpack.c.l.b16 %v3534
  %v4351 = vunpack.c.h.b16 %v3534
  %v4352 = vunpack.c.l.b16 %v3535
  %v4353 = vunpack.c.h.b16 %v3535
  %v4354 = vunpack.c.l.b16 %v3536
  %v4355 = vunpack.c.h.b16 %v3536
  %v4356 = vunpack.c.l.b16 %v3537
  %v4357 = vunpack.c.h.b16 %v3537
  %v4358 = vunpack.c.l.b16 %v3538
  %v4359 = vunpack.c.h.b16 %v3538
  %v4360 = vunpack.c.l.b16 %v3539
  %v4361 = vunpack.c.h.b16 %v3539
  %v4362 = vunpack.c.l.b16 %v3540
  %v4363 = vunpack.c.h.b16 %v3540
  %v4364 = vunpack.c.l.b16 %v3541
  %v4365 = vunpack.c.h.b16 %v3541
  %v4366 = vunpack.c.l.b16 %v3542
  %v4367 = vunpack.c.h.b16 %v3542
  %v4368 = vunpack.c.l.b16 %v3543
  %v4369 = vunpack.c.h.b16 %v3543
  %v4370 = vunpack.c.l.b16 %v3544
  %v4371 = vunpack.c.h.b16 %v3544
  %v4372 = vunpack.c.l.b16 %v3545
  %v4373 = vunpack.c.h.b16 %v3545
  %v4374 = vunpack.c.l.b16 %v3546
  %v4375 = vunpack.c.h.b16 %v3546
  %v4376 = vunpack.c.l.b16 %v3547
  %v4377 = vunpack.c.h.b16 %v3547
  %v4378 = vunpack.c.l.b16 %v3548
  %v4379 = vunpack.c.h.b16 %v3548
  %v4380 = vunpack.c.l.b16 %v3549
  %v4381 = vunpack.c.h.b16 %v3549
  %v4382 = vunpack.c.l.b16 %v3550
  %v4383 = vunpack.c.h.b16 %v3550
  %v4384 = vunpack.c.l.b16 %v3551
  %v4385 = vunpack.c.h.b16 %v3551
  %v4386 = vunpack.c.l.b16 %v3552
  %v4387 = vunpack.c.h.b16 %v3552
  %v4388 = vunpack.c.l.b16 %v3553
  %v4389 = vunpack.c.h.b16 %v3553
  %v4390 = vunpack.c.l.b16 %v3554
  %v4391 = vunpack.c.h.b16 %v3554
  %v4392 = vunpack.c.l.b16 %v3555
  %v4393 = vunpack.c.h.b16 %v3555
  %v4394 = vunpack.c.l.b16 %v3556
  %v4395 = vunpack.c.h.b16 %v3556
  %v4396 = vunpack.c.l.b16 %v3557
  %v4397 = vunpack.c.h.b16 %v3557
  %v4398 = vunpack.c.l.b16 %v3558
  %v4399 = vunpack.c.h.b16 %v3558
  %v4400 = vunpack.c.l.b16 %v3559
  %v4401 = vunpack.c.h.b16 %v3559
  %v4402 = vunpack.c.l.b16 %v3560
  %v4403 = vunpack.c.h.b16 %v3560
  %v4404 = vunpack.c.l.b16 %v3561
  %v4405 = vunpack.c.h.b16 %v3561
  %v4406 = vunpack.c.l.b16 %v3562
  %v4407 = vunpack.c.h.b16 %v3562
  %v4408 = vunpack.c.l.b16 %v3563
  %v4409 = vunpack.c.h.b16 %v3563
  %v4410 = vunpack.c.l.b16 %v3564
  %v4411 = vunpack.c.h.b16 %v3564
  %v4412 = vunpack.c.l.b16 %v3565
  %v4413 = vunpack.c.h.b16 %v3565
  %v4414 = vunpack.c.l.b16 %v3566
  %v4415 = vunpack.c.h.b16 %v3566
  %v4416 = vunpack.c.l.b16 %v3567
  %v4417 = vunpack.c.h.b16 %v3567
  %v4418 = vunpack.c.l.b16 %v3568
  %v4419 = vunpack.c.h.b16 %v3568
  %v4420 = vunpack.c.l.b16 %v3569
  %v4421 = vunpack.c.h.b16 %v3569
  %v4422 = vunpack.c.l.b16 %v3570
  %v4423 = vunpack.c.h.b16 %v3570
  %v4424 = vunpack.c.l.b16 %v3571
  %v4425 = vunpack.c.h.b16 %v3571
  %v4426 = vunpack.c.l.b16 %v3572
  %v4427 = vunpack.c.h.b16 %v3572
  %v4428 = vunpack.c.l.b16 %v3573
  %v4429 = vunpack.c.h.b16 %v3573
  %v4430 = vunpack.c.l.b16 %v3574
  %v4431 = vunpack.c.h.b16 %v3574
  %v4432 = vunpack.c.l.b16 %v3575
  %v4433 = vunpack.c.h.b16 %v3575
  %v4434 = vunpack.c.l.b16 %v3576
  %v4435 = vunpack.c.h.b16 %v3576
  %v4436 = vunpack.c.l.b16 %v3577
  %v4437 = vunpack.c.h.b16 %v3577
  %v4438 = vunpack.c.l.b16 %v3578
  %v4439 = vunpack.c.h.b16 %v3578
  %v4440 = vunpack.c.l.b16 %v3579
  %v4441 = vunpack.c.h.b16 %v3579
  %v4442 = vunpack.c.l.b16 %v3580
  %v4443 = vunpack.c.h.b16 %v3580
  %v4444 = vunpack.c.l.b16 %v3581
  %v4445 = vunpack.c.h.b16 %v3581
  %v4446 = vunpack.c.l.b16 %v3582
  %v4447 = vunpack.c.h.b16 %v3582
  %v4448 = vunpack.c.l.b16 %v3583
  %v4449 = vunpack.c.h.b16 %v3583
  %v4450 = vunpack.c.l.b16 %v3584
  %v4451 = vunpack.c.h.b16 %v3584
  %v4452 = vunpack.c.l.b16 %v3585
  %v4453 = vunpack.c.h.b16 %v3585
  %v4454 = vunpack.c.l.b16 %v3586
  %v4455 = vunpack.c.h.b16 %v3586
  %v4456 = vunpack.c.l.b16 %v3587
  %v4457 = vunpack.c.h.b16 %v3587
  %v4458 = vunpack.c.l.b16 %v3588
  %v4459 = vunpack.c.h.b16 %v3588
  %v4460 = vunpack.c.l.b16 %v3589
  %v4461 = vunpack.c.h.b16 %v3589
  %v4462 = vunpack.c.l.b16 %v3590
  %v4463 = vunpack.c.h.b16 %v3590
  %v4464 = vunpack.c.l.b16 %v3591
  %v4465 = vunpack.c.h.b16 %v3591
  %v4466 = vunpack.c.l.b16 %v3592
  %v4467 = vunpack.c.h.b16 %v3592
  %v4468 = vunpack.c.l.b16 %v3593
  %v4469 = vunpack.c.h.b16 %v3593
  %v4470 = vunpack.c.l.b16 %v3594
  %v4471 = vunpack.c.h.b16 %v3594
  %v4472 = vunpack.c.l.b16 %v3595
  %v4473 = vunpack.c.h.b16 %v3595
  %v4474 = vunpack.c.l.b16 %v3596
  %v4475 = vunpack.c.h.b16 %v3596
  %v4476 = vunpack.c.l.b16 %v3597
  %v4477 = vunpack.c.h.b16 %v3597
  %v4478 = vunpack.c.l.b16 %v3598
  %v4479 = vunpack.c.h.b16 %v3598
  %v4480 = vunpack.c.l.b16 %v3599
  %v4481 = vunpack.c.h.b16 %v3599
  %v4482 = vunpack.c.l.b16 %v3600
  %v4483 = vunpack.c.h.b16 %v3600
  %v4484 = vunpack.c.l.b16 %v3601
  %v4485 = vunpack.c.h.b16 %v3601
  %v4486 = vunpack.c.l.b16 %v3602
  %v4487 = vunpack.c.h.b16 %v3602
  %v4488 = vunpack.c.l.b16 %v3603
  %v4489 = vunpack.c.h.b16 %v3603
  %v4490 = vunpack.c.l.b16 %v3604
  %v4491 = vunpack.c.h.b16 %v3604
  %v4492 = vunpack.c.l.b16 %v3605
  %v4493 = vunpack.c.h.b16 %v3605
  %v4494 = vpack.c.b16 %v3986, %v3982
  %v4495 = vpack.c.b16 %v3987, %v3983
  %v4496 = vpack.c.b16 %v3988, %v3984
  %v4497 = vpack.c.b16 %v3989, %v3985
  %v4498 = vpack.c.b16 %v3994, %v3990
  %v4499 = vpack.c.b16 %v3995, %v3991
  %v4500 = vpack.c.b16 %v3996, %v3992
  %v4501 = vpack.c.b16 %v3997, %v3993
  %v4502 = vpack.c.b16 %v4002, %v3998
  %v4503 = vpack.c.b16 %v4003, %v3999
  %v4504 = vpack.c.b16 %v4004, %v4000
  %v4505 = vpack.c.b16 %v4005, %v4001
  %v4506 = vpack.c.b16 %v4010, %v4006
  %v4507 = vpack.c.b16 %v4011, %v4007
  %v4508 = vpack.c.b16 %v4012, %v4008
  %v4509 = vpack.c.b16 %v4013, %v4009
  %v4510 = vpack.c.b16 %v4018, %v4014
  %v4511 = vpack.c.b16 %v4019, %v4015
  %v4512 = vpack.c.b16 %v4020, %v4016
  %v4513 = vpack.c.b16 %v4021, %v4017
  %v4514 = vpack.c.b16 %v4026, %v4022
  %v4515 = vpack.c.b16 %v4027, %v4023
  %v4516 = vpack.c.b16 %v4028, %v4024
  %v4517 = vpack.c.b16 %v4029, %v4025
  %v4518 = vpack.c.b16 %v4034, %v4030
  %v4519 = vpack.c.b16 %v4035, %v4031
  %v4520 = vpack.c.b16 %v4036, %v4032
  %v4521 = vpack.c.b16 %v4037, %v4033
  %v4522 = vpack.c.b16 %v4042, %v4038
  %v4523 = vpack.c.b16 %v4043, %v4039
  %v4524 = vpack.c.b16 %v4044, %v4040
  %v4525 = vpack.c.b16 %v4045, %v4041
  %v4526 = vpack.c.b16 %v4050, %v4046
  %v4527 = vpack.c.b16 %v4051, %v4047
  %v4528 = vpack.c.b16 %v4052, %v4048
  %v4529 = vpack.c.b16 %v4053, %v4049
  %v4530 = vpack.c.b16 %v4058, %v4054
  %v4531 = vpack.c.b16 %v4059, %v4055
  %v4532 = vpack.c.b16 %v4060, %v4056
  %v4533 = vpack.c.b16 %v4061, %v4057
  %v4534 = vpack.c.b16 %v4066, %v4062
  %v4535 = vpack.c.b16 %v4067, %v4063
  %v4536 = vpack.c.b16 %v4068, %v4064
  %v4537 = vpack.c.b16 %v4069, %v4065
  %v4538 = vpack.c.b16 %v4074, %v4070
  %v4539 = vpack.c.b16 %v4075, %v4071
  %v4540 = vpack.c.b16 %v4076, %v4072
  %v4541 = vpack.c.b16 %v4077, %v4073
  %v4542 = vpack.c.b16 %v4082, %v4078
  %v4543 = vpack.c.b16 %v4083, %v4079
  %v4544 = vpack.c.b16 %v4084, %v4080
  %v4545 = vpack.c.b16 %v4085, %v4081
  %v4546 = vpack.c.b16 %v4090, %v4086
  %v4547 = vpack.c.b16 %v4091, %v4087
  %v4548 = vpack.c.b16 %v4092, %v4088
  %v4549 = vpack.c.b16 %v4093, %v4089
  %v4550 = vpack.c.b16 %v4098, %v4094
  %v4551 = vpack.c.b16 %v4099, %v4095
  %v4552 = vpack.c.b16 %v4100, %v4096
  %v4553 = vpack.c.b16 %v4101, %v4097
  %v4554 = vpack.c.b16 %v4106, %v4102
  %v4555 = vpack.c.b16 %v4107, %v4103
  %v4556 = vpack.c.b16 %v4108, %v4104
  %v4557 = vpack.c.b16 %v4109, %v4105
  %v4558 = vpack.c.b16 %v4114, %v4110
  %v4559 = vpack.c.b16 %v4115, %v4111
  %v4560 = vpack.c.b16 %v4116, %v4112
  %v4561 = vpack.c.b16 %v4117, %v4113
  %v4562 = vpack.c.b16 %v4122, %v4118
  %v4563 = vpack.c.b16 %v4123, %v4119
  %v4564 = vpack.c.b16 %v4124, %v4120
  %v4565 = vpack.c.b16 %v4125, %v4121
  %v4566 = vpack.c.b16 %v4130, %v4126
  %v4567 = vpack.c.b16 %v4131, %v4127
  %v4568 = vpack.c.b16 %v4132, %v4128
  %v4569 = vpack.c.b16 %v4133, %v4129
  %v4570 = vpack.c.b16 %v4138, %v4134
  %v4571 = vpack.c.b16 %v4139, %v4135
  %v4572 = vpack.c.b16 %v4140, %v4136
  %v4573 = vpack.c.b16 %v4141, %v4137
  %v4574 = vpack.c.b16 %v4146, %v4142
  %v4575 = vpack.c.b16 %v4147, %v4143
  %v4576 = vpack.c.b16 %v4148, %v4144
  %v4577 = vpack.c.b16 %v4149, %v4145
  %v4578 = vpack.c.b16 %v4154, %v4150
  %v4579 = vpack.c.b16 %v4155, %v4151
  %v4580 = vpack.c.b16 %v4156, %v4152
  %v4581 = vpack.c.b16 %v4157, %v4153
  %v4582 = vpack.c.b16 %v4162, %v4158
  %v4583 = vpack.c.b16 %v4163, %v4159
  %v4584 = vpack.c.b16 %v4164, %v4160
  %v4585 = vpack.c.b16 %v4165, %v4161
  %v4586 = vpack.c.b16 %v4170, %v4166
  %v4587 = vpack.c.b16 %v4171, %v4167
  %v4588 = vpack.c.b16 %v4172, %v4168
  %v4589 = vpack.c.b16 %v4173, %v4169
  %v4590 = vpack.c.b16 %v4178, %v4174
  %v4591 = vpack.c.b16 %v4179, %v4175
  %v4592 = vpack.c.b16 %v4180, %v4176
  %v4593 = vpack.c.b16 %v4181, %v4177
  %v4594 = vpack.c.b16 %v4186, %v4182
  %v4595 = vpack.c.b16 %v4187, %v4183
  %v4596 = vpack.c.b16 %v4188, %v4184
  %v4597 = vpack.c.b16 %v4189, %v4185
  %v4598 = vpack.c.b16 %v4194, %v4190
  %v4599 = vpack.c.b16 %v4195, %v4191
  %v4600 = vpack.c.b16 %v4196, %v4192
  %v4601 = vpack.c.b16 %v4197, %v4193
  %v4602 = vpack.c.b16 %v4202, %v4198
  %v4603 = vpack.c.b16 %v4203, %v4199
  %v4604 = vpack.c.b16 %v4204, %v4200
  %v4605 = vpack.c.b16 %v4205, %v4201
  %v4606 = vpack.c.b16 %v4210, %v4206
  %v4607 = vpack.c.b16 %v4211, %v4207
  %v4608 = vpack.c.b16 %v4212, %v4208
  %v4609 = vpack.c.b16 %v4213, %v4209
  %v4610 = vpack.c.b16 %v4218, %v4214
  %v4611 = vpack.c.b16 %v4219, %v4215
  %v4612 = vpack.c.b16 %v4220, %v4216
  %v4613 = vpack.c.b16 %v4221, %v4217
  %v4614 = vpack.c.b16 %v4226, %v4222
  %v4615 = vpack.c.b16 %v4227, %v4223
  %v4616 = vpack.c.b16 %v4228, %v4224
  %v4617 = vpack.c.b16 %v4229, %v4225
  %v4618 = vpack.c.b16 %v4234, %v4230
  %v4619 = vpack.c.b16 %v4235, %v4231
  %v4620 = vpack.c.b16 %v4236, %v4232
  %v4621 = vpack.c.b16 %v4237, %v4233
  %v4622 = vpack.c.b16 %v4242, %v4238
  %v4623 = vpack.c.b16 %v4243, %v4239
  %v4624 = vpack.c.b16 %v4244, %v4240
  %v4625 = vpack.c.b16 %v4245, %v4241
  %v4626 = vpack.c.b16 %v4250, %v4246
  %v4627 = vpack.c.b16 %v4251, %v4247
  %v4628 = vpack.c.b16 %v4252, %v4248
  %v4629 = vpack.c.b16 %v4253, %v4249
  %v4630 = vpack.c.b16 %v4258, %v4254
  %v4631 = vpack.c.b16 %v4259, %v4255
  %v4632 = vpack.c.b16 %v4260, %v4256
  %v4633 = vpack.c.b16 %v4261, %v4257
  %v4634 = vpack.c.b16 %v4266, %v4262
  %v4635 = vpack.c.b16 %v4267, %v4263
  %v4636 = vpack.c.b16 %v4268, %v4264
  %v4637 = vpack.c.b16 %v4269, %v4265
  %v4638 = vpack.c.b16 %v4274, %v4270
  %v4639 = vpack.c.b16 %v4275, %v4271
  %v4640 = vpack.c.b16 %v4276, %v4272
  %v4641 = vpack.c.b16 %v4277, %v4273
  %v4642 = vpack.c.b16 %v4282, %v4278
  %v4643 = vpack.c.b16 %v4283, %v4279
  %v4644 = vpack.c.b16 %v4284, %v4280
  %v4645 = vpack.c.b16 %v4285, %v4281
  %v4646 = vpack.c.b16 %v4290, %v4286
  %v4647 = vpack.c.b16 %v4291, %v4287
  %v4648 = vpack.c.b16 %v4292, %v4288
  %v4649 = vpack.c.b16 %v4293, %v4289
  %v4650 = vpack.c.b16 %v4298, %v4294
  %v4651 = vpack.c.b16 %v4299, %v4295
  %v4652 = vpack.c.b16 %v4300, %v4296
  %v4653 = vpack.c.b16 %v4301, %v4297
  %v4654 = vpack.c.b16 %v4306, %v4302
  %v4655 = vpack.c.b16 %v4307, %v4303
  %v4656 = vpack.c.b16 %v4308, %v4304
  %v4657 = vpack.c.b16 %v4309, %v4305
  %v4658 = vpack.c.b16 %v4314, %v4310
  %v4659 = vpack.c.b16 %v4315, %v4311
  %v4660 = vpack.c.b16 %v4316, %v4312
  %v4661 = vpack.c.b16 %v4317, %v4313
  %v4662 = vpack.c.b16 %v4322, %v4318
  %v4663 = vpack.c.b16 %v4323, %v4319
  %v4664 = vpack.c.b16 %v4324, %v4320
  %v4665 = vpack.c.b16 %v4325, %v4321
  %v4666 = vpack.c.b16 %v4330, %v4326
  %v4667 = vpack.c.b16 %v4331, %v4327
  %v4668 = vpack.c.b16 %v4332, %v4328
  %v4669 = vpack.c.b16 %v4333, %v4329
  %v4670 = vpack.c.b16 %v4338, %v4334
  %v4671 = vpack.c.b16 %v4339, %v4335
  %v4672 = vpack.c.b16 %v4340, %v4336
  %v4673 = vpack.c.b16 %v4341, %v4337
  %v4674 = vpack.c.b16 %v4346, %v4342
  %v4675 = vpack.c.b16 %v4347, %v4343
  %v4676 = vpack.c.b16 %v4348, %v4344
  %v4677 = vpack.c.b16 %v4349, %v4345
  %v4678 = vpack.c.b16 %v4354, %v4350
  %v4679 = vpack.c.b16 %v4355, %v4351
  %v4680 = vpack.c.b16 %v4356, %v4352
  %v4681 = vpack.c.b16 %v4357, %v4353
  %v4682 = vpack.c.b16 %v4362, %v4358
  %v4683 = vpack.c.b16 %v4363, %v4359
  %v4684 = vpack.c.b16 %v4364, %v4360
  %v4685 = vpack.c.b16 %v4365, %v4361
  %v4686 = vpack.c.b16 %v4370, %v4366
  %v4687 = vpack.c.b16 %v4371, %v4367
  %v4688 = vpack.c.b16 %v4372, %v4368
  %v4689 = vpack.c.b16 %v4373, %v4369
  %v4690 = vpack.c.b16 %v4378, %v4374
  %v4691 = vpack.c.b16 %v4379, %v4375
  %v4692 = vpack.c.b16 %v4380, %v4376
  %v4693 = vpack.c.b16 %v4381, %v4377
  %v4694 = vpack.c.b16 %v4386, %v4382
  %v4695 = vpack.c.b16 %v4387, %v4383
  %v4696 = vpack.c.b16 %v4388, %v4384
  %v4697 = vpack.c.b16 %v4389, %v4385
  %v4698 = vpack.c.b16 %v4394, %v4390
  %v4699 = vpack.c.b16 %v4395, %v4391
  %v4700 = vpack.c.b16 %v4396, %v4392
  %v4701 = vpack.c.b16 %v4397, %v4393
  %v4702 = vpack.c.b16 %v4402, %v4398
  %v4703 = vpack.c.b16 %v4403, %v4399
  %v4704 = vpack.c.b16 %v4404, %v4400
  %v4705 = vpack.c.b16 %v4405, %v4401
  %v4706 = vpack.c.b16 %v4410, %v4406
  %v4707 = vpack.c.b16 %v4411, %v4407
  %v4708 = vpack.c.b16 %v4412, %v4408
  %v4709 = vpack.c.b16 %v4413, %v4409
  %v4710 = vpack.c.b16 %v4418, %v4414
  %v4711 = vpack.c.b16 %v4419, %v4415
  %v4712 = vpack.c.b16 %v4420, %v4416
  %v4713 = vpack.c.b16 %v4421, %v4417
  %v4714 = vpack.c.b16 %v4426, %v4422
  %v4715 = vpack.c.b16 %v4427, %v4423
  %v4716 = vpack.c.b16 %v4428, %v4424
  %v4717 = vpack.c.b16 %v4429, %v4425
  %v4718 = vpack.c.b16 %v4434, %v4430
  %v4719 = vpack.c.b16 %v4435, %v4431
  %v4720 = vpack.c.b16 %v4436, %v4432
  %v4721 = vpack.c.b16 %v4437, %v4433
  %v4722 = vpack.c.b16 %v4442, %v4438
  %v4723 = vpack.c.b16 %v4443, %v4439
  %v4724 = vpack.c.b16 %v4444, %v4440
  %v4725 = vpack.c.b16 %v4445, %v4441
  %v4726 = vpack.c.b16 %v4450, %v4446
  %v4727 = vpack.c.b16 %v4451, %v4447
  %v4728 = vpack.c.b16 %v4452, %v4448
  %v4729 = vpack.c.b16 %v4453, %v4449
  %v4730 = vpack.c.b16 %v4458, %v4454
  %v4731 = vpack.c.b16 %v4459, %v4455
  %v4732 = vpack.c.b16 %v4460, %v4456
  %v4733 = vpack.c.b16 %v4461, %v4457
  %v4734 = vpack.c.b16 %v4466, %v4462
  %v4735 = vpack.c.b16 %v4467, %v4463
  %v4736 = vpack.c.b16 %v4468, %v4464
  %v4737 = vpack.c.b16 %v4469, %v4465
  %v4738 = vpack.c.b16 %v4474, %v4470
  %v4739 = vpack.c.b16 %v4475, %v4471
  %v4740 = vpack.c.b16 %v4476, %v4472
  %v4741 = vpack.c.b16 %v4477, %v4473
  %v4742 = vpack.c.b16 %v4482, %v4478
  %v4743 = vpack.c.b16 %v4483, %v4479
  %v4744 = vpack.c.b16 %v4484, %v4480
  %v4745 = vpack.c.b16 %v4485, %v4481
  %v4746 = vpack.c.b16 %v4490, %v4486
  %v4747 = vpack.c.b16 %v4491, %v4487
  %v4748 = vpack.c.b16 %v4492, %v4488
  %v4749 = vpack.c.b16 %v4493, %v4489
  %5006 = vmatprep.subr.bf16.mxu0 %v4495
  %5007 = vmatpush1.bf16.msra.mxu0 %v4494
  %5008 = vmatprep.subr.bf16.mxu0 %v4499
  %5009 = vmatpush1.bf16.msra.mxu0 %v4498
  %5010 = vmatprep.subr.bf16.mxu0 %v4503
  %5011 = vmatpush1.bf16.msra.mxu0 %v4502
  %5012 = vmatprep.subr.bf16.mxu0 %v4507
  %5013 = vmatpush1.bf16.msra.mxu0 %v4506
  %5014 = vmatprep.subr.bf16.mxu0 %v4511
  %5015 = vmatpush1.bf16.msra.mxu0 %v4510
  %5016 = vmatprep.subr.bf16.mxu0 %v4515
  %5017 = vmatpush1.bf16.msra.mxu0 %v4514
  %5018 = vmatprep.subr.bf16.mxu0 %v4519
  %5019 = vmatpush1.bf16.msra.mxu0 %v4518
  %5020 = vmatprep.subr.bf16.mxu0 %v4523
  %5021 = vmatpush1.bf16.msra.mxu0 %v4522
  %5022 = vmatprep.subr.bf16.mxu0 %v4527
  %5023 = vmatpush1.bf16.msra.mxu0 %v4526
  %5024 = vmatprep.subr.bf16.mxu0 %v4531
  %5025 = vmatpush1.bf16.msra.mxu0 %v4530
  %5026 = vmatprep.subr.bf16.mxu0 %v4535
  %5027 = vmatpush1.bf16.msra.mxu0 %v4534
  %5028 = vmatprep.subr.bf16.mxu0 %v4539
  %5029 = vmatpush1.bf16.msra.mxu0 %v4538
  %5030 = vmatprep.subr.bf16.mxu0 %v4543
  %5031 = vmatpush1.bf16.msra.mxu0 %v4542
  %5032 = vmatprep.subr.bf16.mxu0 %v4547
  %5033 = vmatpush1.bf16.msra.mxu0 %v4546
  %5034 = vmatprep.subr.bf16.mxu0 %v4551
  %5035 = vmatpush1.bf16.msra.mxu0 %v4550
  %5036 = vmatprep.subr.bf16.mxu0 %v4555
  %5037 = vmatpush1.bf16.msra.mxu0 %v4554
  %5038 = vmatprep.mubr.bf16.mxu0 %v3343
  %5039 = vmatmul.mubr.bf16.gmra.mrb[0].mxu0 %v3342
  %v5040 = vpop.f32.mrb[0].mxu0
  %v5041 = vadd.f32 %v3709, %v5040
  %v5042 = vpop.f32.mrb[0].mxu0
  %v5043 = vadd.f32 %v3713, %v5042
  %v5044 = vpop.f32.mrb[0].mxu0
  %v5045 = vpop.f32.mrb[0].mxu0
  %5046 = vdwg.mxu0
  %5047 = vmatprep.subr.bf16.mxu0 %v4559
  %5048 = vmatpush1.bf16.msra.mxu0 %v4558
  %5049 = vmatprep.subr.bf16.mxu0 %v4563
  %5050 = vmatpush1.bf16.msra.mxu0 %v4562
  %5051 = vmatprep.subr.bf16.mxu0 %v4567
  %5052 = vmatpush1.bf16.msra.mxu0 %v4566
  %5053 = vmatprep.subr.bf16.mxu0 %v4571
  %5054 = vmatpush1.bf16.msra.mxu0 %v4570
  %5055 = vmatprep.subr.bf16.mxu0 %v4575
  %5056 = vmatpush1.bf16.msra.mxu0 %v4574
  %5057 = vmatprep.subr.bf16.mxu0 %v4579
  %5058 = vmatpush1.bf16.msra.mxu0 %v4578
  %5059 = vmatprep.subr.bf16.mxu0 %v4583
  %5060 = vmatpush1.bf16.msra.mxu0 %v4582
  %5061 = vmatprep.subr.bf16.mxu0 %v4587
  %5062 = vmatpush1.bf16.msra.mxu0 %v4586
  %5063 = vmatprep.subr.bf16.mxu0 %v4591
  %5064 = vmatpush1.bf16.msra.mxu0 %v4590
  %5065 = vmatprep.subr.bf16.mxu0 %v4595
  %5066 = vmatpush1.bf16.msra.mxu0 %v4594
  %5067 = vmatprep.subr.bf16.mxu0 %v4599
  %5068 = vmatpush1.bf16.msra.mxu0 %v4598
  %5069 = vmatprep.subr.bf16.mxu0 %v4603
  %5070 = vmatpush1.bf16.msra.mxu0 %v4602
  %5071 = vmatprep.subr.bf16.mxu0 %v4607
  %5072 = vmatpush1.bf16.msra.mxu0 %v4606
  %5073 = vmatprep.subr.bf16.mxu0 %v4611
  %5074 = vmatpush1.bf16.msra.mxu0 %v4610
  %5075 = vmatprep.subr.bf16.mxu0 %v4615
  %5076 = vmatpush1.bf16.msra.mxu0 %v4614
  %5077 = vmatprep.subr.bf16.mxu0 %v4619
  %5078 = vmatpush1.bf16.msra.mxu0 %v4618
  %5079 = vmatprep.mubr.bf16.mxu0 %v3345
  %5080 = vmatmul.mubr.bf16.gmra.mrb[0].mxu0 %v3344
  %v5081 = vpop.f32.mrb[0].mxu0
  %v5082 = vadd.f32 %v5041, %v5081
  %v5083 = vpop.f32.mrb[0].mxu0
  %v5084 = vadd.f32 %v5043, %v5083
  %v5085 = vpop.f32.mrb[0].mxu0
  %v5086 = vpop.f32.mrb[0].mxu0
  %5087 = vdwg.mxu0
  %5088 = vmatprep.subr.bf16.mxu0 %v4623
  %5089 = vmatpush1.bf16.msra.mxu0 %v4622
  %5090 = vmatprep.subr.bf16.mxu0 %v4627
  %5091 = vmatpush1.bf16.msra.mxu0 %v4626
  %5092 = vmatprep.subr.bf16.mxu0 %v4631
  %5093 = vmatpush1.bf16.msra.mxu0 %v4630
  %5094 = vmatprep.subr.bf16.mxu0 %v4635
  %5095 = vmatpush1.bf16.msra.mxu0 %v4634
  %5096 = vmatprep.subr.bf16.mxu0 %v4639
  %5097 = vmatpush1.bf16.msra.mxu0 %v4638
  %5098 = vmatprep.subr.bf16.mxu0 %v4643
  %5099 = vmatpush1.bf16.msra.mxu0 %v4642
  %5100 = vmatprep.subr.bf16.mxu0 %v4647
  %5101 = vmatpush1.bf16.msra.mxu0 %v4646
  %5102 = vmatprep.subr.bf16.mxu0 %v4651
  %5103 = vmatpush1.bf16.msra.mxu0 %v4650
  %5104 = vmatprep.subr.bf16.mxu0 %v4655
  %5105 = vmatpush1.bf16.msra.mxu0 %v4654
  %5106 = vmatprep.subr.bf16.mxu0 %v4659
  %5107 = vmatpush1.bf16.msra.mxu0 %v4658
  %5108 = vmatprep.subr.bf16.mxu0 %v4663
  %5109 = vmatpush1.bf16.msra.mxu0 %v4662
  %5110 = vmatprep.subr.bf16.mxu0 %v4667
  %5111 = vmatpush1.bf16.msra.mxu0 %v4666
  %5112 = vmatprep.subr.bf16.mxu0 %v4671
  %5113 = vmatpush1.bf16.msra.mxu0 %v4670
  %5114 = vmatprep.subr.bf16.mxu0 %v4675
  %5115 = vmatpush1.bf16.msra.mxu0 %v4674
  %5116 = vmatprep.subr.bf16.mxu0 %v4679
  %5117 = vmatpush1.bf16.msra.mxu0 %v4678
  %5118 = vmatprep.subr.bf16.mxu0 %v4683
  %5119 = vmatpush1.bf16.msra.mxu0 %v4682
  %5120 = vmatprep.mubr.bf16.mxu0 %v3347
  %5121 = vmatmul.mubr.bf16.gmra.mrb[0].mxu0 %v3346
  %v5122 = vpop.f32.mrb[0].mxu0
  %v5123 = vadd.f32 %v5082, %v5122
  %v5124 = vpop.f32.mrb[0].mxu0
  %v5125 = vadd.f32 %v5084, %v5124
  %v5126 = vpop.f32.mrb[0].mxu0
  %v5127 = vpop.f32.mrb[0].mxu0
  %5128 = vdwg.mxu0
  %5129 = vmatprep.subr.bf16.mxu0 %v4687
  %5130 = vmatpush1.bf16.msra.mxu0 %v4686
  %5131 = vmatprep.subr.bf16.mxu0 %v4691
  %5132 = vmatpush1.bf16.msra.mxu0 %v4690
  %5133 = vmatprep.subr.bf16.mxu0 %v4695
  %5134 = vmatpush1.bf16.msra.mxu0 %v4694
  %5135 = vmatprep.subr.bf16.mxu0 %v4699
  %5136 = vmatpush1.bf16.msra.mxu0 %v4698
  %5137 = vmatprep.subr.bf16.mxu0 %v4703
  %5138 = vmatpush1.bf16.msra.mxu0 %v4702
  %5139 = vmatprep.subr.bf16.mxu0 %v4707
  %5140 = vmatpush1.bf16.msra.mxu0 %v4706
  %5141 = vmatprep.subr.bf16.mxu0 %v4711
  %5142 = vmatpush1.bf16.msra.mxu0 %v4710
  %5143 = vmatprep.subr.bf16.mxu0 %v4715
  %5144 = vmatpush1.bf16.msra.mxu0 %v4714
  %5145 = vmatprep.subr.bf16.mxu0 %v4719
  %5146 = vmatpush1.bf16.msra.mxu0 %v4718
  %5147 = vmatprep.subr.bf16.mxu0 %v4723
  %5148 = vmatpush1.bf16.msra.mxu0 %v4722
  %5149 = vmatprep.subr.bf16.mxu0 %v4727
  %5150 = vmatpush1.bf16.msra.mxu0 %v4726
  %5151 = vmatprep.subr.bf16.mxu0 %v4731
  %5152 = vmatpush1.bf16.msra.mxu0 %v4730
  %5153 = vmatprep.subr.bf16.mxu0 %v4735
  %5154 = vmatpush1.bf16.msra.mxu0 %v4734
  %5155 = vmatprep.subr.bf16.mxu0 %v4739
  %5156 = vmatpush1.bf16.msra.mxu0 %v4738
  %5157 = vmatprep.subr.bf16.mxu0 %v4743
  %5158 = vmatpush1.bf16.msra.mxu0 %v4742
  %5159 = vmatprep.subr.bf16.mxu0 %v4747
  %5160 = vmatpush1.bf16.msra.mxu0 %v4746
  %5161 = vmatprep.mubr.bf16.mxu0 %v3349
  %5162 = vmatmul.mubr.bf16.gmra.mrb[0].mxu0 %v3348
  %v5163 = vpop.f32.mrb[0].mxu0
  %v5164 = vadd.f32 %v5123, %v5163
  %v5165 = vpop.f32.mrb[0].mxu0
  %v5166 = vadd.f32 %v5125, %v5165
  %v5167 = vpop.f32.mrb[0].mxu0
  %v5168 = vpop.f32.mrb[0].mxu0
  %5169 = vdwg.mxu0
  %5170 = vmatprep.subr.bf16.mxu0 %v4497
  %5171 = vmatpush1.bf16.msra.mxu0 %v4496
  %5172 = vmatprep.subr.bf16.mxu0 %v4501
  %5173 = vmatpush1.bf16.msra.mxu0 %v4500
  %5174 = vmatprep.subr.bf16.mxu0 %v4505
  %5175 = vmatpush1.bf16.msra.mxu0 %v4504
  %5176 = vmatprep.subr.bf16.mxu0 %v4509
  %5177 = vmatpush1.bf16.msra.mxu0 %v4508
  %5178 = vmatprep.subr.bf16.mxu0 %v4513
  %5179 = vmatpush1.bf16.msra.mxu0 %v4512
  %5180 = vmatprep.subr.bf16.mxu0 %v4517
  %5181 = vmatpush1.bf16.msra.mxu0 %v4516
  %5182 = vmatprep.subr.bf16.mxu0 %v4521
  %5183 = vmatpush1.bf16.msra.mxu0 %v4520
  %5184 = vmatprep.subr.bf16.mxu0 %v4525
  %5185 = vmatpush1.bf16.msra.mxu0 %v4524
  %5186 = vmatprep.subr.bf16.mxu0 %v4529
  %5187 = vmatpush1.bf16.msra.mxu0 %v4528
  %5188 = vmatprep.subr.bf16.mxu0 %v4533
  %5189 = vmatpush1.bf16.msra.mxu0 %v4532
  %5190 = vmatprep.subr.bf16.mxu0 %v4537
  %5191 = vmatpush1.bf16.msra.mxu0 %v4536
  %5192 = vmatprep.subr.bf16.mxu0 %v4541
  %5193 = vmatpush1.bf16.msra.mxu0 %v4540
  %5194 = vmatprep.subr.bf16.mxu0 %v4545
  %5195 = vmatpush1.bf16.msra.mxu0 %v4544
  %5196 = vmatprep.subr.bf16.mxu0 %v4549
  %5197 = vmatpush1.bf16.msra.mxu0 %v4548
  %5198 = vmatprep.subr.bf16.mxu0 %v4553
  %5199 = vmatpush1.bf16.msra.mxu0 %v4552
  %5200 = vmatprep.subr.bf16.mxu0 %v4557
  %5201 = vmatpush1.bf16.msra.mxu0 %v4556
  %5202 = vmatprep.mubr.bf16.mxu0 %v3343
  %5203 = vmatmul.mubr.bf16.gmra.mrb[0].mxu0 %v3342
  %v5204 = vpop.f32.mrb[0].mxu0
  %v5205 = vadd.f32 %v3717, %v5204
  %v5206 = vpop.f32.mrb[0].mxu0
  %v5207 = vadd.f32 %v3721, %v5206
  %v5208 = vpop.f32.mrb[0].mxu0
  %v5209 = vpop.f32.mrb[0].mxu0
  %5210 = vdwg.mxu0
  %5211 = vmatprep.subr.bf16.mxu0 %v4561
  %5212 = vmatpush1.bf16.msra.mxu0 %v4560
  %5213 = vmatprep.subr.bf16.mxu0 %v4565
  %5214 = vmatpush1.bf16.msra.mxu0 %v4564
  %5215 = vmatprep.subr.bf16.mxu0 %v4569
  %5216 = vmatpush1.bf16.msra.mxu0 %v4568
  %5217 = vmatprep.subr.bf16.mxu0 %v4573
  %5218 = vmatpush1.bf16.msra.mxu0 %v4572
  %5219 = vmatprep.subr.bf16.mxu0 %v4577
  %5220 = vmatpush1.bf16.msra.mxu0 %v4576
  %5221 = vmatprep.subr.bf16.mxu0 %v4581
  %5222 = vmatpush1.bf16.msra.mxu0 %v4580
  %5223 = vmatprep.subr.bf16.mxu0 %v4585
  %5224 = vmatpush1.bf16.msra.mxu0 %v4584
  %5225 = vmatprep.subr.bf16.mxu0 %v4589
  %5226 = vmatpush1.bf16.msra.mxu0 %v4588
  %5227 = vmatprep.subr.bf16.mxu0 %v4593
  %5228 = vmatpush1.bf16.msra.mxu0 %v4592
  %5229 = vmatprep.subr.bf16.mxu0 %v4597
  %5230 = vmatpush1.bf16.msra.mxu0 %v4596
  %5231 = vmatprep.subr.bf16.mxu0 %v4601
  %5232 = vmatpush1.bf16.msra.mxu0 %v4600
  %5233 = vmatprep.subr.bf16.mxu0 %v4605
  %5234 = vmatpush1.bf16.msra.mxu0 %v4604
  %5235 = vmatprep.subr.bf16.mxu0 %v4609
  %5236 = vmatpush1.bf16.msra.mxu0 %v4608
  %5237 = vmatprep.subr.bf16.mxu0 %v4613
  %5238 = vmatpush1.bf16.msra.mxu0 %v4612
  %5239 = vmatprep.subr.bf16.mxu0 %v4617
  %5240 = vmatpush1.bf16.msra.mxu0 %v4616
  %5241 = vmatprep.subr.bf16.mxu0 %v4621
  %5242 = vmatpush1.bf16.msra.mxu0 %v4620
  %5243 = vmatprep.mubr.bf16.mxu0 %v3345
  %5244 = vmatmul.mubr.bf16.gmra.mrb[0].mxu0 %v3344
  %v5245 = vpop.f32.mrb[0].mxu0
  %v5246 = vadd.f32 %v5205, %v5245
  %v5247 = vpop.f32.mrb[0].mxu0
  %v5248 = vadd.f32 %v5207, %v5247
  %v5249 = vpop.f32.mrb[0].mxu0
  %v5250 = vpop.f32.mrb[0].mxu0
  %5251 = vdwg.mxu0
  %5252 = vmatprep.subr.bf16.mxu0 %v4625
  %5253 = vmatpush1.bf16.msra.mxu0 %v4624
  %5254 = vmatprep.subr.bf16.mxu0 %v4629
  %5255 = vmatpush1.bf16.msra.mxu0 %v4628
  %5256 = vmatprep.subr.bf16.mxu0 %v4633
  %5257 = vmatpush1.bf16.msra.mxu0 %v4632
  %5258 = vmatprep.subr.bf16.mxu0 %v4637
  %5259 = vmatpush1.bf16.msra.mxu0 %v4636
  %5260 = vmatprep.subr.bf16.mxu0 %v4641
  %5261 = vmatpush1.bf16.msra.mxu0 %v4640
  %5262 = vmatprep.subr.bf16.mxu0 %v4645
  %5263 = vmatpush1.bf16.msra.mxu0 %v4644
  %5264 = vmatprep.subr.bf16.mxu0 %v4649
  %5265 = vmatpush1.bf16.msra.mxu0 %v4648
  %5266 = vmatprep.subr.bf16.mxu0 %v4653
  %5267 = vmatpush1.bf16.msra.mxu0 %v4652
  %5268 = vmatprep.subr.bf16.mxu0 %v4657
  %5269 = vmatpush1.bf16.msra.mxu0 %v4656
  %5270 = vmatprep.subr.bf16.mxu0 %v4661
  %5271 = vmatpush1.bf16.msra.mxu0 %v4660
  %5272 = vmatprep.subr.bf16.mxu0 %v4665
  %5273 = vmatpush1.bf16.msra.mxu0 %v4664
  %5274 = vmatprep.subr.bf16.mxu0 %v4669
  %5275 = vmatpush1.bf16.msra.mxu0 %v4668
  %5276 = vmatprep.subr.bf16.mxu0 %v4673
  %5277 = vmatpush1.bf16.msra.mxu0 %v4672
  %5278 = vmatprep.subr.bf16.mxu0 %v4677
  %5279 = vmatpush1.bf16.msra.mxu0 %v4676
  %5280 = vmatprep.subr.bf16.mxu0 %v4681
  %5281 = vmatpush1.bf16.msra.mxu0 %v4680
  %5282 = vmatprep.subr.bf16.mxu0 %v4685
  %5283 = vmatpush1.bf16.msra.mxu0 %v4684
  %5284 = vmatprep.mubr.bf16.mxu0 %v3347
  %5285 = vmatmul.mubr.bf16.gmra.mrb[0].mxu0 %v3346
  %v5286 = vpop.f32.mrb[0].mxu0
  %v5287 = vadd.f32 %v5246, %v5286
  %v5288 = vpop.f32.mrb[0].mxu0
  %v5289 = vadd.f32 %v5248, %v5288
  %v5290 = vpop.f32.mrb[0].mxu0
  %v5291 = vpop.f32.mrb[0].mxu0
  %5292 = vdwg.mxu0
  %5293 = vmatprep.subr.bf16.mxu0 %v4689
  %5294 = vmatpush1.bf16.msra.mxu0 %v4688
  %5295 = vmatprep.subr.bf16.mxu0 %v4693
  %5296 = vmatpush1.bf16.msra.mxu0 %v4692
  %5297 = vmatprep.subr.bf16.mxu0 %v4697
  %5298 = vmatpush1.bf16.msra.mxu0 %v4696
  %5299 = vmatprep.subr.bf16.mxu0 %v4701
  %5300 = vmatpush1.bf16.msra.mxu0 %v4700
  %5301 = vmatprep.subr.bf16.mxu0 %v4705
  %5302 = vmatpush1.bf16.msra.mxu0 %v4704
  %5303 = vmatprep.subr.bf16.mxu0 %v4709
  %5304 = vmatpush1.bf16.msra.mxu0 %v4708
  %5305 = vmatprep.subr.bf16.mxu0 %v4713
  %5306 = vmatpush1.bf16.msra.mxu0 %v4712
  %5307 = vmatprep.subr.bf16.mxu0 %v4717
  %5308 = vmatpush1.bf16.msra.mxu0 %v4716
  %5309 = vmatprep.subr.bf16.mxu0 %v4721
  %5310 = vmatpush1.bf16.msra.mxu0 %v4720
  %5311 = vmatprep.subr.bf16.mxu0 %v4725
  %5312 = vmatpush1.bf16.msra.mxu0 %v4724
  %5313 = vmatprep.subr.bf16.mxu0 %v4729
  %5314 = vmatpush1.bf16.msra.mxu0 %v4728
  %5315 = vmatprep.subr.bf16.mxu0 %v4733
  %5316 = vmatpush1.bf16.msra.mxu0 %v4732
  %5317 = vmatprep.subr.bf16.mxu0 %v4737
  %5318 = vmatpush1.bf16.msra.mxu0 %v4736
  %5319 = vmatprep.subr.bf16.mxu0 %v4741
  %5320 = vmatpush1.bf16.msra.mxu0 %v4740
  %5321 = vmatprep.subr.bf16.mxu0 %v4745
  %5322 = vmatpush1.bf16.msra.mxu0 %v4744
  %5323 = vmatprep.subr.bf16.mxu0 %v4749
  %5324 = vmatpush1.bf16.msra.mxu0 %v4748
  %5325 = vmatprep.mubr.bf16.mxu0 %v3349
  %5326 = vmatmul.mubr.bf16.gmra.mrb[0].mxu0 %v3348
  %v5327 = vpop.f32.mrb[0].mxu0
  %v5328 = vadd.f32 %v5287, %v5327
  %v5329 = vpop.f32.mrb[0].mxu0
  %v5330 = vadd.f32 %v5289, %v5329
  %v5331 = vpop.f32.mrb[0].mxu0
  %v5332 = vpop.f32.mrb[0].mxu0
  %5333 = vdwg.mxu0
  %v5334 = vmax.f32 %v5164, 0.0
  %v5335 = vmax.f32 %v5166, 0.0
  %v5336 = vmax.f32 %v5328, 0.0
  %v5337 = vmax.f32 %v5330, 0.0
  %v5338 = vpack.c.bf16 %v5334, %v5334
  %v5339 = vpack.c.bf16 %v5335, %v5335
  %v5340 = vpack.c.bf16 %v5336, %v5336
  %v5341 = vpack.c.bf16 %v5337, %v5337
  %v5343 = vlaneseq
  %v5344 = vshrl.u32 %v5343, 7
  %v5345 = vsub.s32 0, %v5344
  %v5346 = vrot.slane %v3671, %v5345
  %v5347 = vlaneseq
  %v5348 = vshrl.u32 %v5347, 7
  %v5349 = vsub.s32 1, %v5348
  %v5350 = vrot.slane %v3671, %v5349
  %v5417 = vunpack.c.l.b16 %v3607
  %v5418 = vunpack.c.h.b16 %v3607
  %v5419 = vunpack.c.l.b16 %v3608
  %v5420 = vunpack.c.h.b16 %v3608
  %v5421 = vunpack.c.l.b16 %v3609
  %v5422 = vunpack.c.h.b16 %v3609
  %v5423 = vunpack.c.l.b16 %v3610
  %v5424 = vunpack.c.h.b16 %v3610
  %v5425 = vunpack.c.l.b16 %v3611
  %v5426 = vunpack.c.h.b16 %v3611
  %v5427 = vunpack.c.l.b16 %v3612
  %v5428 = vunpack.c.h.b16 %v3612
  %v5429 = vunpack.c.l.b16 %v3613
  %v5430 = vunpack.c.h.b16 %v3613
  %v5431 = vunpack.c.l.b16 %v3614
  %v5432 = vunpack.c.h.b16 %v3614
  %v5433 = vunpack.c.l.b16 %v3615
  %v5434 = vunpack.c.h.b16 %v3615
  %v5435 = vunpack.c.l.b16 %v3616
  %v5436 = vunpack.c.h.b16 %v3616
  %v5437 = vunpack.c.l.b16 %v3617
  %v5438 = vunpack.c.h.b16 %v3617
  %v5439 = vunpack.c.l.b16 %v3618
  %v5440 = vunpack.c.h.b16 %v3618
  %v5441 = vunpack.c.l.b16 %v3619
  %v5442 = vunpack.c.h.b16 %v3619
  %v5443 = vunpack.c.l.b16 %v3620
  %v5444 = vunpack.c.h.b16 %v3620
  %v5445 = vunpack.c.l.b16 %v3621
  %v5446 = vunpack.c.h.b16 %v3621
  %v5447 = vunpack.c.l.b16 %v3622
  %v5448 = vunpack.c.h.b16 %v3622
  %v5449 = vunpack.c.l.b16 %v3623
  %v5450 = vunpack.c.h.b16 %v3623
  %v5451 = vunpack.c.l.b16 %v3624
  %v5452 = vunpack.c.h.b16 %v3624
  %v5453 = vunpack.c.l.b16 %v3625
  %v5454 = vunpack.c.h.b16 %v3625
  %v5455 = vunpack.c.l.b16 %v3626
  %v5456 = vunpack.c.h.b16 %v3626
  %v5457 = vunpack.c.l.b16 %v3627
  %v5458 = vunpack.c.h.b16 %v3627
  %v5459 = vunpack.c.l.b16 %v3628
  %v5460 = vunpack.c.h.b16 %v3628
  %v5461 = vunpack.c.l.b16 %v3629
  %v5462 = vunpack.c.h.b16 %v3629
  %v5463 = vunpack.c.l.b16 %v3630
  %v5464 = vunpack.c.h.b16 %v3630
  %v5465 = vunpack.c.l.b16 %v3631
  %v5466 = vunpack.c.h.b16 %v3631
  %v5467 = vunpack.c.l.b16 %v3632
  %v5468 = vunpack.c.h.b16 %v3632
  %v5469 = vunpack.c.l.b16 %v3633
  %v5470 = vunpack.c.h.b16 %v3633
  %v5471 = vunpack.c.l.b16 %v3634
  %v5472 = vunpack.c.h.b16 %v3634
  %v5473 = vunpack.c.l.b16 %v3635
  %v5474 = vunpack.c.h.b16 %v3635
  %v5475 = vunpack.c.l.b16 %v3636
  %v5476 = vunpack.c.h.b16 %v3636
  %v5477 = vunpack.c.l.b16 %v3637
  %v5478 = vunpack.c.h.b16 %v3637
  %v5479 = vunpack.c.l.b16 %v3638
  %v5480 = vunpack.c.h.b16 %v3638
  %v5481 = vunpack.c.l.b16 %v3639
  %v5482 = vunpack.c.h.b16 %v3639
  %v5483 = vunpack.c.l.b16 %v3640
  %v5484 = vunpack.c.h.b16 %v3640
  %v5485 = vunpack.c.l.b16 %v3641
  %v5486 = vunpack.c.h.b16 %v3641
  %v5487 = vunpack.c.l.b16 %v3642
  %v5488 = vunpack.c.h.b16 %v3642
  %v5489 = vunpack.c.l.b16 %v3643
  %v5490 = vunpack.c.h.b16 %v3643
  %v5491 = vunpack.c.l.b16 %v3644
  %v5492 = vunpack.c.h.b16 %v3644
  %v5493 = vunpack.c.l.b16 %v3645
  %v5494 = vunpack.c.h.b16 %v3645
  %v5495 = vunpack.c.l.b16 %v3646
  %v5496 = vunpack.c.h.b16 %v3646
  %v5497 = vunpack.c.l.b16 %v3647
  %v5498 = vunpack.c.h.b16 %v3647
  %v5499 = vunpack.c.l.b16 %v3648
  %v5500 = vunpack.c.h.b16 %v3648
  %v5501 = vunpack.c.l.b16 %v3649
  %v5502 = vunpack.c.h.b16 %v3649
  %v5503 = vunpack.c.l.b16 %v3650
  %v5504 = vunpack.c.h.b16 %v3650
  %v5505 = vunpack.c.l.b16 %v3651
  %v5506 = vunpack.c.h.b16 %v3651
  %v5507 = vunpack.c.l.b16 %v3652
  %v5508 = vunpack.c.h.b16 %v3652
  %v5509 = vunpack.c.l.b16 %v3653
  %v5510 = vunpack.c.h.b16 %v3653
  %v5511 = vunpack.c.l.b16 %v3654
  %v5512 = vunpack.c.h.b16 %v3654
  %v5513 = vunpack.c.l.b16 %v3655
  %v5514 = vunpack.c.h.b16 %v3655
  %v5515 = vunpack.c.l.b16 %v3656
  %v5516 = vunpack.c.h.b16 %v3656
  %v5517 = vunpack.c.l.b16 %v3657
  %v5518 = vunpack.c.h.b16 %v3657
  %v5519 = vunpack.c.l.b16 %v3658
  %v5520 = vunpack.c.h.b16 %v3658
  %v5521 = vunpack.c.l.b16 %v3659
  %v5522 = vunpack.c.h.b16 %v3659
  %v5523 = vunpack.c.l.b16 %v3660
  %v5524 = vunpack.c.h.b16 %v3660
  %v5525 = vunpack.c.l.b16 %v3661
  %v5526 = vunpack.c.h.b16 %v3661
  %v5527 = vunpack.c.l.b16 %v3662
  %v5528 = vunpack.c.h.b16 %v3662
  %v5529 = vunpack.c.l.b16 %v3663
  %v5530 = vunpack.c.h.b16 %v3663
  %v5531 = vunpack.c.l.b16 %v3664
  %v5532 = vunpack.c.h.b16 %v3664
  %v5533 = vunpack.c.l.b16 %v3665
  %v5534 = vunpack.c.h.b16 %v3665
  %v5535 = vunpack.c.l.b16 %v3666
  %v5536 = vunpack.c.h.b16 %v3666
  %v5537 = vunpack.c.l.b16 %v3667
  %v5538 = vunpack.c.h.b16 %v3667
  %v5539 = vunpack.c.l.b16 %v3668
  %v5540 = vunpack.c.h.b16 %v3668
  %v5541 = vunpack.c.l.b16 %v3669
  %v5542 = vunpack.c.h.b16 %v3669
  %v5543 = vunpack.c.l.b16 %v3670
  %v5544 = vunpack.c.h.b16 %v3670
  %v5545 = vpack.c.b16 %v5419, %v5417
  %v5546 = vpack.c.b16 %v5420, %v5418
  %v5547 = vpack.c.b16 %v5423, %v5421
  %v5548 = vpack.c.b16 %v5424, %v5422
  %v5549 = vpack.c.b16 %v5427, %v5425
  %v5550 = vpack.c.b16 %v5428, %v5426
  %v5551 = vpack.c.b16 %v5431, %v5429
  %v5552 = vpack.c.b16 %v5432, %v5430
  %v5553 = vpack.c.b16 %v5435, %v5433
  %v5554 = vpack.c.b16 %v5436, %v5434
  %v5555 = vpack.c.b16 %v5439, %v5437
  %v5556 = vpack.c.b16 %v5440, %v5438
  %v5557 = vpack.c.b16 %v5443, %v5441
  %v5558 = vpack.c.b16 %v5444, %v5442
  %v5559 = vpack.c.b16 %v5447, %v5445
  %v5560 = vpack.c.b16 %v5448, %v5446
  %v5561 = vpack.c.b16 %v5451, %v5449
  %v5562 = vpack.c.b16 %v5452, %v5450
  %v5563 = vpack.c.b16 %v5455, %v5453
  %v5564 = vpack.c.b16 %v5456, %v5454
  %v5565 = vpack.c.b16 %v5459, %v5457
  %v5566 = vpack.c.b16 %v5460, %v5458
  %v5567 = vpack.c.b16 %v5463, %v5461
  %v5568 = vpack.c.b16 %v5464, %v5462
  %v5569 = vpack.c.b16 %v5467, %v5465
  %v5570 = vpack.c.b16 %v5468, %v5466
  %v5571 = vpack.c.b16 %v5471, %v5469
  %v5572 = vpack.c.b16 %v5472, %v5470
  %v5573 = vpack.c.b16 %v5475, %v5473
  %v5574 = vpack.c.b16 %v5476, %v5474
  %v5575 = vpack.c.b16 %v5479, %v5477
  %v5576 = vpack.c.b16 %v5480, %v5478
  %v5577 = vpack.c.b16 %v5483, %v5481
  %v5578 = vpack.c.b16 %v5484, %v5482
  %v5579 = vpack.c.b16 %v5487, %v5485
  %v5580 = vpack.c.b16 %v5488, %v5486
  %v5581 = vpack.c.b16 %v5491, %v5489
  %v5582 = vpack.c.b16 %v5492, %v5490
  %v5583 = vpack.c.b16 %v5495, %v5493
  %v5584 = vpack.c.b16 %v5496, %v5494
  %v5585 = vpack.c.b16 %v5499, %v5497
  %v5586 = vpack.c.b16 %v5500, %v5498
  %v5587 = vpack.c.b16 %v5503, %v5501
  %v5588 = vpack.c.b16 %v5504, %v5502
  %v5589 = vpack.c.b16 %v5507, %v5505
  %v5590 = vpack.c.b16 %v5508, %v5506
  %v5591 = vpack.c.b16 %v5511, %v5509
  %v5592 = vpack.c.b16 %v5512, %v5510
  %v5593 = vpack.c.b16 %v5515, %v5513
  %v5594 = vpack.c.b16 %v5516, %v5514
  %v5595 = vpack.c.b16 %v5519, %v5517
  %v5596 = vpack.c.b16 %v5520, %v5518
  %v5597 = vpack.c.b16 %v5523, %v5521
  %v5598 = vpack.c.b16 %v5524, %v5522
  %v5599 = vpack.c.b16 %v5527, %v5525
  %v5600 = vpack.c.b16 %v5528, %v5526
  %v5601 = vpack.c.b16 %v5531, %v5529
  %v5602 = vpack.c.b16 %v5532, %v5530
  %v5603 = vpack.c.b16 %v5535, %v5533
  %v5604 = vpack.c.b16 %v5536, %v5534
  %v5605 = vpack.c.b16 %v5539, %v5537
  %v5606 = vpack.c.b16 %v5540, %v5538
  %v5607 = vpack.c.b16 %v5543, %v5541
  %v5608 = vpack.c.b16 %v5544, %v5542
  %5673 = vmatprep.subr.bf16.mxu0 %v5546
  %5674 = vmatpush1.bf16.msra.mxu0 %v5545
  %5675 = vmatprep.subr.bf16.mxu0 %v5548
  %5676 = vmatpush1.bf16.msra.mxu0 %v5547
  %5677 = vmatprep.subr.bf16.mxu0 %v5550
  %5678 = vmatpush1.bf16.msra.mxu0 %v5549
  %5679 = vmatprep.subr.bf16.mxu0 %v5552
  %5680 = vmatpush1.bf16.msra.mxu0 %v5551
  %5681 = vmatprep.subr.bf16.mxu0 %v5554
  %5682 = vmatpush1.bf16.msra.mxu0 %v5553
  %5683 = vmatprep.subr.bf16.mxu0 %v5556
  %5684 = vmatpush1.bf16.msra.mxu0 %v5555
  %5685 = vmatprep.subr.bf16.mxu0 %v5558
  %5686 = vmatpush1.bf16.msra.mxu0 %v5557
  %5687 = vmatprep.subr.bf16.mxu0 %v5560
  %5688 = vmatpush1.bf16.msra.mxu0 %v5559
  %5689 = vmatprep.subr.bf16.mxu0 %v5562
  %5690 = vmatpush1.bf16.msra.mxu0 %v5561
  %5691 = vmatprep.subr.bf16.mxu0 %v5564
  %5692 = vmatpush1.bf16.msra.mxu0 %v5563
  %5693 = vmatprep.subr.bf16.mxu0 %v5566
  %5694 = vmatpush1.bf16.msra.mxu0 %v5565
  %5695 = vmatprep.subr.bf16.mxu0 %v5568
  %5696 = vmatpush1.bf16.msra.mxu0 %v5567
  %5697 = vmatprep.subr.bf16.mxu0 %v5570
  %5698 = vmatpush1.bf16.msra.mxu0 %v5569
  %5699 = vmatprep.subr.bf16.mxu0 %v5572
  %5700 = vmatpush1.bf16.msra.mxu0 %v5571
  %5701 = vmatprep.subr.bf16.mxu0 %v5574
  %5702 = vmatpush1.bf16.msra.mxu0 %v5573
  %5703 = vmatprep.subr.bf16.mxu0 %v5576
  %5704 = vmatpush1.bf16.msra.mxu0 %v5575
  %5705 = vmatprep.mubr.bf16.mxu0 %v5339
  %5706 = vmatmul.mubr.bf16.gmra.mrb[0].mxu0 %v5338
  %v5707 = vpop.f32.mrb[0].mxu0
  %v5708 = vadd.f32 %v5346, %v5707
  %v5709 = vpop.f32.mrb[0].mxu0
  %v5710 = vadd.f32 %v5350, %v5709
  %v5711 = vpop.f32.mrb[0].mxu0
  %v5712 = vpop.f32.mrb[0].mxu0
  %5713 = vdwg.mxu0
  %5714 = vmatprep.subr.bf16.mxu0 %v5578
  %5715 = vmatpush1.bf16.msra.mxu0 %v5577
  %5716 = vmatprep.subr.bf16.mxu0 %v5580
  %5717 = vmatpush1.bf16.msra.mxu0 %v5579
  %5718 = vmatprep.subr.bf16.mxu0 %v5582
  %5719 = vmatpush1.bf16.msra.mxu0 %v5581
  %5720 = vmatprep.subr.bf16.mxu0 %v5584
  %5721 = vmatpush1.bf16.msra.mxu0 %v5583
  %5722 = vmatprep.subr.bf16.mxu0 %v5586
  %5723 = vmatpush1.bf16.msra.mxu0 %v5585
  %5724 = vmatprep.subr.bf16.mxu0 %v5588
  %5725 = vmatpush1.bf16.msra.mxu0 %v5587
  %5726 = vmatprep.subr.bf16.mxu0 %v5590
  %5727 = vmatpush1.bf16.msra.mxu0 %v5589
  %5728 = vmatprep.subr.bf16.mxu0 %v5592
  %5729 = vmatpush1.bf16.msra.mxu0 %v5591
  %5730 = vmatprep.subr.bf16.mxu0 %v5594
  %5731 = vmatpush1.bf16.msra.mxu0 %v5593
  %5732 = vmatprep.subr.bf16.mxu0 %v5596
  %5733 = vmatpush1.bf16.msra.mxu0 %v5595
  %5734 = vmatprep.subr.bf16.mxu0 %v5598
  %5735 = vmatpush1.bf16.msra.mxu0 %v5597
  %5736 = vmatprep.subr.bf16.mxu0 %v5600
  %5737 = vmatpush1.bf16.msra.mxu0 %v5599
  %5738 = vmatprep.subr.bf16.mxu0 %v5602
  %5739 = vmatpush1.bf16.msra.mxu0 %v5601
  %5740 = vmatprep.subr.bf16.mxu0 %v5604
  %5741 = vmatpush1.bf16.msra.mxu0 %v5603
  %5742 = vmatprep.subr.bf16.mxu0 %v5606
  %5743 = vmatpush1.bf16.msra.mxu0 %v5605
  %5744 = vmatprep.subr.bf16.mxu0 %v5608
  %5745 = vmatpush1.bf16.msra.mxu0 %v5607
  %5746 = vmatprep.mubr.bf16.mxu0 %v5341
  %5747 = vmatmul.mubr.bf16.gmra.mrb[0].mxu0 %v5340
  %v5748 = vpop.f32.mrb[0].mxu0
  %v5749 = vadd.f32 %v5708, %v5748
  %v5750 = vpop.f32.mrb[0].mxu0
  %v5751 = vadd.f32 %v5710, %v5750
  %v5752 = vpop.f32.mrb[0].mxu0
  %v5753 = vpop.f32.mrb[0].mxu0
  %5754 = vdwg.mxu0
  %v5755 = vmax.f32 %v5749, 0.0
  %v5756 = vmax.f32 %v5751, 0.0
  %v5757 = vpack.c.bf16 %v5755, %v5755
  %v5758 = vpack.c.bf16 %v5756, %v5756
  %v5760 = vlaneseq
  %v5761 = vshrl.u32 %v5760, 7
  %v5762 = vsub.s32 0, %v5761
  %v5763 = vrot.slane %v3704, %v5762
  %v5797 = vunpack.c.l.b16 %v3672
  %v5798 = vunpack.c.l.b16 %v3673
  %v5799 = vunpack.c.l.b16 %v3674
  %v5800 = vunpack.c.l.b16 %v3675
  %v5801 = vunpack.c.l.b16 %v3676
  %v5802 = vunpack.c.l.b16 %v3677
  %v5803 = vunpack.c.l.b16 %v3678
  %v5804 = vunpack.c.l.b16 %v3679
  %v5805 = vunpack.c.l.b16 %v3680
  %v5806 = vunpack.c.l.b16 %v3681
  %v5807 = vunpack.c.l.b16 %v3682
  %v5808 = vunpack.c.l.b16 %v3683
  %v5809 = vunpack.c.l.b16 %v3684
  %v5810 = vunpack.c.l.b16 %v3685
  %v5811 = vunpack.c.l.b16 %v3686
  %v5812 = vunpack.c.l.b16 %v3687
  %v5813 = vunpack.c.l.b16 %v3688
  %v5814 = vunpack.c.l.b16 %v3689
  %v5815 = vunpack.c.l.b16 %v3690
  %v5816 = vunpack.c.l.b16 %v3691
  %v5817 = vunpack.c.l.b16 %v3692
  %v5818 = vunpack.c.l.b16 %v3693
  %v5819 = vunpack.c.l.b16 %v3694
  %v5820 = vunpack.c.l.b16 %v3695
  %v5821 = vunpack.c.l.b16 %v3696
  %v5822 = vunpack.c.l.b16 %v3697
  %v5823 = vunpack.c.l.b16 %v3698
  %v5824 = vunpack.c.l.b16 %v3699
  %v5825 = vunpack.c.l.b16 %v3700
  %v5826 = vunpack.c.l.b16 %v3701
  %v5827 = vunpack.c.l.b16 %v3702
  %v5828 = vunpack.c.l.b16 %v3703
  %v5829 = vpack.c.b16 %v5798, %v5797
  %v5830 = vpack.c.b16 %v5800, %v5799
  %v5831 = vpack.c.b16 %v5802, %v5801
  %v5832 = vpack.c.b16 %v5804, %v5803
  %v5833 = vpack.c.b16 %v5806, %v5805
  %v5834 = vpack.c.b16 %v5808, %v5807
  %v5835 = vpack.c.b16 %v5810, %v5809
  %v5836 = vpack.c.b16 %v5812, %v5811
  %v5837 = vpack.c.b16 %v5814, %v5813
  %v5838 = vpack.c.b16 %v5816, %v5815
  %v5839 = vpack.c.b16 %v5818, %v5817
  %v5840 = vpack.c.b16 %v5820, %v5819
  %v5841 = vpack.c.b16 %v5822, %v5821
  %v5842 = vpack.c.b16 %v5824, %v5823
  %v5843 = vpack.c.b16 %v5826, %v5825
  %v5844 = vpack.c.b16 %v5828, %v5827
  %5861 = vmatprep.subr.bf16.mxu0 0
  %5862 = vmatpush1.bf16.msra.mxu0 %v5829
  %5863 = vmatprep.subr.bf16.mxu0 0
  %5864 = vmatpush1.bf16.msra.mxu0 %v5830
  %5865 = vmatprep.subr.bf16.mxu0 0
  %5866 = vmatpush1.bf16.msra.mxu0 %v5831
  %5867 = vmatprep.subr.bf16.mxu0 0
  %5868 = vmatpush1.bf16.msra.mxu0 %v5832
  %5869 = vmatprep.subr.bf16.mxu0 0
  %5870 = vmatpush1.bf16.msra.mxu0 %v5833
  %5871 = vmatprep.subr.bf16.mxu0 0
  %5872 = vmatpush1.bf16.msra.mxu0 %v5834
  %5873 = vmatprep.subr.bf16.mxu0 0
  %5874 = vmatpush1.bf16.msra.mxu0 %v5835
  %5875 = vmatprep.subr.bf16.mxu0 0
  %5876 = vmatpush1.bf16.msra.mxu0 %v5836
  %5877 = vmatprep.subr.bf16.mxu0 0
  %5878 = vmatpush1.bf16.msra.mxu0 %v5837
  %5879 = vmatprep.subr.bf16.mxu0 0
  %5880 = vmatpush1.bf16.msra.mxu0 %v5838
  %5881 = vmatprep.subr.bf16.mxu0 0
  %5882 = vmatpush1.bf16.msra.mxu0 %v5839
  %5883 = vmatprep.subr.bf16.mxu0 0
  %5884 = vmatpush1.bf16.msra.mxu0 %v5840
  %5885 = vmatprep.subr.bf16.mxu0 0
  %5886 = vmatpush1.bf16.msra.mxu0 %v5841
  %5887 = vmatprep.subr.bf16.mxu0 0
  %5888 = vmatpush1.bf16.msra.mxu0 %v5842
  %5889 = vmatprep.subr.bf16.mxu0 0
  %5890 = vmatpush1.bf16.msra.mxu0 %v5843
  %5891 = vmatprep.subr.bf16.mxu0 0
  %5892 = vmatpush1.bf16.msra.mxu0 %v5844
  %5893 = vmatprep.mubr.bf16.mxu0 %v5758
  %5894 = vmatmul.mubr.bf16.gmra.mrb[0].mxu0 %v5757
  %v5895 = vpop.f32.mrb[0].mxu0
  %v5896 = vadd.f32 %v5763, %v5895
  %v5897 = vpop.f32.mrb[0].mxu0
  %v5898 = vpop.f32.mrb[0].mxu0
  %v5899 = vpop.f32.mrb[0].mxu0
  %5900 = vdwg.mxu0
  %vm5901 = vcmask 80896
  %v5902 = vsel %vm5901, %v5896, -inf
  %5903 = vmax.xlane.f32.xlu0 %v5902
  %v5904 = vpop.xlane.xlu0 %5903
  %v5905 = vsub.f32 %v5896, %v5904
  %v5906 = vmul.f32 %v5905, 1.442695
  %v5907 = vpow.pop %v5906
  %v5908 = vsel %vm5901, %v5907, 0.0
  %5909 = vadd.xlane.f32.xlu0 %v5908
  %v5910 = vpop.xlane.xlu0 %5909
  %v5911 = vlog2.pop %v5910
  %v5912 = vmul.f32 %v5911, 0.6931472
  %v5913 = vadd.f32 %v5912, %v5904
  %v5914 = vsub.f32 %v5896, %v5913
  %5915 = vst.msk [vmem:[%s13] sm:$0xff] %vm5901, %v5914
  // Predicated region
  $region54: #{pointnet2_forward.5} parent=0 // pred_check
    _
  $region55: #{pointnet2_forward.5} parent=0 // pred_check_branch
    %5917 = sbr.rel (0) target = $region57
  $region56: #{pointnet2_forward.5} parent=0 // pred_region
    _
  $region57: #{pointnet2_forward.5} parent=0 // pred_fallthru
    _
  // Predicated region
  $region58: #{pointnet2_forward.5} parent=0 // pred_check
    _
  $region59: #{pointnet2_forward.5} parent=0 // pred_check_branch
    %5919 = sbr.rel (0) target = $region61
  $region60: #{pointnet2_forward.5} parent=0 // pred_region
    _
  $region61: #{pointnet2_forward.5} parent=0 // pred_fallthru
    _

</llo_original>
